<compile_context>
chip_gen: v6e
topology: v6e:2x2x1
jax: 0.10.0
libtpu: 0.0.40
codegen_flags: <defaults>
</compile_context>

<pallas_src>
import functools
import math

import jax
import jax.numpy as jnp
from jax.experimental import pallas as pl
from jax.experimental.pallas import tpu as pltpu

TIMEINTER = 3

_DEG2RAD = math.pi / 180.0
_RAD2DEG = 180.0 / math.pi
_WGS_A = 6378137.0
_WGS_B = 6356752.3142
_WGS_A2 = _WGS_A * _WGS_A
_WGS_B2 = _WGS_B * _WGS_B
# knots * (TIMEINTER/60) h * 1.852 km/nm * 1000 m/km folded into one constant:
# dist[rad] = sog * _DIST_KM * (1 / R[m]).
_DIST_KM = (TIMEINTER / 60.0) * 1.852 * 1000.0


def _myloss_kernel(pred_ref, tpos_ref, sc0_ref, loss_ref, pout_ref,
                   *, L, SBLK, TB, B_true):
    """One batch block.

    pred_ref: [2, L,   SBLK, 128]  (delta SOG, delta COG)
    tpos_ref: [2, L+1, SBLK, 128]  (true lon, true lat)
    sc0_ref:  [2,      SBLK, 128]  (true SOG, true COG at t=0)
    loss_ref: [1, SBLK, 128]       masked per-lane partial distance sum
    pout_ref: [2, L, SBLK, 128]    predicted (lon, lat) in degrees
    """

    def wrap_cog(c):
        # Correction_course: single +/-360 wrap of the course (COG channel only).
        return jnp.where(c > 360.0, c - 360.0, jnp.where(c < 0.0, c + 360.0, c))

    def radius_terms(sin_lat, cos_lat):
        # WGS-84 radius ratio (meters^2).  One approx reciprocal + one rsqrt
        # serve BOTH the haversine radius and the next dead-reckoning step.
        an = _WGS_A2 * cos_lat
        bn = _WGS_B2 * sin_lat
        ad = _WGS_A * cos_lat
        bd = _WGS_B * sin_lat
        num = an * an + bn * bn
        den = ad * ad + bd * bd
        ratio = num * pl.reciprocal(den, approx=True) + 1e-10
        r_inv = jax.lax.rsqrt(ratio)            # 1 / R[m]
        radius_km = ratio * r_inv * 1e-3        # sqrt(ratio)/1000 = R[km]
        return r_inv, radius_km

    # Zero-cost field views (static leading index).
    dsog_ref = pred_ref.at[0]          # [L, SBLK, 128]
    dcog_ref = pred_ref.at[1]
    tlon_ref = tpos_ref.at[0]          # [L+1, SBLK, 128]
    tlat_ref = tpos_ref.at[1]
    plon_ref = pout_ref.at[0]          # [L, SBLK, 128]
    plat_ref = pout_ref.at[1]

    # ---- initial carry: true state at t = 0 ----
    lat0 = tlat_ref[0] * _DEG2RAD
    sin_lat0 = jnp.sin(lat0)
    cos_lat0 = jnp.cos(lat0)
    lon0 = tlon_ref[0] * _DEG2RAD
    r_inv0, _ = radius_terms(sin_lat0, cos_lat0)
    acc0 = jnp.zeros((SBLK, 128), jnp.float32)

    # ---- sequential dead-reckoning recurrence with fused haversine ----
    def body(i, carry):
        sog, cog, lon_rad, sin_lat, cos_lat, r_inv, acc = carry

        # Accumulated SOG / wrapped accumulated COG (exact left fold of the ref).
        sog = sog + dsog_ref[i]
        cog = wrap_cog(cog + dcog_ref[i])
        cog_rad = cog * _DEG2RAD
        sin_c = jnp.sin(cog_rad)                     # off the lat chain
        cos_c = jnp.cos(cog_rad)

        # Destination point (lat chain: dist -> sin/cos(dist) -> sin_lat2 -> sqrt).
        dist = sog * _DIST_KM * r_inv
        sin_d = jnp.sin(dist)
        cos_d = jnp.cos(dist)
        sin_lat2 = sin_lat * cos_d + cos_lat * sin_d * cos_c
        cos_lat2 = jnp.sqrt(jnp.maximum(1.0 - sin_lat2 * sin_lat2, 0.0))
        lon2_rad = lon_rad + jnp.arctan2(sin_c * sin_d * cos_lat,
                                         cos_d - sin_lat * sin_lat2)

        # Radius at the new latitude: feeds step i's haversine AND step i+1's dist.
        r_inv2, radius_km = radius_terms(sin_lat2, cos_lat2)

        # ---- off-chain: degree-valued outputs (lane-dense stores) ----
        lat2_rad = jnp.arctan2(sin_lat2, cos_lat2)   # == asin(sin_lat2), cos >= 0
        plon_ref[i] = lon2_rad * _RAD2DEG
        plat_ref[i] = lat2_rad * _RAD2DEG

        # ---- off-chain: fused haversine against true position at t = i+1 ----
        tlat_d = tlat_ref[i + 1]
        tlon_d = tlon_ref[i + 1]
        dlat = tlat_d * _DEG2RAD - lat2_rad
        dlon = tlon_d * _DEG2RAD - lon2_rad
        s_lat = jnp.sin(dlat * 0.5)
        s_lon = jnp.sin(dlon * 0.5)
        a = s_lat * s_lat + cos_lat2 * jnp.cos(tlat_d * _DEG2RAD) * s_lon * s_lon
        c = 2.0 * jnp.arctan2(jnp.sqrt(a + 1e-10), jnp.sqrt(1.0 - a + 1e-10))
        acc = acc + radius_km * c

        return sog, cog, lon2_rad, sin_lat2, cos_lat2, r_inv2, acc

    carry0 = (sc0_ref[0], sc0_ref[1], lon0, sin_lat0, cos_lat0, r_inv0, acc0)
    unroll = L if L <= 16 else 8
    carry = jax.lax.fori_loop(0, L, body, carry0, unroll=unroll)
    acc = carry[-1]

    # Mask lanes that are pure batch padding so they do not dilute the mean.
    g = pl.program_id(0)
    sub = jax.lax.broadcasted_iota(jnp.int32, (SBLK, 128), 0)
    lane = jax.lax.broadcasted_iota(jnp.int32, (SBLK, 128), 1)
    valid = (g * TB + sub * 128 + lane) < B_true
    loss_ref[0] = jnp.where(valid, acc, 0.0)


def myloss_forward(pred, true):
    """pred: [B, L, 2] (delta SOG, delta COG); true: [B, L+1, 4] (lon, lat, SOG, COG)."""
    B, L, _ = pred.shape
    assert true.shape[0] == B and true.shape[1] == L + 1

    # ---- generation-aware VMEM budget (v7x has 64 MiB; v5e/v6e have 128 MiB) ----
    try:
        vmem_cap = int(pltpu.get_tpu_info().vmem_capacity_bytes)
    except Exception:
        vmem_cap = 64 * 2**20
    budget = (vmem_cap * 3) // 4          # leave headroom for compiler scratch

    def block_bytes(s):
        # pred + tpos + sc0 + pout + loss slabs per block, f32.
        return 4 * 128 * s * (6 * L + 5)

    # ---- batch tiling: pack batch across sublanes AND lanes ----
    sb_total = -(-B // 128)               # rows of 128 lanes needed
    if sb_total <= 8:
        sblk = sb_total                   # single block (block == full dim)
    else:
        sblk = 8
        # For very large batches give the EUP more independent chains per block,
        # but keep grid >= 2 so v7x's second TensorCore stays fed.
        for cand in (32, 24, 16):
            if sb_total >= 2 * cand and 2 * block_bytes(cand) + (2 << 20) <= budget:
                sblk = cand
                break
    # TODO(synk): for extreme L where even sblk=8 overflows the v7x 64 MiB VMEM,
    # add an inner "arbitrary" time-chunk grid axis with the recurrence carry in
    # VMEM scratch; not needed for typical MSTFormer sequence lengths.
    sb_pad = -(-sb_total // sblk) * sblk
    b_pad = sb_pad * 128
    grid = sb_pad // sblk
    tb = sblk * 128
    pad_b = b_pad - B

    pred32 = pred.astype(jnp.float32)
    true32 = true.astype(jnp.float32)

    # Two fused transposes instead of per-field ones (less glue HBM traffic).
    pred_t = jnp.transpose(pred32, (2, 1, 0))                    # [2, L, B]
    pred_t = jnp.pad(pred_t, ((0, 0), (0, 0), (0, pad_b))).reshape(2, L, sb_pad, 128)
    tpos = jnp.transpose(true32[:, :, 0:2], (2, 1, 0))           # [2, L+1, B]
    tpos = jnp.pad(tpos, ((0, 0), (0, 0), (0, pad_b))).reshape(2, L + 1, sb_pad, 128)
    sc0 = jnp.transpose(true32[:, 0, 2:4], (1, 0))               # [2, B]
    sc0 = jnp.pad(sc0, ((0, 0), (0, pad_b))).reshape(2, sb_pad, 128)

    kernel = functools.partial(_myloss_kernel, L=L, SBLK=sblk, TB=tb, B_true=B)

    vmem_bytes = int(min(budget, max(16 * 2**20, 2 * block_bytes(sblk) + (2 << 20))))

    elems = L * b_pad
    cost = pl.CostEstimate(
        flops=int(70 * elems),
        transcendentals=int(15 * elems),
        bytes_accessed=int((pred_t.size + tpos.size + sc0.size
                            + 2 * elems + grid * sblk * 128) * 4),
    )

    grid_spec = pltpu.PrefetchScalarGridSpec(
        num_scalar_prefetch=0,
        grid=(grid,),
        in_specs=[
            pl.BlockSpec((2, L, sblk, 128), lambda g: (0, 0, g, 0)),
            pl.BlockSpec((2, L + 1, sblk, 128), lambda g: (0, 0, g, 0)),
            pl.BlockSpec((2, sblk, 128), lambda g: (0, g, 0)),
        ],
        out_specs=(
            pl.BlockSpec((1, sblk, 128), lambda g: (g, 0, 0)),
            pl.BlockSpec((2, L, sblk, 128), lambda g: (0, 0, g, 0)),
        ),
    )

    loss_part, pout = pl.pallas_call(
        kernel,
        out_shape=(
            jax.ShapeDtypeStruct((grid, sblk, 128), jnp.float32),     # partial sums
            jax.ShapeDtypeStruct((2, L, sb_pad, 128), jnp.float32),   # pred lon/lat
        ),
        grid_spec=grid_spec,
        compiler_params=pltpu.CompilerParams(
            dimension_semantics=("parallel",),
            vmem_limit_bytes=vmem_bytes,
        ),
        cost_estimate=cost,
    )(pred_t, tpos, sc0)

    # Combine masked partial sums as sum / (L * B) to preserve the exact mean.
    loss = jnp.sum(loss_part) / float(L * B)
    # Single relayout: [2, L, b_pad] -> slice -> [B, L, 2] (lon, lat).
    posi_preds = jnp.transpose(pout.reshape(2, L, b_pad)[:, :, :B], (2, 1, 0))
    return loss, posi_preds


if __name__ == "__main__":
    B, L = 4, 8
    key = jax.random.PRNGKey(0)
    k1, k2 = jax.random.split(key)

    # Small per-step deltas of (SOG [knots], COG [deg]).
    pred = jax.random.normal(k1, (B, L, 2), dtype=jnp.float32) \
        * jnp.array([0.5, 5.0], dtype=jnp.float32)

    # True trajectory: lon in [100,140], lat in [10,40], sog in [5,20], cog in [0,360].
    u = jax.random.uniform(k2, (B, L + 1, 4), dtype=jnp.float32)
    true = u * jnp.array([40.0, 30.0, 15.0, 360.0], dtype=jnp.float32) \
        + jnp.array([100.0, 10.0, 5.0, 0.0], dtype=jnp.float32)

    loss, preds = jax.jit(myloss_forward)(pred, true)
    jax.block_until_ready((loss, preds))
    assert preds.shape == (B, L, 2)
    assert jnp.isfinite(loss)
    print("KERNEL_OK")
</pallas_src>

<mosaic_0001>
module attributes {stable_mosaic.version = 11 : i64} {
  func.func @_myloss_kernel(%arg0: i32, %arg1: memref<2x8x1x128xf32, #tpu.memory_space<vmem>>, %arg2: memref<2x9x1x128xf32, #tpu.memory_space<vmem>>, %arg3: memref<2x1x128xf32, #tpu.memory_space<vmem>>, %arg4: memref<1x1x128xf32, #tpu.memory_space<vmem>>, %arg5: memref<2x8x1x128xf32, #tpu.memory_space<vmem>>) attributes {dimension_semantics = [#tpu.dimension_semantics<parallel>], iteration_bounds = array<i64: 1>, scalar_prefetch = 0 : i64, scratch_operands = 0 : i64, tpu.core_type = #tpu.core_type<tc>, window_params = [{transform_indices = @transform_0, window_bounds = array<i64: 2, 8, 1, 128>}, {transform_indices = @transform_1, window_bounds = array<i64: 2, 9, 1, 128>}, {transform_indices = @transform_2, window_bounds = array<i64: 2, 1, 128>}, {transform_indices = @transform_3, window_bounds = array<i64: 1, 1, 128>}, {transform_indices = @transform_4, window_bounds = array<i64: 2, 8, 1, 128>}]} {
    %c1_i32 = arith.constant 1 : i32
    %c0_i32 = arith.constant 0 : i32
    %c0_i32_0 = arith.constant 0 : i32
    %c0_i32_1 = arith.constant 0 : i32
    %0 = tpu.memref_slice %arg2[%c1_i32, %c0_i32, %c0_i32_0, %c0_i32_1] : memref<2x9x1x128xf32, #tpu.memory_space<vmem>> -> memref<1x9x1x128xf32, #tpu.memory_space<vmem>>
    %1 = tpu.memref_squeeze %0 : memref<1x9x1x128xf32, #tpu.memory_space<vmem>> -> memref<9x1x128xf32, #tpu.memory_space<vmem>>
    %c0 = arith.constant 0 : index
    %c0_2 = arith.constant 0 : index
    %c0_3 = arith.constant 0 : index
    %2 = vector.load %1[%c0, %c0_2, %c0_3] : memref<9x1x128xf32, #tpu.memory_space<vmem>>, vector<1x1x128xf32>
    %3 = vector.shape_cast %2 : vector<1x1x128xf32> to vector<1x128xf32>
    %cst = arith.constant 0.0174532924 : f32
    %4 = vector.broadcast %cst : f32 to vector<1x128xf32>
    %5 = arith.mulf %3, %4 : vector<1x128xf32>
    %6 = math.sin %5 : vector<1x128xf32>
    %7 = math.cos %5 : vector<1x128xf32>
    %c0_i32_4 = arith.constant 0 : i32
    %c0_i32_5 = arith.constant 0 : i32
    %c0_i32_6 = arith.constant 0 : i32
    %c0_i32_7 = arith.constant 0 : i32
    %8 = tpu.memref_slice %arg2[%c0_i32_4, %c0_i32_5, %c0_i32_6, %c0_i32_7] : memref<2x9x1x128xf32, #tpu.memory_space<vmem>> -> memref<1x9x1x128xf32, #tpu.memory_space<vmem>>
    %9 = tpu.memref_squeeze %8 : memref<1x9x1x128xf32, #tpu.memory_space<vmem>> -> memref<9x1x128xf32, #tpu.memory_space<vmem>>
    %c0_8 = arith.constant 0 : index
    %c0_9 = arith.constant 0 : index
    %c0_10 = arith.constant 0 : index
    %10 = vector.load %9[%c0_8, %c0_9, %c0_10] : memref<9x1x128xf32, #tpu.memory_space<vmem>>, vector<1x1x128xf32>
    %11 = vector.shape_cast %10 : vector<1x1x128xf32> to vector<1x128xf32>
    %cst_11 = arith.constant 0.0174532924 : f32
    %12 = vector.broadcast %cst_11 : f32 to vector<1x128xf32>
    %13 = arith.mulf %11, %12 : vector<1x128xf32>
    %cst_12 = arith.constant 4.068063E+13 : f32
    %14 = vector.broadcast %cst_12 : f32 to vector<1x128xf32>
    %15 = arith.mulf %14, %7 : vector<1x128xf32>
    %cst_13 = arith.constant 4.040830e+13 : f32
    %16 = vector.broadcast %cst_13 : f32 to vector<1x128xf32>
    %17 = arith.mulf %16, %6 : vector<1x128xf32>
    %cst_14 = arith.constant 0x4AC2A532 : f32
    %18 = vector.broadcast %cst_14 : f32 to vector<1x128xf32>
    %19 = arith.mulf %18, %7 : vector<1x128xf32>
    %cst_15 = arith.constant 6356752.5 : f32
    %20 = vector.broadcast %cst_15 : f32 to vector<1x128xf32>
    %21 = arith.mulf %20, %6 : vector<1x128xf32>
    %22 = arith.mulf %15, %15 : vector<1x128xf32>
    %23 = arith.mulf %17, %17 : vector<1x128xf32>
    %24 = arith.addf %22, %23 : vector<1x128xf32>
    %25 = arith.mulf %19, %19 : vector<1x128xf32>
    %26 = arith.mulf %21, %21 : vector<1x128xf32>
    %27 = arith.addf %25, %26 : vector<1x128xf32>
    %28 = tpu.reciprocal %27 {approx = true} : vector<1x128xf32> -> vector<1x128xf32>
    %29 = arith.mulf %24, %28 : vector<1x128xf32>
    %cst_16 = arith.constant 1.000000e-10 : f32
    %30 = vector.broadcast %cst_16 : f32 to vector<1x128xf32>
    %31 = arith.addf %29, %30 : vector<1x128xf32>
    %32 = math.rsqrt %31 : vector<1x128xf32>
    %cst_17 = arith.constant 0.000000e+00 : f32
    %33 = vector.broadcast %cst_17 : f32 to vector<1x128xf32>
    %c0_18 = arith.constant 0 : index
    %c0_19 = arith.constant 0 : index
    %c0_20 = arith.constant 0 : index
    %34 = vector.load %arg3[%c0_18, %c0_19, %c0_20] : memref<2x1x128xf32, #tpu.memory_space<vmem>>, vector<1x1x128xf32>
    %35 = vector.shape_cast %34 : vector<1x1x128xf32> to vector<1x128xf32>
    %c1 = arith.constant 1 : index
    %c0_21 = arith.constant 0 : index
    %c0_22 = arith.constant 0 : index
    %36 = vector.load %arg3[%c1, %c0_21, %c0_22] : memref<2x1x128xf32, #tpu.memory_space<vmem>>, vector<1x1x128xf32>
    %37 = vector.shape_cast %36 : vector<1x1x128xf32> to vector<1x128xf32>
    %c0_i32_23 = arith.constant 0 : i32
    %c1_i32_24 = arith.constant 1 : i32
    %c0_i32_25 = arith.constant 0 : i32
    %c1_i32_26 = arith.constant 1 : i32
    %c1_i32_27 = arith.constant 1 : i32
    %c0_i32_28 = arith.constant 0 : i32
    %c0_i32_29 = arith.constant 0 : i32
    %c0_i32_30 = arith.constant 0 : i32
    %c0_i32_31 = arith.constant 0 : i32
    %c0_i32_32 = arith.constant 0 : i32
    %38 = tpu.memref_slice %arg1[%c0_i32_23, %c0_i32_30, %c0_i32_31, %c0_i32_32] : memref<2x8x1x128xf32, #tpu.memory_space<vmem>> -> memref<1x8x1x128xf32, #tpu.memory_space<vmem>>
    %39 = tpu.memref_squeeze %38 : memref<1x8x1x128xf32, #tpu.memory_space<vmem>> -> memref<8x1x128xf32, #tpu.memory_space<vmem>>
    %40 = arith.index_cast %c0_i32_29 : i32 to index
    %c0_33 = arith.constant 0 : index
    %c0_34 = arith.constant 0 : index
    %41 = vector.load %39[%40, %c0_33, %c0_34] : memref<8x1x128xf32, #tpu.memory_space<vmem>>, vector<1x1x128xf32>
    %42 = vector.shape_cast %41 : vector<1x1x128xf32> to vector<1x128xf32>
    %43 = arith.addf %35, %42 : vector<1x128xf32>
    %c0_i32_35 = arith.constant 0 : i32
    %c0_i32_36 = arith.constant 0 : i32
    %c0_i32_37 = arith.constant 0 : i32
    %44 = tpu.memref_slice %arg1[%c1_i32_24, %c0_i32_35, %c0_i32_36, %c0_i32_37] : memref<2x8x1x128xf32, #tpu.memory_space<vmem>> -> memref<1x8x1x128xf32, #tpu.memory_space<vmem>>
    %45 = tpu.memref_squeeze %44 : memref<1x8x1x128xf32, #tpu.memory_space<vmem>> -> memref<8x1x128xf32, #tpu.memory_space<vmem>>
    %46 = arith.index_cast %c0_i32_29 : i32 to index
    %c0_38 = arith.constant 0 : index
    %c0_39 = arith.constant 0 : index
    %47 = vector.load %45[%46, %c0_38, %c0_39] : memref<8x1x128xf32, #tpu.memory_space<vmem>>, vector<1x1x128xf32>
    %48 = vector.shape_cast %47 : vector<1x1x128xf32> to vector<1x128xf32>
    %49 = arith.addf %37, %48 : vector<1x128xf32>
    %cst_40 = arith.constant 3.600000e+02 : f32
    %50 = vector.broadcast %cst_40 : f32 to vector<1x128xf32>
    %51 = arith.cmpf ogt, %49, %50 : vector<1x128xf32>
    %cst_41 = arith.constant 3.600000e+02 : f32
    %52 = vector.broadcast %cst_41 : f32 to vector<1x128xf32>
    %53 = arith.subf %49, %52 : vector<1x128xf32>
    %cst_42 = arith.constant 0.000000e+00 : f32
    %54 = vector.broadcast %cst_42 : f32 to vector<1x128xf32>
    %55 = arith.cmpf olt, %49, %54 : vector<1x128xf32>
    %cst_43 = arith.constant 3.600000e+02 : f32
    %56 = vector.broadcast %cst_43 : f32 to vector<1x128xf32>
    %57 = arith.addf %49, %56 : vector<1x128xf32>
    %58 = arith.select %55, %57, %49 : vector<1x128xi1>, vector<1x128xf32>
    %59 = arith.select %51, %53, %58 : vector<1x128xi1>, vector<1x128xf32>
    %cst_44 = arith.constant 0.0174532924 : f32
    %60 = vector.broadcast %cst_44 : f32 to vector<1x128xf32>
    %61 = arith.mulf %59, %60 : vector<1x128xf32>
    %62 = math.sin %61 : vector<1x128xf32>
    %63 = math.cos %61 : vector<1x128xf32>
    %cst_45 = arith.constant 92.5999984 : f32
    %64 = vector.broadcast %cst_45 : f32 to vector<1x128xf32>
    %65 = arith.mulf %43, %64 : vector<1x128xf32>
    %66 = arith.mulf %65, %32 : vector<1x128xf32>
    %67 = math.sin %66 : vector<1x128xf32>
    %68 = math.cos %66 : vector<1x128xf32>
    %69 = arith.mulf %6, %68 : vector<1x128xf32>
    %70 = arith.mulf %7, %67 : vector<1x128xf32>
    %71 = arith.mulf %70, %63 : vector<1x128xf32>
    %72 = arith.addf %69, %71 : vector<1x128xf32>
    %73 = arith.mulf %72, %72 : vector<1x128xf32>
    %cst_46 = arith.constant 1.000000e+00 : f32
    %74 = vector.broadcast %cst_46 : f32 to vector<1x128xf32>
    %75 = arith.subf %74, %73 : vector<1x128xf32>
    %cst_47 = arith.constant 0.000000e+00 : f32
    %76 = vector.broadcast %cst_47 : f32 to vector<1x128xf32>
    %77 = arith.maximumf %75, %76 : vector<1x128xf32>
    %78 = math.sqrt %77 : vector<1x128xf32>
    %79 = arith.mulf %62, %67 : vector<1x128xf32>
    %80 = arith.mulf %79, %7 : vector<1x128xf32>
    %81 = arith.mulf %6, %72 : vector<1x128xf32>
    %82 = arith.subf %68, %81 : vector<1x128xf32>
    %83 = math.atan2 %80, %82 : vector<1x128xf32>
    %84 = arith.addf %13, %83 : vector<1x128xf32>
    %cst_48 = arith.constant 4.068063E+13 : f32
    %85 = vector.broadcast %cst_48 : f32 to vector<1x128xf32>
    %86 = arith.mulf %85, %78 : vector<1x128xf32>
    %cst_49 = arith.constant 4.040830e+13 : f32
    %87 = vector.broadcast %cst_49 : f32 to vector<1x128xf32>
    %88 = arith.mulf %87, %72 : vector<1x128xf32>
    %cst_50 = arith.constant 0x4AC2A532 : f32
    %89 = vector.broadcast %cst_50 : f32 to vector<1x128xf32>
    %90 = arith.mulf %89, %78 : vector<1x128xf32>
    %cst_51 = arith.constant 6356752.5 : f32
    %91 = vector.broadcast %cst_51 : f32 to vector<1x128xf32>
    %92 = arith.mulf %91, %72 : vector<1x128xf32>
    %93 = arith.mulf %86, %86 : vector<1x128xf32>
    %94 = arith.mulf %88, %88 : vector<1x128xf32>
    %95 = arith.addf %93, %94 : vector<1x128xf32>
    %96 = arith.mulf %90, %90 : vector<1x128xf32>
    %97 = arith.mulf %92, %92 : vector<1x128xf32>
    %98 = arith.addf %96, %97 : vector<1x128xf32>
    %99 = tpu.reciprocal %98 {approx = true} : vector<1x128xf32> -> vector<1x128xf32>
    %100 = arith.mulf %95, %99 : vector<1x128xf32>
    %cst_52 = arith.constant 1.000000e-10 : f32
    %101 = vector.broadcast %cst_52 : f32 to vector<1x128xf32>
    %102 = arith.addf %100, %101 : vector<1x128xf32>
    %103 = math.rsqrt %102 : vector<1x128xf32>
    %104 = arith.mulf %102, %103 : vector<1x128xf32>
    %cst_53 = arith.constant 1.000000e-03 : f32
    %105 = vector.broadcast %cst_53 : f32 to vector<1x128xf32>
    %106 = arith.mulf %104, %105 : vector<1x128xf32>
    %107 = math.atan2 %72, %78 : vector<1x128xf32>
    %cst_54 = arith.constant 57.2957802 : f32
    %108 = vector.broadcast %cst_54 : f32 to vector<1x128xf32>
    %109 = arith.mulf %84, %108 : vector<1x128xf32>
    %c0_i32_55 = arith.constant 0 : i32
    %c0_i32_56 = arith.constant 0 : i32
    %c0_i32_57 = arith.constant 0 : i32
    %110 = tpu.memref_slice %arg5[%c0_i32_25, %c0_i32_55, %c0_i32_56, %c0_i32_57] : memref<2x8x1x128xf32, #tpu.memory_space<vmem>> -> memref<1x8x1x128xf32, #tpu.memory_space<vmem>>
    %111 = tpu.memref_squeeze %110 : memref<1x8x1x128xf32, #tpu.memory_space<vmem>> -> memref<8x1x128xf32, #tpu.memory_space<vmem>>
    %112 = arith.index_cast %c0_i32_29 : i32 to index
    %c0_58 = arith.constant 0 : index
    %c0_59 = arith.constant 0 : index
    %113 = vector.load %111[%112, %c0_58, %c0_59] : memref<8x1x128xf32, #tpu.memory_space<vmem>>, vector<1x1x128xf32>
    %114 = vector.shape_cast %113 : vector<1x1x128xf32> to vector<1x128xf32>
    %115 = vector.shape_cast %109 : vector<1x128xf32> to vector<1x1x128xf32>
    tpu.vector_store %111[%112, %c0_58, %c0_59], %115 {strides = array<i32>} : memref<8x1x128xf32, #tpu.memory_space<vmem>>, vector<1x1x128xf32>,
    %cst_60 = arith.constant 57.2957802 : f32
    %116 = vector.broadcast %cst_60 : f32 to vector<1x128xf32>
    %117 = arith.mulf %107, %116 : vector<1x128xf32>
    %c0_i32_61 = arith.constant 0 : i32
    %c0_i32_62 = arith.constant 0 : i32
    %c0_i32_63 = arith.constant 0 : i32
    %118 = tpu.memref_slice %arg5[%c1_i32_26, %c0_i32_61, %c0_i32_62, %c0_i32_63] : memref<2x8x1x128xf32, #tpu.memory_space<vmem>> -> memref<1x8x1x128xf32, #tpu.memory_space<vmem>>
    %119 = tpu.memref_squeeze %118 : memref<1x8x1x128xf32, #tpu.memory_space<vmem>> -> memref<8x1x128xf32, #tpu.memory_space<vmem>>
    %120 = arith.index_cast %c0_i32_29 : i32 to index
    %c0_64 = arith.constant 0 : index
    %c0_65 = arith.constant 0 : index
    %121 = vector.load %119[%120, %c0_64, %c0_65] : memref<8x1x128xf32, #tpu.memory_space<vmem>>, vector<1x1x128xf32>
    %122 = vector.shape_cast %121 : vector<1x1x128xf32> to vector<1x128xf32>
    %123 = vector.shape_cast %117 : vector<1x128xf32> to vector<1x1x128xf32>
    tpu.vector_store %119[%120, %c0_64, %c0_65], %123 {strides = array<i32>} : memref<8x1x128xf32, #tpu.memory_space<vmem>>, vector<1x1x128xf32>,
    %c1_i32_66 = arith.constant 1 : i32
    %124 = arith.addi %c0_i32_29, %c1_i32_66 : i32
    %c0_i32_67 = arith.constant 0 : i32
    %c0_i32_68 = arith.constant 0 : i32
    %c0_i32_69 = arith.constant 0 : i32
    %125 = tpu.memref_slice %arg2[%c1_i32_27, %c0_i32_67, %c0_i32_68, %c0_i32_69] : memref<2x9x1x128xf32, #tpu.memory_space<vmem>> -> memref<1x9x1x128xf32, #tpu.memory_space<vmem>>
    %126 = tpu.memref_squeeze %125 : memref<1x9x1x128xf32, #tpu.memory_space<vmem>> -> memref<9x1x128xf32, #tpu.memory_space<vmem>>
    %127 = arith.index_cast %124 : i32 to index
    %c0_70 = arith.constant 0 : index
    %c0_71 = arith.constant 0 : index
    %128 = vector.load %126[%127, %c0_70, %c0_71] : memref<9x1x128xf32, #tpu.memory_space<vmem>>, vector<1x1x128xf32>
    %129 = vector.shape_cast %128 : vector<1x1x128xf32> to vector<1x128xf32>
    %c1_i32_72 = arith.constant 1 : i32
    %130 = arith.addi %c0_i32_29, %c1_i32_72 : i32
    %c0_i32_73 = arith.constant 0 : i32
    %c0_i32_74 = arith.constant 0 : i32
    %c0_i32_75 = arith.constant 0 : i32
    %131 = tpu.memref_slice %arg2[%c0_i32_28, %c0_i32_73, %c0_i32_74, %c0_i32_75] : memref<2x9x1x128xf32, #tpu.memory_space<vmem>> -> memref<1x9x1x128xf32, #tpu.memory_space<vmem>>
    %132 = tpu.memref_squeeze %131 : memref<1x9x1x128xf32, #tpu.memory_space<vmem>> -> memref<9x1x128xf32, #tpu.memory_space<vmem>>
    %133 = arith.index_cast %130 : i32 to index
    %c0_76 = arith.constant 0 : index
    %c0_77 = arith.constant 0 : index
    %134 = vector.load %132[%133, %c0_76, %c0_77] : memref<9x1x128xf32, #tpu.memory_space<vmem>>, vector<1x1x128xf32>
    %135 = vector.shape_cast %134 : vector<1x1x128xf32> to vector<1x128xf32>
    %cst_78 = arith.constant 0.0174532924 : f32
    %136 = vector.broadcast %cst_78 : f32 to vector<1x128xf32>
    %137 = arith.mulf %129, %136 : vector<1x128xf32>
    %138 = arith.subf %137, %107 : vector<1x128xf32>
    %cst_79 = arith.constant 0.0174532924 : f32
    %139 = vector.broadcast %cst_79 : f32 to vector<1x128xf32>
    %140 = arith.mulf %135, %139 : vector<1x128xf32>
    %141 = arith.subf %140, %84 : vector<1x128xf32>
    %cst_80 = arith.constant 5.000000e-01 : f32
    %142 = vector.broadcast %cst_80 : f32 to vector<1x128xf32>
    %143 = arith.mulf %138, %142 : vector<1x128xf32>
    %144 = math.sin %143 : vector<1x128xf32>
    %cst_81 = arith.constant 5.000000e-01 : f32
    %145 = vector.broadcast %cst_81 : f32 to vector<1x128xf32>
    %146 = arith.mulf %141, %145 : vector<1x128xf32>
    %147 = math.sin %146 : vector<1x128xf32>
    %148 = arith.mulf %144, %144 : vector<1x128xf32>
    %cst_82 = arith.constant 0.0174532924 : f32
    %149 = vector.broadcast %cst_82 : f32 to vector<1x128xf32>
    %150 = arith.mulf %129, %149 : vector<1x128xf32>
    %151 = math.cos %150 : vector<1x128xf32>
    %152 = arith.mulf %78, %151 : vector<1x128xf32>
    %153 = arith.mulf %152, %147 : vector<1x128xf32>
    %154 = arith.mulf %153, %147 : vector<1x128xf32>
    %155 = arith.addf %148, %154 : vector<1x128xf32>
    %cst_83 = arith.constant 1.000000e-10 : f32
    %156 = vector.broadcast %cst_83 : f32 to vector<1x128xf32>
    %157 = arith.addf %155, %156 : vector<1x128xf32>
    %158 = math.sqrt %157 : vector<1x128xf32>
    %cst_84 = arith.constant 1.000000e+00 : f32
    %159 = vector.broadcast %cst_84 : f32 to vector<1x128xf32>
    %160 = arith.subf %159, %155 : vector<1x128xf32>
    %cst_85 = arith.constant 1.000000e-10 : f32
    %161 = vector.broadcast %cst_85 : f32 to vector<1x128xf32>
    %162 = arith.addf %160, %161 : vector<1x128xf32>
    %163 = math.sqrt %162 : vector<1x128xf32>
    %164 = math.atan2 %158, %163 : vector<1x128xf32>
    %cst_86 = arith.constant 2.000000e+00 : f32
    %165 = vector.broadcast %cst_86 : f32 to vector<1x128xf32>
    %166 = arith.mulf %165, %164 : vector<1x128xf32>
    %167 = arith.mulf %106, %166 : vector<1x128xf32>
    %168 = arith.addf %33, %167 : vector<1x128xf32>
    %c1_i32_87 = arith.constant 1 : i32
    %c0_i32_88 = arith.constant 0 : i32
    %c0_i32_89 = arith.constant 0 : i32
    %c0_i32_90 = arith.constant 0 : i32
    %169 = tpu.memref_slice %arg1[%c0_i32_23, %c0_i32_88, %c0_i32_89, %c0_i32_90] : memref<2x8x1x128xf32, #tpu.memory_space<vmem>> -> memref<1x8x1x128xf32, #tpu.memory_space<vmem>>
    %170 = tpu.memref_squeeze %169 : memref<1x8x1x128xf32, #tpu.memory_space<vmem>> -> memref<8x1x128xf32, #tpu.memory_space<vmem>>
    %171 = arith.index_cast %c1_i32_87 : i32 to index
    %c0_91 = arith.constant 0 : index
    %c0_92 = arith.constant 0 : index
    %172 = vector.load %170[%171, %c0_91, %c0_92] : memref<8x1x128xf32, #tpu.memory_space<vmem>>, vector<1x1x128xf32>
    %173 = vector.shape_cast %172 : vector<1x1x128xf32> to vector<1x128xf32>
    %174 = arith.addf %43, %173 : vector<1x128xf32>
    %c0_i32_93 = arith.constant 0 : i32
    %c0_i32_94 = arith.constant 0 : i32
    %c0_i32_95 = arith.constant 0 : i32
    %175 = tpu.memref_slice %arg1[%c1_i32_24, %c0_i32_93, %c0_i32_94, %c0_i32_95] : memref<2x8x1x128xf32, #tpu.memory_space<vmem>> -> memref<1x8x1x128xf32, #tpu.memory_space<vmem>>
    %176 = tpu.memref_squeeze %175 : memref<1x8x1x128xf32, #tpu.memory_space<vmem>> -> memref<8x1x128xf32, #tpu.memory_space<vmem>>
    %177 = arith.index_cast %c1_i32_87 : i32 to index
    %c0_96 = arith.constant 0 : index
    %c0_97 = arith.constant 0 : index
    %178 = vector.load %176[%177, %c0_96, %c0_97] : memref<8x1x128xf32, #tpu.memory_space<vmem>>, vector<1x1x128xf32>
    %179 = vector.shape_cast %178 : vector<1x1x128xf32> to vector<1x128xf32>
    %180 = arith.addf %59, %179 : vector<1x128xf32>
    %cst_98 = arith.constant 3.600000e+02 : f32
    %181 = vector.broadcast %cst_98 : f32 to vector<1x128xf32>
    %182 = arith.cmpf ogt, %180, %181 : vector<1x128xf32>
    %cst_99 = arith.constant 3.600000e+02 : f32
    %183 = vector.broadcast %cst_99 : f32 to vector<1x128xf32>
    %184 = arith.subf %180, %183 : vector<1x128xf32>
    %cst_100 = arith.constant 0.000000e+00 : f32
    %185 = vector.broadcast %cst_100 : f32 to vector<1x128xf32>
    %186 = arith.cmpf olt, %180, %185 : vector<1x128xf32>
    %cst_101 = arith.constant 3.600000e+02 : f32
    %187 = vector.broadcast %cst_101 : f32 to vector<1x128xf32>
    %188 = arith.addf %180, %187 : vector<1x128xf32>
    %189 = arith.select %186, %188, %180 : vector<1x128xi1>, vector<1x128xf32>
    %190 = arith.select %182, %184, %189 : vector<1x128xi1>, vector<1x128xf32>
    %cst_102 = arith.constant 0.0174532924 : f32
    %191 = vector.broadcast %cst_102 : f32 to vector<1x128xf32>
    %192 = arith.mulf %190, %191 : vector<1x128xf32>
    %193 = math.sin %192 : vector<1x128xf32>
    %194 = math.cos %192 : vector<1x128xf32>
    %cst_103 = arith.constant 92.5999984 : f32
    %195 = vector.broadcast %cst_103 : f32 to vector<1x128xf32>
    %196 = arith.mulf %174, %195 : vector<1x128xf32>
    %197 = arith.mulf %196, %103 : vector<1x128xf32>
    %198 = math.sin %197 : vector<1x128xf32>
    %199 = math.cos %197 : vector<1x128xf32>
    %200 = arith.mulf %72, %199 : vector<1x128xf32>
    %201 = arith.mulf %78, %198 : vector<1x128xf32>
    %202 = arith.mulf %201, %194 : vector<1x128xf32>
    %203 = arith.addf %200, %202 : vector<1x128xf32>
    %204 = arith.mulf %203, %203 : vector<1x128xf32>
    %cst_104 = arith.constant 1.000000e+00 : f32
    %205 = vector.broadcast %cst_104 : f32 to vector<1x128xf32>
    %206 = arith.subf %205, %204 : vector<1x128xf32>
    %cst_105 = arith.constant 0.000000e+00 : f32
    %207 = vector.broadcast %cst_105 : f32 to vector<1x128xf32>
    %208 = arith.maximumf %206, %207 : vector<1x128xf32>
    %209 = math.sqrt %208 : vector<1x128xf32>
    %210 = arith.mulf %193, %198 : vector<1x128xf32>
    %211 = arith.mulf %210, %78 : vector<1x128xf32>
    %212 = arith.mulf %72, %203 : vector<1x128xf32>
    %213 = arith.subf %199, %212 : vector<1x128xf32>
    %214 = math.atan2 %211, %213 : vector<1x128xf32>
    %215 = arith.addf %84, %214 : vector<1x128xf32>
    %cst_106 = arith.constant 4.068063E+13 : f32
    %216 = vector.broadcast %cst_106 : f32 to vector<1x128xf32>
    %217 = arith.mulf %216, %209 : vector<1x128xf32>
    %cst_107 = arith.constant 4.040830e+13 : f32
    %218 = vector.broadcast %cst_107 : f32 to vector<1x128xf32>
    %219 = arith.mulf %218, %203 : vector<1x128xf32>
    %cst_108 = arith.constant 0x4AC2A532 : f32
    %220 = vector.broadcast %cst_108 : f32 to vector<1x128xf32>
    %221 = arith.mulf %220, %209 : vector<1x128xf32>
    %cst_109 = arith.constant 6356752.5 : f32
    %222 = vector.broadcast %cst_109 : f32 to vector<1x128xf32>
    %223 = arith.mulf %222, %203 : vector<1x128xf32>
    %224 = arith.mulf %217, %217 : vector<1x128xf32>
    %225 = arith.mulf %219, %219 : vector<1x128xf32>
    %226 = arith.addf %224, %225 : vector<1x128xf32>
    %227 = arith.mulf %221, %221 : vector<1x128xf32>
    %228 = arith.mulf %223, %223 : vector<1x128xf32>
    %229 = arith.addf %227, %228 : vector<1x128xf32>
    %230 = tpu.reciprocal %229 {approx = true} : vector<1x128xf32> -> vector<1x128xf32>
    %231 = arith.mulf %226, %230 : vector<1x128xf32>
    %cst_110 = arith.constant 1.000000e-10 : f32
    %232 = vector.broadcast %cst_110 : f32 to vector<1x128xf32>
    %233 = arith.addf %231, %232 : vector<1x128xf32>
    %234 = math.rsqrt %233 : vector<1x128xf32>
    %235 = arith.mulf %233, %234 : vector<1x128xf32>
    %cst_111 = arith.constant 1.000000e-03 : f32
    %236 = vector.broadcast %cst_111 : f32 to vector<1x128xf32>
    %237 = arith.mulf %235, %236 : vector<1x128xf32>
    %238 = math.atan2 %203, %209 : vector<1x128xf32>
    %cst_112 = arith.constant 57.2957802 : f32
    %239 = vector.broadcast %cst_112 : f32 to vector<1x128xf32>
    %240 = arith.mulf %215, %239 : vector<1x128xf32>
    %c0_i32_113 = arith.constant 0 : i32
    %c0_i32_114 = arith.constant 0 : i32
    %c0_i32_115 = arith.constant 0 : i32
    %241 = tpu.memref_slice %arg5[%c0_i32_25, %c0_i32_113, %c0_i32_114, %c0_i32_115] : memref<2x8x1x128xf32, #tpu.memory_space<vmem>> -> memref<1x8x1x128xf32, #tpu.memory_space<vmem>>
    %242 = tpu.memref_squeeze %241 : memref<1x8x1x128xf32, #tpu.memory_space<vmem>> -> memref<8x1x128xf32, #tpu.memory_space<vmem>>
    %243 = arith.index_cast %c1_i32_87 : i32 to index
    %c0_116 = arith.constant 0 : index
    %c0_117 = arith.constant 0 : index
    %244 = vector.load %242[%243, %c0_116, %c0_117] : memref<8x1x128xf32, #tpu.memory_space<vmem>>, vector<1x1x128xf32>
    %245 = vector.shape_cast %244 : vector<1x1x128xf32> to vector<1x128xf32>
    %246 = vector.shape_cast %240 : vector<1x128xf32> to vector<1x1x128xf32>
    tpu.vector_store %242[%243, %c0_116, %c0_117], %246 {strides = array<i32>} : memref<8x1x128xf32, #tpu.memory_space<vmem>>, vector<1x1x128xf32>,
    %cst_118 = arith.constant 57.2957802 : f32
    %247 = vector.broadcast %cst_118 : f32 to vector<1x128xf32>
    %248 = arith.mulf %238, %247 : vector<1x128xf32>
    %c0_i32_119 = arith.constant 0 : i32
    %c0_i32_120 = arith.constant 0 : i32
    %c0_i32_121 = arith.constant 0 : i32
    %249 = tpu.memref_slice %arg5[%c1_i32_26, %c0_i32_119, %c0_i32_120, %c0_i32_121] : memref<2x8x1x128xf32, #tpu.memory_space<vmem>> -> memref<1x8x1x128xf32, #tpu.memory_space<vmem>>
    %250 = tpu.memref_squeeze %249 : memref<1x8x1x128xf32, #tpu.memory_space<vmem>> -> memref<8x1x128xf32, #tpu.memory_space<vmem>>
    %251 = arith.index_cast %c1_i32_87 : i32 to index
    %c0_122 = arith.constant 0 : index
    %c0_123 = arith.constant 0 : index
    %252 = vector.load %250[%251, %c0_122, %c0_123] : memref<8x1x128xf32, #tpu.memory_space<vmem>>, vector<1x1x128xf32>
    %253 = vector.shape_cast %252 : vector<1x1x128xf32> to vector<1x128xf32>
    %254 = vector.shape_cast %248 : vector<1x128xf32> to vector<1x1x128xf32>
    tpu.vector_store %250[%251, %c0_122, %c0_123], %254 {strides = array<i32>} : memref<8x1x128xf32, #tpu.memory_space<vmem>>, vector<1x1x128xf32>,
    %c1_i32_124 = arith.constant 1 : i32
    %255 = arith.addi %c1_i32_87, %c1_i32_124 : i32
    %c0_i32_125 = arith.constant 0 : i32
    %c0_i32_126 = arith.constant 0 : i32
    %c0_i32_127 = arith.constant 0 : i32
    %256 = tpu.memref_slice %arg2[%c1_i32_27, %c0_i32_125, %c0_i32_126, %c0_i32_127] : memref<2x9x1x128xf32, #tpu.memory_space<vmem>> -> memref<1x9x1x128xf32, #tpu.memory_space<vmem>>
    %257 = tpu.memref_squeeze %256 : memref<1x9x1x128xf32, #tpu.memory_space<vmem>> -> memref<9x1x128xf32, #tpu.memory_space<vmem>>
    %258 = arith.index_cast %255 : i32 to index
    %c0_128 = arith.constant 0 : index
    %c0_129 = arith.constant 0 : index
    %259 = vector.load %257[%258, %c0_128, %c0_129] : memref<9x1x128xf32, #tpu.memory_space<vmem>>, vector<1x1x128xf32>
    %260 = vector.shape_cast %259 : vector<1x1x128xf32> to vector<1x128xf32>
    %c1_i32_130 = arith.constant 1 : i32
    %261 = arith.addi %c1_i32_87, %c1_i32_130 : i32
    %c0_i32_131 = arith.constant 0 : i32
    %c0_i32_132 = arith.constant 0 : i32
    %c0_i32_133 = arith.constant 0 : i32
    %262 = tpu.memref_slice %arg2[%c0_i32_28, %c0_i32_131, %c0_i32_132, %c0_i32_133] : memref<2x9x1x128xf32, #tpu.memory_space<vmem>> -> memref<1x9x1x128xf32, #tpu.memory_space<vmem>>
    %263 = tpu.memref_squeeze %262 : memref<1x9x1x128xf32, #tpu.memory_space<vmem>> -> memref<9x1x128xf32, #tpu.memory_space<vmem>>
    %264 = arith.index_cast %261 : i32 to index
    %c0_134 = arith.constant 0 : index
    %c0_135 = arith.constant 0 : index
    %265 = vector.load %263[%264, %c0_134, %c0_135] : memref<9x1x128xf32, #tpu.memory_space<vmem>>, vector<1x1x128xf32>
    %266 = vector.shape_cast %265 : vector<1x1x128xf32> to vector<1x128xf32>
    %cst_136 = arith.constant 0.0174532924 : f32
    %267 = vector.broadcast %cst_136 : f32 to vector<1x128xf32>
    %268 = arith.mulf %260, %267 : vector<1x128xf32>
    %269 = arith.subf %268, %238 : vector<1x128xf32>
    %cst_137 = arith.constant 0.0174532924 : f32
    %270 = vector.broadcast %cst_137 : f32 to vector<1x128xf32>
    %271 = arith.mulf %266, %270 : vector<1x128xf32>
    %272 = arith.subf %271, %215 : vector<1x128xf32>
    %cst_138 = arith.constant 5.000000e-01 : f32
    %273 = vector.broadcast %cst_138 : f32 to vector<1x128xf32>
    %274 = arith.mulf %269, %273 : vector<1x128xf32>
    %275 = math.sin %274 : vector<1x128xf32>
    %cst_139 = arith.constant 5.000000e-01 : f32
    %276 = vector.broadcast %cst_139 : f32 to vector<1x128xf32>
    %277 = arith.mulf %272, %276 : vector<1x128xf32>
    %278 = math.sin %277 : vector<1x128xf32>
    %279 = arith.mulf %275, %275 : vector<1x128xf32>
    %cst_140 = arith.constant 0.0174532924 : f32
    %280 = vector.broadcast %cst_140 : f32 to vector<1x128xf32>
    %281 = arith.mulf %260, %280 : vector<1x128xf32>
    %282 = math.cos %281 : vector<1x128xf32>
    %283 = arith.mulf %209, %282 : vector<1x128xf32>
    %284 = arith.mulf %283, %278 : vector<1x128xf32>
    %285 = arith.mulf %284, %278 : vector<1x128xf32>
    %286 = arith.addf %279, %285 : vector<1x128xf32>
    %cst_141 = arith.constant 1.000000e-10 : f32
    %287 = vector.broadcast %cst_141 : f32 to vector<1x128xf32>
    %288 = arith.addf %286, %287 : vector<1x128xf32>
    %289 = math.sqrt %288 : vector<1x128xf32>
    %cst_142 = arith.constant 1.000000e+00 : f32
    %290 = vector.broadcast %cst_142 : f32 to vector<1x128xf32>
    %291 = arith.subf %290, %286 : vector<1x128xf32>
    %cst_143 = arith.constant 1.000000e-10 : f32
    %292 = vector.broadcast %cst_143 : f32 to vector<1x128xf32>
    %293 = arith.addf %291, %292 : vector<1x128xf32>
    %294 = math.sqrt %293 : vector<1x128xf32>
    %295 = math.atan2 %289, %294 : vector<1x128xf32>
    %cst_144 = arith.constant 2.000000e+00 : f32
    %296 = vector.broadcast %cst_144 : f32 to vector<1x128xf32>
    %297 = arith.mulf %296, %295 : vector<1x128xf32>
    %298 = arith.mulf %237, %297 : vector<1x128xf32>
    %299 = arith.addf %168, %298 : vector<1x128xf32>
    %c2_i32 = arith.constant 2 : i32
    %c0_i32_145 = arith.constant 0 : i32
    %c0_i32_146 = arith.constant 0 : i32
    %c0_i32_147 = arith.constant 0 : i32
    %300 = tpu.memref_slice %arg1[%c0_i32_23, %c0_i32_145, %c0_i32_146, %c0_i32_147] : memref<2x8x1x128xf32, #tpu.memory_space<vmem>> -> memref<1x8x1x128xf32, #tpu.memory_space<vmem>>
    %301 = tpu.memref_squeeze %300 : memref<1x8x1x128xf32, #tpu.memory_space<vmem>> -> memref<8x1x128xf32, #tpu.memory_space<vmem>>
    %302 = arith.index_cast %c2_i32 : i32 to index
    %c0_148 = arith.constant 0 : index
    %c0_149 = arith.constant 0 : index
    %303 = vector.load %301[%302, %c0_148, %c0_149] : memref<8x1x128xf32, #tpu.memory_space<vmem>>, vector<1x1x128xf32>
    %304 = vector.shape_cast %303 : vector<1x1x128xf32> to vector<1x128xf32>
    %305 = arith.addf %174, %304 : vector<1x128xf32>
    %c0_i32_150 = arith.constant 0 : i32
    %c0_i32_151 = arith.constant 0 : i32
    %c0_i32_152 = arith.constant 0 : i32
    %306 = tpu.memref_slice %arg1[%c1_i32_24, %c0_i32_150, %c0_i32_151, %c0_i32_152] : memref<2x8x1x128xf32, #tpu.memory_space<vmem>> -> memref<1x8x1x128xf32, #tpu.memory_space<vmem>>
    %307 = tpu.memref_squeeze %306 : memref<1x8x1x128xf32, #tpu.memory_space<vmem>> -> memref<8x1x128xf32, #tpu.memory_space<vmem>>
    %308 = arith.index_cast %c2_i32 : i32 to index
    %c0_153 = arith.constant 0 : index
    %c0_154 = arith.constant 0 : index
    %309 = vector.load %307[%308, %c0_153, %c0_154] : memref<8x1x128xf32, #tpu.memory_space<vmem>>, vector<1x1x128xf32>
    %310 = vector.shape_cast %309 : vector<1x1x128xf32> to vector<1x128xf32>
    %311 = arith.addf %190, %310 : vector<1x128xf32>
    %cst_155 = arith.constant 3.600000e+02 : f32
    %312 = vector.broadcast %cst_155 : f32 to vector<1x128xf32>
    %313 = arith.cmpf ogt, %311, %312 : vector<1x128xf32>
    %cst_156 = arith.constant 3.600000e+02 : f32
    %314 = vector.broadcast %cst_156 : f32 to vector<1x128xf32>
    %315 = arith.subf %311, %314 : vector<1x128xf32>
    %cst_157 = arith.constant 0.000000e+00 : f32
    %316 = vector.broadcast %cst_157 : f32 to vector<1x128xf32>
    %317 = arith.cmpf olt, %311, %316 : vector<1x128xf32>
    %cst_158 = arith.constant 3.600000e+02 : f32
    %318 = vector.broadcast %cst_158 : f32 to vector<1x128xf32>
    %319 = arith.addf %311, %318 : vector<1x128xf32>
    %320 = arith.select %317, %319, %311 : vector<1x128xi1>, vector<1x128xf32>
    %321 = arith.select %313, %315, %320 : vector<1x128xi1>, vector<1x128xf32>
    %cst_159 = arith.constant 0.0174532924 : f32
    %322 = vector.broadcast %cst_159 : f32 to vector<1x128xf32>
    %323 = arith.mulf %321, %322 : vector<1x128xf32>
    %324 = math.sin %323 : vector<1x128xf32>
    %325 = math.cos %323 : vector<1x128xf32>
    %cst_160 = arith.constant 92.5999984 : f32
    %326 = vector.broadcast %cst_160 : f32 to vector<1x128xf32>
    %327 = arith.mulf %305, %326 : vector<1x128xf32>
    %328 = arith.mulf %327, %234 : vector<1x128xf32>
    %329 = math.sin %328 : vector<1x128xf32>
    %330 = math.cos %328 : vector<1x128xf32>
    %331 = arith.mulf %203, %330 : vector<1x128xf32>
    %332 = arith.mulf %209, %329 : vector<1x128xf32>
    %333 = arith.mulf %332, %325 : vector<1x128xf32>
    %334 = arith.addf %331, %333 : vector<1x128xf32>
    %335 = arith.mulf %334, %334 : vector<1x128xf32>
    %cst_161 = arith.constant 1.000000e+00 : f32
    %336 = vector.broadcast %cst_161 : f32 to vector<1x128xf32>
    %337 = arith.subf %336, %335 : vector<1x128xf32>
    %cst_162 = arith.constant 0.000000e+00 : f32
    %338 = vector.broadcast %cst_162 : f32 to vector<1x128xf32>
    %339 = arith.maximumf %337, %338 : vector<1x128xf32>
    %340 = math.sqrt %339 : vector<1x128xf32>
    %341 = arith.mulf %324, %329 : vector<1x128xf32>
    %342 = arith.mulf %341, %209 : vector<1x128xf32>
    %343 = arith.mulf %203, %334 : vector<1x128xf32>
    %344 = arith.subf %330, %343 : vector<1x128xf32>
    %345 = math.atan2 %342, %344 : vector<1x128xf32>
    %346 = arith.addf %215, %345 : vector<1x128xf32>
    %cst_163 = arith.constant 4.068063E+13 : f32
    %347 = vector.broadcast %cst_163 : f32 to vector<1x128xf32>
    %348 = arith.mulf %347, %340 : vector<1x128xf32>
    %cst_164 = arith.constant 4.040830e+13 : f32
    %349 = vector.broadcast %cst_164 : f32 to vector<1x128xf32>
    %350 = arith.mulf %349, %334 : vector<1x128xf32>
    %cst_165 = arith.constant 0x4AC2A532 : f32
    %351 = vector.broadcast %cst_165 : f32 to vector<1x128xf32>
    %352 = arith.mulf %351, %340 : vector<1x128xf32>
    %cst_166 = arith.constant 6356752.5 : f32
    %353 = vector.broadcast %cst_166 : f32 to vector<1x128xf32>
    %354 = arith.mulf %353, %334 : vector<1x128xf32>
    %355 = arith.mulf %348, %348 : vector<1x128xf32>
    %356 = arith.mulf %350, %350 : vector<1x128xf32>
    %357 = arith.addf %355, %356 : vector<1x128xf32>
    %358 = arith.mulf %352, %352 : vector<1x128xf32>
    %359 = arith.mulf %354, %354 : vector<1x128xf32>
    %360 = arith.addf %358, %359 : vector<1x128xf32>
    %361 = tpu.reciprocal %360 {approx = true} : vector<1x128xf32> -> vector<1x128xf32>
    %362 = arith.mulf %357, %361 : vector<1x128xf32>
    %cst_167 = arith.constant 1.000000e-10 : f32
    %363 = vector.broadcast %cst_167 : f32 to vector<1x128xf32>
    %364 = arith.addf %362, %363 : vector<1x128xf32>
    %365 = math.rsqrt %364 : vector<1x128xf32>
    %366 = arith.mulf %364, %365 : vector<1x128xf32>
    %cst_168 = arith.constant 1.000000e-03 : f32
    %367 = vector.broadcast %cst_168 : f32 to vector<1x128xf32>
    %368 = arith.mulf %366, %367 : vector<1x128xf32>
    %369 = math.atan2 %334, %340 : vector<1x128xf32>
    %cst_169 = arith.constant 57.2957802 : f32
    %370 = vector.broadcast %cst_169 : f32 to vector<1x128xf32>
    %371 = arith.mulf %346, %370 : vector<1x128xf32>
    %c0_i32_170 = arith.constant 0 : i32
    %c0_i32_171 = arith.constant 0 : i32
    %c0_i32_172 = arith.constant 0 : i32
    %372 = tpu.memref_slice %arg5[%c0_i32_25, %c0_i32_170, %c0_i32_171, %c0_i32_172] : memref<2x8x1x128xf32, #tpu.memory_space<vmem>> -> memref<1x8x1x128xf32, #tpu.memory_space<vmem>>
    %373 = tpu.memref_squeeze %372 : memref<1x8x1x128xf32, #tpu.memory_space<vmem>> -> memref<8x1x128xf32, #tpu.memory_space<vmem>>
    %374 = arith.index_cast %c2_i32 : i32 to index
    %c0_173 = arith.constant 0 : index
    %c0_174 = arith.constant 0 : index
    %375 = vector.load %373[%374, %c0_173, %c0_174] : memref<8x1x128xf32, #tpu.memory_space<vmem>>, vector<1x1x128xf32>
    %376 = vector.shape_cast %375 : vector<1x1x128xf32> to vector<1x128xf32>
    %377 = vector.shape_cast %371 : vector<1x128xf32> to vector<1x1x128xf32>
    tpu.vector_store %373[%374, %c0_173, %c0_174], %377 {strides = array<i32>} : memref<8x1x128xf32, #tpu.memory_space<vmem>>, vector<1x1x128xf32>,
    %cst_175 = arith.constant 57.2957802 : f32
    %378 = vector.broadcast %cst_175 : f32 to vector<1x128xf32>
    %379 = arith.mulf %369, %378 : vector<1x128xf32>
    %c0_i32_176 = arith.constant 0 : i32
    %c0_i32_177 = arith.constant 0 : i32
    %c0_i32_178 = arith.constant 0 : i32
    %380 = tpu.memref_slice %arg5[%c1_i32_26, %c0_i32_176, %c0_i32_177, %c0_i32_178] : memref<2x8x1x128xf32, #tpu.memory_space<vmem>> -> memref<1x8x1x128xf32, #tpu.memory_space<vmem>>
    %381 = tpu.memref_squeeze %380 : memref<1x8x1x128xf32, #tpu.memory_space<vmem>> -> memref<8x1x128xf32, #tpu.memory_space<vmem>>
    %382 = arith.index_cast %c2_i32 : i32 to index
    %c0_179 = arith.constant 0 : index
    %c0_180 = arith.constant 0 : index
    %383 = vector.load %381[%382, %c0_179, %c0_180] : memref<8x1x128xf32, #tpu.memory_space<vmem>>, vector<1x1x128xf32>
    %384 = vector.shape_cast %383 : vector<1x1x128xf32> to vector<1x128xf32>
    %385 = vector.shape_cast %379 : vector<1x128xf32> to vector<1x1x128xf32>
    tpu.vector_store %381[%382, %c0_179, %c0_180], %385 {strides = array<i32>} : memref<8x1x128xf32, #tpu.memory_space<vmem>>, vector<1x1x128xf32>,
    %c1_i32_181 = arith.constant 1 : i32
    %386 = arith.addi %c2_i32, %c1_i32_181 : i32
    %c0_i32_182 = arith.constant 0 : i32
    %c0_i32_183 = arith.constant 0 : i32
    %c0_i32_184 = arith.constant 0 : i32
    %387 = tpu.memref_slice %arg2[%c1_i32_27, %c0_i32_182, %c0_i32_183, %c0_i32_184] : memref<2x9x1x128xf32, #tpu.memory_space<vmem>> -> memref<1x9x1x128xf32, #tpu.memory_space<vmem>>
    %388 = tpu.memref_squeeze %387 : memref<1x9x1x128xf32, #tpu.memory_space<vmem>> -> memref<9x1x128xf32, #tpu.memory_space<vmem>>
    %389 = arith.index_cast %386 : i32 to index
    %c0_185 = arith.constant 0 : index
    %c0_186 = arith.constant 0 : index
    %390 = vector.load %388[%389, %c0_185, %c0_186] : memref<9x1x128xf32, #tpu.memory_space<vmem>>, vector<1x1x128xf32>
    %391 = vector.shape_cast %390 : vector<1x1x128xf32> to vector<1x128xf32>
    %c1_i32_187 = arith.constant 1 : i32
    %392 = arith.addi %c2_i32, %c1_i32_187 : i32
    %c0_i32_188 = arith.constant 0 : i32
    %c0_i32_189 = arith.constant 0 : i32
    %c0_i32_190 = arith.constant 0 : i32
    %393 = tpu.memref_slice %arg2[%c0_i32_28, %c0_i32_188, %c0_i32_189, %c0_i32_190] : memref<2x9x1x128xf32, #tpu.memory_space<vmem>> -> memref<1x9x1x128xf32, #tpu.memory_space<vmem>>
    %394 = tpu.memref_squeeze %393 : memref<1x9x1x128xf32, #tpu.memory_space<vmem>> -> memref<9x1x128xf32, #tpu.memory_space<vmem>>
    %395 = arith.index_cast %392 : i32 to index
    %c0_191 = arith.constant 0 : index
    %c0_192 = arith.constant 0 : index
    %396 = vector.load %394[%395, %c0_191, %c0_192] : memref<9x1x128xf32, #tpu.memory_space<vmem>>, vector<1x1x128xf32>
    %397 = vector.shape_cast %396 : vector<1x1x128xf32> to vector<1x128xf32>
    %cst_193 = arith.constant 0.0174532924 : f32
    %398 = vector.broadcast %cst_193 : f32 to vector<1x128xf32>
    %399 = arith.mulf %391, %398 : vector<1x128xf32>
    %400 = arith.subf %399, %369 : vector<1x128xf32>
    %cst_194 = arith.constant 0.0174532924 : f32
    %401 = vector.broadcast %cst_194 : f32 to vector<1x128xf32>
    %402 = arith.mulf %397, %401 : vector<1x128xf32>
    %403 = arith.subf %402, %346 : vector<1x128xf32>
    %cst_195 = arith.constant 5.000000e-01 : f32
    %404 = vector.broadcast %cst_195 : f32 to vector<1x128xf32>
    %405 = arith.mulf %400, %404 : vector<1x128xf32>
    %406 = math.sin %405 : vector<1x128xf32>
    %cst_196 = arith.constant 5.000000e-01 : f32
    %407 = vector.broadcast %cst_196 : f32 to vector<1x128xf32>
    %408 = arith.mulf %403, %407 : vector<1x128xf32>
    %409 = math.sin %408 : vector<1x128xf32>
    %410 = arith.mulf %406, %406 : vector<1x128xf32>
    %cst_197 = arith.constant 0.0174532924 : f32
    %411 = vector.broadcast %cst_197 : f32 to vector<1x128xf32>
    %412 = arith.mulf %391, %411 : vector<1x128xf32>
    %413 = math.cos %412 : vector<1x128xf32>
    %414 = arith.mulf %340, %413 : vector<1x128xf32>
    %415 = arith.mulf %414, %409 : vector<1x128xf32>
    %416 = arith.mulf %415, %409 : vector<1x128xf32>
    %417 = arith.addf %410, %416 : vector<1x128xf32>
    %cst_198 = arith.constant 1.000000e-10 : f32
    %418 = vector.broadcast %cst_198 : f32 to vector<1x128xf32>
    %419 = arith.addf %417, %418 : vector<1x128xf32>
    %420 = math.sqrt %419 : vector<1x128xf32>
    %cst_199 = arith.constant 1.000000e+00 : f32
    %421 = vector.broadcast %cst_199 : f32 to vector<1x128xf32>
    %422 = arith.subf %421, %417 : vector<1x128xf32>
    %cst_200 = arith.constant 1.000000e-10 : f32
    %423 = vector.broadcast %cst_200 : f32 to vector<1x128xf32>
    %424 = arith.addf %422, %423 : vector<1x128xf32>
    %425 = math.sqrt %424 : vector<1x128xf32>
    %426 = math.atan2 %420, %425 : vector<1x128xf32>
    %cst_201 = arith.constant 2.000000e+00 : f32
    %427 = vector.broadcast %cst_201 : f32 to vector<1x128xf32>
    %428 = arith.mulf %427, %426 : vector<1x128xf32>
    %429 = arith.mulf %368, %428 : vector<1x128xf32>
    %430 = arith.addf %299, %429 : vector<1x128xf32>
    %c3_i32 = arith.constant 3 : i32
    %c0_i32_202 = arith.constant 0 : i32
    %c0_i32_203 = arith.constant 0 : i32
    %c0_i32_204 = arith.constant 0 : i32
    %431 = tpu.memref_slice %arg1[%c0_i32_23, %c0_i32_202, %c0_i32_203, %c0_i32_204] : memref<2x8x1x128xf32, #tpu.memory_space<vmem>> -> memref<1x8x1x128xf32, #tpu.memory_space<vmem>>
    %432 = tpu.memref_squeeze %431 : memref<1x8x1x128xf32, #tpu.memory_space<vmem>> -> memref<8x1x128xf32, #tpu.memory_space<vmem>>
    %433 = arith.index_cast %c3_i32 : i32 to index
    %c0_205 = arith.constant 0 : index
    %c0_206 = arith.constant 0 : index
    %434 = vector.load %432[%433, %c0_205, %c0_206] : memref<8x1x128xf32, #tpu.memory_space<vmem>>, vector<1x1x128xf32>
    %435 = vector.shape_cast %434 : vector<1x1x128xf32> to vector<1x128xf32>
    %436 = arith.addf %305, %435 : vector<1x128xf32>
    %c0_i32_207 = arith.constant 0 : i32
    %c0_i32_208 = arith.constant 0 : i32
    %c0_i32_209 = arith.constant 0 : i32
    %437 = tpu.memref_slice %arg1[%c1_i32_24, %c0_i32_207, %c0_i32_208, %c0_i32_209] : memref<2x8x1x128xf32, #tpu.memory_space<vmem>> -> memref<1x8x1x128xf32, #tpu.memory_space<vmem>>
    %438 = tpu.memref_squeeze %437 : memref<1x8x1x128xf32, #tpu.memory_space<vmem>> -> memref<8x1x128xf32, #tpu.memory_space<vmem>>
    %439 = arith.index_cast %c3_i32 : i32 to index
    %c0_210 = arith.constant 0 : index
    %c0_211 = arith.constant 0 : index
    %440 = vector.load %438[%439, %c0_210, %c0_211] : memref<8x1x128xf32, #tpu.memory_space<vmem>>, vector<1x1x128xf32>
    %441 = vector.shape_cast %440 : vector<1x1x128xf32> to vector<1x128xf32>
    %442 = arith.addf %321, %441 : vector<1x128xf32>
    %cst_212 = arith.constant 3.600000e+02 : f32
    %443 = vector.broadcast %cst_212 : f32 to vector<1x128xf32>
    %444 = arith.cmpf ogt, %442, %443 : vector<1x128xf32>
    %cst_213 = arith.constant 3.600000e+02 : f32
    %445 = vector.broadcast %cst_213 : f32 to vector<1x128xf32>
    %446 = arith.subf %442, %445 : vector<1x128xf32>
    %cst_214 = arith.constant 0.000000e+00 : f32
    %447 = vector.broadcast %cst_214 : f32 to vector<1x128xf32>
    %448 = arith.cmpf olt, %442, %447 : vector<1x128xf32>
    %cst_215 = arith.constant 3.600000e+02 : f32
    %449 = vector.broadcast %cst_215 : f32 to vector<1x128xf32>
    %450 = arith.addf %442, %449 : vector<1x128xf32>
    %451 = arith.select %448, %450, %442 : vector<1x128xi1>, vector<1x128xf32>
    %452 = arith.select %444, %446, %451 : vector<1x128xi1>, vector<1x128xf32>
    %cst_216 = arith.constant 0.0174532924 : f32
    %453 = vector.broadcast %cst_216 : f32 to vector<1x128xf32>
    %454 = arith.mulf %452, %453 : vector<1x128xf32>
    %455 = math.sin %454 : vector<1x128xf32>
    %456 = math.cos %454 : vector<1x128xf32>
    %cst_217 = arith.constant 92.5999984 : f32
    %457 = vector.broadcast %cst_217 : f32 to vector<1x128xf32>
    %458 = arith.mulf %436, %457 : vector<1x128xf32>
    %459 = arith.mulf %458, %365 : vector<1x128xf32>
    %460 = math.sin %459 : vector<1x128xf32>
    %461 = math.cos %459 : vector<1x128xf32>
    %462 = arith.mulf %334, %461 : vector<1x128xf32>
    %463 = arith.mulf %340, %460 : vector<1x128xf32>
    %464 = arith.mulf %463, %456 : vector<1x128xf32>
    %465 = arith.addf %462, %464 : vector<1x128xf32>
    %466 = arith.mulf %465, %465 : vector<1x128xf32>
    %cst_218 = arith.constant 1.000000e+00 : f32
    %467 = vector.broadcast %cst_218 : f32 to vector<1x128xf32>
    %468 = arith.subf %467, %466 : vector<1x128xf32>
    %cst_219 = arith.constant 0.000000e+00 : f32
    %469 = vector.broadcast %cst_219 : f32 to vector<1x128xf32>
    %470 = arith.maximumf %468, %469 : vector<1x128xf32>
    %471 = math.sqrt %470 : vector<1x128xf32>
    %472 = arith.mulf %455, %460 : vector<1x128xf32>
    %473 = arith.mulf %472, %340 : vector<1x128xf32>
    %474 = arith.mulf %334, %465 : vector<1x128xf32>
    %475 = arith.subf %461, %474 : vector<1x128xf32>
    %476 = math.atan2 %473, %475 : vector<1x128xf32>
    %477 = arith.addf %346, %476 : vector<1x128xf32>
    %cst_220 = arith.constant 4.068063E+13 : f32
    %478 = vector.broadcast %cst_220 : f32 to vector<1x128xf32>
    %479 = arith.mulf %478, %471 : vector<1x128xf32>
    %cst_221 = arith.constant 4.040830e+13 : f32
    %480 = vector.broadcast %cst_221 : f32 to vector<1x128xf32>
    %481 = arith.mulf %480, %465 : vector<1x128xf32>
    %cst_222 = arith.constant 0x4AC2A532 : f32
    %482 = vector.broadcast %cst_222 : f32 to vector<1x128xf32>
    %483 = arith.mulf %482, %471 : vector<1x128xf32>
    %cst_223 = arith.constant 6356752.5 : f32
    %484 = vector.broadcast %cst_223 : f32 to vector<1x128xf32>
    %485 = arith.mulf %484, %465 : vector<1x128xf32>
    %486 = arith.mulf %479, %479 : vector<1x128xf32>
    %487 = arith.mulf %481, %481 : vector<1x128xf32>
    %488 = arith.addf %486, %487 : vector<1x128xf32>
    %489 = arith.mulf %483, %483 : vector<1x128xf32>
    %490 = arith.mulf %485, %485 : vector<1x128xf32>
    %491 = arith.addf %489, %490 : vector<1x128xf32>
    %492 = tpu.reciprocal %491 {approx = true} : vector<1x128xf32> -> vector<1x128xf32>
    %493 = arith.mulf %488, %492 : vector<1x128xf32>
    %cst_224 = arith.constant 1.000000e-10 : f32
    %494 = vector.broadcast %cst_224 : f32 to vector<1x128xf32>
    %495 = arith.addf %493, %494 : vector<1x128xf32>
    %496 = math.rsqrt %495 : vector<1x128xf32>
    %497 = arith.mulf %495, %496 : vector<1x128xf32>
    %cst_225 = arith.constant 1.000000e-03 : f32
    %498 = vector.broadcast %cst_225 : f32 to vector<1x128xf32>
    %499 = arith.mulf %497, %498 : vector<1x128xf32>
    %500 = math.atan2 %465, %471 : vector<1x128xf32>
    %cst_226 = arith.constant 57.2957802 : f32
    %501 = vector.broadcast %cst_226 : f32 to vector<1x128xf32>
    %502 = arith.mulf %477, %501 : vector<1x128xf32>
    %c0_i32_227 = arith.constant 0 : i32
    %c0_i32_228 = arith.constant 0 : i32
    %c0_i32_229 = arith.constant 0 : i32
    %503 = tpu.memref_slice %arg5[%c0_i32_25, %c0_i32_227, %c0_i32_228, %c0_i32_229] : memref<2x8x1x128xf32, #tpu.memory_space<vmem>> -> memref<1x8x1x128xf32, #tpu.memory_space<vmem>>
    %504 = tpu.memref_squeeze %503 : memref<1x8x1x128xf32, #tpu.memory_space<vmem>> -> memref<8x1x128xf32, #tpu.memory_space<vmem>>
    %505 = arith.index_cast %c3_i32 : i32 to index
    %c0_230 = arith.constant 0 : index
    %c0_231 = arith.constant 0 : index
    %506 = vector.load %504[%505, %c0_230, %c0_231] : memref<8x1x128xf32, #tpu.memory_space<vmem>>, vector<1x1x128xf32>
    %507 = vector.shape_cast %506 : vector<1x1x128xf32> to vector<1x128xf32>
    %508 = vector.shape_cast %502 : vector<1x128xf32> to vector<1x1x128xf32>
    tpu.vector_store %504[%505, %c0_230, %c0_231], %508 {strides = array<i32>} : memref<8x1x128xf32, #tpu.memory_space<vmem>>, vector<1x1x128xf32>,
    %cst_232 = arith.constant 57.2957802 : f32
    %509 = vector.broadcast %cst_232 : f32 to vector<1x128xf32>
    %510 = arith.mulf %500, %509 : vector<1x128xf32>
    %c0_i32_233 = arith.constant 0 : i32
    %c0_i32_234 = arith.constant 0 : i32
    %c0_i32_235 = arith.constant 0 : i32
    %511 = tpu.memref_slice %arg5[%c1_i32_26, %c0_i32_233, %c0_i32_234, %c0_i32_235] : memref<2x8x1x128xf32, #tpu.memory_space<vmem>> -> memref<1x8x1x128xf32, #tpu.memory_space<vmem>>
    %512 = tpu.memref_squeeze %511 : memref<1x8x1x128xf32, #tpu.memory_space<vmem>> -> memref<8x1x128xf32, #tpu.memory_space<vmem>>
    %513 = arith.index_cast %c3_i32 : i32 to index
    %c0_236 = arith.constant 0 : index
    %c0_237 = arith.constant 0 : index
    %514 = vector.load %512[%513, %c0_236, %c0_237] : memref<8x1x128xf32, #tpu.memory_space<vmem>>, vector<1x1x128xf32>
    %515 = vector.shape_cast %514 : vector<1x1x128xf32> to vector<1x128xf32>
    %516 = vector.shape_cast %510 : vector<1x128xf32> to vector<1x1x128xf32>
    tpu.vector_store %512[%513, %c0_236, %c0_237], %516 {strides = array<i32>} : memref<8x1x128xf32, #tpu.memory_space<vmem>>, vector<1x1x128xf32>,
    %c1_i32_238 = arith.constant 1 : i32
    %517 = arith.addi %c3_i32, %c1_i32_238 : i32
    %c0_i32_239 = arith.constant 0 : i32
    %c0_i32_240 = arith.constant 0 : i32
    %c0_i32_241 = arith.constant 0 : i32
    %518 = tpu.memref_slice %arg2[%c1_i32_27, %c0_i32_239, %c0_i32_240, %c0_i32_241] : memref<2x9x1x128xf32, #tpu.memory_space<vmem>> -> memref<1x9x1x128xf32, #tpu.memory_space<vmem>>
    %519 = tpu.memref_squeeze %518 : memref<1x9x1x128xf32, #tpu.memory_space<vmem>> -> memref<9x1x128xf32, #tpu.memory_space<vmem>>
    %520 = arith.index_cast %517 : i32 to index
    %c0_242 = arith.constant 0 : index
    %c0_243 = arith.constant 0 : index
    %521 = vector.load %519[%520, %c0_242, %c0_243] : memref<9x1x128xf32, #tpu.memory_space<vmem>>, vector<1x1x128xf32>
    %522 = vector.shape_cast %521 : vector<1x1x128xf32> to vector<1x128xf32>
    %c1_i32_244 = arith.constant 1 : i32
    %523 = arith.addi %c3_i32, %c1_i32_244 : i32
    %c0_i32_245 = arith.constant 0 : i32
    %c0_i32_246 = arith.constant 0 : i32
    %c0_i32_247 = arith.constant 0 : i32
    %524 = tpu.memref_slice %arg2[%c0_i32_28, %c0_i32_245, %c0_i32_246, %c0_i32_247] : memref<2x9x1x128xf32, #tpu.memory_space<vmem>> -> memref<1x9x1x128xf32, #tpu.memory_space<vmem>>
    %525 = tpu.memref_squeeze %524 : memref<1x9x1x128xf32, #tpu.memory_space<vmem>> -> memref<9x1x128xf32, #tpu.memory_space<vmem>>
    %526 = arith.index_cast %523 : i32 to index
    %c0_248 = arith.constant 0 : index
    %c0_249 = arith.constant 0 : index
    %527 = vector.load %525[%526, %c0_248, %c0_249] : memref<9x1x128xf32, #tpu.memory_space<vmem>>, vector<1x1x128xf32>
    %528 = vector.shape_cast %527 : vector<1x1x128xf32> to vector<1x128xf32>
    %cst_250 = arith.constant 0.0174532924 : f32
    %529 = vector.broadcast %cst_250 : f32 to vector<1x128xf32>
    %530 = arith.mulf %522, %529 : vector<1x128xf32>
    %531 = arith.subf %530, %500 : vector<1x128xf32>
    %cst_251 = arith.constant 0.0174532924 : f32
    %532 = vector.broadcast %cst_251 : f32 to vector<1x128xf32>
    %533 = arith.mulf %528, %532 : vector<1x128xf32>
    %534 = arith.subf %533, %477 : vector<1x128xf32>
    %cst_252 = arith.constant 5.000000e-01 : f32
    %535 = vector.broadcast %cst_252 : f32 to vector<1x128xf32>
    %536 = arith.mulf %531, %535 : vector<1x128xf32>
    %537 = math.sin %536 : vector<1x128xf32>
    %cst_253 = arith.constant 5.000000e-01 : f32
    %538 = vector.broadcast %cst_253 : f32 to vector<1x128xf32>
    %539 = arith.mulf %534, %538 : vector<1x128xf32>
    %540 = math.sin %539 : vector<1x128xf32>
    %541 = arith.mulf %537, %537 : vector<1x128xf32>
    %cst_254 = arith.constant 0.0174532924 : f32
    %542 = vector.broadcast %cst_254 : f32 to vector<1x128xf32>
    %543 = arith.mulf %522, %542 : vector<1x128xf32>
    %544 = math.cos %543 : vector<1x128xf32>
    %545 = arith.mulf %471, %544 : vector<1x128xf32>
    %546 = arith.mulf %545, %540 : vector<1x128xf32>
    %547 = arith.mulf %546, %540 : vector<1x128xf32>
    %548 = arith.addf %541, %547 : vector<1x128xf32>
    %cst_255 = arith.constant 1.000000e-10 : f32
    %549 = vector.broadcast %cst_255 : f32 to vector<1x128xf32>
    %550 = arith.addf %548, %549 : vector<1x128xf32>
    %551 = math.sqrt %550 : vector<1x128xf32>
    %cst_256 = arith.constant 1.000000e+00 : f32
    %552 = vector.broadcast %cst_256 : f32 to vector<1x128xf32>
    %553 = arith.subf %552, %548 : vector<1x128xf32>
    %cst_257 = arith.constant 1.000000e-10 : f32
    %554 = vector.broadcast %cst_257 : f32 to vector<1x128xf32>
    %555 = arith.addf %553, %554 : vector<1x128xf32>
    %556 = math.sqrt %555 : vector<1x128xf32>
    %557 = math.atan2 %551, %556 : vector<1x128xf32>
    %cst_258 = arith.constant 2.000000e+00 : f32
    %558 = vector.broadcast %cst_258 : f32 to vector<1x128xf32>
    %559 = arith.mulf %558, %557 : vector<1x128xf32>
    %560 = arith.mulf %499, %559 : vector<1x128xf32>
    %561 = arith.addf %430, %560 : vector<1x128xf32>
    %c4_i32 = arith.constant 4 : i32
    %c0_i32_259 = arith.constant 0 : i32
    %c0_i32_260 = arith.constant 0 : i32
    %c0_i32_261 = arith.constant 0 : i32
    %562 = tpu.memref_slice %arg1[%c0_i32_23, %c0_i32_259, %c0_i32_260, %c0_i32_261] : memref<2x8x1x128xf32, #tpu.memory_space<vmem>> -> memref<1x8x1x128xf32, #tpu.memory_space<vmem>>
    %563 = tpu.memref_squeeze %562 : memref<1x8x1x128xf32, #tpu.memory_space<vmem>> -> memref<8x1x128xf32, #tpu.memory_space<vmem>>
    %564 = arith.index_cast %c4_i32 : i32 to index
    %c0_262 = arith.constant 0 : index
    %c0_263 = arith.constant 0 : index
    %565 = vector.load %563[%564, %c0_262, %c0_263] : memref<8x1x128xf32, #tpu.memory_space<vmem>>, vector<1x1x128xf32>
    %566 = vector.shape_cast %565 : vector<1x1x128xf32> to vector<1x128xf32>
    %567 = arith.addf %436, %566 : vector<1x128xf32>
    %c0_i32_264 = arith.constant 0 : i32
    %c0_i32_265 = arith.constant 0 : i32
    %c0_i32_266 = arith.constant 0 : i32
    %568 = tpu.memref_slice %arg1[%c1_i32_24, %c0_i32_264, %c0_i32_265, %c0_i32_266] : memref<2x8x1x128xf32, #tpu.memory_space<vmem>> -> memref<1x8x1x128xf32, #tpu.memory_space<vmem>>
    %569 = tpu.memref_squeeze %568 : memref<1x8x1x128xf32, #tpu.memory_space<vmem>> -> memref<8x1x128xf32, #tpu.memory_space<vmem>>
    %570 = arith.index_cast %c4_i32 : i32 to index
    %c0_267 = arith.constant 0 : index
    %c0_268 = arith.constant 0 : index
    %571 = vector.load %569[%570, %c0_267, %c0_268] : memref<8x1x128xf32, #tpu.memory_space<vmem>>, vector<1x1x128xf32>
    %572 = vector.shape_cast %571 : vector<1x1x128xf32> to vector<1x128xf32>
    %573 = arith.addf %452, %572 : vector<1x128xf32>
    %cst_269 = arith.constant 3.600000e+02 : f32
    %574 = vector.broadcast %cst_269 : f32 to vector<1x128xf32>
    %575 = arith.cmpf ogt, %573, %574 : vector<1x128xf32>
    %cst_270 = arith.constant 3.600000e+02 : f32
    %576 = vector.broadcast %cst_270 : f32 to vector<1x128xf32>
    %577 = arith.subf %573, %576 : vector<1x128xf32>
    %cst_271 = arith.constant 0.000000e+00 : f32
    %578 = vector.broadcast %cst_271 : f32 to vector<1x128xf32>
    %579 = arith.cmpf olt, %573, %578 : vector<1x128xf32>
    %cst_272 = arith.constant 3.600000e+02 : f32
    %580 = vector.broadcast %cst_272 : f32 to vector<1x128xf32>
    %581 = arith.addf %573, %580 : vector<1x128xf32>
    %582 = arith.select %579, %581, %573 : vector<1x128xi1>, vector<1x128xf32>
    %583 = arith.select %575, %577, %582 : vector<1x128xi1>, vector<1x128xf32>
    %cst_273 = arith.constant 0.0174532924 : f32
    %584 = vector.broadcast %cst_273 : f32 to vector<1x128xf32>
    %585 = arith.mulf %583, %584 : vector<1x128xf32>
    %586 = math.sin %585 : vector<1x128xf32>
    %587 = math.cos %585 : vector<1x128xf32>
    %cst_274 = arith.constant 92.5999984 : f32
    %588 = vector.broadcast %cst_274 : f32 to vector<1x128xf32>
    %589 = arith.mulf %567, %588 : vector<1x128xf32>
    %590 = arith.mulf %589, %496 : vector<1x128xf32>
    %591 = math.sin %590 : vector<1x128xf32>
    %592 = math.cos %590 : vector<1x128xf32>
    %593 = arith.mulf %465, %592 : vector<1x128xf32>
    %594 = arith.mulf %471, %591 : vector<1x128xf32>
    %595 = arith.mulf %594, %587 : vector<1x128xf32>
    %596 = arith.addf %593, %595 : vector<1x128xf32>
    %597 = arith.mulf %596, %596 : vector<1x128xf32>
    %cst_275 = arith.constant 1.000000e+00 : f32
    %598 = vector.broadcast %cst_275 : f32 to vector<1x128xf32>
    %599 = arith.subf %598, %597 : vector<1x128xf32>
    %cst_276 = arith.constant 0.000000e+00 : f32
    %600 = vector.broadcast %cst_276 : f32 to vector<1x128xf32>
    %601 = arith.maximumf %599, %600 : vector<1x128xf32>
    %602 = math.sqrt %601 : vector<1x128xf32>
    %603 = arith.mulf %586, %591 : vector<1x128xf32>
    %604 = arith.mulf %603, %471 : vector<1x128xf32>
    %605 = arith.mulf %465, %596 : vector<1x128xf32>
    %606 = arith.subf %592, %605 : vector<1x128xf32>
    %607 = math.atan2 %604, %606 : vector<1x128xf32>
    %608 = arith.addf %477, %607 : vector<1x128xf32>
    %cst_277 = arith.constant 4.068063E+13 : f32
    %609 = vector.broadcast %cst_277 : f32 to vector<1x128xf32>
    %610 = arith.mulf %609, %602 : vector<1x128xf32>
    %cst_278 = arith.constant 4.040830e+13 : f32
    %611 = vector.broadcast %cst_278 : f32 to vector<1x128xf32>
    %612 = arith.mulf %611, %596 : vector<1x128xf32>
    %cst_279 = arith.constant 0x4AC2A532 : f32
    %613 = vector.broadcast %cst_279 : f32 to vector<1x128xf32>
    %614 = arith.mulf %613, %602 : vector<1x128xf32>
    %cst_280 = arith.constant 6356752.5 : f32
    %615 = vector.broadcast %cst_280 : f32 to vector<1x128xf32>
    %616 = arith.mulf %615, %596 : vector<1x128xf32>
    %617 = arith.mulf %610, %610 : vector<1x128xf32>
    %618 = arith.mulf %612, %612 : vector<1x128xf32>
    %619 = arith.addf %617, %618 : vector<1x128xf32>
    %620 = arith.mulf %614, %614 : vector<1x128xf32>
    %621 = arith.mulf %616, %616 : vector<1x128xf32>
    %622 = arith.addf %620, %621 : vector<1x128xf32>
    %623 = tpu.reciprocal %622 {approx = true} : vector<1x128xf32> -> vector<1x128xf32>
    %624 = arith.mulf %619, %623 : vector<1x128xf32>
    %cst_281 = arith.constant 1.000000e-10 : f32
    %625 = vector.broadcast %cst_281 : f32 to vector<1x128xf32>
    %626 = arith.addf %624, %625 : vector<1x128xf32>
    %627 = math.rsqrt %626 : vector<1x128xf32>
    %628 = arith.mulf %626, %627 : vector<1x128xf32>
    %cst_282 = arith.constant 1.000000e-03 : f32
    %629 = vector.broadcast %cst_282 : f32 to vector<1x128xf32>
    %630 = arith.mulf %628, %629 : vector<1x128xf32>
    %631 = math.atan2 %596, %602 : vector<1x128xf32>
    %cst_283 = arith.constant 57.2957802 : f32
    %632 = vector.broadcast %cst_283 : f32 to vector<1x128xf32>
    %633 = arith.mulf %608, %632 : vector<1x128xf32>
    %c0_i32_284 = arith.constant 0 : i32
    %c0_i32_285 = arith.constant 0 : i32
    %c0_i32_286 = arith.constant 0 : i32
    %634 = tpu.memref_slice %arg5[%c0_i32_25, %c0_i32_284, %c0_i32_285, %c0_i32_286] : memref<2x8x1x128xf32, #tpu.memory_space<vmem>> -> memref<1x8x1x128xf32, #tpu.memory_space<vmem>>
    %635 = tpu.memref_squeeze %634 : memref<1x8x1x128xf32, #tpu.memory_space<vmem>> -> memref<8x1x128xf32, #tpu.memory_space<vmem>>
    %636 = arith.index_cast %c4_i32 : i32 to index
    %c0_287 = arith.constant 0 : index
    %c0_288 = arith.constant 0 : index
    %637 = vector.load %635[%636, %c0_287, %c0_288] : memref<8x1x128xf32, #tpu.memory_space<vmem>>, vector<1x1x128xf32>
    %638 = vector.shape_cast %637 : vector<1x1x128xf32> to vector<1x128xf32>
    %639 = vector.shape_cast %633 : vector<1x128xf32> to vector<1x1x128xf32>
    tpu.vector_store %635[%636, %c0_287, %c0_288], %639 {strides = array<i32>} : memref<8x1x128xf32, #tpu.memory_space<vmem>>, vector<1x1x128xf32>,
    %cst_289 = arith.constant 57.2957802 : f32
    %640 = vector.broadcast %cst_289 : f32 to vector<1x128xf32>
    %641 = arith.mulf %631, %640 : vector<1x128xf32>
    %c0_i32_290 = arith.constant 0 : i32
    %c0_i32_291 = arith.constant 0 : i32
    %c0_i32_292 = arith.constant 0 : i32
    %642 = tpu.memref_slice %arg5[%c1_i32_26, %c0_i32_290, %c0_i32_291, %c0_i32_292] : memref<2x8x1x128xf32, #tpu.memory_space<vmem>> -> memref<1x8x1x128xf32, #tpu.memory_space<vmem>>
    %643 = tpu.memref_squeeze %642 : memref<1x8x1x128xf32, #tpu.memory_space<vmem>> -> memref<8x1x128xf32, #tpu.memory_space<vmem>>
    %644 = arith.index_cast %c4_i32 : i32 to index
    %c0_293 = arith.constant 0 : index
    %c0_294 = arith.constant 0 : index
    %645 = vector.load %643[%644, %c0_293, %c0_294] : memref<8x1x128xf32, #tpu.memory_space<vmem>>, vector<1x1x128xf32>
    %646 = vector.shape_cast %645 : vector<1x1x128xf32> to vector<1x128xf32>
    %647 = vector.shape_cast %641 : vector<1x128xf32> to vector<1x1x128xf32>
    tpu.vector_store %643[%644, %c0_293, %c0_294], %647 {strides = array<i32>} : memref<8x1x128xf32, #tpu.memory_space<vmem>>, vector<1x1x128xf32>,
    %c1_i32_295 = arith.constant 1 : i32
    %648 = arith.addi %c4_i32, %c1_i32_295 : i32
    %c0_i32_296 = arith.constant 0 : i32
    %c0_i32_297 = arith.constant 0 : i32
    %c0_i32_298 = arith.constant 0 : i32
    %649 = tpu.memref_slice %arg2[%c1_i32_27, %c0_i32_296, %c0_i32_297, %c0_i32_298] : memref<2x9x1x128xf32, #tpu.memory_space<vmem>> -> memref<1x9x1x128xf32, #tpu.memory_space<vmem>>
    %650 = tpu.memref_squeeze %649 : memref<1x9x1x128xf32, #tpu.memory_space<vmem>> -> memref<9x1x128xf32, #tpu.memory_space<vmem>>
    %651 = arith.index_cast %648 : i32 to index
    %c0_299 = arith.constant 0 : index
    %c0_300 = arith.constant 0 : index
    %652 = vector.load %650[%651, %c0_299, %c0_300] : memref<9x1x128xf32, #tpu.memory_space<vmem>>, vector<1x1x128xf32>
    %653 = vector.shape_cast %652 : vector<1x1x128xf32> to vector<1x128xf32>
    %c1_i32_301 = arith.constant 1 : i32
    %654 = arith.addi %c4_i32, %c1_i32_301 : i32
    %c0_i32_302 = arith.constant 0 : i32
    %c0_i32_303 = arith.constant 0 : i32
    %c0_i32_304 = arith.constant 0 : i32
    %655 = tpu.memref_slice %arg2[%c0_i32_28, %c0_i32_302, %c0_i32_303, %c0_i32_304] : memref<2x9x1x128xf32, #tpu.memory_space<vmem>> -> memref<1x9x1x128xf32, #tpu.memory_space<vmem>>
    %656 = tpu.memref_squeeze %655 : memref<1x9x1x128xf32, #tpu.memory_space<vmem>> -> memref<9x1x128xf32, #tpu.memory_space<vmem>>
    %657 = arith.index_cast %654 : i32 to index
    %c0_305 = arith.constant 0 : index
    %c0_306 = arith.constant 0 : index
    %658 = vector.load %656[%657, %c0_305, %c0_306] : memref<9x1x128xf32, #tpu.memory_space<vmem>>, vector<1x1x128xf32>
    %659 = vector.shape_cast %658 : vector<1x1x128xf32> to vector<1x128xf32>
    %cst_307 = arith.constant 0.0174532924 : f32
    %660 = vector.broadcast %cst_307 : f32 to vector<1x128xf32>
    %661 = arith.mulf %653, %660 : vector<1x128xf32>
    %662 = arith.subf %661, %631 : vector<1x128xf32>
    %cst_308 = arith.constant 0.0174532924 : f32
    %663 = vector.broadcast %cst_308 : f32 to vector<1x128xf32>
    %664 = arith.mulf %659, %663 : vector<1x128xf32>
    %665 = arith.subf %664, %608 : vector<1x128xf32>
    %cst_309 = arith.constant 5.000000e-01 : f32
    %666 = vector.broadcast %cst_309 : f32 to vector<1x128xf32>
    %667 = arith.mulf %662, %666 : vector<1x128xf32>
    %668 = math.sin %667 : vector<1x128xf32>
    %cst_310 = arith.constant 5.000000e-01 : f32
    %669 = vector.broadcast %cst_310 : f32 to vector<1x128xf32>
    %670 = arith.mulf %665, %669 : vector<1x128xf32>
    %671 = math.sin %670 : vector<1x128xf32>
    %672 = arith.mulf %668, %668 : vector<1x128xf32>
    %cst_311 = arith.constant 0.0174532924 : f32
    %673 = vector.broadcast %cst_311 : f32 to vector<1x128xf32>
    %674 = arith.mulf %653, %673 : vector<1x128xf32>
    %675 = math.cos %674 : vector<1x128xf32>
    %676 = arith.mulf %602, %675 : vector<1x128xf32>
    %677 = arith.mulf %676, %671 : vector<1x128xf32>
    %678 = arith.mulf %677, %671 : vector<1x128xf32>
    %679 = arith.addf %672, %678 : vector<1x128xf32>
    %cst_312 = arith.constant 1.000000e-10 : f32
    %680 = vector.broadcast %cst_312 : f32 to vector<1x128xf32>
    %681 = arith.addf %679, %680 : vector<1x128xf32>
    %682 = math.sqrt %681 : vector<1x128xf32>
    %cst_313 = arith.constant 1.000000e+00 : f32
    %683 = vector.broadcast %cst_313 : f32 to vector<1x128xf32>
    %684 = arith.subf %683, %679 : vector<1x128xf32>
    %cst_314 = arith.constant 1.000000e-10 : f32
    %685 = vector.broadcast %cst_314 : f32 to vector<1x128xf32>
    %686 = arith.addf %684, %685 : vector<1x128xf32>
    %687 = math.sqrt %686 : vector<1x128xf32>
    %688 = math.atan2 %682, %687 : vector<1x128xf32>
    %cst_315 = arith.constant 2.000000e+00 : f32
    %689 = vector.broadcast %cst_315 : f32 to vector<1x128xf32>
    %690 = arith.mulf %689, %688 : vector<1x128xf32>
    %691 = arith.mulf %630, %690 : vector<1x128xf32>
    %692 = arith.addf %561, %691 : vector<1x128xf32>
    %c5_i32 = arith.constant 5 : i32
    %c0_i32_316 = arith.constant 0 : i32
    %c0_i32_317 = arith.constant 0 : i32
    %c0_i32_318 = arith.constant 0 : i32
    %693 = tpu.memref_slice %arg1[%c0_i32_23, %c0_i32_316, %c0_i32_317, %c0_i32_318] : memref<2x8x1x128xf32, #tpu.memory_space<vmem>> -> memref<1x8x1x128xf32, #tpu.memory_space<vmem>>
    %694 = tpu.memref_squeeze %693 : memref<1x8x1x128xf32, #tpu.memory_space<vmem>> -> memref<8x1x128xf32, #tpu.memory_space<vmem>>
    %695 = arith.index_cast %c5_i32 : i32 to index
    %c0_319 = arith.constant 0 : index
    %c0_320 = arith.constant 0 : index
    %696 = vector.load %694[%695, %c0_319, %c0_320] : memref<8x1x128xf32, #tpu.memory_space<vmem>>, vector<1x1x128xf32>
    %697 = vector.shape_cast %696 : vector<1x1x128xf32> to vector<1x128xf32>
    %698 = arith.addf %567, %697 : vector<1x128xf32>
    %c0_i32_321 = arith.constant 0 : i32
    %c0_i32_322 = arith.constant 0 : i32
    %c0_i32_323 = arith.constant 0 : i32
    %699 = tpu.memref_slice %arg1[%c1_i32_24, %c0_i32_321, %c0_i32_322, %c0_i32_323] : memref<2x8x1x128xf32, #tpu.memory_space<vmem>> -> memref<1x8x1x128xf32, #tpu.memory_space<vmem>>
    %700 = tpu.memref_squeeze %699 : memref<1x8x1x128xf32, #tpu.memory_space<vmem>> -> memref<8x1x128xf32, #tpu.memory_space<vmem>>
    %701 = arith.index_cast %c5_i32 : i32 to index
    %c0_324 = arith.constant 0 : index
    %c0_325 = arith.constant 0 : index
    %702 = vector.load %700[%701, %c0_324, %c0_325] : memref<8x1x128xf32, #tpu.memory_space<vmem>>, vector<1x1x128xf32>
    %703 = vector.shape_cast %702 : vector<1x1x128xf32> to vector<1x128xf32>
    %704 = arith.addf %583, %703 : vector<1x128xf32>
    %cst_326 = arith.constant 3.600000e+02 : f32
    %705 = vector.broadcast %cst_326 : f32 to vector<1x128xf32>
    %706 = arith.cmpf ogt, %704, %705 : vector<1x128xf32>
    %cst_327 = arith.constant 3.600000e+02 : f32
    %707 = vector.broadcast %cst_327 : f32 to vector<1x128xf32>
    %708 = arith.subf %704, %707 : vector<1x128xf32>
    %cst_328 = arith.constant 0.000000e+00 : f32
    %709 = vector.broadcast %cst_328 : f32 to vector<1x128xf32>
    %710 = arith.cmpf olt, %704, %709 : vector<1x128xf32>
    %cst_329 = arith.constant 3.600000e+02 : f32
    %711 = vector.broadcast %cst_329 : f32 to vector<1x128xf32>
    %712 = arith.addf %704, %711 : vector<1x128xf32>
    %713 = arith.select %710, %712, %704 : vector<1x128xi1>, vector<1x128xf32>
    %714 = arith.select %706, %708, %713 : vector<1x128xi1>, vector<1x128xf32>
    %cst_330 = arith.constant 0.0174532924 : f32
    %715 = vector.broadcast %cst_330 : f32 to vector<1x128xf32>
    %716 = arith.mulf %714, %715 : vector<1x128xf32>
    %717 = math.sin %716 : vector<1x128xf32>
    %718 = math.cos %716 : vector<1x128xf32>
    %cst_331 = arith.constant 92.5999984 : f32
    %719 = vector.broadcast %cst_331 : f32 to vector<1x128xf32>
    %720 = arith.mulf %698, %719 : vector<1x128xf32>
    %721 = arith.mulf %720, %627 : vector<1x128xf32>
    %722 = math.sin %721 : vector<1x128xf32>
    %723 = math.cos %721 : vector<1x128xf32>
    %724 = arith.mulf %596, %723 : vector<1x128xf32>
    %725 = arith.mulf %602, %722 : vector<1x128xf32>
    %726 = arith.mulf %725, %718 : vector<1x128xf32>
    %727 = arith.addf %724, %726 : vector<1x128xf32>
    %728 = arith.mulf %727, %727 : vector<1x128xf32>
    %cst_332 = arith.constant 1.000000e+00 : f32
    %729 = vector.broadcast %cst_332 : f32 to vector<1x128xf32>
    %730 = arith.subf %729, %728 : vector<1x128xf32>
    %cst_333 = arith.constant 0.000000e+00 : f32
    %731 = vector.broadcast %cst_333 : f32 to vector<1x128xf32>
    %732 = arith.maximumf %730, %731 : vector<1x128xf32>
    %733 = math.sqrt %732 : vector<1x128xf32>
    %734 = arith.mulf %717, %722 : vector<1x128xf32>
    %735 = arith.mulf %734, %602 : vector<1x128xf32>
    %736 = arith.mulf %596, %727 : vector<1x128xf32>
    %737 = arith.subf %723, %736 : vector<1x128xf32>
    %738 = math.atan2 %735, %737 : vector<1x128xf32>
    %739 = arith.addf %608, %738 : vector<1x128xf32>
    %cst_334 = arith.constant 4.068063E+13 : f32
    %740 = vector.broadcast %cst_334 : f32 to vector<1x128xf32>
    %741 = arith.mulf %740, %733 : vector<1x128xf32>
    %cst_335 = arith.constant 4.040830e+13 : f32
    %742 = vector.broadcast %cst_335 : f32 to vector<1x128xf32>
    %743 = arith.mulf %742, %727 : vector<1x128xf32>
    %cst_336 = arith.constant 0x4AC2A532 : f32
    %744 = vector.broadcast %cst_336 : f32 to vector<1x128xf32>
    %745 = arith.mulf %744, %733 : vector<1x128xf32>
    %cst_337 = arith.constant 6356752.5 : f32
    %746 = vector.broadcast %cst_337 : f32 to vector<1x128xf32>
    %747 = arith.mulf %746, %727 : vector<1x128xf32>
    %748 = arith.mulf %741, %741 : vector<1x128xf32>
    %749 = arith.mulf %743, %743 : vector<1x128xf32>
    %750 = arith.addf %748, %749 : vector<1x128xf32>
    %751 = arith.mulf %745, %745 : vector<1x128xf32>
    %752 = arith.mulf %747, %747 : vector<1x128xf32>
    %753 = arith.addf %751, %752 : vector<1x128xf32>
    %754 = tpu.reciprocal %753 {approx = true} : vector<1x128xf32> -> vector<1x128xf32>
    %755 = arith.mulf %750, %754 : vector<1x128xf32>
    %cst_338 = arith.constant 1.000000e-10 : f32
    %756 = vector.broadcast %cst_338 : f32 to vector<1x128xf32>
    %757 = arith.addf %755, %756 : vector<1x128xf32>
    %758 = math.rsqrt %757 : vector<1x128xf32>
    %759 = arith.mulf %757, %758 : vector<1x128xf32>
    %cst_339 = arith.constant 1.000000e-03 : f32
    %760 = vector.broadcast %cst_339 : f32 to vector<1x128xf32>
    %761 = arith.mulf %759, %760 : vector<1x128xf32>
    %762 = math.atan2 %727, %733 : vector<1x128xf32>
    %cst_340 = arith.constant 57.2957802 : f32
    %763 = vector.broadcast %cst_340 : f32 to vector<1x128xf32>
    %764 = arith.mulf %739, %763 : vector<1x128xf32>
    %c0_i32_341 = arith.constant 0 : i32
    %c0_i32_342 = arith.constant 0 : i32
    %c0_i32_343 = arith.constant 0 : i32
    %765 = tpu.memref_slice %arg5[%c0_i32_25, %c0_i32_341, %c0_i32_342, %c0_i32_343] : memref<2x8x1x128xf32, #tpu.memory_space<vmem>> -> memref<1x8x1x128xf32, #tpu.memory_space<vmem>>
    %766 = tpu.memref_squeeze %765 : memref<1x8x1x128xf32, #tpu.memory_space<vmem>> -> memref<8x1x128xf32, #tpu.memory_space<vmem>>
    %767 = arith.index_cast %c5_i32 : i32 to index
    %c0_344 = arith.constant 0 : index
    %c0_345 = arith.constant 0 : index
    %768 = vector.load %766[%767, %c0_344, %c0_345] : memref<8x1x128xf32, #tpu.memory_space<vmem>>, vector<1x1x128xf32>
    %769 = vector.shape_cast %768 : vector<1x1x128xf32> to vector<1x128xf32>
    %770 = vector.shape_cast %764 : vector<1x128xf32> to vector<1x1x128xf32>
    tpu.vector_store %766[%767, %c0_344, %c0_345], %770 {strides = array<i32>} : memref<8x1x128xf32, #tpu.memory_space<vmem>>, vector<1x1x128xf32>,
    %cst_346 = arith.constant 57.2957802 : f32
    %771 = vector.broadcast %cst_346 : f32 to vector<1x128xf32>
    %772 = arith.mulf %762, %771 : vector<1x128xf32>
    %c0_i32_347 = arith.constant 0 : i32
    %c0_i32_348 = arith.constant 0 : i32
    %c0_i32_349 = arith.constant 0 : i32
    %773 = tpu.memref_slice %arg5[%c1_i32_26, %c0_i32_347, %c0_i32_348, %c0_i32_349] : memref<2x8x1x128xf32, #tpu.memory_space<vmem>> -> memref<1x8x1x128xf32, #tpu.memory_space<vmem>>
    %774 = tpu.memref_squeeze %773 : memref<1x8x1x128xf32, #tpu.memory_space<vmem>> -> memref<8x1x128xf32, #tpu.memory_space<vmem>>
    %775 = arith.index_cast %c5_i32 : i32 to index
    %c0_350 = arith.constant 0 : index
    %c0_351 = arith.constant 0 : index
    %776 = vector.load %774[%775, %c0_350, %c0_351] : memref<8x1x128xf32, #tpu.memory_space<vmem>>, vector<1x1x128xf32>
    %777 = vector.shape_cast %776 : vector<1x1x128xf32> to vector<1x128xf32>
    %778 = vector.shape_cast %772 : vector<1x128xf32> to vector<1x1x128xf32>
    tpu.vector_store %774[%775, %c0_350, %c0_351], %778 {strides = array<i32>} : memref<8x1x128xf32, #tpu.memory_space<vmem>>, vector<1x1x128xf32>,
    %c1_i32_352 = arith.constant 1 : i32
    %779 = arith.addi %c5_i32, %c1_i32_352 : i32
    %c0_i32_353 = arith.constant 0 : i32
    %c0_i32_354 = arith.constant 0 : i32
    %c0_i32_355 = arith.constant 0 : i32
    %780 = tpu.memref_slice %arg2[%c1_i32_27, %c0_i32_353, %c0_i32_354, %c0_i32_355] : memref<2x9x1x128xf32, #tpu.memory_space<vmem>> -> memref<1x9x1x128xf32, #tpu.memory_space<vmem>>
    %781 = tpu.memref_squeeze %780 : memref<1x9x1x128xf32, #tpu.memory_space<vmem>> -> memref<9x1x128xf32, #tpu.memory_space<vmem>>
    %782 = arith.index_cast %779 : i32 to index
    %c0_356 = arith.constant 0 : index
    %c0_357 = arith.constant 0 : index
    %783 = vector.load %781[%782, %c0_356, %c0_357] : memref<9x1x128xf32, #tpu.memory_space<vmem>>, vector<1x1x128xf32>
    %784 = vector.shape_cast %783 : vector<1x1x128xf32> to vector<1x128xf32>
    %c1_i32_358 = arith.constant 1 : i32
    %785 = arith.addi %c5_i32, %c1_i32_358 : i32
    %c0_i32_359 = arith.constant 0 : i32
    %c0_i32_360 = arith.constant 0 : i32
    %c0_i32_361 = arith.constant 0 : i32
    %786 = tpu.memref_slice %arg2[%c0_i32_28, %c0_i32_359, %c0_i32_360, %c0_i32_361] : memref<2x9x1x128xf32, #tpu.memory_space<vmem>> -> memref<1x9x1x128xf32, #tpu.memory_space<vmem>>
    %787 = tpu.memref_squeeze %786 : memref<1x9x1x128xf32, #tpu.memory_space<vmem>> -> memref<9x1x128xf32, #tpu.memory_space<vmem>>
    %788 = arith.index_cast %785 : i32 to index
    %c0_362 = arith.constant 0 : index
    %c0_363 = arith.constant 0 : index
    %789 = vector.load %787[%788, %c0_362, %c0_363] : memref<9x1x128xf32, #tpu.memory_space<vmem>>, vector<1x1x128xf32>
    %790 = vector.shape_cast %789 : vector<1x1x128xf32> to vector<1x128xf32>
    %cst_364 = arith.constant 0.0174532924 : f32
    %791 = vector.broadcast %cst_364 : f32 to vector<1x128xf32>
    %792 = arith.mulf %784, %791 : vector<1x128xf32>
    %793 = arith.subf %792, %762 : vector<1x128xf32>
    %cst_365 = arith.constant 0.0174532924 : f32
    %794 = vector.broadcast %cst_365 : f32 to vector<1x128xf32>
    %795 = arith.mulf %790, %794 : vector<1x128xf32>
    %796 = arith.subf %795, %739 : vector<1x128xf32>
    %cst_366 = arith.constant 5.000000e-01 : f32
    %797 = vector.broadcast %cst_366 : f32 to vector<1x128xf32>
    %798 = arith.mulf %793, %797 : vector<1x128xf32>
    %799 = math.sin %798 : vector<1x128xf32>
    %cst_367 = arith.constant 5.000000e-01 : f32
    %800 = vector.broadcast %cst_367 : f32 to vector<1x128xf32>
    %801 = arith.mulf %796, %800 : vector<1x128xf32>
    %802 = math.sin %801 : vector<1x128xf32>
    %803 = arith.mulf %799, %799 : vector<1x128xf32>
    %cst_368 = arith.constant 0.0174532924 : f32
    %804 = vector.broadcast %cst_368 : f32 to vector<1x128xf32>
    %805 = arith.mulf %784, %804 : vector<1x128xf32>
    %806 = math.cos %805 : vector<1x128xf32>
    %807 = arith.mulf %733, %806 : vector<1x128xf32>
    %808 = arith.mulf %807, %802 : vector<1x128xf32>
    %809 = arith.mulf %808, %802 : vector<1x128xf32>
    %810 = arith.addf %803, %809 : vector<1x128xf32>
    %cst_369 = arith.constant 1.000000e-10 : f32
    %811 = vector.broadcast %cst_369 : f32 to vector<1x128xf32>
    %812 = arith.addf %810, %811 : vector<1x128xf32>
    %813 = math.sqrt %812 : vector<1x128xf32>
    %cst_370 = arith.constant 1.000000e+00 : f32
    %814 = vector.broadcast %cst_370 : f32 to vector<1x128xf32>
    %815 = arith.subf %814, %810 : vector<1x128xf32>
    %cst_371 = arith.constant 1.000000e-10 : f32
    %816 = vector.broadcast %cst_371 : f32 to vector<1x128xf32>
    %817 = arith.addf %815, %816 : vector<1x128xf32>
    %818 = math.sqrt %817 : vector<1x128xf32>
    %819 = math.atan2 %813, %818 : vector<1x128xf32>
    %cst_372 = arith.constant 2.000000e+00 : f32
    %820 = vector.broadcast %cst_372 : f32 to vector<1x128xf32>
    %821 = arith.mulf %820, %819 : vector<1x128xf32>
    %822 = arith.mulf %761, %821 : vector<1x128xf32>
    %823 = arith.addf %692, %822 : vector<1x128xf32>
    %c6_i32 = arith.constant 6 : i32
    %c0_i32_373 = arith.constant 0 : i32
    %c0_i32_374 = arith.constant 0 : i32
    %c0_i32_375 = arith.constant 0 : i32
    %824 = tpu.memref_slice %arg1[%c0_i32_23, %c0_i32_373, %c0_i32_374, %c0_i32_375] : memref<2x8x1x128xf32, #tpu.memory_space<vmem>> -> memref<1x8x1x128xf32, #tpu.memory_space<vmem>>
    %825 = tpu.memref_squeeze %824 : memref<1x8x1x128xf32, #tpu.memory_space<vmem>> -> memref<8x1x128xf32, #tpu.memory_space<vmem>>
    %826 = arith.index_cast %c6_i32 : i32 to index
    %c0_376 = arith.constant 0 : index
    %c0_377 = arith.constant 0 : index
    %827 = vector.load %825[%826, %c0_376, %c0_377] : memref<8x1x128xf32, #tpu.memory_space<vmem>>, vector<1x1x128xf32>
    %828 = vector.shape_cast %827 : vector<1x1x128xf32> to vector<1x128xf32>
    %829 = arith.addf %698, %828 : vector<1x128xf32>
    %c0_i32_378 = arith.constant 0 : i32
    %c0_i32_379 = arith.constant 0 : i32
    %c0_i32_380 = arith.constant 0 : i32
    %830 = tpu.memref_slice %arg1[%c1_i32_24, %c0_i32_378, %c0_i32_379, %c0_i32_380] : memref<2x8x1x128xf32, #tpu.memory_space<vmem>> -> memref<1x8x1x128xf32, #tpu.memory_space<vmem>>
    %831 = tpu.memref_squeeze %830 : memref<1x8x1x128xf32, #tpu.memory_space<vmem>> -> memref<8x1x128xf32, #tpu.memory_space<vmem>>
    %832 = arith.index_cast %c6_i32 : i32 to index
    %c0_381 = arith.constant 0 : index
    %c0_382 = arith.constant 0 : index
    %833 = vector.load %831[%832, %c0_381, %c0_382] : memref<8x1x128xf32, #tpu.memory_space<vmem>>, vector<1x1x128xf32>
    %834 = vector.shape_cast %833 : vector<1x1x128xf32> to vector<1x128xf32>
    %835 = arith.addf %714, %834 : vector<1x128xf32>
    %cst_383 = arith.constant 3.600000e+02 : f32
    %836 = vector.broadcast %cst_383 : f32 to vector<1x128xf32>
    %837 = arith.cmpf ogt, %835, %836 : vector<1x128xf32>
    %cst_384 = arith.constant 3.600000e+02 : f32
    %838 = vector.broadcast %cst_384 : f32 to vector<1x128xf32>
    %839 = arith.subf %835, %838 : vector<1x128xf32>
    %cst_385 = arith.constant 0.000000e+00 : f32
    %840 = vector.broadcast %cst_385 : f32 to vector<1x128xf32>
    %841 = arith.cmpf olt, %835, %840 : vector<1x128xf32>
    %cst_386 = arith.constant 3.600000e+02 : f32
    %842 = vector.broadcast %cst_386 : f32 to vector<1x128xf32>
    %843 = arith.addf %835, %842 : vector<1x128xf32>
    %844 = arith.select %841, %843, %835 : vector<1x128xi1>, vector<1x128xf32>
    %845 = arith.select %837, %839, %844 : vector<1x128xi1>, vector<1x128xf32>
    %cst_387 = arith.constant 0.0174532924 : f32
    %846 = vector.broadcast %cst_387 : f32 to vector<1x128xf32>
    %847 = arith.mulf %845, %846 : vector<1x128xf32>
    %848 = math.sin %847 : vector<1x128xf32>
    %849 = math.cos %847 : vector<1x128xf32>
    %cst_388 = arith.constant 92.5999984 : f32
    %850 = vector.broadcast %cst_388 : f32 to vector<1x128xf32>
    %851 = arith.mulf %829, %850 : vector<1x128xf32>
    %852 = arith.mulf %851, %758 : vector<1x128xf32>
    %853 = math.sin %852 : vector<1x128xf32>
    %854 = math.cos %852 : vector<1x128xf32>
    %855 = arith.mulf %727, %854 : vector<1x128xf32>
    %856 = arith.mulf %733, %853 : vector<1x128xf32>
    %857 = arith.mulf %856, %849 : vector<1x128xf32>
    %858 = arith.addf %855, %857 : vector<1x128xf32>
    %859 = arith.mulf %858, %858 : vector<1x128xf32>
    %cst_389 = arith.constant 1.000000e+00 : f32
    %860 = vector.broadcast %cst_389 : f32 to vector<1x128xf32>
    %861 = arith.subf %860, %859 : vector<1x128xf32>
    %cst_390 = arith.constant 0.000000e+00 : f32
    %862 = vector.broadcast %cst_390 : f32 to vector<1x128xf32>
    %863 = arith.maximumf %861, %862 : vector<1x128xf32>
    %864 = math.sqrt %863 : vector<1x128xf32>
    %865 = arith.mulf %848, %853 : vector<1x128xf32>
    %866 = arith.mulf %865, %733 : vector<1x128xf32>
    %867 = arith.mulf %727, %858 : vector<1x128xf32>
    %868 = arith.subf %854, %867 : vector<1x128xf32>
    %869 = math.atan2 %866, %868 : vector<1x128xf32>
    %870 = arith.addf %739, %869 : vector<1x128xf32>
    %cst_391 = arith.constant 4.068063E+13 : f32
    %871 = vector.broadcast %cst_391 : f32 to vector<1x128xf32>
    %872 = arith.mulf %871, %864 : vector<1x128xf32>
    %cst_392 = arith.constant 4.040830e+13 : f32
    %873 = vector.broadcast %cst_392 : f32 to vector<1x128xf32>
    %874 = arith.mulf %873, %858 : vector<1x128xf32>
    %cst_393 = arith.constant 0x4AC2A532 : f32
    %875 = vector.broadcast %cst_393 : f32 to vector<1x128xf32>
    %876 = arith.mulf %875, %864 : vector<1x128xf32>
    %cst_394 = arith.constant 6356752.5 : f32
    %877 = vector.broadcast %cst_394 : f32 to vector<1x128xf32>
    %878 = arith.mulf %877, %858 : vector<1x128xf32>
    %879 = arith.mulf %872, %872 : vector<1x128xf32>
    %880 = arith.mulf %874, %874 : vector<1x128xf32>
    %881 = arith.addf %879, %880 : vector<1x128xf32>
    %882 = arith.mulf %876, %876 : vector<1x128xf32>
    %883 = arith.mulf %878, %878 : vector<1x128xf32>
    %884 = arith.addf %882, %883 : vector<1x128xf32>
    %885 = tpu.reciprocal %884 {approx = true} : vector<1x128xf32> -> vector<1x128xf32>
    %886 = arith.mulf %881, %885 : vector<1x128xf32>
    %cst_395 = arith.constant 1.000000e-10 : f32
    %887 = vector.broadcast %cst_395 : f32 to vector<1x128xf32>
    %888 = arith.addf %886, %887 : vector<1x128xf32>
    %889 = math.rsqrt %888 : vector<1x128xf32>
    %890 = arith.mulf %888, %889 : vector<1x128xf32>
    %cst_396 = arith.constant 1.000000e-03 : f32
    %891 = vector.broadcast %cst_396 : f32 to vector<1x128xf32>
    %892 = arith.mulf %890, %891 : vector<1x128xf32>
    %893 = math.atan2 %858, %864 : vector<1x128xf32>
    %cst_397 = arith.constant 57.2957802 : f32
    %894 = vector.broadcast %cst_397 : f32 to vector<1x128xf32>
    %895 = arith.mulf %870, %894 : vector<1x128xf32>
    %c0_i32_398 = arith.constant 0 : i32
    %c0_i32_399 = arith.constant 0 : i32
    %c0_i32_400 = arith.constant 0 : i32
    %896 = tpu.memref_slice %arg5[%c0_i32_25, %c0_i32_398, %c0_i32_399, %c0_i32_400] : memref<2x8x1x128xf32, #tpu.memory_space<vmem>> -> memref<1x8x1x128xf32, #tpu.memory_space<vmem>>
    %897 = tpu.memref_squeeze %896 : memref<1x8x1x128xf32, #tpu.memory_space<vmem>> -> memref<8x1x128xf32, #tpu.memory_space<vmem>>
    %898 = arith.index_cast %c6_i32 : i32 to index
    %c0_401 = arith.constant 0 : index
    %c0_402 = arith.constant 0 : index
    %899 = vector.load %897[%898, %c0_401, %c0_402] : memref<8x1x128xf32, #tpu.memory_space<vmem>>, vector<1x1x128xf32>
    %900 = vector.shape_cast %899 : vector<1x1x128xf32> to vector<1x128xf32>
    %901 = vector.shape_cast %895 : vector<1x128xf32> to vector<1x1x128xf32>
    tpu.vector_store %897[%898, %c0_401, %c0_402], %901 {strides = array<i32>} : memref<8x1x128xf32, #tpu.memory_space<vmem>>, vector<1x1x128xf32>,
    %cst_403 = arith.constant 57.2957802 : f32
    %902 = vector.broadcast %cst_403 : f32 to vector<1x128xf32>
    %903 = arith.mulf %893, %902 : vector<1x128xf32>
    %c0_i32_404 = arith.constant 0 : i32
    %c0_i32_405 = arith.constant 0 : i32
    %c0_i32_406 = arith.constant 0 : i32
    %904 = tpu.memref_slice %arg5[%c1_i32_26, %c0_i32_404, %c0_i32_405, %c0_i32_406] : memref<2x8x1x128xf32, #tpu.memory_space<vmem>> -> memref<1x8x1x128xf32, #tpu.memory_space<vmem>>
    %905 = tpu.memref_squeeze %904 : memref<1x8x1x128xf32, #tpu.memory_space<vmem>> -> memref<8x1x128xf32, #tpu.memory_space<vmem>>
    %906 = arith.index_cast %c6_i32 : i32 to index
    %c0_407 = arith.constant 0 : index
    %c0_408 = arith.constant 0 : index
    %907 = vector.load %905[%906, %c0_407, %c0_408] : memref<8x1x128xf32, #tpu.memory_space<vmem>>, vector<1x1x128xf32>
    %908 = vector.shape_cast %907 : vector<1x1x128xf32> to vector<1x128xf32>
    %909 = vector.shape_cast %903 : vector<1x128xf32> to vector<1x1x128xf32>
    tpu.vector_store %905[%906, %c0_407, %c0_408], %909 {strides = array<i32>} : memref<8x1x128xf32, #tpu.memory_space<vmem>>, vector<1x1x128xf32>,
    %c1_i32_409 = arith.constant 1 : i32
    %910 = arith.addi %c6_i32, %c1_i32_409 : i32
    %c0_i32_410 = arith.constant 0 : i32
    %c0_i32_411 = arith.constant 0 : i32
    %c0_i32_412 = arith.constant 0 : i32
    %911 = tpu.memref_slice %arg2[%c1_i32_27, %c0_i32_410, %c0_i32_411, %c0_i32_412] : memref<2x9x1x128xf32, #tpu.memory_space<vmem>> -> memref<1x9x1x128xf32, #tpu.memory_space<vmem>>
    %912 = tpu.memref_squeeze %911 : memref<1x9x1x128xf32, #tpu.memory_space<vmem>> -> memref<9x1x128xf32, #tpu.memory_space<vmem>>
    %913 = arith.index_cast %910 : i32 to index
    %c0_413 = arith.constant 0 : index
    %c0_414 = arith.constant 0 : index
    %914 = vector.load %912[%913, %c0_413, %c0_414] : memref<9x1x128xf32, #tpu.memory_space<vmem>>, vector<1x1x128xf32>
    %915 = vector.shape_cast %914 : vector<1x1x128xf32> to vector<1x128xf32>
    %c1_i32_415 = arith.constant 1 : i32
    %916 = arith.addi %c6_i32, %c1_i32_415 : i32
    %c0_i32_416 = arith.constant 0 : i32
    %c0_i32_417 = arith.constant 0 : i32
    %c0_i32_418 = arith.constant 0 : i32
    %917 = tpu.memref_slice %arg2[%c0_i32_28, %c0_i32_416, %c0_i32_417, %c0_i32_418] : memref<2x9x1x128xf32, #tpu.memory_space<vmem>> -> memref<1x9x1x128xf32, #tpu.memory_space<vmem>>
    %918 = tpu.memref_squeeze %917 : memref<1x9x1x128xf32, #tpu.memory_space<vmem>> -> memref<9x1x128xf32, #tpu.memory_space<vmem>>
    %919 = arith.index_cast %916 : i32 to index
    %c0_419 = arith.constant 0 : index
    %c0_420 = arith.constant 0 : index
    %920 = vector.load %918[%919, %c0_419, %c0_420] : memref<9x1x128xf32, #tpu.memory_space<vmem>>, vector<1x1x128xf32>
    %921 = vector.shape_cast %920 : vector<1x1x128xf32> to vector<1x128xf32>
    %cst_421 = arith.constant 0.0174532924 : f32
    %922 = vector.broadcast %cst_421 : f32 to vector<1x128xf32>
    %923 = arith.mulf %915, %922 : vector<1x128xf32>
    %924 = arith.subf %923, %893 : vector<1x128xf32>
    %cst_422 = arith.constant 0.0174532924 : f32
    %925 = vector.broadcast %cst_422 : f32 to vector<1x128xf32>
    %926 = arith.mulf %921, %925 : vector<1x128xf32>
    %927 = arith.subf %926, %870 : vector<1x128xf32>
    %cst_423 = arith.constant 5.000000e-01 : f32
    %928 = vector.broadcast %cst_423 : f32 to vector<1x128xf32>
    %929 = arith.mulf %924, %928 : vector<1x128xf32>
    %930 = math.sin %929 : vector<1x128xf32>
    %cst_424 = arith.constant 5.000000e-01 : f32
    %931 = vector.broadcast %cst_424 : f32 to vector<1x128xf32>
    %932 = arith.mulf %927, %931 : vector<1x128xf32>
    %933 = math.sin %932 : vector<1x128xf32>
    %934 = arith.mulf %930, %930 : vector<1x128xf32>
    %cst_425 = arith.constant 0.0174532924 : f32
    %935 = vector.broadcast %cst_425 : f32 to vector<1x128xf32>
    %936 = arith.mulf %915, %935 : vector<1x128xf32>
    %937 = math.cos %936 : vector<1x128xf32>
    %938 = arith.mulf %864, %937 : vector<1x128xf32>
    %939 = arith.mulf %938, %933 : vector<1x128xf32>
    %940 = arith.mulf %939, %933 : vector<1x128xf32>
    %941 = arith.addf %934, %940 : vector<1x128xf32>
    %cst_426 = arith.constant 1.000000e-10 : f32
    %942 = vector.broadcast %cst_426 : f32 to vector<1x128xf32>
    %943 = arith.addf %941, %942 : vector<1x128xf32>
    %944 = math.sqrt %943 : vector<1x128xf32>
    %cst_427 = arith.constant 1.000000e+00 : f32
    %945 = vector.broadcast %cst_427 : f32 to vector<1x128xf32>
    %946 = arith.subf %945, %941 : vector<1x128xf32>
    %cst_428 = arith.constant 1.000000e-10 : f32
    %947 = vector.broadcast %cst_428 : f32 to vector<1x128xf32>
    %948 = arith.addf %946, %947 : vector<1x128xf32>
    %949 = math.sqrt %948 : vector<1x128xf32>
    %950 = math.atan2 %944, %949 : vector<1x128xf32>
    %cst_429 = arith.constant 2.000000e+00 : f32
    %951 = vector.broadcast %cst_429 : f32 to vector<1x128xf32>
    %952 = arith.mulf %951, %950 : vector<1x128xf32>
    %953 = arith.mulf %892, %952 : vector<1x128xf32>
    %954 = arith.addf %823, %953 : vector<1x128xf32>
    %c7_i32 = arith.constant 7 : i32
    %c0_i32_430 = arith.constant 0 : i32
    %c0_i32_431 = arith.constant 0 : i32
    %c0_i32_432 = arith.constant 0 : i32
    %955 = tpu.memref_slice %arg1[%c0_i32_23, %c0_i32_430, %c0_i32_431, %c0_i32_432] : memref<2x8x1x128xf32, #tpu.memory_space<vmem>> -> memref<1x8x1x128xf32, #tpu.memory_space<vmem>>
    %956 = tpu.memref_squeeze %955 : memref<1x8x1x128xf32, #tpu.memory_space<vmem>> -> memref<8x1x128xf32, #tpu.memory_space<vmem>>
    %957 = arith.index_cast %c7_i32 : i32 to index
    %c0_433 = arith.constant 0 : index
    %c0_434 = arith.constant 0 : index
    %958 = vector.load %956[%957, %c0_433, %c0_434] : memref<8x1x128xf32, #tpu.memory_space<vmem>>, vector<1x1x128xf32>
    %959 = vector.shape_cast %958 : vector<1x1x128xf32> to vector<1x128xf32>
    %960 = arith.addf %829, %959 : vector<1x128xf32>
    %c0_i32_435 = arith.constant 0 : i32
    %c0_i32_436 = arith.constant 0 : i32
    %c0_i32_437 = arith.constant 0 : i32
    %961 = tpu.memref_slice %arg1[%c1_i32_24, %c0_i32_435, %c0_i32_436, %c0_i32_437] : memref<2x8x1x128xf32, #tpu.memory_space<vmem>> -> memref<1x8x1x128xf32, #tpu.memory_space<vmem>>
    %962 = tpu.memref_squeeze %961 : memref<1x8x1x128xf32, #tpu.memory_space<vmem>> -> memref<8x1x128xf32, #tpu.memory_space<vmem>>
    %963 = arith.index_cast %c7_i32 : i32 to index
    %c0_438 = arith.constant 0 : index
    %c0_439 = arith.constant 0 : index
    %964 = vector.load %962[%963, %c0_438, %c0_439] : memref<8x1x128xf32, #tpu.memory_space<vmem>>, vector<1x1x128xf32>
    %965 = vector.shape_cast %964 : vector<1x1x128xf32> to vector<1x128xf32>
    %966 = arith.addf %845, %965 : vector<1x128xf32>
    %cst_440 = arith.constant 3.600000e+02 : f32
    %967 = vector.broadcast %cst_440 : f32 to vector<1x128xf32>
    %968 = arith.cmpf ogt, %966, %967 : vector<1x128xf32>
    %cst_441 = arith.constant 3.600000e+02 : f32
    %969 = vector.broadcast %cst_441 : f32 to vector<1x128xf32>
    %970 = arith.subf %966, %969 : vector<1x128xf32>
    %cst_442 = arith.constant 0.000000e+00 : f32
    %971 = vector.broadcast %cst_442 : f32 to vector<1x128xf32>
    %972 = arith.cmpf olt, %966, %971 : vector<1x128xf32>
    %cst_443 = arith.constant 3.600000e+02 : f32
    %973 = vector.broadcast %cst_443 : f32 to vector<1x128xf32>
    %974 = arith.addf %966, %973 : vector<1x128xf32>
    %975 = arith.select %972, %974, %966 : vector<1x128xi1>, vector<1x128xf32>
    %976 = arith.select %968, %970, %975 : vector<1x128xi1>, vector<1x128xf32>
    %cst_444 = arith.constant 0.0174532924 : f32
    %977 = vector.broadcast %cst_444 : f32 to vector<1x128xf32>
    %978 = arith.mulf %976, %977 : vector<1x128xf32>
    %979 = math.sin %978 : vector<1x128xf32>
    %980 = math.cos %978 : vector<1x128xf32>
    %cst_445 = arith.constant 92.5999984 : f32
    %981 = vector.broadcast %cst_445 : f32 to vector<1x128xf32>
    %982 = arith.mulf %960, %981 : vector<1x128xf32>
    %983 = arith.mulf %982, %889 : vector<1x128xf32>
    %984 = math.sin %983 : vector<1x128xf32>
    %985 = math.cos %983 : vector<1x128xf32>
    %986 = arith.mulf %858, %985 : vector<1x128xf32>
    %987 = arith.mulf %864, %984 : vector<1x128xf32>
    %988 = arith.mulf %987, %980 : vector<1x128xf32>
    %989 = arith.addf %986, %988 : vector<1x128xf32>
    %990 = arith.mulf %989, %989 : vector<1x128xf32>
    %cst_446 = arith.constant 1.000000e+00 : f32
    %991 = vector.broadcast %cst_446 : f32 to vector<1x128xf32>
    %992 = arith.subf %991, %990 : vector<1x128xf32>
    %cst_447 = arith.constant 0.000000e+00 : f32
    %993 = vector.broadcast %cst_447 : f32 to vector<1x128xf32>
    %994 = arith.maximumf %992, %993 : vector<1x128xf32>
    %995 = math.sqrt %994 : vector<1x128xf32>
    %996 = arith.mulf %979, %984 : vector<1x128xf32>
    %997 = arith.mulf %996, %864 : vector<1x128xf32>
    %998 = arith.mulf %858, %989 : vector<1x128xf32>
    %999 = arith.subf %985, %998 : vector<1x128xf32>
    %1000 = math.atan2 %997, %999 : vector<1x128xf32>
    %1001 = arith.addf %870, %1000 : vector<1x128xf32>
    %cst_448 = arith.constant 4.068063E+13 : f32
    %1002 = vector.broadcast %cst_448 : f32 to vector<1x128xf32>
    %1003 = arith.mulf %1002, %995 : vector<1x128xf32>
    %cst_449 = arith.constant 4.040830e+13 : f32
    %1004 = vector.broadcast %cst_449 : f32 to vector<1x128xf32>
    %1005 = arith.mulf %1004, %989 : vector<1x128xf32>
    %cst_450 = arith.constant 0x4AC2A532 : f32
    %1006 = vector.broadcast %cst_450 : f32 to vector<1x128xf32>
    %1007 = arith.mulf %1006, %995 : vector<1x128xf32>
    %cst_451 = arith.constant 6356752.5 : f32
    %1008 = vector.broadcast %cst_451 : f32 to vector<1x128xf32>
    %1009 = arith.mulf %1008, %989 : vector<1x128xf32>
    %1010 = arith.mulf %1003, %1003 : vector<1x128xf32>
    %1011 = arith.mulf %1005, %1005 : vector<1x128xf32>
    %1012 = arith.addf %1010, %1011 : vector<1x128xf32>
    %1013 = arith.mulf %1007, %1007 : vector<1x128xf32>
    %1014 = arith.mulf %1009, %1009 : vector<1x128xf32>
    %1015 = arith.addf %1013, %1014 : vector<1x128xf32>
    %1016 = tpu.reciprocal %1015 {approx = true} : vector<1x128xf32> -> vector<1x128xf32>
    %1017 = arith.mulf %1012, %1016 : vector<1x128xf32>
    %cst_452 = arith.constant 1.000000e-10 : f32
    %1018 = vector.broadcast %cst_452 : f32 to vector<1x128xf32>
    %1019 = arith.addf %1017, %1018 : vector<1x128xf32>
    %1020 = math.rsqrt %1019 : vector<1x128xf32>
    %1021 = arith.mulf %1019, %1020 : vector<1x128xf32>
    %cst_453 = arith.constant 1.000000e-03 : f32
    %1022 = vector.broadcast %cst_453 : f32 to vector<1x128xf32>
    %1023 = arith.mulf %1021, %1022 : vector<1x128xf32>
    %1024 = math.atan2 %989, %995 : vector<1x128xf32>
    %cst_454 = arith.constant 57.2957802 : f32
    %1025 = vector.broadcast %cst_454 : f32 to vector<1x128xf32>
    %1026 = arith.mulf %1001, %1025 : vector<1x128xf32>
    %c0_i32_455 = arith.constant 0 : i32
    %c0_i32_456 = arith.constant 0 : i32
    %c0_i32_457 = arith.constant 0 : i32
    %1027 = tpu.memref_slice %arg5[%c0_i32_25, %c0_i32_455, %c0_i32_456, %c0_i32_457] : memref<2x8x1x128xf32, #tpu.memory_space<vmem>> -> memref<1x8x1x128xf32, #tpu.memory_space<vmem>>
    %1028 = tpu.memref_squeeze %1027 : memref<1x8x1x128xf32, #tpu.memory_space<vmem>> -> memref<8x1x128xf32, #tpu.memory_space<vmem>>
    %1029 = arith.index_cast %c7_i32 : i32 to index
    %c0_458 = arith.constant 0 : index
    %c0_459 = arith.constant 0 : index
    %1030 = vector.load %1028[%1029, %c0_458, %c0_459] : memref<8x1x128xf32, #tpu.memory_space<vmem>>, vector<1x1x128xf32>
    %1031 = vector.shape_cast %1030 : vector<1x1x128xf32> to vector<1x128xf32>
    %1032 = vector.shape_cast %1026 : vector<1x128xf32> to vector<1x1x128xf32>
    tpu.vector_store %1028[%1029, %c0_458, %c0_459], %1032 {strides = array<i32>} : memref<8x1x128xf32, #tpu.memory_space<vmem>>, vector<1x1x128xf32>,
    %cst_460 = arith.constant 57.2957802 : f32
    %1033 = vector.broadcast %cst_460 : f32 to vector<1x128xf32>
    %1034 = arith.mulf %1024, %1033 : vector<1x128xf32>
    %c0_i32_461 = arith.constant 0 : i32
    %c0_i32_462 = arith.constant 0 : i32
    %c0_i32_463 = arith.constant 0 : i32
    %1035 = tpu.memref_slice %arg5[%c1_i32_26, %c0_i32_461, %c0_i32_462, %c0_i32_463] : memref<2x8x1x128xf32, #tpu.memory_space<vmem>> -> memref<1x8x1x128xf32, #tpu.memory_space<vmem>>
    %1036 = tpu.memref_squeeze %1035 : memref<1x8x1x128xf32, #tpu.memory_space<vmem>> -> memref<8x1x128xf32, #tpu.memory_space<vmem>>
    %1037 = arith.index_cast %c7_i32 : i32 to index
    %c0_464 = arith.constant 0 : index
    %c0_465 = arith.constant 0 : index
    %1038 = vector.load %1036[%1037, %c0_464, %c0_465] : memref<8x1x128xf32, #tpu.memory_space<vmem>>, vector<1x1x128xf32>
    %1039 = vector.shape_cast %1038 : vector<1x1x128xf32> to vector<1x128xf32>
    %1040 = vector.shape_cast %1034 : vector<1x128xf32> to vector<1x1x128xf32>
    tpu.vector_store %1036[%1037, %c0_464, %c0_465], %1040 {strides = array<i32>} : memref<8x1x128xf32, #tpu.memory_space<vmem>>, vector<1x1x128xf32>,
    %c1_i32_466 = arith.constant 1 : i32
    %1041 = arith.addi %c7_i32, %c1_i32_466 : i32
    %c0_i32_467 = arith.constant 0 : i32
    %c0_i32_468 = arith.constant 0 : i32
    %c0_i32_469 = arith.constant 0 : i32
    %1042 = tpu.memref_slice %arg2[%c1_i32_27, %c0_i32_467, %c0_i32_468, %c0_i32_469] : memref<2x9x1x128xf32, #tpu.memory_space<vmem>> -> memref<1x9x1x128xf32, #tpu.memory_space<vmem>>
    %1043 = tpu.memref_squeeze %1042 : memref<1x9x1x128xf32, #tpu.memory_space<vmem>> -> memref<9x1x128xf32, #tpu.memory_space<vmem>>
    %1044 = arith.index_cast %1041 : i32 to index
    %c0_470 = arith.constant 0 : index
    %c0_471 = arith.constant 0 : index
    %1045 = vector.load %1043[%1044, %c0_470, %c0_471] : memref<9x1x128xf32, #tpu.memory_space<vmem>>, vector<1x1x128xf32>
    %1046 = vector.shape_cast %1045 : vector<1x1x128xf32> to vector<1x128xf32>
    %c1_i32_472 = arith.constant 1 : i32
    %1047 = arith.addi %c7_i32, %c1_i32_472 : i32
    %c0_i32_473 = arith.constant 0 : i32
    %c0_i32_474 = arith.constant 0 : i32
    %c0_i32_475 = arith.constant 0 : i32
    %1048 = tpu.memref_slice %arg2[%c0_i32_28, %c0_i32_473, %c0_i32_474, %c0_i32_475] : memref<2x9x1x128xf32, #tpu.memory_space<vmem>> -> memref<1x9x1x128xf32, #tpu.memory_space<vmem>>
    %1049 = tpu.memref_squeeze %1048 : memref<1x9x1x128xf32, #tpu.memory_space<vmem>> -> memref<9x1x128xf32, #tpu.memory_space<vmem>>
    %1050 = arith.index_cast %1047 : i32 to index
    %c0_476 = arith.constant 0 : index
    %c0_477 = arith.constant 0 : index
    %1051 = vector.load %1049[%1050, %c0_476, %c0_477] : memref<9x1x128xf32, #tpu.memory_space<vmem>>, vector<1x1x128xf32>
    %1052 = vector.shape_cast %1051 : vector<1x1x128xf32> to vector<1x128xf32>
    %cst_478 = arith.constant 0.0174532924 : f32
    %1053 = vector.broadcast %cst_478 : f32 to vector<1x128xf32>
    %1054 = arith.mulf %1046, %1053 : vector<1x128xf32>
    %1055 = arith.subf %1054, %1024 : vector<1x128xf32>
    %cst_479 = arith.constant 0.0174532924 : f32
    %1056 = vector.broadcast %cst_479 : f32 to vector<1x128xf32>
    %1057 = arith.mulf %1052, %1056 : vector<1x128xf32>
    %1058 = arith.subf %1057, %1001 : vector<1x128xf32>
    %cst_480 = arith.constant 5.000000e-01 : f32
    %1059 = vector.broadcast %cst_480 : f32 to vector<1x128xf32>
    %1060 = arith.mulf %1055, %1059 : vector<1x128xf32>
    %1061 = math.sin %1060 : vector<1x128xf32>
    %cst_481 = arith.constant 5.000000e-01 : f32
    %1062 = vector.broadcast %cst_481 : f32 to vector<1x128xf32>
    %1063 = arith.mulf %1058, %1062 : vector<1x128xf32>
    %1064 = math.sin %1063 : vector<1x128xf32>
    %1065 = arith.mulf %1061, %1061 : vector<1x128xf32>
    %cst_482 = arith.constant 0.0174532924 : f32
    %1066 = vector.broadcast %cst_482 : f32 to vector<1x128xf32>
    %1067 = arith.mulf %1046, %1066 : vector<1x128xf32>
    %1068 = math.cos %1067 : vector<1x128xf32>
    %1069 = arith.mulf %995, %1068 : vector<1x128xf32>
    %1070 = arith.mulf %1069, %1064 : vector<1x128xf32>
    %1071 = arith.mulf %1070, %1064 : vector<1x128xf32>
    %1072 = arith.addf %1065, %1071 : vector<1x128xf32>
    %cst_483 = arith.constant 1.000000e-10 : f32
    %1073 = vector.broadcast %cst_483 : f32 to vector<1x128xf32>
    %1074 = arith.addf %1072, %1073 : vector<1x128xf32>
    %1075 = math.sqrt %1074 : vector<1x128xf32>
    %cst_484 = arith.constant 1.000000e+00 : f32
    %1076 = vector.broadcast %cst_484 : f32 to vector<1x128xf32>
    %1077 = arith.subf %1076, %1072 : vector<1x128xf32>
    %cst_485 = arith.constant 1.000000e-10 : f32
    %1078 = vector.broadcast %cst_485 : f32 to vector<1x128xf32>
    %1079 = arith.addf %1077, %1078 : vector<1x128xf32>
    %1080 = math.sqrt %1079 : vector<1x128xf32>
    %1081 = math.atan2 %1075, %1080 : vector<1x128xf32>
    %cst_486 = arith.constant 2.000000e+00 : f32
    %1082 = vector.broadcast %cst_486 : f32 to vector<1x128xf32>
    %1083 = arith.mulf %1082, %1081 : vector<1x128xf32>
    %1084 = arith.mulf %1023, %1083 : vector<1x128xf32>
    %1085 = arith.addf %954, %1084 : vector<1x128xf32>
    %c8_i32 = arith.constant 8 : i32
    %1086 = tpu.iota {dimensions = array<i32: 0>} : vector<1x128xi32>
    %1087 = tpu.iota {dimensions = array<i32: 1>} : vector<1x128xi32>
    %c128_i32 = arith.constant 128 : i32
    %1088 = arith.muli %arg0, %c128_i32 : i32
    %c128_i32_487 = arith.constant 128 : i32
    %1089 = vector.broadcast %c128_i32_487 : i32 to vector<1x128xi32>
    %1090 = arith.muli %1086, %1089 : vector<1x128xi32>
    %1091 = vector.broadcast %1088 : i32 to vector<1x128xi32>
    %1092 = arith.addi %1091, %1090 : vector<1x128xi32>
    %1093 = arith.addi %1092, %1087 : vector<1x128xi32>
    %c4_i32_488 = arith.constant 4 : i32
    %1094 = vector.broadcast %c4_i32_488 : i32 to vector<1x128xi32>
    %1095 = arith.cmpi slt, %1093, %1094 : vector<1x128xi32>
    %cst_489 = arith.constant 0.000000e+00 : f32
    %1096 = vector.broadcast %cst_489 : f32 to vector<1x128xf32>
    %1097 = arith.select %1095, %1085, %1096 : vector<1x128xi1>, vector<1x128xf32>
    %c0_490 = arith.constant 0 : index
    %c0_491 = arith.constant 0 : index
    %c0_492 = arith.constant 0 : index
    %1098 = vector.load %arg4[%c0_490, %c0_491, %c0_492] : memref<1x1x128xf32, #tpu.memory_space<vmem>>, vector<1x1x128xf32>
    %1099 = vector.shape_cast %1098 : vector<1x1x128xf32> to vector<1x128xf32>
    %1100 = vector.shape_cast %1097 : vector<1x128xf32> to vector<1x1x128xf32>
    tpu.vector_store %arg4[%c0_490, %c0_491, %c0_492], %1100 {strides = array<i32>} : memref<1x1x128xf32, #tpu.memory_space<vmem>>, vector<1x1x128xf32>,
    return
  }
  func.func @transform_0(%arg0: i32) -> (i32, i32, i32, i32) {
    %c0_i32 = arith.constant 0 : i32
    %c0_i32_0 = arith.constant 0 : i32
    %c0_i32_1 = arith.constant 0 : i32
    %c0_i32_2 = arith.constant 0 : i32
    return %c0_i32, %c0_i32_0, %arg0, %c0_i32_1 : i32, i32, i32, i32
  }
  func.func @transform_1(%arg0: i32) -> (i32, i32, i32, i32) {
    %c0_i32 = arith.constant 0 : i32
    %c0_i32_0 = arith.constant 0 : i32
    %c0_i32_1 = arith.constant 0 : i32
    %c0_i32_2 = arith.constant 0 : i32
    return %c0_i32, %c0_i32_0, %arg0, %c0_i32_1 : i32, i32, i32, i32
  }
  func.func @transform_2(%arg0: i32) -> (i32, i32, i32) {
    %c0_i32 = arith.constant 0 : i32
    %c0_i32_0 = arith.constant 0 : i32
    %c0_i32_1 = arith.constant 0 : i32
    return %c0_i32, %arg0, %c0_i32_0 : i32, i32, i32
  }
  func.func @transform_3(%arg0: i32) -> (i32, i32, i32) {
    %c0_i32 = arith.constant 0 : i32
    %c0_i32_0 = arith.constant 0 : i32
    %c0_i32_1 = arith.constant 0 : i32
    return %arg0, %c0_i32, %c0_i32_0 : i32, i32, i32
  }
  func.func @transform_4(%arg0: i32) -> (i32, i32, i32, i32) {
    %c0_i32 = arith.constant 0 : i32
    %c0_i32_0 = arith.constant 0 : i32
    %c0_i32_1 = arith.constant 0 : i32
    %c0_i32_2 = arith.constant 0 : i32
    return %c0_i32, %c0_i32_0, %arg0, %c0_i32_1 : i32, i32, i32, i32
  }
}

</mosaic_0001>

<llo_original>
// kernel: myloss_forward.1
$region0: #{myloss_forward.1}
  #allocation0 [shape = 'u32[]', space=smem, size = 0x4, offset = 0x4, fixed_abs, tag = 'smem constant byte address 0x4 - core index']
  #allocation1 [shape = 'u32[144,128]{1,0:T(1,128)}', space=vmem, size = 0x12000, scoped, tag = 'internal scratch']
  %s0 = inlined_call_operand.vmem [shape: f32[2,8,1,128], index: 0, kind: input, shape index: {}]
  %s1 = inlined_call_operand.vmem [shape: f32[2,9,1,128], index: 1, kind: input, shape index: {}]
  %s2 = inlined_call_operand.vmem [shape: f32[2,1,128], index: 2, kind: input, shape index: {}]
  %s3 = inlined_call_operand.vmem [shape: f32[1,1,128], index: 3, kind: output, shape index: {0}]
  %s4 = inlined_call_operand.vmem [shape: f32[2,8,1,128], index: 4, kind: output, shape index: {1}]
  %5 = xla_tuple %s3, %s4
  %s6 = sld [smem:[#allocation0]]
  $region30: #{myloss_forward.1} parent=0
    _
  %s8 = ssub.s32 1, %s6
  %s9 = scalar_select 0, %s8, %s6
  // Predicated region
  $region2: #{myloss_forward.1} parent=0 // pred_check
    _
  $region3: #{myloss_forward.1} parent=0 // pred_check_branch
    %11 = sbr.rel (0) target = $region5
  $region4: #{myloss_forward.1} parent=0 // pred_region
    _
  $region5: #{myloss_forward.1} parent=0 // pred_fallthru
    _
  // Predicated region
  $region6: #{myloss_forward.1} parent=0 // pred_check
    _
  $region7: #{myloss_forward.1} parent=0 // pred_check_branch
    %13 = sbr.rel (0) target = $region9
  $region8: #{myloss_forward.1} parent=0 // pred_region
    _
  $region9: #{myloss_forward.1} parent=0 // pred_fallthru
    _
  // Predicated region
  $region10: #{myloss_forward.1} parent=0 // pred_check
    _
  $region11: #{myloss_forward.1} parent=0 // pred_check_branch
    %15 = sbr.rel (0) target = $region13
  $region12: #{myloss_forward.1} parent=0 // pred_region
    _
  $region13: #{myloss_forward.1} parent=0 // pred_fallthru
    _
  %s16 = scalar_lea.vmem %s1, 9
  %v17 = vld [vmem:[%s16] sm:$0x1]
  %v18 = vmul.f32 %v17, 0.017453292
  %v19 = vand.u32 2147483647, %v18
  %vm20 = vcmp.le.f32.partialorder %v19, 0.7853982
  %vm21 = vcmp.lt.s32.totalorder %v18, 0
  %v22 = vand.u32 %v18, 2139095040
  %v23 = vshrl.u32 %v22, 23
  %v24 = vsub.s32 %v23, 127
  %v25 = vand.u32 2147483647, %v18
  %v26 = vand.u32 %v25, 8388607
  %v27 = vor.u32 %v26, 8388608
  %v28 = vsub.s32 0, %v27
  %v29 = vadd.s32 %v24, 1
  %vm30 = vcmp.gt.s32.totalorder %v29, 0
  %v31 = vsel %vm30, %v29, 0
  %v32 = vshrl.u32 %v31, 5
  %v33 = vand.u32 %v31, 31
  %v34 = vsub.s32 32, %v33
  %v35 = vshrl.u32 683565275, %v34
  %v36 = vshll.u32 683565275, %v33
  %v37 = vshrl.u32 2475754826, %v34
  %v38 = vor.u32 %v36, %v37
  %v39 = vshll.u32 2475754826, %v33
  %v40 = vshrl.u32 2131351028, %v34
  %v41 = vor.u32 %v39, %v40
  %v42 = vshll.u32 2131351028, %v33
  %v43 = vshrl.u32 2102212464, %v34
  %v44 = vor.u32 %v42, %v43
  %v45 = vshll.u32 2102212464, %v33
  %v46 = vshrl.u32 920167782, %v34
  %v47 = vor.u32 %v45, %v46
  %v48 = vshll.u32 920167782, %v33
  %v49 = vshrl.u32 1326507024, %v34
  %v50 = vor.u32 %v48, %v49
  %vm51 = vcmp.lt.s32.totalorder %v32, 1
  %vm52 = vcmp.lt.s32.totalorder %v32, 2
  %vm53 = vcmp.lt.s32.totalorder %v32, 3
  %vm54 = vcmp.lt.s32.totalorder %v32, 4
  %v55 = vsel %vm51, %v35, %v38
  %v56 = vsel %vm54, %v44, 2102212464
  %v57 = vsel %vm53, %v41, %v56
  %v58 = vsel %vm52, %v55, %v57
  %v59 = vsel %vm51, %v38, %v41
  %v60 = vsel %vm54, %v47, 920167782
  %v61 = vsel %vm53, %v44, %v60
  %v62 = vsel %vm52, %v59, %v61
  %v63 = vsel %vm51, %v41, %v44
  %v64 = vsel %vm54, %v50, 1326507024
  %v65 = vsel %vm53, %v47, %v64
  %v66 = vsel %vm52, %v63, %v65
  %v67 = vshll.u32 %v27, 8
  %v68 = vmul.u32.u64.compose %v67, %v66
  %v69 = vextract.low.u32 %v68
  %v70 = vextract.high.u32 %v68
  %v71 = vmul.u32.u64.compose %v67, %v62
  %v72 = vextract.low.u32 %v71
  %v73 = vextract.high.u32 %v71
  %v74 = vmul.u32 %v67, %v58
  %v75 = vadd.s32 %v70, %v72
  %vm76 = vc.u32 %v70, %v72
  %v77 = vadd.s32 %v73, 1
  %v78 = vsel %vm76, %v77, %v73
  %v79 = vadd.s32 %v74, %v78
  %v80 = vadd.s32 %v79, 536870912
  %v81 = vshrl.u32 %v80, 30
  %v82 = vshll.u32 %v81, 30
  %v83 = vsub.s32 %v79, %v82
  %vm84 = vcmp.lt.s32.totalorder %v83, 0
  %v85 = vsub.s32 0, %v83
  %v86 = vsel %vm84, %v85, %v83
  %v87 = vclz %v86
  %v88 = vsub.s32 %v87, 2
  %vm89 = vcmp.gt.s32.totalorder 0, %v88
  %v90 = vsel %vm89, 0, %v88
  %v91 = vsub.s32 32, %v90
  %v92 = vshll.u32 %v83, %v90
  %v93 = vshrl.u32 %v75, %v91
  %v94 = vor.u32 %v92, %v93
  %v95 = vsub.s32 4294967266, %v90
  %v96 = vadd.s32 %v95, 127
  %v97 = vshll.u32 %v96, 23
  %v98 = vor.u32 4788187, %v97
  %v99 = vand.u32 2147483647, %v98
  %v101 = vcvt.s32.f32 %v94
  %v102 = vmul.f32 %v101, %v99
  %v103 = vxor.u32 %v102, 2147483648
  %v104 = vsel %vm21, %v103, %v102
  %v105 = vsub.s32 4, %v81
  %v106 = vsel %vm21, %v105, %v81
  %v107 = vsel %vm20, %v18, %v104
  %v108 = vsel %vm20, 0, %v106
  %v109 = vcosq.f32.pop %v107
  %v110 = vsinq.f32.pop %v107
  %vm111 = vweird.f32 %v18
  %v112 = vadd.s32 %v108, 3
  %v113 = vand.u32 %v112, 3
  %vm114 = vcmp.lt.s32.totalorder %v113, 2
  %vm115 = vcmp.eq.s32.totalorder %v113, 0
  %v116 = vxor.u32 %v110, 2147483648
  %v117 = vsel %vm115, %v109, %v116
  %vm118 = vcmp.eq.s32.totalorder %v113, 2
  %v119 = vxor.u32 %v109, 2147483648
  %v120 = vsel %vm118, %v119, %v110
  %v121 = vsel %vm114, %v117, %v120
  %v122 = vsel %vm111, nan, %v121
  %v123 = vand.u32 2147483647, %v18
  %vm124 = vcmp.le.f32.partialorder %v123, 0.7853982
  %vm125 = vcmp.lt.s32.totalorder %v18, 0
  %v126 = vand.u32 %v18, 2139095040
  %v127 = vshrl.u32 %v126, 23
  %v128 = vsub.s32 %v127, 127
  %v129 = vand.u32 2147483647, %v18
  %v130 = vand.u32 %v129, 8388607
  %v131 = vor.u32 %v130, 8388608
  %v132 = vsub.s32 0, %v131
  %v133 = vadd.s32 %v128, 1
  %vm134 = vcmp.gt.s32.totalorder %v133, 0
  %v135 = vsel %vm134, %v133, 0
  %v136 = vshrl.u32 %v135, 5
  %v137 = vand.u32 %v135, 31
  %v138 = vsub.s32 32, %v137
  %v139 = vshrl.u32 683565275, %v138
  %v140 = vshll.u32 683565275, %v137
  %v141 = vshrl.u32 2475754826, %v138
  %v142 = vor.u32 %v140, %v141
  %v143 = vshll.u32 2475754826, %v137
  %v144 = vshrl.u32 2131351028, %v138
  %v145 = vor.u32 %v143, %v144
  %v146 = vshll.u32 2131351028, %v137
  %v147 = vshrl.u32 2102212464, %v138
  %v148 = vor.u32 %v146, %v147
  %v149 = vshll.u32 2102212464, %v137
  %v150 = vshrl.u32 920167782, %v138
  %v151 = vor.u32 %v149, %v150
  %v152 = vshll.u32 920167782, %v137
  %v153 = vshrl.u32 1326507024, %v138
  %v154 = vor.u32 %v152, %v153
  %vm155 = vcmp.lt.s32.totalorder %v136, 1
  %vm156 = vcmp.lt.s32.totalorder %v136, 2
  %vm157 = vcmp.lt.s32.totalorder %v136, 3
  %vm158 = vcmp.lt.s32.totalorder %v136, 4
  %v159 = vsel %vm155, %v139, %v142
  %v160 = vsel %vm158, %v148, 2102212464
  %v161 = vsel %vm157, %v145, %v160
  %v162 = vsel %vm156, %v159, %v161
  %v163 = vsel %vm155, %v142, %v145
  %v164 = vsel %vm158, %v151, 920167782
  %v165 = vsel %vm157, %v148, %v164
  %v166 = vsel %vm156, %v163, %v165
  %v167 = vsel %vm155, %v145, %v148
  %v168 = vsel %vm158, %v154, 1326507024
  %v169 = vsel %vm157, %v151, %v168
  %v170 = vsel %vm156, %v167, %v169
  %v171 = vshll.u32 %v131, 8
  %v172 = vmul.u32.u64.compose %v171, %v170
  %v173 = vextract.low.u32 %v172
  %v174 = vextract.high.u32 %v172
  %v175 = vmul.u32.u64.compose %v171, %v166
  %v176 = vextract.low.u32 %v175
  %v177 = vextract.high.u32 %v175
  %v178 = vmul.u32 %v171, %v162
  %v179 = vadd.s32 %v174, %v176
  %vm180 = vc.u32 %v174, %v176
  %v181 = vadd.s32 %v177, 1
  %v182 = vsel %vm180, %v181, %v177
  %v183 = vadd.s32 %v178, %v182
  %v184 = vadd.s32 %v183, 536870912
  %v185 = vshrl.u32 %v184, 30
  %v186 = vshll.u32 %v185, 30
  %v187 = vsub.s32 %v183, %v186
  %vm188 = vcmp.lt.s32.totalorder %v187, 0
  %v189 = vsub.s32 0, %v187
  %v190 = vsel %vm188, %v189, %v187
  %v191 = vclz %v190
  %v192 = vsub.s32 %v191, 2
  %vm193 = vcmp.gt.s32.totalorder 0, %v192
  %v194 = vsel %vm193, 0, %v192
  %v195 = vsub.s32 32, %v194
  %v196 = vshll.u32 %v187, %v194
  %v197 = vshrl.u32 %v179, %v195
  %v198 = vor.u32 %v196, %v197
  %v199 = vsub.s32 4294967266, %v194
  %v200 = vadd.s32 %v199, 127
  %v201 = vshll.u32 %v200, 23
  %v202 = vor.u32 4788187, %v201
  %v203 = vand.u32 2147483647, %v202
  %v205 = vcvt.s32.f32 %v198
  %v206 = vmul.f32 %v205, %v203
  %v207 = vxor.u32 %v206, 2147483648
  %v208 = vsel %vm125, %v207, %v206
  %v209 = vsub.s32 4, %v185
  %v210 = vsel %vm125, %v209, %v185
  %v211 = vsel %vm124, %v18, %v208
  %v212 = vsel %vm124, 0, %v210
  %v213 = vcosq.f32.pop %v211
  %v214 = vsinq.f32.pop %v211
  %vm215 = vweird.f32 %v18
  %v216 = vand.u32 %v212, 3
  %vm217 = vcmp.lt.s32.totalorder %v216, 2
  %vm218 = vcmp.eq.s32.totalorder %v216, 0
  %v219 = vxor.u32 %v214, 2147483648
  %v220 = vsel %vm218, %v213, %v219
  %vm221 = vcmp.eq.s32.totalorder %v216, 2
  %v222 = vxor.u32 %v213, 2147483648
  %v223 = vsel %vm221, %v222, %v214
  %v224 = vsel %vm217, %v220, %v223
  %v225 = vsel %vm215, nan, %v224
  %v226 = vld [vmem:[%s1] sm:$0x1]
  %v227 = vmul.f32 %v226, 0.017453292
  %v228 = vmul.f32 %v225, 4.068063e+13
  %v229 = vmul.f32 %v122, 4.04083e+13
  %v230 = vmul.f32 %v225, 6378137.0
  %v231 = vmul.f32 %v122, 6356752.5
  %v232 = vmul.f32 %v228, %v228
  %v233 = vmul.f32 %v229, %v229
  %v234 = vadd.f32 %v232, %v233
  %v235 = vmul.f32 %v230, %v230
  %v236 = vmul.f32 %v231, %v231
  %v237 = vadd.f32 %v235, %v236
  %v238 = vrcp.pop %v237
  %v239 = vmul.f32 %v234, %v238
  %v240 = vadd.f32 %v239, 1e-10
  %v241 = vrsqrt.pop %v240
  %v242 = vld [vmem:[%s2] sm:$0x1]
  %s243 = scalar_lea.vmem %s2, 1
  %v244 = vld [vmem:[%s243] sm:$0x1]
  %v245 = vld [vmem:[%s0] sm:$0x1]
  %v246 = vadd.f32 %v242, %v245
  %s247 = scalar_lea.vmem %s0, 8
  %v248 = vld [vmem:[%s247] sm:$0x1]
  %v249 = vadd.f32 %v244, %v248
  %vm250 = vcmp.gt.f32.partialorder %v249, 360.0
  %v251 = vsub.f32 %v249, 360.0
  %vm252 = vcmp.lt.f32.partialorder %v249, 0.0
  %v253 = vadd.f32 %v249, 360.0
  %v254 = vsel %vm252, %v253, %v249
  %v255 = vsel %vm250, %v251, %v254
  %v256 = vmul.f32 %v255, 0.017453292
  %v257 = vand.u32 2147483647, %v256
  %vm258 = vcmp.le.f32.partialorder %v257, 0.7853982
  %vm259 = vcmp.lt.s32.totalorder %v256, 0
  %v260 = vand.u32 %v256, 2139095040
  %v261 = vshrl.u32 %v260, 23
  %v262 = vsub.s32 %v261, 127
  %v263 = vand.u32 2147483647, %v256
  %v264 = vand.u32 %v263, 8388607
  %v265 = vor.u32 %v264, 8388608
  %v266 = vsub.s32 0, %v265
  %v267 = vadd.s32 %v262, 1
  %vm268 = vcmp.gt.s32.totalorder %v267, 0
  %v269 = vsel %vm268, %v267, 0
  %v270 = vshrl.u32 %v269, 5
  %v271 = vand.u32 %v269, 31
  %v272 = vsub.s32 32, %v271
  %v273 = vshrl.u32 683565275, %v272
  %v274 = vshll.u32 683565275, %v271
  %v275 = vshrl.u32 2475754826, %v272
  %v276 = vor.u32 %v274, %v275
  %v277 = vshll.u32 2475754826, %v271
  %v278 = vshrl.u32 2131351028, %v272
  %v279 = vor.u32 %v277, %v278
  %v280 = vshll.u32 2131351028, %v271
  %v281 = vshrl.u32 2102212464, %v272
  %v282 = vor.u32 %v280, %v281
  %v283 = vshll.u32 2102212464, %v271
  %v284 = vshrl.u32 920167782, %v272
  %v285 = vor.u32 %v283, %v284
  %v286 = vshll.u32 920167782, %v271
  %v287 = vshrl.u32 1326507024, %v272
  %v288 = vor.u32 %v286, %v287
  %vm289 = vcmp.lt.s32.totalorder %v270, 1
  %vm290 = vcmp.lt.s32.totalorder %v270, 2
  %vm291 = vcmp.lt.s32.totalorder %v270, 3
  %vm292 = vcmp.lt.s32.totalorder %v270, 4
  %v293 = vsel %vm289, %v273, %v276
  %v294 = vsel %vm292, %v282, 2102212464
  %v295 = vsel %vm291, %v279, %v294
  %v296 = vsel %vm290, %v293, %v295
  %v297 = vsel %vm289, %v276, %v279
  %v298 = vsel %vm292, %v285, 920167782
  %v299 = vsel %vm291, %v282, %v298
  %v300 = vsel %vm290, %v297, %v299
  %v301 = vsel %vm289, %v279, %v282
  %v302 = vsel %vm292, %v288, 1326507024
  %v303 = vsel %vm291, %v285, %v302
  %v304 = vsel %vm290, %v301, %v303
  %v305 = vshll.u32 %v265, 8
  %v306 = vmul.u32.u64.compose %v305, %v304
  %v307 = vextract.low.u32 %v306
  %v308 = vextract.high.u32 %v306
  %v309 = vmul.u32.u64.compose %v305, %v300
  %v310 = vextract.low.u32 %v309
  %v311 = vextract.high.u32 %v309
  %v312 = vmul.u32 %v305, %v296
  %v313 = vadd.s32 %v308, %v310
  %vm314 = vc.u32 %v308, %v310
  %v315 = vadd.s32 %v311, 1
  %v316 = vsel %vm314, %v315, %v311
  %v317 = vadd.s32 %v312, %v316
  %v318 = vadd.s32 %v317, 536870912
  %v319 = vshrl.u32 %v318, 30
  %v320 = vshll.u32 %v319, 30
  %v321 = vsub.s32 %v317, %v320
  %vm322 = vcmp.lt.s32.totalorder %v321, 0
  %v323 = vsub.s32 0, %v321
  %v324 = vsel %vm322, %v323, %v321
  %v325 = vclz %v324
  %v326 = vsub.s32 %v325, 2
  %vm327 = vcmp.gt.s32.totalorder 0, %v326
  %v328 = vsel %vm327, 0, %v326
  %v329 = vsub.s32 32, %v328
  %v330 = vshll.u32 %v321, %v328
  %v331 = vshrl.u32 %v313, %v329
  %v332 = vor.u32 %v330, %v331
  %v333 = vsub.s32 4294967266, %v328
  %v334 = vadd.s32 %v333, 127
  %v335 = vshll.u32 %v334, 23
  %v336 = vor.u32 4788187, %v335
  %v337 = vand.u32 2147483647, %v336
  %v339 = vcvt.s32.f32 %v332
  %v340 = vmul.f32 %v339, %v337
  %v341 = vxor.u32 %v340, 2147483648
  %v342 = vsel %vm259, %v341, %v340
  %v343 = vsub.s32 4, %v319
  %v344 = vsel %vm259, %v343, %v319
  %v345 = vsel %vm258, %v256, %v342
  %v346 = vsel %vm258, 0, %v344
  %v347 = vcosq.f32.pop %v345
  %v348 = vsinq.f32.pop %v345
  %vm349 = vweird.f32 %v256
  %v350 = vadd.s32 %v346, 3
  %v351 = vand.u32 %v350, 3
  %vm352 = vcmp.lt.s32.totalorder %v351, 2
  %vm353 = vcmp.eq.s32.totalorder %v351, 0
  %v354 = vxor.u32 %v348, 2147483648
  %v355 = vsel %vm353, %v347, %v354
  %vm356 = vcmp.eq.s32.totalorder %v351, 2
  %v357 = vxor.u32 %v347, 2147483648
  %v358 = vsel %vm356, %v357, %v348
  %v359 = vsel %vm352, %v355, %v358
  %v360 = vsel %vm349, nan, %v359
  %v361 = vand.u32 2147483647, %v256
  %vm362 = vcmp.le.f32.partialorder %v361, 0.7853982
  %vm363 = vcmp.lt.s32.totalorder %v256, 0
  %v364 = vand.u32 %v256, 2139095040
  %v365 = vshrl.u32 %v364, 23
  %v366 = vsub.s32 %v365, 127
  %v367 = vand.u32 2147483647, %v256
  %v368 = vand.u32 %v367, 8388607
  %v369 = vor.u32 %v368, 8388608
  %v370 = vsub.s32 0, %v369
  %v371 = vadd.s32 %v366, 1
  %vm372 = vcmp.gt.s32.totalorder %v371, 0
  %v373 = vsel %vm372, %v371, 0
  %v374 = vshrl.u32 %v373, 5
  %v375 = vand.u32 %v373, 31
  %v376 = vsub.s32 32, %v375
  %v377 = vshrl.u32 683565275, %v376
  %v378 = vshll.u32 683565275, %v375
  %v379 = vshrl.u32 2475754826, %v376
  %v380 = vor.u32 %v378, %v379
  %v381 = vshll.u32 2475754826, %v375
  %v382 = vshrl.u32 2131351028, %v376
  %v383 = vor.u32 %v381, %v382
  %v384 = vshll.u32 2131351028, %v375
  %v385 = vshrl.u32 2102212464, %v376
  %v386 = vor.u32 %v384, %v385
  %v387 = vshll.u32 2102212464, %v375
  %v388 = vshrl.u32 920167782, %v376
  %v389 = vor.u32 %v387, %v388
  %v390 = vshll.u32 920167782, %v375
  %v391 = vshrl.u32 1326507024, %v376
  %v392 = vor.u32 %v390, %v391
  %vm393 = vcmp.lt.s32.totalorder %v374, 1
  %vm394 = vcmp.lt.s32.totalorder %v374, 2
  %vm395 = vcmp.lt.s32.totalorder %v374, 3
  %vm396 = vcmp.lt.s32.totalorder %v374, 4
  %v397 = vsel %vm393, %v377, %v380
  %v398 = vsel %vm396, %v386, 2102212464
  %v399 = vsel %vm395, %v383, %v398
  %v400 = vsel %vm394, %v397, %v399
  %v401 = vsel %vm393, %v380, %v383
  %v402 = vsel %vm396, %v389, 920167782
  %v403 = vsel %vm395, %v386, %v402
  %v404 = vsel %vm394, %v401, %v403
  %v405 = vsel %vm393, %v383, %v386
  %v406 = vsel %vm396, %v392, 1326507024
  %v407 = vsel %vm395, %v389, %v406
  %v408 = vsel %vm394, %v405, %v407
  %v409 = vshll.u32 %v369, 8
  %v410 = vmul.u32.u64.compose %v409, %v408
  %v411 = vextract.low.u32 %v410
  %v412 = vextract.high.u32 %v410
  %v413 = vmul.u32.u64.compose %v409, %v404
  %v414 = vextract.low.u32 %v413
  %v415 = vextract.high.u32 %v413
  %v416 = vmul.u32 %v409, %v400
  %v417 = vadd.s32 %v412, %v414
  %vm418 = vc.u32 %v412, %v414
  %v419 = vadd.s32 %v415, 1
  %v420 = vsel %vm418, %v419, %v415
  %v421 = vadd.s32 %v416, %v420
  %v422 = vadd.s32 %v421, 536870912
  %v423 = vshrl.u32 %v422, 30
  %v424 = vshll.u32 %v423, 30
  %v425 = vsub.s32 %v421, %v424
  %vm426 = vcmp.lt.s32.totalorder %v425, 0
  %v427 = vsub.s32 0, %v425
  %v428 = vsel %vm426, %v427, %v425
  %v429 = vclz %v428
  %v430 = vsub.s32 %v429, 2
  %vm431 = vcmp.gt.s32.totalorder 0, %v430
  %v432 = vsel %vm431, 0, %v430
  %v433 = vsub.s32 32, %v432
  %v434 = vshll.u32 %v425, %v432
  %v435 = vshrl.u32 %v417, %v433
  %v436 = vor.u32 %v434, %v435
  %v437 = vsub.s32 4294967266, %v432
  %v438 = vadd.s32 %v437, 127
  %v439 = vshll.u32 %v438, 23
  %v440 = vor.u32 4788187, %v439
  %v441 = vand.u32 2147483647, %v440
  %v443 = vcvt.s32.f32 %v436
  %v444 = vmul.f32 %v443, %v441
  %v445 = vxor.u32 %v444, 2147483648
  %v446 = vsel %vm363, %v445, %v444
  %v447 = vsub.s32 4, %v423
  %v448 = vsel %vm363, %v447, %v423
  %v449 = vsel %vm362, %v256, %v446
  %v450 = vsel %vm362, 0, %v448
  %v451 = vcosq.f32.pop %v449
  %v452 = vsinq.f32.pop %v449
  %vm453 = vweird.f32 %v256
  %v454 = vand.u32 %v450, 3
  %vm455 = vcmp.lt.s32.totalorder %v454, 2
  %vm456 = vcmp.eq.s32.totalorder %v454, 0
  %v457 = vxor.u32 %v452, 2147483648
  %v458 = vsel %vm456, %v451, %v457
  %vm459 = vcmp.eq.s32.totalorder %v454, 2
  %v460 = vxor.u32 %v451, 2147483648
  %v461 = vsel %vm459, %v460, %v452
  %v462 = vsel %vm455, %v458, %v461
  %v463 = vsel %vm453, nan, %v462
  %v464 = vmul.f32 %v246, 92.6
  %v465 = vmul.f32 %v464, %v241
  %v466 = vand.u32 2147483647, %v465
  %vm467 = vcmp.le.f32.partialorder %v466, 0.7853982
  %vm468 = vcmp.lt.s32.totalorder %v465, 0
  %v469 = vand.u32 %v465, 2139095040
  %v470 = vshrl.u32 %v469, 23
  %v471 = vsub.s32 %v470, 127
  %v472 = vand.u32 2147483647, %v465
  %v473 = vand.u32 %v472, 8388607
  %v474 = vor.u32 %v473, 8388608
  %v475 = vsub.s32 0, %v474
  %v476 = vadd.s32 %v471, 1
  %vm477 = vcmp.gt.s32.totalorder %v476, 0
  %v478 = vsel %vm477, %v476, 0
  %v479 = vshrl.u32 %v478, 5
  %v480 = vand.u32 %v478, 31
  %v481 = vsub.s32 32, %v480
  %v482 = vshrl.u32 683565275, %v481
  %v483 = vshll.u32 683565275, %v480
  %v484 = vshrl.u32 2475754826, %v481
  %v485 = vor.u32 %v483, %v484
  %v486 = vshll.u32 2475754826, %v480
  %v487 = vshrl.u32 2131351028, %v481
  %v488 = vor.u32 %v486, %v487
  %v489 = vshll.u32 2131351028, %v480
  %v490 = vshrl.u32 2102212464, %v481
  %v491 = vor.u32 %v489, %v490
  %v492 = vshll.u32 2102212464, %v480
  %v493 = vshrl.u32 920167782, %v481
  %v494 = vor.u32 %v492, %v493
  %v495 = vshll.u32 920167782, %v480
  %v496 = vshrl.u32 1326507024, %v481
  %v497 = vor.u32 %v495, %v496
  %vm498 = vcmp.lt.s32.totalorder %v479, 1
  %vm499 = vcmp.lt.s32.totalorder %v479, 2
  %vm500 = vcmp.lt.s32.totalorder %v479, 3
  %vm501 = vcmp.lt.s32.totalorder %v479, 4
  %v502 = vsel %vm498, %v482, %v485
  %v503 = vsel %vm501, %v491, 2102212464
  %v504 = vsel %vm500, %v488, %v503
  %v505 = vsel %vm499, %v502, %v504
  %v506 = vsel %vm498, %v485, %v488
  %v507 = vsel %vm501, %v494, 920167782
  %v508 = vsel %vm500, %v491, %v507
  %v509 = vsel %vm499, %v506, %v508
  %v510 = vsel %vm498, %v488, %v491
  %v511 = vsel %vm501, %v497, 1326507024
  %v512 = vsel %vm500, %v494, %v511
  %v513 = vsel %vm499, %v510, %v512
  %v514 = vshll.u32 %v474, 8
  %v515 = vmul.u32.u64.compose %v514, %v513
  %v516 = vextract.low.u32 %v515
  %v517 = vextract.high.u32 %v515
  %v518 = vmul.u32.u64.compose %v514, %v509
  %v519 = vextract.low.u32 %v518
  %v520 = vextract.high.u32 %v518
  %v521 = vmul.u32 %v514, %v505
  %v522 = vadd.s32 %v517, %v519
  %vm523 = vc.u32 %v517, %v519
  %v524 = vadd.s32 %v520, 1
  %v525 = vsel %vm523, %v524, %v520
  %v526 = vadd.s32 %v521, %v525
  %v527 = vadd.s32 %v526, 536870912
  %v528 = vshrl.u32 %v527, 30
  %v529 = vshll.u32 %v528, 30
  %v530 = vsub.s32 %v526, %v529
  %vm531 = vcmp.lt.s32.totalorder %v530, 0
  %v532 = vsub.s32 0, %v530
  %v533 = vsel %vm531, %v532, %v530
  %v534 = vclz %v533
  %v535 = vsub.s32 %v534, 2
  %vm536 = vcmp.gt.s32.totalorder 0, %v535
  %v537 = vsel %vm536, 0, %v535
  %v538 = vsub.s32 32, %v537
  %v539 = vshll.u32 %v530, %v537
  %v540 = vshrl.u32 %v522, %v538
  %v541 = vor.u32 %v539, %v540
  %v542 = vsub.s32 4294967266, %v537
  %v543 = vadd.s32 %v542, 127
  %v544 = vshll.u32 %v543, 23
  %v545 = vor.u32 4788187, %v544
  %v546 = vand.u32 2147483647, %v545
  %v548 = vcvt.s32.f32 %v541
  %v549 = vmul.f32 %v548, %v546
  %v550 = vxor.u32 %v549, 2147483648
  %v551 = vsel %vm468, %v550, %v549
  %v552 = vsub.s32 4, %v528
  %v553 = vsel %vm468, %v552, %v528
  %v554 = vsel %vm467, %v465, %v551
  %v555 = vsel %vm467, 0, %v553
  %v556 = vcosq.f32.pop %v554
  %v557 = vsinq.f32.pop %v554
  %vm558 = vweird.f32 %v465
  %v559 = vadd.s32 %v555, 3
  %v560 = vand.u32 %v559, 3
  %vm561 = vcmp.lt.s32.totalorder %v560, 2
  %vm562 = vcmp.eq.s32.totalorder %v560, 0
  %v563 = vxor.u32 %v557, 2147483648
  %v564 = vsel %vm562, %v556, %v563
  %vm565 = vcmp.eq.s32.totalorder %v560, 2
  %v566 = vxor.u32 %v556, 2147483648
  %v567 = vsel %vm565, %v566, %v557
  %v568 = vsel %vm561, %v564, %v567
  %v569 = vsel %vm558, nan, %v568
  %v570 = vand.u32 2147483647, %v465
  %vm571 = vcmp.le.f32.partialorder %v570, 0.7853982
  %vm572 = vcmp.lt.s32.totalorder %v465, 0
  %v573 = vand.u32 %v465, 2139095040
  %v574 = vshrl.u32 %v573, 23
  %v575 = vsub.s32 %v574, 127
  %v576 = vand.u32 2147483647, %v465
  %v577 = vand.u32 %v576, 8388607
  %v578 = vor.u32 %v577, 8388608
  %v579 = vsub.s32 0, %v578
  %v580 = vadd.s32 %v575, 1
  %vm581 = vcmp.gt.s32.totalorder %v580, 0
  %v582 = vsel %vm581, %v580, 0
  %v583 = vshrl.u32 %v582, 5
  %v584 = vand.u32 %v582, 31
  %v585 = vsub.s32 32, %v584
  %v586 = vshrl.u32 683565275, %v585
  %v587 = vshll.u32 683565275, %v584
  %v588 = vshrl.u32 2475754826, %v585
  %v589 = vor.u32 %v587, %v588
  %v590 = vshll.u32 2475754826, %v584
  %v591 = vshrl.u32 2131351028, %v585
  %v592 = vor.u32 %v590, %v591
  %v593 = vshll.u32 2131351028, %v584
  %v594 = vshrl.u32 2102212464, %v585
  %v595 = vor.u32 %v593, %v594
  %v596 = vshll.u32 2102212464, %v584
  %v597 = vshrl.u32 920167782, %v585
  %v598 = vor.u32 %v596, %v597
  %v599 = vshll.u32 920167782, %v584
  %v600 = vshrl.u32 1326507024, %v585
  %v601 = vor.u32 %v599, %v600
  %vm602 = vcmp.lt.s32.totalorder %v583, 1
  %vm603 = vcmp.lt.s32.totalorder %v583, 2
  %vm604 = vcmp.lt.s32.totalorder %v583, 3
  %vm605 = vcmp.lt.s32.totalorder %v583, 4
  %v606 = vsel %vm602, %v586, %v589
  %v607 = vsel %vm605, %v595, 2102212464
  %v608 = vsel %vm604, %v592, %v607
  %v609 = vsel %vm603, %v606, %v608
  %v610 = vsel %vm602, %v589, %v592
  %v611 = vsel %vm605, %v598, 920167782
  %v612 = vsel %vm604, %v595, %v611
  %v613 = vsel %vm603, %v610, %v612
  %v614 = vsel %vm602, %v592, %v595
  %v615 = vsel %vm605, %v601, 1326507024
  %v616 = vsel %vm604, %v598, %v615
  %v617 = vsel %vm603, %v614, %v616
  %v618 = vshll.u32 %v578, 8
  %v619 = vmul.u32.u64.compose %v618, %v617
  %v620 = vextract.low.u32 %v619
  %v621 = vextract.high.u32 %v619
  %v622 = vmul.u32.u64.compose %v618, %v613
  %v623 = vextract.low.u32 %v622
  %v624 = vextract.high.u32 %v622
  %v625 = vmul.u32 %v618, %v609
  %v626 = vadd.s32 %v621, %v623
  %vm627 = vc.u32 %v621, %v623
  %v628 = vadd.s32 %v624, 1
  %v629 = vsel %vm627, %v628, %v624
  %v630 = vadd.s32 %v625, %v629
  %v631 = vadd.s32 %v630, 536870912
  %v632 = vshrl.u32 %v631, 30
  %v633 = vshll.u32 %v632, 30
  %v634 = vsub.s32 %v630, %v633
  %vm635 = vcmp.lt.s32.totalorder %v634, 0
  %v636 = vsub.s32 0, %v634
  %v637 = vsel %vm635, %v636, %v634
  %v638 = vclz %v637
  %v639 = vsub.s32 %v638, 2
  %vm640 = vcmp.gt.s32.totalorder 0, %v639
  %v641 = vsel %vm640, 0, %v639
  %v642 = vsub.s32 32, %v641
  %v643 = vshll.u32 %v634, %v641
  %v644 = vshrl.u32 %v626, %v642
  %v645 = vor.u32 %v643, %v644
  %v646 = vsub.s32 4294967266, %v641
  %v647 = vadd.s32 %v646, 127
  %v648 = vshll.u32 %v647, 23
  %v649 = vor.u32 4788187, %v648
  %v650 = vand.u32 2147483647, %v649
  %v652 = vcvt.s32.f32 %v645
  %v653 = vmul.f32 %v652, %v650
  %v654 = vxor.u32 %v653, 2147483648
  %v655 = vsel %vm572, %v654, %v653
  %v656 = vsub.s32 4, %v632
  %v657 = vsel %vm572, %v656, %v632
  %v658 = vsel %vm571, %v465, %v655
  %v659 = vsel %vm571, 0, %v657
  %v660 = vcosq.f32.pop %v658
  %v661 = vsinq.f32.pop %v658
  %vm662 = vweird.f32 %v465
  %v663 = vand.u32 %v659, 3
  %vm664 = vcmp.lt.s32.totalorder %v663, 2
  %vm665 = vcmp.eq.s32.totalorder %v663, 0
  %v666 = vxor.u32 %v661, 2147483648
  %v667 = vsel %vm665, %v660, %v666
  %vm668 = vcmp.eq.s32.totalorder %v663, 2
  %v669 = vxor.u32 %v660, 2147483648
  %v670 = vsel %vm668, %v669, %v661
  %v671 = vsel %vm664, %v667, %v670
  %v672 = vsel %vm662, nan, %v671
  %v673 = vmul.f32 %v122, %v672
  %v674 = vmul.f32 %v225, %v569
  %v675 = vmul.f32 %v674, %v463
  %v676 = vadd.f32 %v673, %v675
  %v677 = vmul.f32 %v676, %v676
  %v678 = vsub.f32 1.0, %v677
  %v679 = vmax.f32 %v678, 0.0
  %v680 = vrsqrt.pop %v679
  %v681 = vmul.f32 %v679, %v680
  %vm682 = vcmp.eq.f32.partialorder %v679, inf
  %v683 = vsel %vm682, %v679, %v681
  %vm684 = vcmp.eq.f32.partialorder %v679, 0.0
  %v685 = vand.u32 %v679, 2147483648
  %v686 = vsel %vm684, %v685, %v683
  %v687 = vmul.f32 %v360, %v569
  %v688 = vmul.f32 %v687, %v225
  %v689 = vmul.f32 %v122, %v676
  %v690 = vsub.f32 %v672, %v689
  %v691 = vand.u32 2147483647, %v690
  %v692 = vand.u32 2147483647, %v688
  %v693 = vmin.f32 %v691, %v692
  %v694 = vmax.f32 %v691, %v692
  %v695 = vrcp.pop %v694
  %v696 = vmul.f32 %v693, %v695
  %v697 = vmul.f32 %v696, %v696
  %v698 = vmul.f32 0.002785687, %v697
  %v699 = vadd.f32 %v698, -0.015866
  %v700 = vmul.f32 %v699, %v697
  %v701 = vadd.f32 %v700, 0.04247222
  %v702 = vmul.f32 %v701, %v697
  %v703 = vadd.f32 %v702, -0.074975304
  %v704 = vmul.f32 %v703, %v697
  %v705 = vadd.f32 %v704, 0.1064488
  %v706 = vmul.f32 %v705, %v697
  %v707 = vadd.f32 %v706, -0.14207031
  %v708 = vmul.f32 %v707, %v697
  %v709 = vadd.f32 %v708, 0.19993454
  %v710 = vmul.f32 %v709, %v697
  %v711 = vadd.f32 %v710, -0.33333147
  %v712 = vmul.f32 %v711, %v697
  %v713 = vmul.f32 %v712, %v696
  %v714 = vadd.f32 %v713, %v696
  %vm715 = vcmp.gt.f32.partialorder %v692, %v691
  %v716 = vsub.f32 1.5707964, %v714
  %v717 = vsel %vm715, %v716, %v714
  %vm718 = vcmp.lt.f32.partialorder %v690, 0.0
  %v719 = vsub.f32 3.1415927, %v717
  %v720 = vsel %vm718, %v719, %v717
  %vm721 = vcmp.lt.s32.totalorder %v690, 0
  %v722 = vsel %vm721, 3.1415927, 0.0
  %vm723 = vcmp.eq.f32.partialorder %v688, 0.0
  %v724 = vsel %vm723, %v722, %v720
  %vm725 = vcmp.ne.f32.partialorder %v690, %v690
  %vm726 = vcmp.ne.f32.partialorder %v688, %v688
  %vm727 = vmor %vm725, %vm726
  %v728 = vsel %vm727, nan, %v724
  %vm729 = vcmp.lt.f32.partialorder %v690, 0.0
  %v730 = vsel %vm729, 2.3561945, 0.7853982
  %vm731 = vcmp.eq.s32.totalorder %v691, inf
  %vm732 = vcmp.eq.s32.totalorder %v692, inf
  %vm733 = vmand %vm731, %vm732
  %v734 = vsel %vm733, %v730, %v728
  %v735 = vand.u32 2147483647, %v734
  %v736 = vand.u32 %v688, 2147483648
  %v737 = vor.u32 %v735, %v736
  %v738 = vadd.f32 %v227, %v737
  %v739 = vmul.f32 %v686, 4.068063e+13
  %v740 = vmul.f32 %v676, 4.04083e+13
  %v741 = vmul.f32 %v686, 6378137.0
  %v742 = vmul.f32 %v676, 6356752.5
  %v743 = vmul.f32 %v739, %v739
  %v744 = vmul.f32 %v740, %v740
  %v745 = vadd.f32 %v743, %v744
  %v746 = vmul.f32 %v741, %v741
  %v747 = vmul.f32 %v742, %v742
  %v748 = vadd.f32 %v746, %v747
  %v749 = vrcp.pop %v748
  %v750 = vmul.f32 %v745, %v749
  %v751 = vadd.f32 %v750, 1e-10
  %v752 = vrsqrt.pop %v751
  %v753 = vmul.f32 %v751, %v752
  %v754 = vmul.f32 %v753, 0.001
  %v755 = vand.u32 2147483647, %v686
  %v756 = vand.u32 2147483647, %v676
  %v757 = vmin.f32 %v755, %v756
  %v758 = vmax.f32 %v755, %v756
  %v759 = vrcp.pop %v758
  %v760 = vmul.f32 %v757, %v759
  %v761 = vmul.f32 %v760, %v760
  %v762 = vmul.f32 0.002785687, %v761
  %v763 = vadd.f32 %v762, -0.015866
  %v764 = vmul.f32 %v763, %v761
  %v765 = vadd.f32 %v764, 0.04247222
  %v766 = vmul.f32 %v765, %v761
  %v767 = vadd.f32 %v766, -0.074975304
  %v768 = vmul.f32 %v767, %v761
  %v769 = vadd.f32 %v768, 0.1064488
  %v770 = vmul.f32 %v769, %v761
  %v771 = vadd.f32 %v770, -0.14207031
  %v772 = vmul.f32 %v771, %v761
  %v773 = vadd.f32 %v772, 0.19993454
  %v774 = vmul.f32 %v773, %v761
  %v775 = vadd.f32 %v774, -0.33333147
  %v776 = vmul.f32 %v775, %v761
  %v777 = vmul.f32 %v776, %v760
  %v778 = vadd.f32 %v777, %v760
  %vm779 = vcmp.gt.f32.partialorder %v756, %v755
  %v780 = vsub.f32 1.5707964, %v778
  %v781 = vsel %vm779, %v780, %v778
  %vm782 = vcmp.lt.f32.partialorder %v686, 0.0
  %v783 = vsub.f32 3.1415927, %v781
  %v784 = vsel %vm782, %v783, %v781
  %vm785 = vcmp.lt.s32.totalorder %v686, 0
  %v786 = vsel %vm785, 3.1415927, 0.0
  %vm787 = vcmp.eq.f32.partialorder %v676, 0.0
  %v788 = vsel %vm787, %v786, %v784
  %vm789 = vcmp.ne.f32.partialorder %v686, %v686
  %vm790 = vcmp.ne.f32.partialorder %v676, %v676
  %vm791 = vmor %vm789, %vm790
  %v792 = vsel %vm791, nan, %v788
  %vm793 = vcmp.lt.f32.partialorder %v686, 0.0
  %v794 = vsel %vm793, 2.3561945, 0.7853982
  %vm795 = vcmp.eq.s32.totalorder %v755, inf
  %vm796 = vcmp.eq.s32.totalorder %v756, inf
  %vm797 = vmand %vm795, %vm796
  %v798 = vsel %vm797, %v794, %v792
  %v799 = vand.u32 2147483647, %v798
  %v800 = vand.u32 %v676, 2147483648
  %v801 = vor.u32 %v799, %v800
  %v802 = vmul.f32 %v738, 57.29578
  %803 = vst [vmem:[%s4] sm:$0x1] %v802
  %v804 = vmul.f32 %v801, 57.29578
  %s805 = scalar_lea.vmem %s4, 8
  %806 = vst [vmem:[%s805] sm:$0x1] %v804
  %s807 = scalar_lea.vmem %s16, 1
  %v808 = vld [vmem:[%s807] sm:$0x1]
  %s809 = scalar_lea.vmem %s1, 1
  %v810 = vld [vmem:[%s809] sm:$0x1]
  %v811 = vmul.f32 %v808, 0.017453292
  %v812 = vsub.f32 %v811, %v801
  %v813 = vmul.f32 %v810, 0.017453292
  %v814 = vsub.f32 %v813, %v738
  %v815 = vmul.f32 %v812, 0.5
  %v816 = vand.u32 2147483647, %v815
  %vm817 = vcmp.le.f32.partialorder %v816, 0.7853982
  %vm818 = vcmp.lt.s32.totalorder %v815, 0
  %v819 = vand.u32 %v815, 2139095040
  %v820 = vshrl.u32 %v819, 23
  %v821 = vsub.s32 %v820, 127
  %v822 = vand.u32 2147483647, %v815
  %v823 = vand.u32 %v822, 8388607
  %v824 = vor.u32 %v823, 8388608
  %v825 = vsub.s32 0, %v824
  %v826 = vadd.s32 %v821, 1
  %vm827 = vcmp.gt.s32.totalorder %v826, 0
  %v828 = vsel %vm827, %v826, 0
  %v829 = vshrl.u32 %v828, 5
  %v830 = vand.u32 %v828, 31
  %v831 = vsub.s32 32, %v830
  %v832 = vshrl.u32 683565275, %v831
  %v833 = vshll.u32 683565275, %v830
  %v834 = vshrl.u32 2475754826, %v831
  %v835 = vor.u32 %v833, %v834
  %v836 = vshll.u32 2475754826, %v830
  %v837 = vshrl.u32 2131351028, %v831
  %v838 = vor.u32 %v836, %v837
  %v839 = vshll.u32 2131351028, %v830
  %v840 = vshrl.u32 2102212464, %v831
  %v841 = vor.u32 %v839, %v840
  %v842 = vshll.u32 2102212464, %v830
  %v843 = vshrl.u32 920167782, %v831
  %v844 = vor.u32 %v842, %v843
  %v845 = vshll.u32 920167782, %v830
  %v846 = vshrl.u32 1326507024, %v831
  %v847 = vor.u32 %v845, %v846
  %vm848 = vcmp.lt.s32.totalorder %v829, 1
  %vm849 = vcmp.lt.s32.totalorder %v829, 2
  %vm850 = vcmp.lt.s32.totalorder %v829, 3
  %vm851 = vcmp.lt.s32.totalorder %v829, 4
  %v852 = vsel %vm848, %v832, %v835
  %v853 = vsel %vm851, %v841, 2102212464
  %v854 = vsel %vm850, %v838, %v853
  %v855 = vsel %vm849, %v852, %v854
  %v856 = vsel %vm848, %v835, %v838
  %v857 = vsel %vm851, %v844, 920167782
  %v858 = vsel %vm850, %v841, %v857
  %v859 = vsel %vm849, %v856, %v858
  %v860 = vsel %vm848, %v838, %v841
  %v861 = vsel %vm851, %v847, 1326507024
  %v862 = vsel %vm850, %v844, %v861
  %v863 = vsel %vm849, %v860, %v862
  %v864 = vshll.u32 %v824, 8
  %v865 = vmul.u32.u64.compose %v864, %v863
  %v866 = vextract.low.u32 %v865
  %v867 = vextract.high.u32 %v865
  %v868 = vmul.u32.u64.compose %v864, %v859
  %v869 = vextract.low.u32 %v868
  %v870 = vextract.high.u32 %v868
  %v871 = vmul.u32 %v864, %v855
  %v872 = vadd.s32 %v867, %v869
  %vm873 = vc.u32 %v867, %v869
  %v874 = vadd.s32 %v870, 1
  %v875 = vsel %vm873, %v874, %v870
  %v876 = vadd.s32 %v871, %v875
  %v877 = vadd.s32 %v876, 536870912
  %v878 = vshrl.u32 %v877, 30
  %v879 = vshll.u32 %v878, 30
  %v880 = vsub.s32 %v876, %v879
  %vm881 = vcmp.lt.s32.totalorder %v880, 0
  %v882 = vsub.s32 0, %v880
  %v883 = vsel %vm881, %v882, %v880
  %v884 = vclz %v883
  %v885 = vsub.s32 %v884, 2
  %vm886 = vcmp.gt.s32.totalorder 0, %v885
  %v887 = vsel %vm886, 0, %v885
  %v888 = vsub.s32 32, %v887
  %v889 = vshll.u32 %v880, %v887
  %v890 = vshrl.u32 %v872, %v888
  %v891 = vor.u32 %v889, %v890
  %v892 = vsub.s32 4294967266, %v887
  %v893 = vadd.s32 %v892, 127
  %v894 = vshll.u32 %v893, 23
  %v895 = vor.u32 4788187, %v894
  %v896 = vand.u32 2147483647, %v895
  %v898 = vcvt.s32.f32 %v891
  %v899 = vmul.f32 %v898, %v896
  %v900 = vxor.u32 %v899, 2147483648
  %v901 = vsel %vm818, %v900, %v899
  %v902 = vsub.s32 4, %v878
  %v903 = vsel %vm818, %v902, %v878
  %v904 = vsel %vm817, %v815, %v901
  %v905 = vsel %vm817, 0, %v903
  %v906 = vcosq.f32.pop %v904
  %v907 = vsinq.f32.pop %v904
  %vm908 = vweird.f32 %v815
  %v909 = vadd.s32 %v905, 3
  %v910 = vand.u32 %v909, 3
  %vm911 = vcmp.lt.s32.totalorder %v910, 2
  %vm912 = vcmp.eq.s32.totalorder %v910, 0
  %v913 = vxor.u32 %v907, 2147483648
  %v914 = vsel %vm912, %v906, %v913
  %vm915 = vcmp.eq.s32.totalorder %v910, 2
  %v916 = vxor.u32 %v906, 2147483648
  %v917 = vsel %vm915, %v916, %v907
  %v918 = vsel %vm911, %v914, %v917
  %v919 = vsel %vm908, nan, %v918
  %v920 = vmul.f32 %v814, 0.5
  %v921 = vand.u32 2147483647, %v920
  %vm922 = vcmp.le.f32.partialorder %v921, 0.7853982
  %vm923 = vcmp.lt.s32.totalorder %v920, 0
  %v924 = vand.u32 %v920, 2139095040
  %v925 = vshrl.u32 %v924, 23
  %v926 = vsub.s32 %v925, 127
  %v927 = vand.u32 2147483647, %v920
  %v928 = vand.u32 %v927, 8388607
  %v929 = vor.u32 %v928, 8388608
  %v930 = vsub.s32 0, %v929
  %v931 = vadd.s32 %v926, 1
  %vm932 = vcmp.gt.s32.totalorder %v931, 0
  %v933 = vsel %vm932, %v931, 0
  %v934 = vshrl.u32 %v933, 5
  %v935 = vand.u32 %v933, 31
  %v936 = vsub.s32 32, %v935
  %v937 = vshrl.u32 683565275, %v936
  %v938 = vshll.u32 683565275, %v935
  %v939 = vshrl.u32 2475754826, %v936
  %v940 = vor.u32 %v938, %v939
  %v941 = vshll.u32 2475754826, %v935
  %v942 = vshrl.u32 2131351028, %v936
  %v943 = vor.u32 %v941, %v942
  %v944 = vshll.u32 2131351028, %v935
  %v945 = vshrl.u32 2102212464, %v936
  %v946 = vor.u32 %v944, %v945
  %v947 = vshll.u32 2102212464, %v935
  %v948 = vshrl.u32 920167782, %v936
  %v949 = vor.u32 %v947, %v948
  %v950 = vshll.u32 920167782, %v935
  %v951 = vshrl.u32 1326507024, %v936
  %v952 = vor.u32 %v950, %v951
  %vm953 = vcmp.lt.s32.totalorder %v934, 1
  %vm954 = vcmp.lt.s32.totalorder %v934, 2
  %vm955 = vcmp.lt.s32.totalorder %v934, 3
  %vm956 = vcmp.lt.s32.totalorder %v934, 4
  %v957 = vsel %vm953, %v937, %v940
  %v958 = vsel %vm956, %v946, 2102212464
  %v959 = vsel %vm955, %v943, %v958
  %v960 = vsel %vm954, %v957, %v959
  %v961 = vsel %vm953, %v940, %v943
  %v962 = vsel %vm956, %v949, 920167782
  %v963 = vsel %vm955, %v946, %v962
  %v964 = vsel %vm954, %v961, %v963
  %v965 = vsel %vm953, %v943, %v946
  %v966 = vsel %vm956, %v952, 1326507024
  %v967 = vsel %vm955, %v949, %v966
  %v968 = vsel %vm954, %v965, %v967
  %v969 = vshll.u32 %v929, 8
  %v970 = vmul.u32.u64.compose %v969, %v968
  %v971 = vextract.low.u32 %v970
  %v972 = vextract.high.u32 %v970
  %v973 = vmul.u32.u64.compose %v969, %v964
  %v974 = vextract.low.u32 %v973
  %v975 = vextract.high.u32 %v973
  %v976 = vmul.u32 %v969, %v960
  %v977 = vadd.s32 %v972, %v974
  %vm978 = vc.u32 %v972, %v974
  %v979 = vadd.s32 %v975, 1
  %v980 = vsel %vm978, %v979, %v975
  %v981 = vadd.s32 %v976, %v980
  %v982 = vadd.s32 %v981, 536870912
  %v983 = vshrl.u32 %v982, 30
  %v984 = vshll.u32 %v983, 30
  %v985 = vsub.s32 %v981, %v984
  %vm986 = vcmp.lt.s32.totalorder %v985, 0
  %v987 = vsub.s32 0, %v985
  %v988 = vsel %vm986, %v987, %v985
  %v989 = vclz %v988
  %v990 = vsub.s32 %v989, 2
  %vm991 = vcmp.gt.s32.totalorder 0, %v990
  %v992 = vsel %vm991, 0, %v990
  %v993 = vsub.s32 32, %v992
  %v994 = vshll.u32 %v985, %v992
  %v995 = vshrl.u32 %v977, %v993
  %v996 = vor.u32 %v994, %v995
  %v997 = vsub.s32 4294967266, %v992
  %v998 = vadd.s32 %v997, 127
  %v999 = vshll.u32 %v998, 23
  %v1000 = vor.u32 4788187, %v999
  %v1001 = vand.u32 2147483647, %v1000
  %v1003 = vcvt.s32.f32 %v996
  %v1004 = vmul.f32 %v1003, %v1001
  %v1005 = vxor.u32 %v1004, 2147483648
  %v1006 = vsel %vm923, %v1005, %v1004
  %v1007 = vsub.s32 4, %v983
  %v1008 = vsel %vm923, %v1007, %v983
  %v1009 = vsel %vm922, %v920, %v1006
  %v1010 = vsel %vm922, 0, %v1008
  %v1011 = vcosq.f32.pop %v1009
  %v1012 = vsinq.f32.pop %v1009
  %vm1013 = vweird.f32 %v920
  %v1014 = vadd.s32 %v1010, 3
  %v1015 = vand.u32 %v1014, 3
  %vm1016 = vcmp.lt.s32.totalorder %v1015, 2
  %vm1017 = vcmp.eq.s32.totalorder %v1015, 0
  %v1018 = vxor.u32 %v1012, 2147483648
  %v1019 = vsel %vm1017, %v1011, %v1018
  %vm1020 = vcmp.eq.s32.totalorder %v1015, 2
  %v1021 = vxor.u32 %v1011, 2147483648
  %v1022 = vsel %vm1020, %v1021, %v1012
  %v1023 = vsel %vm1016, %v1019, %v1022
  %v1024 = vsel %vm1013, nan, %v1023
  %v1025 = vmul.f32 %v919, %v919
  %v1026 = vand.u32 2147483647, %v811
  %vm1027 = vcmp.le.f32.partialorder %v1026, 0.7853982
  %vm1028 = vcmp.lt.s32.totalorder %v811, 0
  %v1029 = vand.u32 %v811, 2139095040
  %v1030 = vshrl.u32 %v1029, 23
  %v1031 = vsub.s32 %v1030, 127
  %v1032 = vand.u32 2147483647, %v811
  %v1033 = vand.u32 %v1032, 8388607
  %v1034 = vor.u32 %v1033, 8388608
  %v1035 = vsub.s32 0, %v1034
  %v1036 = vadd.s32 %v1031, 1
  %vm1037 = vcmp.gt.s32.totalorder %v1036, 0
  %v1038 = vsel %vm1037, %v1036, 0
  %v1039 = vshrl.u32 %v1038, 5
  %v1040 = vand.u32 %v1038, 31
  %v1041 = vsub.s32 32, %v1040
  %v1042 = vshrl.u32 683565275, %v1041
  %v1043 = vshll.u32 683565275, %v1040
  %v1044 = vshrl.u32 2475754826, %v1041
  %v1045 = vor.u32 %v1043, %v1044
  %v1046 = vshll.u32 2475754826, %v1040
  %v1047 = vshrl.u32 2131351028, %v1041
  %v1048 = vor.u32 %v1046, %v1047
  %v1049 = vshll.u32 2131351028, %v1040
  %v1050 = vshrl.u32 2102212464, %v1041
  %v1051 = vor.u32 %v1049, %v1050
  %v1052 = vshll.u32 2102212464, %v1040
  %v1053 = vshrl.u32 920167782, %v1041
  %v1054 = vor.u32 %v1052, %v1053
  %v1055 = vshll.u32 920167782, %v1040
  %v1056 = vshrl.u32 1326507024, %v1041
  %v1057 = vor.u32 %v1055, %v1056
  %vm1058 = vcmp.lt.s32.totalorder %v1039, 1
  %vm1059 = vcmp.lt.s32.totalorder %v1039, 2
  %vm1060 = vcmp.lt.s32.totalorder %v1039, 3
  %vm1061 = vcmp.lt.s32.totalorder %v1039, 4
  %v1062 = vsel %vm1058, %v1042, %v1045
  %v1063 = vsel %vm1061, %v1051, 2102212464
  %v1064 = vsel %vm1060, %v1048, %v1063
  %v1065 = vsel %vm1059, %v1062, %v1064
  %v1066 = vsel %vm1058, %v1045, %v1048
  %v1067 = vsel %vm1061, %v1054, 920167782
  %v1068 = vsel %vm1060, %v1051, %v1067
  %v1069 = vsel %vm1059, %v1066, %v1068
  %v1070 = vsel %vm1058, %v1048, %v1051
  %v1071 = vsel %vm1061, %v1057, 1326507024
  %v1072 = vsel %vm1060, %v1054, %v1071
  %v1073 = vsel %vm1059, %v1070, %v1072
  %v1074 = vshll.u32 %v1034, 8
  %v1075 = vmul.u32.u64.compose %v1074, %v1073
  %v1076 = vextract.low.u32 %v1075
  %v1077 = vextract.high.u32 %v1075
  %v1078 = vmul.u32.u64.compose %v1074, %v1069
  %v1079 = vextract.low.u32 %v1078
  %v1080 = vextract.high.u32 %v1078
  %v1081 = vmul.u32 %v1074, %v1065
  %v1082 = vadd.s32 %v1077, %v1079
  %vm1083 = vc.u32 %v1077, %v1079
  %v1084 = vadd.s32 %v1080, 1
  %v1085 = vsel %vm1083, %v1084, %v1080
  %v1086 = vadd.s32 %v1081, %v1085
  %v1087 = vadd.s32 %v1086, 536870912
  %v1088 = vshrl.u32 %v1087, 30
  %v1089 = vshll.u32 %v1088, 30
  %v1090 = vsub.s32 %v1086, %v1089
  %vm1091 = vcmp.lt.s32.totalorder %v1090, 0
  %v1092 = vsub.s32 0, %v1090
  %v1093 = vsel %vm1091, %v1092, %v1090
  %v1094 = vclz %v1093
  %v1095 = vsub.s32 %v1094, 2
  %vm1096 = vcmp.gt.s32.totalorder 0, %v1095
  %v1097 = vsel %vm1096, 0, %v1095
  %v1098 = vsub.s32 32, %v1097
  %v1099 = vshll.u32 %v1090, %v1097
  %v1100 = vshrl.u32 %v1082, %v1098
  %v1101 = vor.u32 %v1099, %v1100
  %v1102 = vsub.s32 4294967266, %v1097
  %v1103 = vadd.s32 %v1102, 127
  %v1104 = vshll.u32 %v1103, 23
  %v1105 = vor.u32 4788187, %v1104
  %v1106 = vand.u32 2147483647, %v1105
  %v1108 = vcvt.s32.f32 %v1101
  %v1109 = vmul.f32 %v1108, %v1106
  %v1110 = vxor.u32 %v1109, 2147483648
  %v1111 = vsel %vm1028, %v1110, %v1109
  %v1112 = vsub.s32 4, %v1088
  %v1113 = vsel %vm1028, %v1112, %v1088
  %v1114 = vsel %vm1027, %v811, %v1111
  %v1115 = vsel %vm1027, 0, %v1113
  %v1116 = vcosq.f32.pop %v1114
  %v1117 = vsinq.f32.pop %v1114
  %vm1118 = vweird.f32 %v811
  %v1119 = vand.u32 %v1115, 3
  %vm1120 = vcmp.lt.s32.totalorder %v1119, 2
  %vm1121 = vcmp.eq.s32.totalorder %v1119, 0
  %v1122 = vxor.u32 %v1117, 2147483648
  %v1123 = vsel %vm1121, %v1116, %v1122
  %vm1124 = vcmp.eq.s32.totalorder %v1119, 2
  %v1125 = vxor.u32 %v1116, 2147483648
  %v1126 = vsel %vm1124, %v1125, %v1117
  %v1127 = vsel %vm1120, %v1123, %v1126
  %v1128 = vsel %vm1118, nan, %v1127
  %v1129 = vmul.f32 %v686, %v1128
  %v1130 = vmul.f32 %v1129, %v1024
  %v1131 = vmul.f32 %v1130, %v1024
  %v1132 = vadd.f32 %v1025, %v1131
  %v1133 = vadd.f32 %v1132, 1e-10
  %v1134 = vrsqrt.pop %v1133
  %v1135 = vmul.f32 %v1133, %v1134
  %vm1136 = vcmp.eq.f32.partialorder %v1133, inf
  %v1137 = vsel %vm1136, %v1133, %v1135
  %vm1138 = vcmp.eq.f32.partialorder %v1133, 0.0
  %v1139 = vand.u32 %v1133, 2147483648
  %v1140 = vsel %vm1138, %v1139, %v1137
  %v1141 = vsub.f32 1.0, %v1132
  %v1142 = vadd.f32 %v1141, 1e-10
  %v1143 = vrsqrt.pop %v1142
  %v1144 = vmul.f32 %v1142, %v1143
  %vm1145 = vcmp.eq.f32.partialorder %v1142, inf
  %v1146 = vsel %vm1145, %v1142, %v1144
  %vm1147 = vcmp.eq.f32.partialorder %v1142, 0.0
  %v1148 = vand.u32 %v1142, 2147483648
  %v1149 = vsel %vm1147, %v1148, %v1146
  %v1150 = vand.u32 2147483647, %v1149
  %v1151 = vand.u32 2147483647, %v1140
  %v1152 = vmin.f32 %v1150, %v1151
  %v1153 = vmax.f32 %v1150, %v1151
  %v1154 = vrcp.pop %v1153
  %v1155 = vmul.f32 %v1152, %v1154
  %v1156 = vmul.f32 %v1155, %v1155
  %v1157 = vmul.f32 0.002785687, %v1156
  %v1158 = vadd.f32 %v1157, -0.015866
  %v1159 = vmul.f32 %v1158, %v1156
  %v1160 = vadd.f32 %v1159, 0.04247222
  %v1161 = vmul.f32 %v1160, %v1156
  %v1162 = vadd.f32 %v1161, -0.074975304
  %v1163 = vmul.f32 %v1162, %v1156
  %v1164 = vadd.f32 %v1163, 0.1064488
  %v1165 = vmul.f32 %v1164, %v1156
  %v1166 = vadd.f32 %v1165, -0.14207031
  %v1167 = vmul.f32 %v1166, %v1156
  %v1168 = vadd.f32 %v1167, 0.19993454
  %v1169 = vmul.f32 %v1168, %v1156
  %v1170 = vadd.f32 %v1169, -0.33333147
  %v1171 = vmul.f32 %v1170, %v1156
  %v1172 = vmul.f32 %v1171, %v1155
  %v1173 = vadd.f32 %v1172, %v1155
  %vm1174 = vcmp.gt.f32.partialorder %v1151, %v1150
  %v1175 = vsub.f32 1.5707964, %v1173
  %v1176 = vsel %vm1174, %v1175, %v1173
  %vm1177 = vcmp.lt.f32.partialorder %v1149, 0.0
  %v1178 = vsub.f32 3.1415927, %v1176
  %v1179 = vsel %vm1177, %v1178, %v1176
  %vm1180 = vcmp.lt.s32.totalorder %v1149, 0
  %v1181 = vsel %vm1180, 3.1415927, 0.0
  %vm1182 = vcmp.eq.f32.partialorder %v1140, 0.0
  %v1183 = vsel %vm1182, %v1181, %v1179
  %vm1184 = vcmp.ne.f32.partialorder %v1149, %v1149
  %vm1185 = vcmp.ne.f32.partialorder %v1140, %v1140
  %vm1186 = vmor %vm1184, %vm1185
  %v1187 = vsel %vm1186, nan, %v1183
  %vm1188 = vcmp.lt.f32.partialorder %v1149, 0.0
  %v1189 = vsel %vm1188, 2.3561945, 0.7853982
  %vm1190 = vcmp.eq.s32.totalorder %v1150, inf
  %vm1191 = vcmp.eq.s32.totalorder %v1151, inf
  %vm1192 = vmand %vm1190, %vm1191
  %v1193 = vsel %vm1192, %v1189, %v1187
  %v1194 = vand.u32 2147483647, %v1193
  %v1195 = vand.u32 %v1140, 2147483648
  %v1196 = vor.u32 %v1194, %v1195
  %v1197 = vmul.f32 %v1196, 2.0
  %v1198 = vmul.f32 %v754, %v1197
  %v1199 = vadd.f32 %v1198, 0.0
  %s1200 = scalar_lea.vmem %s0, 1
  %v1201 = vld [vmem:[%s1200] sm:$0x1]
  %v1202 = vadd.f32 %v246, %v1201
  %s1203 = scalar_lea.vmem %s247, 1
  %v1204 = vld [vmem:[%s1203] sm:$0x1]
  %v1205 = vadd.f32 %v255, %v1204
  %vm1206 = vcmp.gt.f32.partialorder %v1205, 360.0
  %v1207 = vsub.f32 %v1205, 360.0
  %vm1208 = vcmp.lt.f32.partialorder %v1205, 0.0
  %v1209 = vadd.f32 %v1205, 360.0
  %v1210 = vsel %vm1208, %v1209, %v1205
  %v1211 = vsel %vm1206, %v1207, %v1210
  %v1212 = vmul.f32 %v1211, 0.017453292
  %v1213 = vand.u32 2147483647, %v1212
  %vm1214 = vcmp.le.f32.partialorder %v1213, 0.7853982
  %vm1215 = vcmp.lt.s32.totalorder %v1212, 0
  %v1216 = vand.u32 %v1212, 2139095040
  %v1217 = vshrl.u32 %v1216, 23
  %v1218 = vsub.s32 %v1217, 127
  %v1219 = vand.u32 2147483647, %v1212
  %v1220 = vand.u32 %v1219, 8388607
  %v1221 = vor.u32 %v1220, 8388608
  %v1222 = vsub.s32 0, %v1221
  %v1223 = vadd.s32 %v1218, 1
  %vm1224 = vcmp.gt.s32.totalorder %v1223, 0
  %v1225 = vsel %vm1224, %v1223, 0
  %v1226 = vshrl.u32 %v1225, 5
  %v1227 = vand.u32 %v1225, 31
  %v1228 = vsub.s32 32, %v1227
  %v1229 = vshrl.u32 683565275, %v1228
  %v1230 = vshll.u32 683565275, %v1227
  %v1231 = vshrl.u32 2475754826, %v1228
  %v1232 = vor.u32 %v1230, %v1231
  %v1233 = vshll.u32 2475754826, %v1227
  %v1234 = vshrl.u32 2131351028, %v1228
  %v1235 = vor.u32 %v1233, %v1234
  %v1236 = vshll.u32 2131351028, %v1227
  %v1237 = vshrl.u32 2102212464, %v1228
  %v1238 = vor.u32 %v1236, %v1237
  %v1239 = vshll.u32 2102212464, %v1227
  %v1240 = vshrl.u32 920167782, %v1228
  %v1241 = vor.u32 %v1239, %v1240
  %v1242 = vshll.u32 920167782, %v1227
  %v1243 = vshrl.u32 1326507024, %v1228
  %v1244 = vor.u32 %v1242, %v1243
  %vm1245 = vcmp.lt.s32.totalorder %v1226, 1
  %vm1246 = vcmp.lt.s32.totalorder %v1226, 2
  %vm1247 = vcmp.lt.s32.totalorder %v1226, 3
  %vm1248 = vcmp.lt.s32.totalorder %v1226, 4
  %v1249 = vsel %vm1245, %v1229, %v1232
  %v1250 = vsel %vm1248, %v1238, 2102212464
  %v1251 = vsel %vm1247, %v1235, %v1250
  %v1252 = vsel %vm1246, %v1249, %v1251
  %v1253 = vsel %vm1245, %v1232, %v1235
  %v1254 = vsel %vm1248, %v1241, 920167782
  %v1255 = vsel %vm1247, %v1238, %v1254
  %v1256 = vsel %vm1246, %v1253, %v1255
  %v1257 = vsel %vm1245, %v1235, %v1238
  %v1258 = vsel %vm1248, %v1244, 1326507024
  %v1259 = vsel %vm1247, %v1241, %v1258
  %v1260 = vsel %vm1246, %v1257, %v1259
  %v1261 = vshll.u32 %v1221, 8
  %v1262 = vmul.u32.u64.compose %v1261, %v1260
  %v1263 = vextract.low.u32 %v1262
  %v1264 = vextract.high.u32 %v1262
  %v1265 = vmul.u32.u64.compose %v1261, %v1256
  %v1266 = vextract.low.u32 %v1265
  %v1267 = vextract.high.u32 %v1265
  %v1268 = vmul.u32 %v1261, %v1252
  %v1269 = vadd.s32 %v1264, %v1266
  %vm1270 = vc.u32 %v1264, %v1266
  %v1271 = vadd.s32 %v1267, 1
  %v1272 = vsel %vm1270, %v1271, %v1267
  %v1273 = vadd.s32 %v1268, %v1272
  %v1274 = vadd.s32 %v1273, 536870912
  %v1275 = vshrl.u32 %v1274, 30
  %v1276 = vshll.u32 %v1275, 30
  %v1277 = vsub.s32 %v1273, %v1276
  %vm1278 = vcmp.lt.s32.totalorder %v1277, 0
  %v1279 = vsub.s32 0, %v1277
  %v1280 = vsel %vm1278, %v1279, %v1277
  %v1281 = vclz %v1280
  %v1282 = vsub.s32 %v1281, 2
  %vm1283 = vcmp.gt.s32.totalorder 0, %v1282
  %v1284 = vsel %vm1283, 0, %v1282
  %v1285 = vsub.s32 32, %v1284
  %v1286 = vshll.u32 %v1277, %v1284
  %v1287 = vshrl.u32 %v1269, %v1285
  %v1288 = vor.u32 %v1286, %v1287
  %v1289 = vsub.s32 4294967266, %v1284
  %v1290 = vadd.s32 %v1289, 127
  %v1291 = vshll.u32 %v1290, 23
  %v1292 = vor.u32 4788187, %v1291
  %v1293 = vand.u32 2147483647, %v1292
  %v1295 = vcvt.s32.f32 %v1288
  %v1296 = vmul.f32 %v1295, %v1293
  %v1297 = vxor.u32 %v1296, 2147483648
  %v1298 = vsel %vm1215, %v1297, %v1296
  %v1299 = vsub.s32 4, %v1275
  %v1300 = vsel %vm1215, %v1299, %v1275
  %v1301 = vsel %vm1214, %v1212, %v1298
  %v1302 = vsel %vm1214, 0, %v1300
  %v1303 = vcosq.f32.pop %v1301
  %v1304 = vsinq.f32.pop %v1301
  %vm1305 = vweird.f32 %v1212
  %v1306 = vadd.s32 %v1302, 3
  %v1307 = vand.u32 %v1306, 3
  %vm1308 = vcmp.lt.s32.totalorder %v1307, 2
  %vm1309 = vcmp.eq.s32.totalorder %v1307, 0
  %v1310 = vxor.u32 %v1304, 2147483648
  %v1311 = vsel %vm1309, %v1303, %v1310
  %vm1312 = vcmp.eq.s32.totalorder %v1307, 2
  %v1313 = vxor.u32 %v1303, 2147483648
  %v1314 = vsel %vm1312, %v1313, %v1304
  %v1315 = vsel %vm1308, %v1311, %v1314
  %v1316 = vsel %vm1305, nan, %v1315
  %v1317 = vand.u32 2147483647, %v1212
  %vm1318 = vcmp.le.f32.partialorder %v1317, 0.7853982
  %vm1319 = vcmp.lt.s32.totalorder %v1212, 0
  %v1320 = vand.u32 %v1212, 2139095040
  %v1321 = vshrl.u32 %v1320, 23
  %v1322 = vsub.s32 %v1321, 127
  %v1323 = vand.u32 2147483647, %v1212
  %v1324 = vand.u32 %v1323, 8388607
  %v1325 = vor.u32 %v1324, 8388608
  %v1326 = vsub.s32 0, %v1325
  %v1327 = vadd.s32 %v1322, 1
  %vm1328 = vcmp.gt.s32.totalorder %v1327, 0
  %v1329 = vsel %vm1328, %v1327, 0
  %v1330 = vshrl.u32 %v1329, 5
  %v1331 = vand.u32 %v1329, 31
  %v1332 = vsub.s32 32, %v1331
  %v1333 = vshrl.u32 683565275, %v1332
  %v1334 = vshll.u32 683565275, %v1331
  %v1335 = vshrl.u32 2475754826, %v1332
  %v1336 = vor.u32 %v1334, %v1335
  %v1337 = vshll.u32 2475754826, %v1331
  %v1338 = vshrl.u32 2131351028, %v1332
  %v1339 = vor.u32 %v1337, %v1338
  %v1340 = vshll.u32 2131351028, %v1331
  %v1341 = vshrl.u32 2102212464, %v1332
  %v1342 = vor.u32 %v1340, %v1341
  %v1343 = vshll.u32 2102212464, %v1331
  %v1344 = vshrl.u32 920167782, %v1332
  %v1345 = vor.u32 %v1343, %v1344
  %v1346 = vshll.u32 920167782, %v1331
  %v1347 = vshrl.u32 1326507024, %v1332
  %v1348 = vor.u32 %v1346, %v1347
  %vm1349 = vcmp.lt.s32.totalorder %v1330, 1
  %vm1350 = vcmp.lt.s32.totalorder %v1330, 2
  %vm1351 = vcmp.lt.s32.totalorder %v1330, 3
  %vm1352 = vcmp.lt.s32.totalorder %v1330, 4
  %v1353 = vsel %vm1349, %v1333, %v1336
  %v1354 = vsel %vm1352, %v1342, 2102212464
  %v1355 = vsel %vm1351, %v1339, %v1354
  %v1356 = vsel %vm1350, %v1353, %v1355
  %v1357 = vsel %vm1349, %v1336, %v1339
  %v1358 = vsel %vm1352, %v1345, 920167782
  %v1359 = vsel %vm1351, %v1342, %v1358
  %v1360 = vsel %vm1350, %v1357, %v1359
  %v1361 = vsel %vm1349, %v1339, %v1342
  %v1362 = vsel %vm1352, %v1348, 1326507024
  %v1363 = vsel %vm1351, %v1345, %v1362
  %v1364 = vsel %vm1350, %v1361, %v1363
  %v1365 = vshll.u32 %v1325, 8
  %v1366 = vmul.u32.u64.compose %v1365, %v1364
  %v1367 = vextract.low.u32 %v1366
  %v1368 = vextract.high.u32 %v1366
  %v1369 = vmul.u32.u64.compose %v1365, %v1360
  %v1370 = vextract.low.u32 %v1369
  %v1371 = vextract.high.u32 %v1369
  %v1372 = vmul.u32 %v1365, %v1356
  %v1373 = vadd.s32 %v1368, %v1370
  %vm1374 = vc.u32 %v1368, %v1370
  %v1375 = vadd.s32 %v1371, 1
  %v1376 = vsel %vm1374, %v1375, %v1371
  %v1377 = vadd.s32 %v1372, %v1376
  %v1378 = vadd.s32 %v1377, 536870912
  %v1379 = vshrl.u32 %v1378, 30
  %v1380 = vshll.u32 %v1379, 30
  %v1381 = vsub.s32 %v1377, %v1380
  %vm1382 = vcmp.lt.s32.totalorder %v1381, 0
  %v1383 = vsub.s32 0, %v1381
  %v1384 = vsel %vm1382, %v1383, %v1381
  %v1385 = vclz %v1384
  %v1386 = vsub.s32 %v1385, 2
  %vm1387 = vcmp.gt.s32.totalorder 0, %v1386
  %v1388 = vsel %vm1387, 0, %v1386
  %v1389 = vsub.s32 32, %v1388
  %v1390 = vshll.u32 %v1381, %v1388
  %v1391 = vshrl.u32 %v1373, %v1389
  %v1392 = vor.u32 %v1390, %v1391
  %v1393 = vsub.s32 4294967266, %v1388
  %v1394 = vadd.s32 %v1393, 127
  %v1395 = vshll.u32 %v1394, 23
  %v1396 = vor.u32 4788187, %v1395
  %v1397 = vand.u32 2147483647, %v1396
  %v1399 = vcvt.s32.f32 %v1392
  %v1400 = vmul.f32 %v1399, %v1397
  %v1401 = vxor.u32 %v1400, 2147483648
  %v1402 = vsel %vm1319, %v1401, %v1400
  %v1403 = vsub.s32 4, %v1379
  %v1404 = vsel %vm1319, %v1403, %v1379
  %v1405 = vsel %vm1318, %v1212, %v1402
  %v1406 = vsel %vm1318, 0, %v1404
  %v1407 = vcosq.f32.pop %v1405
  %v1408 = vsinq.f32.pop %v1405
  %vm1409 = vweird.f32 %v1212
  %v1410 = vand.u32 %v1406, 3
  %vm1411 = vcmp.lt.s32.totalorder %v1410, 2
  %vm1412 = vcmp.eq.s32.totalorder %v1410, 0
  %v1413 = vxor.u32 %v1408, 2147483648
  %v1414 = vsel %vm1412, %v1407, %v1413
  %vm1415 = vcmp.eq.s32.totalorder %v1410, 2
  %v1416 = vxor.u32 %v1407, 2147483648
  %v1417 = vsel %vm1415, %v1416, %v1408
  %v1418 = vsel %vm1411, %v1414, %v1417
  %v1419 = vsel %vm1409, nan, %v1418
  %v1420 = vmul.f32 %v1202, 92.6
  %v1421 = vmul.f32 %v1420, %v752
  %v1422 = vand.u32 2147483647, %v1421
  %vm1423 = vcmp.le.f32.partialorder %v1422, 0.7853982
  %vm1424 = vcmp.lt.s32.totalorder %v1421, 0
  %v1425 = vand.u32 %v1421, 2139095040
  %v1426 = vshrl.u32 %v1425, 23
  %v1427 = vsub.s32 %v1426, 127
  %v1428 = vand.u32 2147483647, %v1421
  %v1429 = vand.u32 %v1428, 8388607
  %v1430 = vor.u32 %v1429, 8388608
  %v1431 = vsub.s32 0, %v1430
  %v1432 = vadd.s32 %v1427, 1
  %vm1433 = vcmp.gt.s32.totalorder %v1432, 0
  %v1434 = vsel %vm1433, %v1432, 0
  %v1435 = vshrl.u32 %v1434, 5
  %v1436 = vand.u32 %v1434, 31
  %v1437 = vsub.s32 32, %v1436
  %v1438 = vshrl.u32 683565275, %v1437
  %v1439 = vshll.u32 683565275, %v1436
  %v1440 = vshrl.u32 2475754826, %v1437
  %v1441 = vor.u32 %v1439, %v1440
  %v1442 = vshll.u32 2475754826, %v1436
  %v1443 = vshrl.u32 2131351028, %v1437
  %v1444 = vor.u32 %v1442, %v1443
  %v1445 = vshll.u32 2131351028, %v1436
  %v1446 = vshrl.u32 2102212464, %v1437
  %v1447 = vor.u32 %v1445, %v1446
  %v1448 = vshll.u32 2102212464, %v1436
  %v1449 = vshrl.u32 920167782, %v1437
  %v1450 = vor.u32 %v1448, %v1449
  %v1451 = vshll.u32 920167782, %v1436
  %v1452 = vshrl.u32 1326507024, %v1437
  %v1453 = vor.u32 %v1451, %v1452
  %vm1454 = vcmp.lt.s32.totalorder %v1435, 1
  %vm1455 = vcmp.lt.s32.totalorder %v1435, 2
  %vm1456 = vcmp.lt.s32.totalorder %v1435, 3
  %vm1457 = vcmp.lt.s32.totalorder %v1435, 4
  %v1458 = vsel %vm1454, %v1438, %v1441
  %v1459 = vsel %vm1457, %v1447, 2102212464
  %v1460 = vsel %vm1456, %v1444, %v1459
  %v1461 = vsel %vm1455, %v1458, %v1460
  %v1462 = vsel %vm1454, %v1441, %v1444
  %v1463 = vsel %vm1457, %v1450, 920167782
  %v1464 = vsel %vm1456, %v1447, %v1463
  %v1465 = vsel %vm1455, %v1462, %v1464
  %v1466 = vsel %vm1454, %v1444, %v1447
  %v1467 = vsel %vm1457, %v1453, 1326507024
  %v1468 = vsel %vm1456, %v1450, %v1467
  %v1469 = vsel %vm1455, %v1466, %v1468
  %v1470 = vshll.u32 %v1430, 8
  %v1471 = vmul.u32.u64.compose %v1470, %v1469
  %v1472 = vextract.low.u32 %v1471
  %v1473 = vextract.high.u32 %v1471
  %v1474 = vmul.u32.u64.compose %v1470, %v1465
  %v1475 = vextract.low.u32 %v1474
  %v1476 = vextract.high.u32 %v1474
  %v1477 = vmul.u32 %v1470, %v1461
  %v1478 = vadd.s32 %v1473, %v1475
  %vm1479 = vc.u32 %v1473, %v1475
  %v1480 = vadd.s32 %v1476, 1
  %v1481 = vsel %vm1479, %v1480, %v1476
  %v1482 = vadd.s32 %v1477, %v1481
  %v1483 = vadd.s32 %v1482, 536870912
  %v1484 = vshrl.u32 %v1483, 30
  %v1485 = vshll.u32 %v1484, 30
  %v1486 = vsub.s32 %v1482, %v1485
  %vm1487 = vcmp.lt.s32.totalorder %v1486, 0
  %v1488 = vsub.s32 0, %v1486
  %v1489 = vsel %vm1487, %v1488, %v1486
  %v1490 = vclz %v1489
  %v1491 = vsub.s32 %v1490, 2
  %vm1492 = vcmp.gt.s32.totalorder 0, %v1491
  %v1493 = vsel %vm1492, 0, %v1491
  %v1494 = vsub.s32 32, %v1493
  %v1495 = vshll.u32 %v1486, %v1493
  %v1496 = vshrl.u32 %v1478, %v1494
  %v1497 = vor.u32 %v1495, %v1496
  %v1498 = vsub.s32 4294967266, %v1493
  %v1499 = vadd.s32 %v1498, 127
  %v1500 = vshll.u32 %v1499, 23
  %v1501 = vor.u32 4788187, %v1500
  %v1502 = vand.u32 2147483647, %v1501
  %v1504 = vcvt.s32.f32 %v1497
  %v1505 = vmul.f32 %v1504, %v1502
  %v1506 = vxor.u32 %v1505, 2147483648
  %v1507 = vsel %vm1424, %v1506, %v1505
  %v1508 = vsub.s32 4, %v1484
  %v1509 = vsel %vm1424, %v1508, %v1484
  %v1510 = vsel %vm1423, %v1421, %v1507
  %v1511 = vsel %vm1423, 0, %v1509
  %v1512 = vcosq.f32.pop %v1510
  %v1513 = vsinq.f32.pop %v1510
  %vm1514 = vweird.f32 %v1421
  %v1515 = vadd.s32 %v1511, 3
  %v1516 = vand.u32 %v1515, 3
  %vm1517 = vcmp.lt.s32.totalorder %v1516, 2
  %vm1518 = vcmp.eq.s32.totalorder %v1516, 0
  %v1519 = vxor.u32 %v1513, 2147483648
  %v1520 = vsel %vm1518, %v1512, %v1519
  %vm1521 = vcmp.eq.s32.totalorder %v1516, 2
  %v1522 = vxor.u32 %v1512, 2147483648
  %v1523 = vsel %vm1521, %v1522, %v1513
  %v1524 = vsel %vm1517, %v1520, %v1523
  %v1525 = vsel %vm1514, nan, %v1524
  %v1526 = vand.u32 2147483647, %v1421
  %vm1527 = vcmp.le.f32.partialorder %v1526, 0.7853982
  %vm1528 = vcmp.lt.s32.totalorder %v1421, 0
  %v1529 = vand.u32 %v1421, 2139095040
  %v1530 = vshrl.u32 %v1529, 23
  %v1531 = vsub.s32 %v1530, 127
  %v1532 = vand.u32 2147483647, %v1421
  %v1533 = vand.u32 %v1532, 8388607
  %v1534 = vor.u32 %v1533, 8388608
  %v1535 = vsub.s32 0, %v1534
  %v1536 = vadd.s32 %v1531, 1
  %vm1537 = vcmp.gt.s32.totalorder %v1536, 0
  %v1538 = vsel %vm1537, %v1536, 0
  %v1539 = vshrl.u32 %v1538, 5
  %v1540 = vand.u32 %v1538, 31
  %v1541 = vsub.s32 32, %v1540
  %v1542 = vshrl.u32 683565275, %v1541
  %v1543 = vshll.u32 683565275, %v1540
  %v1544 = vshrl.u32 2475754826, %v1541
  %v1545 = vor.u32 %v1543, %v1544
  %v1546 = vshll.u32 2475754826, %v1540
  %v1547 = vshrl.u32 2131351028, %v1541
  %v1548 = vor.u32 %v1546, %v1547
  %v1549 = vshll.u32 2131351028, %v1540
  %v1550 = vshrl.u32 2102212464, %v1541
  %v1551 = vor.u32 %v1549, %v1550
  %v1552 = vshll.u32 2102212464, %v1540
  %v1553 = vshrl.u32 920167782, %v1541
  %v1554 = vor.u32 %v1552, %v1553
  %v1555 = vshll.u32 920167782, %v1540
  %v1556 = vshrl.u32 1326507024, %v1541
  %v1557 = vor.u32 %v1555, %v1556
  %vm1558 = vcmp.lt.s32.totalorder %v1539, 1
  %vm1559 = vcmp.lt.s32.totalorder %v1539, 2
  %vm1560 = vcmp.lt.s32.totalorder %v1539, 3
  %vm1561 = vcmp.lt.s32.totalorder %v1539, 4
  %v1562 = vsel %vm1558, %v1542, %v1545
  %v1563 = vsel %vm1561, %v1551, 2102212464
  %v1564 = vsel %vm1560, %v1548, %v1563
  %v1565 = vsel %vm1559, %v1562, %v1564
  %v1566 = vsel %vm1558, %v1545, %v1548
  %v1567 = vsel %vm1561, %v1554, 920167782
  %v1568 = vsel %vm1560, %v1551, %v1567
  %v1569 = vsel %vm1559, %v1566, %v1568
  %v1570 = vsel %vm1558, %v1548, %v1551
  %v1571 = vsel %vm1561, %v1557, 1326507024
  %v1572 = vsel %vm1560, %v1554, %v1571
  %v1573 = vsel %vm1559, %v1570, %v1572
  %v1574 = vshll.u32 %v1534, 8
  %v1575 = vmul.u32.u64.compose %v1574, %v1573
  %v1576 = vextract.low.u32 %v1575
  %v1577 = vextract.high.u32 %v1575
  %v1578 = vmul.u32.u64.compose %v1574, %v1569
  %v1579 = vextract.low.u32 %v1578
  %v1580 = vextract.high.u32 %v1578
  %v1581 = vmul.u32 %v1574, %v1565
  %v1582 = vadd.s32 %v1577, %v1579
  %vm1583 = vc.u32 %v1577, %v1579
  %v1584 = vadd.s32 %v1580, 1
  %v1585 = vsel %vm1583, %v1584, %v1580
  %v1586 = vadd.s32 %v1581, %v1585
  %v1587 = vadd.s32 %v1586, 536870912
  %v1588 = vshrl.u32 %v1587, 30
  %v1589 = vshll.u32 %v1588, 30
  %v1590 = vsub.s32 %v1586, %v1589
  %vm1591 = vcmp.lt.s32.totalorder %v1590, 0
  %v1592 = vsub.s32 0, %v1590
  %v1593 = vsel %vm1591, %v1592, %v1590
  %v1594 = vclz %v1593
  %v1595 = vsub.s32 %v1594, 2
  %vm1596 = vcmp.gt.s32.totalorder 0, %v1595
  %v1597 = vsel %vm1596, 0, %v1595
  %v1598 = vsub.s32 32, %v1597
  %v1599 = vshll.u32 %v1590, %v1597
  %v1600 = vshrl.u32 %v1582, %v1598
  %v1601 = vor.u32 %v1599, %v1600
  %v1602 = vsub.s32 4294967266, %v1597
  %v1603 = vadd.s32 %v1602, 127
  %v1604 = vshll.u32 %v1603, 23
  %v1605 = vor.u32 4788187, %v1604
  %v1606 = vand.u32 2147483647, %v1605
  %v1608 = vcvt.s32.f32 %v1601
  %v1609 = vmul.f32 %v1608, %v1606
  %v1610 = vxor.u32 %v1609, 2147483648
  %v1611 = vsel %vm1528, %v1610, %v1609
  %v1612 = vsub.s32 4, %v1588
  %v1613 = vsel %vm1528, %v1612, %v1588
  %v1614 = vsel %vm1527, %v1421, %v1611
  %v1615 = vsel %vm1527, 0, %v1613
  %v1616 = vcosq.f32.pop %v1614
  %v1617 = vsinq.f32.pop %v1614
  %vm1618 = vweird.f32 %v1421
  %v1619 = vand.u32 %v1615, 3
  %vm1620 = vcmp.lt.s32.totalorder %v1619, 2
  %vm1621 = vcmp.eq.s32.totalorder %v1619, 0
  %v1622 = vxor.u32 %v1617, 2147483648
  %v1623 = vsel %vm1621, %v1616, %v1622
  %vm1624 = vcmp.eq.s32.totalorder %v1619, 2
  %v1625 = vxor.u32 %v1616, 2147483648
  %v1626 = vsel %vm1624, %v1625, %v1617
  %v1627 = vsel %vm1620, %v1623, %v1626
  %v1628 = vsel %vm1618, nan, %v1627
  %v1629 = vmul.f32 %v676, %v1628
  %v1630 = vmul.f32 %v686, %v1525
  %v1631 = vmul.f32 %v1630, %v1419
  %v1632 = vadd.f32 %v1629, %v1631
  %v1633 = vmul.f32 %v1632, %v1632
  %v1634 = vsub.f32 1.0, %v1633
  %v1635 = vmax.f32 %v1634, 0.0
  %v1636 = vrsqrt.pop %v1635
  %v1637 = vmul.f32 %v1635, %v1636
  %vm1638 = vcmp.eq.f32.partialorder %v1635, inf
  %v1639 = vsel %vm1638, %v1635, %v1637
  %vm1640 = vcmp.eq.f32.partialorder %v1635, 0.0
  %v1641 = vand.u32 %v1635, 2147483648
  %v1642 = vsel %vm1640, %v1641, %v1639
  %v1643 = vmul.f32 %v1316, %v1525
  %v1644 = vmul.f32 %v1643, %v686
  %v1645 = vmul.f32 %v676, %v1632
  %v1646 = vsub.f32 %v1628, %v1645
  %v1647 = vand.u32 2147483647, %v1646
  %v1648 = vand.u32 2147483647, %v1644
  %v1649 = vmin.f32 %v1647, %v1648
  %v1650 = vmax.f32 %v1647, %v1648
  %v1651 = vrcp.pop %v1650
  %v1652 = vmul.f32 %v1649, %v1651
  %v1653 = vmul.f32 %v1652, %v1652
  %v1654 = vmul.f32 0.002785687, %v1653
  %v1655 = vadd.f32 %v1654, -0.015866
  %v1656 = vmul.f32 %v1655, %v1653
  %v1657 = vadd.f32 %v1656, 0.04247222
  %v1658 = vmul.f32 %v1657, %v1653
  %v1659 = vadd.f32 %v1658, -0.074975304
  %v1660 = vmul.f32 %v1659, %v1653
  %v1661 = vadd.f32 %v1660, 0.1064488
  %v1662 = vmul.f32 %v1661, %v1653
  %v1663 = vadd.f32 %v1662, -0.14207031
  %v1664 = vmul.f32 %v1663, %v1653
  %v1665 = vadd.f32 %v1664, 0.19993454
  %v1666 = vmul.f32 %v1665, %v1653
  %v1667 = vadd.f32 %v1666, -0.33333147
  %v1668 = vmul.f32 %v1667, %v1653
  %v1669 = vmul.f32 %v1668, %v1652
  %v1670 = vadd.f32 %v1669, %v1652
  %vm1671 = vcmp.gt.f32.partialorder %v1648, %v1647
  %v1672 = vsub.f32 1.5707964, %v1670
  %v1673 = vsel %vm1671, %v1672, %v1670
  %vm1674 = vcmp.lt.f32.partialorder %v1646, 0.0
  %v1675 = vsub.f32 3.1415927, %v1673
  %v1676 = vsel %vm1674, %v1675, %v1673
  %vm1677 = vcmp.lt.s32.totalorder %v1646, 0
  %v1678 = vsel %vm1677, 3.1415927, 0.0
  %vm1679 = vcmp.eq.f32.partialorder %v1644, 0.0
  %v1680 = vsel %vm1679, %v1678, %v1676
  %vm1681 = vcmp.ne.f32.partialorder %v1646, %v1646
  %vm1682 = vcmp.ne.f32.partialorder %v1644, %v1644
  %vm1683 = vmor %vm1681, %vm1682
  %v1684 = vsel %vm1683, nan, %v1680
  %vm1685 = vcmp.lt.f32.partialorder %v1646, 0.0
  %v1686 = vsel %vm1685, 2.3561945, 0.7853982
  %vm1687 = vcmp.eq.s32.totalorder %v1647, inf
  %vm1688 = vcmp.eq.s32.totalorder %v1648, inf
  %vm1689 = vmand %vm1687, %vm1688
  %v1690 = vsel %vm1689, %v1686, %v1684
  %v1691 = vand.u32 2147483647, %v1690
  %v1692 = vand.u32 %v1644, 2147483648
  %v1693 = vor.u32 %v1691, %v1692
  %v1694 = vadd.f32 %v738, %v1693
  %v1695 = vmul.f32 %v1642, 4.068063e+13
  %v1696 = vmul.f32 %v1632, 4.04083e+13
  %v1697 = vmul.f32 %v1642, 6378137.0
  %v1698 = vmul.f32 %v1632, 6356752.5
  %v1699 = vmul.f32 %v1695, %v1695
  %v1700 = vmul.f32 %v1696, %v1696
  %v1701 = vadd.f32 %v1699, %v1700
  %v1702 = vmul.f32 %v1697, %v1697
  %v1703 = vmul.f32 %v1698, %v1698
  %v1704 = vadd.f32 %v1702, %v1703
  %v1705 = vrcp.pop %v1704
  %v1706 = vmul.f32 %v1701, %v1705
  %v1707 = vadd.f32 %v1706, 1e-10
  %v1708 = vrsqrt.pop %v1707
  %v1709 = vmul.f32 %v1707, %v1708
  %v1710 = vmul.f32 %v1709, 0.001
  %v1711 = vand.u32 2147483647, %v1642
  %v1712 = vand.u32 2147483647, %v1632
  %v1713 = vmin.f32 %v1711, %v1712
  %v1714 = vmax.f32 %v1711, %v1712
  %v1715 = vrcp.pop %v1714
  %v1716 = vmul.f32 %v1713, %v1715
  %v1717 = vmul.f32 %v1716, %v1716
  %v1718 = vmul.f32 0.002785687, %v1717
  %v1719 = vadd.f32 %v1718, -0.015866
  %v1720 = vmul.f32 %v1719, %v1717
  %v1721 = vadd.f32 %v1720, 0.04247222
  %v1722 = vmul.f32 %v1721, %v1717
  %v1723 = vadd.f32 %v1722, -0.074975304
  %v1724 = vmul.f32 %v1723, %v1717
  %v1725 = vadd.f32 %v1724, 0.1064488
  %v1726 = vmul.f32 %v1725, %v1717
  %v1727 = vadd.f32 %v1726, -0.14207031
  %v1728 = vmul.f32 %v1727, %v1717
  %v1729 = vadd.f32 %v1728, 0.19993454
  %v1730 = vmul.f32 %v1729, %v1717
  %v1731 = vadd.f32 %v1730, -0.33333147
  %v1732 = vmul.f32 %v1731, %v1717
  %v1733 = vmul.f32 %v1732, %v1716
  %v1734 = vadd.f32 %v1733, %v1716
  %vm1735 = vcmp.gt.f32.partialorder %v1712, %v1711
  %v1736 = vsub.f32 1.5707964, %v1734
  %v1737 = vsel %vm1735, %v1736, %v1734
  %vm1738 = vcmp.lt.f32.partialorder %v1642, 0.0
  %v1739 = vsub.f32 3.1415927, %v1737
  %v1740 = vsel %vm1738, %v1739, %v1737
  %vm1741 = vcmp.lt.s32.totalorder %v1642, 0
  %v1742 = vsel %vm1741, 3.1415927, 0.0
  %vm1743 = vcmp.eq.f32.partialorder %v1632, 0.0
  %v1744 = vsel %vm1743, %v1742, %v1740
  %vm1745 = vcmp.ne.f32.partialorder %v1642, %v1642
  %vm1746 = vcmp.ne.f32.partialorder %v1632, %v1632
  %vm1747 = vmor %vm1745, %vm1746
  %v1748 = vsel %vm1747, nan, %v1744
  %vm1749 = vcmp.lt.f32.partialorder %v1642, 0.0
  %v1750 = vsel %vm1749, 2.3561945, 0.7853982
  %vm1751 = vcmp.eq.s32.totalorder %v1711, inf
  %vm1752 = vcmp.eq.s32.totalorder %v1712, inf
  %vm1753 = vmand %vm1751, %vm1752
  %v1754 = vsel %vm1753, %v1750, %v1748
  %v1755 = vand.u32 2147483647, %v1754
  %v1756 = vand.u32 %v1632, 2147483648
  %v1757 = vor.u32 %v1755, %v1756
  %v1758 = vmul.f32 %v1694, 57.29578
  %s1759 = scalar_lea.vmem %s4, 1
  %1760 = vst [vmem:[%s1759] sm:$0x1] %v1758
  %v1761 = vmul.f32 %v1757, 57.29578
  %s1762 = scalar_lea.vmem %s805, 1
  %1763 = vst [vmem:[%s1762] sm:$0x1] %v1761
  %s1764 = scalar_lea.vmem %s16, 2
  %v1765 = vld [vmem:[%s1764] sm:$0x1]
  %s1766 = scalar_lea.vmem %s1, 2
  %v1767 = vld [vmem:[%s1766] sm:$0x1]
  %v1768 = vmul.f32 %v1765, 0.017453292
  %v1769 = vsub.f32 %v1768, %v1757
  %v1770 = vmul.f32 %v1767, 0.017453292
  %v1771 = vsub.f32 %v1770, %v1694
  %v1772 = vmul.f32 %v1769, 0.5
  %v1773 = vand.u32 2147483647, %v1772
  %vm1774 = vcmp.le.f32.partialorder %v1773, 0.7853982
  %vm1775 = vcmp.lt.s32.totalorder %v1772, 0
  %v1776 = vand.u32 %v1772, 2139095040
  %v1777 = vshrl.u32 %v1776, 23
  %v1778 = vsub.s32 %v1777, 127
  %v1779 = vand.u32 2147483647, %v1772
  %v1780 = vand.u32 %v1779, 8388607
  %v1781 = vor.u32 %v1780, 8388608
  %v1782 = vsub.s32 0, %v1781
  %v1783 = vadd.s32 %v1778, 1
  %vm1784 = vcmp.gt.s32.totalorder %v1783, 0
  %v1785 = vsel %vm1784, %v1783, 0
  %v1786 = vshrl.u32 %v1785, 5
  %v1787 = vand.u32 %v1785, 31
  %v1788 = vsub.s32 32, %v1787
  %v1789 = vshrl.u32 683565275, %v1788
  %v1790 = vshll.u32 683565275, %v1787
  %v1791 = vshrl.u32 2475754826, %v1788
  %v1792 = vor.u32 %v1790, %v1791
  %v1793 = vshll.u32 2475754826, %v1787
  %v1794 = vshrl.u32 2131351028, %v1788
  %v1795 = vor.u32 %v1793, %v1794
  %v1796 = vshll.u32 2131351028, %v1787
  %v1797 = vshrl.u32 2102212464, %v1788
  %v1798 = vor.u32 %v1796, %v1797
  %v1799 = vshll.u32 2102212464, %v1787
  %v1800 = vshrl.u32 920167782, %v1788
  %v1801 = vor.u32 %v1799, %v1800
  %v1802 = vshll.u32 920167782, %v1787
  %v1803 = vshrl.u32 1326507024, %v1788
  %v1804 = vor.u32 %v1802, %v1803
  %vm1805 = vcmp.lt.s32.totalorder %v1786, 1
  %vm1806 = vcmp.lt.s32.totalorder %v1786, 2
  %vm1807 = vcmp.lt.s32.totalorder %v1786, 3
  %vm1808 = vcmp.lt.s32.totalorder %v1786, 4
  %v1809 = vsel %vm1805, %v1789, %v1792
  %v1810 = vsel %vm1808, %v1798, 2102212464
  %v1811 = vsel %vm1807, %v1795, %v1810
  %v1812 = vsel %vm1806, %v1809, %v1811
  %v1813 = vsel %vm1805, %v1792, %v1795
  %v1814 = vsel %vm1808, %v1801, 920167782
  %v1815 = vsel %vm1807, %v1798, %v1814
  %v1816 = vsel %vm1806, %v1813, %v1815
  %v1817 = vsel %vm1805, %v1795, %v1798
  %v1818 = vsel %vm1808, %v1804, 1326507024
  %v1819 = vsel %vm1807, %v1801, %v1818
  %v1820 = vsel %vm1806, %v1817, %v1819
  %v1821 = vshll.u32 %v1781, 8
  %v1822 = vmul.u32.u64.compose %v1821, %v1820
  %v1823 = vextract.low.u32 %v1822
  %v1824 = vextract.high.u32 %v1822
  %v1825 = vmul.u32.u64.compose %v1821, %v1816
  %v1826 = vextract.low.u32 %v1825
  %v1827 = vextract.high.u32 %v1825
  %v1828 = vmul.u32 %v1821, %v1812
  %v1829 = vadd.s32 %v1824, %v1826
  %vm1830 = vc.u32 %v1824, %v1826
  %v1831 = vadd.s32 %v1827, 1
  %v1832 = vsel %vm1830, %v1831, %v1827
  %v1833 = vadd.s32 %v1828, %v1832
  %v1834 = vadd.s32 %v1833, 536870912
  %v1835 = vshrl.u32 %v1834, 30
  %v1836 = vshll.u32 %v1835, 30
  %v1837 = vsub.s32 %v1833, %v1836
  %vm1838 = vcmp.lt.s32.totalorder %v1837, 0
  %v1839 = vsub.s32 0, %v1837
  %v1840 = vsel %vm1838, %v1839, %v1837
  %v1841 = vclz %v1840
  %v1842 = vsub.s32 %v1841, 2
  %vm1843 = vcmp.gt.s32.totalorder 0, %v1842
  %v1844 = vsel %vm1843, 0, %v1842
  %v1845 = vsub.s32 32, %v1844
  %v1846 = vshll.u32 %v1837, %v1844
  %v1847 = vshrl.u32 %v1829, %v1845
  %v1848 = vor.u32 %v1846, %v1847
  %v1849 = vsub.s32 4294967266, %v1844
  %v1850 = vadd.s32 %v1849, 127
  %v1851 = vshll.u32 %v1850, 23
  %v1852 = vor.u32 4788187, %v1851
  %v1853 = vand.u32 2147483647, %v1852
  %v1855 = vcvt.s32.f32 %v1848
  %v1856 = vmul.f32 %v1855, %v1853
  %v1857 = vxor.u32 %v1856, 2147483648
  %v1858 = vsel %vm1775, %v1857, %v1856
  %v1859 = vsub.s32 4, %v1835
  %v1860 = vsel %vm1775, %v1859, %v1835
  %v1861 = vsel %vm1774, %v1772, %v1858
  %v1862 = vsel %vm1774, 0, %v1860
  %v1863 = vcosq.f32.pop %v1861
  %v1864 = vsinq.f32.pop %v1861
  %vm1865 = vweird.f32 %v1772
  %v1866 = vadd.s32 %v1862, 3
  %v1867 = vand.u32 %v1866, 3
  %vm1868 = vcmp.lt.s32.totalorder %v1867, 2
  %vm1869 = vcmp.eq.s32.totalorder %v1867, 0
  %v1870 = vxor.u32 %v1864, 2147483648
  %v1871 = vsel %vm1869, %v1863, %v1870
  %vm1872 = vcmp.eq.s32.totalorder %v1867, 2
  %v1873 = vxor.u32 %v1863, 2147483648
  %v1874 = vsel %vm1872, %v1873, %v1864
  %v1875 = vsel %vm1868, %v1871, %v1874
  %v1876 = vsel %vm1865, nan, %v1875
  %v1877 = vmul.f32 %v1771, 0.5
  %v1878 = vand.u32 2147483647, %v1877
  %vm1879 = vcmp.le.f32.partialorder %v1878, 0.7853982
  %vm1880 = vcmp.lt.s32.totalorder %v1877, 0
  %v1881 = vand.u32 %v1877, 2139095040
  %v1882 = vshrl.u32 %v1881, 23
  %v1883 = vsub.s32 %v1882, 127
  %v1884 = vand.u32 2147483647, %v1877
  %v1885 = vand.u32 %v1884, 8388607
  %v1886 = vor.u32 %v1885, 8388608
  %v1887 = vsub.s32 0, %v1886
  %v1888 = vadd.s32 %v1883, 1
  %vm1889 = vcmp.gt.s32.totalorder %v1888, 0
  %v1890 = vsel %vm1889, %v1888, 0
  %v1891 = vshrl.u32 %v1890, 5
  %v1892 = vand.u32 %v1890, 31
  %v1893 = vsub.s32 32, %v1892
  %v1894 = vshrl.u32 683565275, %v1893
  %v1895 = vshll.u32 683565275, %v1892
  %v1896 = vshrl.u32 2475754826, %v1893
  %v1897 = vor.u32 %v1895, %v1896
  %v1898 = vshll.u32 2475754826, %v1892
  %v1899 = vshrl.u32 2131351028, %v1893
  %v1900 = vor.u32 %v1898, %v1899
  %v1901 = vshll.u32 2131351028, %v1892
  %v1902 = vshrl.u32 2102212464, %v1893
  %v1903 = vor.u32 %v1901, %v1902
  %v1904 = vshll.u32 2102212464, %v1892
  %v1905 = vshrl.u32 920167782, %v1893
  %v1906 = vor.u32 %v1904, %v1905
  %v1907 = vshll.u32 920167782, %v1892
  %v1908 = vshrl.u32 1326507024, %v1893
  %v1909 = vor.u32 %v1907, %v1908
  %vm1910 = vcmp.lt.s32.totalorder %v1891, 1
  %vm1911 = vcmp.lt.s32.totalorder %v1891, 2
  %vm1912 = vcmp.lt.s32.totalorder %v1891, 3
  %vm1913 = vcmp.lt.s32.totalorder %v1891, 4
  %v1914 = vsel %vm1910, %v1894, %v1897
  %v1915 = vsel %vm1913, %v1903, 2102212464
  %v1916 = vsel %vm1912, %v1900, %v1915
  %v1917 = vsel %vm1911, %v1914, %v1916
  %v1918 = vsel %vm1910, %v1897, %v1900
  %v1919 = vsel %vm1913, %v1906, 920167782
  %v1920 = vsel %vm1912, %v1903, %v1919
  %v1921 = vsel %vm1911, %v1918, %v1920
  %v1922 = vsel %vm1910, %v1900, %v1903
  %v1923 = vsel %vm1913, %v1909, 1326507024
  %v1924 = vsel %vm1912, %v1906, %v1923
  %v1925 = vsel %vm1911, %v1922, %v1924
  %v1926 = vshll.u32 %v1886, 8
  %v1927 = vmul.u32.u64.compose %v1926, %v1925
  %v1928 = vextract.low.u32 %v1927
  %v1929 = vextract.high.u32 %v1927
  %v1930 = vmul.u32.u64.compose %v1926, %v1921
  %v1931 = vextract.low.u32 %v1930
  %v1932 = vextract.high.u32 %v1930
  %v1933 = vmul.u32 %v1926, %v1917
  %v1934 = vadd.s32 %v1929, %v1931
  %vm1935 = vc.u32 %v1929, %v1931
  %v1936 = vadd.s32 %v1932, 1
  %v1937 = vsel %vm1935, %v1936, %v1932
  %v1938 = vadd.s32 %v1933, %v1937
  %v1939 = vadd.s32 %v1938, 536870912
  %v1940 = vshrl.u32 %v1939, 30
  %v1941 = vshll.u32 %v1940, 30
  %v1942 = vsub.s32 %v1938, %v1941
  %vm1943 = vcmp.lt.s32.totalorder %v1942, 0
  %v1944 = vsub.s32 0, %v1942
  %v1945 = vsel %vm1943, %v1944, %v1942
  %v1946 = vclz %v1945
  %v1947 = vsub.s32 %v1946, 2
  %vm1948 = vcmp.gt.s32.totalorder 0, %v1947
  %v1949 = vsel %vm1948, 0, %v1947
  %v1950 = vsub.s32 32, %v1949
  %v1951 = vshll.u32 %v1942, %v1949
  %v1952 = vshrl.u32 %v1934, %v1950
  %v1953 = vor.u32 %v1951, %v1952
  %v1954 = vsub.s32 4294967266, %v1949
  %v1955 = vadd.s32 %v1954, 127
  %v1956 = vshll.u32 %v1955, 23
  %v1957 = vor.u32 4788187, %v1956
  %v1958 = vand.u32 2147483647, %v1957
  %v1960 = vcvt.s32.f32 %v1953
  %v1961 = vmul.f32 %v1960, %v1958
  %v1962 = vxor.u32 %v1961, 2147483648
  %v1963 = vsel %vm1880, %v1962, %v1961
  %v1964 = vsub.s32 4, %v1940
  %v1965 = vsel %vm1880, %v1964, %v1940
  %v1966 = vsel %vm1879, %v1877, %v1963
  %v1967 = vsel %vm1879, 0, %v1965
  %v1968 = vcosq.f32.pop %v1966
  %v1969 = vsinq.f32.pop %v1966
  %vm1970 = vweird.f32 %v1877
  %v1971 = vadd.s32 %v1967, 3
  %v1972 = vand.u32 %v1971, 3
  %vm1973 = vcmp.lt.s32.totalorder %v1972, 2
  %vm1974 = vcmp.eq.s32.totalorder %v1972, 0
  %v1975 = vxor.u32 %v1969, 2147483648
  %v1976 = vsel %vm1974, %v1968, %v1975
  %vm1977 = vcmp.eq.s32.totalorder %v1972, 2
  %v1978 = vxor.u32 %v1968, 2147483648
  %v1979 = vsel %vm1977, %v1978, %v1969
  %v1980 = vsel %vm1973, %v1976, %v1979
  %v1981 = vsel %vm1970, nan, %v1980
  %v1982 = vmul.f32 %v1876, %v1876
  %v1983 = vand.u32 2147483647, %v1768
  %vm1984 = vcmp.le.f32.partialorder %v1983, 0.7853982
  %vm1985 = vcmp.lt.s32.totalorder %v1768, 0
  %v1986 = vand.u32 %v1768, 2139095040
  %v1987 = vshrl.u32 %v1986, 23
  %v1988 = vsub.s32 %v1987, 127
  %v1989 = vand.u32 2147483647, %v1768
  %v1990 = vand.u32 %v1989, 8388607
  %v1991 = vor.u32 %v1990, 8388608
  %v1992 = vsub.s32 0, %v1991
  %v1993 = vadd.s32 %v1988, 1
  %vm1994 = vcmp.gt.s32.totalorder %v1993, 0
  %v1995 = vsel %vm1994, %v1993, 0
  %v1996 = vshrl.u32 %v1995, 5
  %v1997 = vand.u32 %v1995, 31
  %v1998 = vsub.s32 32, %v1997
  %v1999 = vshrl.u32 683565275, %v1998
  %v2000 = vshll.u32 683565275, %v1997
  %v2001 = vshrl.u32 2475754826, %v1998
  %v2002 = vor.u32 %v2000, %v2001
  %v2003 = vshll.u32 2475754826, %v1997
  %v2004 = vshrl.u32 2131351028, %v1998
  %v2005 = vor.u32 %v2003, %v2004
  %v2006 = vshll.u32 2131351028, %v1997
  %v2007 = vshrl.u32 2102212464, %v1998
  %v2008 = vor.u32 %v2006, %v2007
  %v2009 = vshll.u32 2102212464, %v1997
  %v2010 = vshrl.u32 920167782, %v1998
  %v2011 = vor.u32 %v2009, %v2010
  %v2012 = vshll.u32 920167782, %v1997
  %v2013 = vshrl.u32 1326507024, %v1998
  %v2014 = vor.u32 %v2012, %v2013
  %vm2015 = vcmp.lt.s32.totalorder %v1996, 1
  %vm2016 = vcmp.lt.s32.totalorder %v1996, 2
  %vm2017 = vcmp.lt.s32.totalorder %v1996, 3
  %vm2018 = vcmp.lt.s32.totalorder %v1996, 4
  %v2019 = vsel %vm2015, %v1999, %v2002
  %v2020 = vsel %vm2018, %v2008, 2102212464
  %v2021 = vsel %vm2017, %v2005, %v2020
  %v2022 = vsel %vm2016, %v2019, %v2021
  %v2023 = vsel %vm2015, %v2002, %v2005
  %v2024 = vsel %vm2018, %v2011, 920167782
  %v2025 = vsel %vm2017, %v2008, %v2024
  %v2026 = vsel %vm2016, %v2023, %v2025
  %v2027 = vsel %vm2015, %v2005, %v2008
  %v2028 = vsel %vm2018, %v2014, 1326507024
  %v2029 = vsel %vm2017, %v2011, %v2028
  %v2030 = vsel %vm2016, %v2027, %v2029
  %v2031 = vshll.u32 %v1991, 8
  %v2032 = vmul.u32.u64.compose %v2031, %v2030
  %v2033 = vextract.low.u32 %v2032
  %v2034 = vextract.high.u32 %v2032
  %v2035 = vmul.u32.u64.compose %v2031, %v2026
  %v2036 = vextract.low.u32 %v2035
  %v2037 = vextract.high.u32 %v2035
  %v2038 = vmul.u32 %v2031, %v2022
  %v2039 = vadd.s32 %v2034, %v2036
  %vm2040 = vc.u32 %v2034, %v2036
  %v2041 = vadd.s32 %v2037, 1
  %v2042 = vsel %vm2040, %v2041, %v2037
  %v2043 = vadd.s32 %v2038, %v2042
  %v2044 = vadd.s32 %v2043, 536870912
  %v2045 = vshrl.u32 %v2044, 30
  %v2046 = vshll.u32 %v2045, 30
  %v2047 = vsub.s32 %v2043, %v2046
  %vm2048 = vcmp.lt.s32.totalorder %v2047, 0
  %v2049 = vsub.s32 0, %v2047
  %v2050 = vsel %vm2048, %v2049, %v2047
  %v2051 = vclz %v2050
  %v2052 = vsub.s32 %v2051, 2
  %vm2053 = vcmp.gt.s32.totalorder 0, %v2052
  %v2054 = vsel %vm2053, 0, %v2052
  %v2055 = vsub.s32 32, %v2054
  %v2056 = vshll.u32 %v2047, %v2054
  %v2057 = vshrl.u32 %v2039, %v2055
  %v2058 = vor.u32 %v2056, %v2057
  %v2059 = vsub.s32 4294967266, %v2054
  %v2060 = vadd.s32 %v2059, 127
  %v2061 = vshll.u32 %v2060, 23
  %v2062 = vor.u32 4788187, %v2061
  %v2063 = vand.u32 2147483647, %v2062
  %v2065 = vcvt.s32.f32 %v2058
  %v2066 = vmul.f32 %v2065, %v2063
  %v2067 = vxor.u32 %v2066, 2147483648
  %v2068 = vsel %vm1985, %v2067, %v2066
  %v2069 = vsub.s32 4, %v2045
  %v2070 = vsel %vm1985, %v2069, %v2045
  %v2071 = vsel %vm1984, %v1768, %v2068
  %v2072 = vsel %vm1984, 0, %v2070
  %v2073 = vcosq.f32.pop %v2071
  %v2074 = vsinq.f32.pop %v2071
  %vm2075 = vweird.f32 %v1768
  %v2076 = vand.u32 %v2072, 3
  %vm2077 = vcmp.lt.s32.totalorder %v2076, 2
  %vm2078 = vcmp.eq.s32.totalorder %v2076, 0
  %v2079 = vxor.u32 %v2074, 2147483648
  %v2080 = vsel %vm2078, %v2073, %v2079
  %vm2081 = vcmp.eq.s32.totalorder %v2076, 2
  %v2082 = vxor.u32 %v2073, 2147483648
  %v2083 = vsel %vm2081, %v2082, %v2074
  %v2084 = vsel %vm2077, %v2080, %v2083
  %v2085 = vsel %vm2075, nan, %v2084
  %v2086 = vmul.f32 %v1642, %v2085
  %v2087 = vmul.f32 %v2086, %v1981
  %v2088 = vmul.f32 %v2087, %v1981
  %v2089 = vadd.f32 %v1982, %v2088
  %v2090 = vadd.f32 %v2089, 1e-10
  %v2091 = vrsqrt.pop %v2090
  %v2092 = vmul.f32 %v2090, %v2091
  %vm2093 = vcmp.eq.f32.partialorder %v2090, inf
  %v2094 = vsel %vm2093, %v2090, %v2092
  %vm2095 = vcmp.eq.f32.partialorder %v2090, 0.0
  %v2096 = vand.u32 %v2090, 2147483648
  %v2097 = vsel %vm2095, %v2096, %v2094
  %v2098 = vsub.f32 1.0, %v2089
  %v2099 = vadd.f32 %v2098, 1e-10
  %v2100 = vrsqrt.pop %v2099
  %v2101 = vmul.f32 %v2099, %v2100
  %vm2102 = vcmp.eq.f32.partialorder %v2099, inf
  %v2103 = vsel %vm2102, %v2099, %v2101
  %vm2104 = vcmp.eq.f32.partialorder %v2099, 0.0
  %v2105 = vand.u32 %v2099, 2147483648
  %v2106 = vsel %vm2104, %v2105, %v2103
  %v2107 = vand.u32 2147483647, %v2106
  %v2108 = vand.u32 2147483647, %v2097
  %v2109 = vmin.f32 %v2107, %v2108
  %v2110 = vmax.f32 %v2107, %v2108
  %v2111 = vrcp.pop %v2110
  %v2112 = vmul.f32 %v2109, %v2111
  %v2113 = vmul.f32 %v2112, %v2112
  %v2114 = vmul.f32 0.002785687, %v2113
  %v2115 = vadd.f32 %v2114, -0.015866
  %v2116 = vmul.f32 %v2115, %v2113
  %v2117 = vadd.f32 %v2116, 0.04247222
  %v2118 = vmul.f32 %v2117, %v2113
  %v2119 = vadd.f32 %v2118, -0.074975304
  %v2120 = vmul.f32 %v2119, %v2113
  %v2121 = vadd.f32 %v2120, 0.1064488
  %v2122 = vmul.f32 %v2121, %v2113
  %v2123 = vadd.f32 %v2122, -0.14207031
  %v2124 = vmul.f32 %v2123, %v2113
  %v2125 = vadd.f32 %v2124, 0.19993454
  %v2126 = vmul.f32 %v2125, %v2113
  %v2127 = vadd.f32 %v2126, -0.33333147
  %v2128 = vmul.f32 %v2127, %v2113
  %v2129 = vmul.f32 %v2128, %v2112
  %v2130 = vadd.f32 %v2129, %v2112
  %vm2131 = vcmp.gt.f32.partialorder %v2108, %v2107
  %v2132 = vsub.f32 1.5707964, %v2130
  %v2133 = vsel %vm2131, %v2132, %v2130
  %vm2134 = vcmp.lt.f32.partialorder %v2106, 0.0
  %v2135 = vsub.f32 3.1415927, %v2133
  %v2136 = vsel %vm2134, %v2135, %v2133
  %vm2137 = vcmp.lt.s32.totalorder %v2106, 0
  %v2138 = vsel %vm2137, 3.1415927, 0.0
  %vm2139 = vcmp.eq.f32.partialorder %v2097, 0.0
  %v2140 = vsel %vm2139, %v2138, %v2136
  %vm2141 = vcmp.ne.f32.partialorder %v2106, %v2106
  %vm2142 = vcmp.ne.f32.partialorder %v2097, %v2097
  %vm2143 = vmor %vm2141, %vm2142
  %v2144 = vsel %vm2143, nan, %v2140
  %vm2145 = vcmp.lt.f32.partialorder %v2106, 0.0
  %v2146 = vsel %vm2145, 2.3561945, 0.7853982
  %vm2147 = vcmp.eq.s32.totalorder %v2107, inf
  %vm2148 = vcmp.eq.s32.totalorder %v2108, inf
  %vm2149 = vmand %vm2147, %vm2148
  %v2150 = vsel %vm2149, %v2146, %v2144
  %v2151 = vand.u32 2147483647, %v2150
  %v2152 = vand.u32 %v2097, 2147483648
  %v2153 = vor.u32 %v2151, %v2152
  %v2154 = vmul.f32 %v2153, 2.0
  %v2155 = vmul.f32 %v1710, %v2154
  %v2156 = vadd.f32 %v1199, %v2155
  %s2157 = scalar_lea.vmem %s0, 2
  %v2158 = vld [vmem:[%s2157] sm:$0x1]
  %v2159 = vadd.f32 %v1202, %v2158
  %s2160 = scalar_lea.vmem %s247, 2
  %v2161 = vld [vmem:[%s2160] sm:$0x1]
  %v2162 = vadd.f32 %v1211, %v2161
  %vm2163 = vcmp.gt.f32.partialorder %v2162, 360.0
  %v2164 = vsub.f32 %v2162, 360.0
  %vm2165 = vcmp.lt.f32.partialorder %v2162, 0.0
  %v2166 = vadd.f32 %v2162, 360.0
  %v2167 = vsel %vm2165, %v2166, %v2162
  %v2168 = vsel %vm2163, %v2164, %v2167
  %v2169 = vmul.f32 %v2168, 0.017453292
  %v2170 = vand.u32 2147483647, %v2169
  %vm2171 = vcmp.le.f32.partialorder %v2170, 0.7853982
  %vm2172 = vcmp.lt.s32.totalorder %v2169, 0
  %v2173 = vand.u32 %v2169, 2139095040
  %v2174 = vshrl.u32 %v2173, 23
  %v2175 = vsub.s32 %v2174, 127
  %v2176 = vand.u32 2147483647, %v2169
  %v2177 = vand.u32 %v2176, 8388607
  %v2178 = vor.u32 %v2177, 8388608
  %v2179 = vsub.s32 0, %v2178
  %v2180 = vadd.s32 %v2175, 1
  %vm2181 = vcmp.gt.s32.totalorder %v2180, 0
  %v2182 = vsel %vm2181, %v2180, 0
  %v2183 = vshrl.u32 %v2182, 5
  %v2184 = vand.u32 %v2182, 31
  %v2185 = vsub.s32 32, %v2184
  %v2186 = vshrl.u32 683565275, %v2185
  %v2187 = vshll.u32 683565275, %v2184
  %v2188 = vshrl.u32 2475754826, %v2185
  %v2189 = vor.u32 %v2187, %v2188
  %v2190 = vshll.u32 2475754826, %v2184
  %v2191 = vshrl.u32 2131351028, %v2185
  %v2192 = vor.u32 %v2190, %v2191
  %v2193 = vshll.u32 2131351028, %v2184
  %v2194 = vshrl.u32 2102212464, %v2185
  %v2195 = vor.u32 %v2193, %v2194
  %v2196 = vshll.u32 2102212464, %v2184
  %v2197 = vshrl.u32 920167782, %v2185
  %v2198 = vor.u32 %v2196, %v2197
  %v2199 = vshll.u32 920167782, %v2184
  %v2200 = vshrl.u32 1326507024, %v2185
  %v2201 = vor.u32 %v2199, %v2200
  %vm2202 = vcmp.lt.s32.totalorder %v2183, 1
  %vm2203 = vcmp.lt.s32.totalorder %v2183, 2
  %vm2204 = vcmp.lt.s32.totalorder %v2183, 3
  %vm2205 = vcmp.lt.s32.totalorder %v2183, 4
  %v2206 = vsel %vm2202, %v2186, %v2189
  %v2207 = vsel %vm2205, %v2195, 2102212464
  %v2208 = vsel %vm2204, %v2192, %v2207
  %v2209 = vsel %vm2203, %v2206, %v2208
  %v2210 = vsel %vm2202, %v2189, %v2192
  %v2211 = vsel %vm2205, %v2198, 920167782
  %v2212 = vsel %vm2204, %v2195, %v2211
  %v2213 = vsel %vm2203, %v2210, %v2212
  %v2214 = vsel %vm2202, %v2192, %v2195
  %v2215 = vsel %vm2205, %v2201, 1326507024
  %v2216 = vsel %vm2204, %v2198, %v2215
  %v2217 = vsel %vm2203, %v2214, %v2216
  %v2218 = vshll.u32 %v2178, 8
  %v2219 = vmul.u32.u64.compose %v2218, %v2217
  %v2220 = vextract.low.u32 %v2219
  %v2221 = vextract.high.u32 %v2219
  %v2222 = vmul.u32.u64.compose %v2218, %v2213
  %v2223 = vextract.low.u32 %v2222
  %v2224 = vextract.high.u32 %v2222
  %v2225 = vmul.u32 %v2218, %v2209
  %v2226 = vadd.s32 %v2221, %v2223
  %vm2227 = vc.u32 %v2221, %v2223
  %v2228 = vadd.s32 %v2224, 1
  %v2229 = vsel %vm2227, %v2228, %v2224
  %v2230 = vadd.s32 %v2225, %v2229
  %v2231 = vadd.s32 %v2230, 536870912
  %v2232 = vshrl.u32 %v2231, 30
  %v2233 = vshll.u32 %v2232, 30
  %v2234 = vsub.s32 %v2230, %v2233
  %vm2235 = vcmp.lt.s32.totalorder %v2234, 0
  %v2236 = vsub.s32 0, %v2234
  %v2237 = vsel %vm2235, %v2236, %v2234
  %v2238 = vclz %v2237
  %v2239 = vsub.s32 %v2238, 2
  %vm2240 = vcmp.gt.s32.totalorder 0, %v2239
  %v2241 = vsel %vm2240, 0, %v2239
  %v2242 = vsub.s32 32, %v2241
  %v2243 = vshll.u32 %v2234, %v2241
  %v2244 = vshrl.u32 %v2226, %v2242
  %v2245 = vor.u32 %v2243, %v2244
  %v2246 = vsub.s32 4294967266, %v2241
  %v2247 = vadd.s32 %v2246, 127
  %v2248 = vshll.u32 %v2247, 23
  %v2249 = vor.u32 4788187, %v2248
  %v2250 = vand.u32 2147483647, %v2249
  %v2252 = vcvt.s32.f32 %v2245
  %v2253 = vmul.f32 %v2252, %v2250
  %v2254 = vxor.u32 %v2253, 2147483648
  %v2255 = vsel %vm2172, %v2254, %v2253
  %v2256 = vsub.s32 4, %v2232
  %v2257 = vsel %vm2172, %v2256, %v2232
  %v2258 = vsel %vm2171, %v2169, %v2255
  %v2259 = vsel %vm2171, 0, %v2257
  %v2260 = vcosq.f32.pop %v2258
  %v2261 = vsinq.f32.pop %v2258
  %vm2262 = vweird.f32 %v2169
  %v2263 = vadd.s32 %v2259, 3
  %v2264 = vand.u32 %v2263, 3
  %vm2265 = vcmp.lt.s32.totalorder %v2264, 2
  %vm2266 = vcmp.eq.s32.totalorder %v2264, 0
  %v2267 = vxor.u32 %v2261, 2147483648
  %v2268 = vsel %vm2266, %v2260, %v2267
  %vm2269 = vcmp.eq.s32.totalorder %v2264, 2
  %v2270 = vxor.u32 %v2260, 2147483648
  %v2271 = vsel %vm2269, %v2270, %v2261
  %v2272 = vsel %vm2265, %v2268, %v2271
  %v2273 = vsel %vm2262, nan, %v2272
  %v2274 = vand.u32 2147483647, %v2169
  %vm2275 = vcmp.le.f32.partialorder %v2274, 0.7853982
  %vm2276 = vcmp.lt.s32.totalorder %v2169, 0
  %v2277 = vand.u32 %v2169, 2139095040
  %v2278 = vshrl.u32 %v2277, 23
  %v2279 = vsub.s32 %v2278, 127
  %v2280 = vand.u32 2147483647, %v2169
  %v2281 = vand.u32 %v2280, 8388607
  %v2282 = vor.u32 %v2281, 8388608
  %v2283 = vsub.s32 0, %v2282
  %v2284 = vadd.s32 %v2279, 1
  %vm2285 = vcmp.gt.s32.totalorder %v2284, 0
  %v2286 = vsel %vm2285, %v2284, 0
  %v2287 = vshrl.u32 %v2286, 5
  %v2288 = vand.u32 %v2286, 31
  %v2289 = vsub.s32 32, %v2288
  %v2290 = vshrl.u32 683565275, %v2289
  %v2291 = vshll.u32 683565275, %v2288
  %v2292 = vshrl.u32 2475754826, %v2289
  %v2293 = vor.u32 %v2291, %v2292
  %v2294 = vshll.u32 2475754826, %v2288
  %v2295 = vshrl.u32 2131351028, %v2289
  %v2296 = vor.u32 %v2294, %v2295
  %v2297 = vshll.u32 2131351028, %v2288
  %v2298 = vshrl.u32 2102212464, %v2289
  %v2299 = vor.u32 %v2297, %v2298
  %v2300 = vshll.u32 2102212464, %v2288
  %v2301 = vshrl.u32 920167782, %v2289
  %v2302 = vor.u32 %v2300, %v2301
  %v2303 = vshll.u32 920167782, %v2288
  %v2304 = vshrl.u32 1326507024, %v2289
  %v2305 = vor.u32 %v2303, %v2304
  %vm2306 = vcmp.lt.s32.totalorder %v2287, 1
  %vm2307 = vcmp.lt.s32.totalorder %v2287, 2
  %vm2308 = vcmp.lt.s32.totalorder %v2287, 3
  %vm2309 = vcmp.lt.s32.totalorder %v2287, 4
  %v2310 = vsel %vm2306, %v2290, %v2293
  %v2311 = vsel %vm2309, %v2299, 2102212464
  %v2312 = vsel %vm2308, %v2296, %v2311
  %v2313 = vsel %vm2307, %v2310, %v2312
  %v2314 = vsel %vm2306, %v2293, %v2296
  %v2315 = vsel %vm2309, %v2302, 920167782
  %v2316 = vsel %vm2308, %v2299, %v2315
  %v2317 = vsel %vm2307, %v2314, %v2316
  %v2318 = vsel %vm2306, %v2296, %v2299
  %v2319 = vsel %vm2309, %v2305, 1326507024
  %v2320 = vsel %vm2308, %v2302, %v2319
  %v2321 = vsel %vm2307, %v2318, %v2320
  %v2322 = vshll.u32 %v2282, 8
  %v2323 = vmul.u32.u64.compose %v2322, %v2321
  %v2324 = vextract.low.u32 %v2323
  %v2325 = vextract.high.u32 %v2323
  %v2326 = vmul.u32.u64.compose %v2322, %v2317
  %v2327 = vextract.low.u32 %v2326
  %v2328 = vextract.high.u32 %v2326
  %v2329 = vmul.u32 %v2322, %v2313
  %v2330 = vadd.s32 %v2325, %v2327
  %vm2331 = vc.u32 %v2325, %v2327
  %v2332 = vadd.s32 %v2328, 1
  %v2333 = vsel %vm2331, %v2332, %v2328
  %v2334 = vadd.s32 %v2329, %v2333
  %v2335 = vadd.s32 %v2334, 536870912
  %v2336 = vshrl.u32 %v2335, 30
  %v2337 = vshll.u32 %v2336, 30
  %v2338 = vsub.s32 %v2334, %v2337
  %vm2339 = vcmp.lt.s32.totalorder %v2338, 0
  %v2340 = vsub.s32 0, %v2338
  %v2341 = vsel %vm2339, %v2340, %v2338
  %v2342 = vclz %v2341
  %v2343 = vsub.s32 %v2342, 2
  %vm2344 = vcmp.gt.s32.totalorder 0, %v2343
  %v2345 = vsel %vm2344, 0, %v2343
  %v2346 = vsub.s32 32, %v2345
  %v2347 = vshll.u32 %v2338, %v2345
  %v2348 = vshrl.u32 %v2330, %v2346
  %v2349 = vor.u32 %v2347, %v2348
  %v2350 = vsub.s32 4294967266, %v2345
  %v2351 = vadd.s32 %v2350, 127
  %v2352 = vshll.u32 %v2351, 23
  %v2353 = vor.u32 4788187, %v2352
  %v2354 = vand.u32 2147483647, %v2353
  %v2356 = vcvt.s32.f32 %v2349
  %v2357 = vmul.f32 %v2356, %v2354
  %v2358 = vxor.u32 %v2357, 2147483648
  %v2359 = vsel %vm2276, %v2358, %v2357
  %v2360 = vsub.s32 4, %v2336
  %v2361 = vsel %vm2276, %v2360, %v2336
  %v2362 = vsel %vm2275, %v2169, %v2359
  %v2363 = vsel %vm2275, 0, %v2361
  %v2364 = vcosq.f32.pop %v2362
  %v2365 = vsinq.f32.pop %v2362
  %vm2366 = vweird.f32 %v2169
  %v2367 = vand.u32 %v2363, 3
  %vm2368 = vcmp.lt.s32.totalorder %v2367, 2
  %vm2369 = vcmp.eq.s32.totalorder %v2367, 0
  %v2370 = vxor.u32 %v2365, 2147483648
  %v2371 = vsel %vm2369, %v2364, %v2370
  %vm2372 = vcmp.eq.s32.totalorder %v2367, 2
  %v2373 = vxor.u32 %v2364, 2147483648
  %v2374 = vsel %vm2372, %v2373, %v2365
  %v2375 = vsel %vm2368, %v2371, %v2374
  %v2376 = vsel %vm2366, nan, %v2375
  %v2377 = vmul.f32 %v2159, 92.6
  %v2378 = vmul.f32 %v2377, %v1708
  %v2379 = vand.u32 2147483647, %v2378
  %vm2380 = vcmp.le.f32.partialorder %v2379, 0.7853982
  %vm2381 = vcmp.lt.s32.totalorder %v2378, 0
  %v2382 = vand.u32 %v2378, 2139095040
  %v2383 = vshrl.u32 %v2382, 23
  %v2384 = vsub.s32 %v2383, 127
  %v2385 = vand.u32 2147483647, %v2378
  %v2386 = vand.u32 %v2385, 8388607
  %v2387 = vor.u32 %v2386, 8388608
  %v2388 = vsub.s32 0, %v2387
  %v2389 = vadd.s32 %v2384, 1
  %vm2390 = vcmp.gt.s32.totalorder %v2389, 0
  %v2391 = vsel %vm2390, %v2389, 0
  %v2392 = vshrl.u32 %v2391, 5
  %v2393 = vand.u32 %v2391, 31
  %v2394 = vsub.s32 32, %v2393
  %v2395 = vshrl.u32 683565275, %v2394
  %v2396 = vshll.u32 683565275, %v2393
  %v2397 = vshrl.u32 2475754826, %v2394
  %v2398 = vor.u32 %v2396, %v2397
  %v2399 = vshll.u32 2475754826, %v2393
  %v2400 = vshrl.u32 2131351028, %v2394
  %v2401 = vor.u32 %v2399, %v2400
  %v2402 = vshll.u32 2131351028, %v2393
  %v2403 = vshrl.u32 2102212464, %v2394
  %v2404 = vor.u32 %v2402, %v2403
  %v2405 = vshll.u32 2102212464, %v2393
  %v2406 = vshrl.u32 920167782, %v2394
  %v2407 = vor.u32 %v2405, %v2406
  %v2408 = vshll.u32 920167782, %v2393
  %v2409 = vshrl.u32 1326507024, %v2394
  %v2410 = vor.u32 %v2408, %v2409
  %vm2411 = vcmp.lt.s32.totalorder %v2392, 1
  %vm2412 = vcmp.lt.s32.totalorder %v2392, 2
  %vm2413 = vcmp.lt.s32.totalorder %v2392, 3
  %vm2414 = vcmp.lt.s32.totalorder %v2392, 4
  %v2415 = vsel %vm2411, %v2395, %v2398
  %v2416 = vsel %vm2414, %v2404, 2102212464
  %v2417 = vsel %vm2413, %v2401, %v2416
  %v2418 = vsel %vm2412, %v2415, %v2417
  %v2419 = vsel %vm2411, %v2398, %v2401
  %v2420 = vsel %vm2414, %v2407, 920167782
  %v2421 = vsel %vm2413, %v2404, %v2420
  %v2422 = vsel %vm2412, %v2419, %v2421
  %v2423 = vsel %vm2411, %v2401, %v2404
  %v2424 = vsel %vm2414, %v2410, 1326507024
  %v2425 = vsel %vm2413, %v2407, %v2424
  %v2426 = vsel %vm2412, %v2423, %v2425
  %v2427 = vshll.u32 %v2387, 8
  %v2428 = vmul.u32.u64.compose %v2427, %v2426
  %v2429 = vextract.low.u32 %v2428
  %v2430 = vextract.high.u32 %v2428
  %v2431 = vmul.u32.u64.compose %v2427, %v2422
  %v2432 = vextract.low.u32 %v2431
  %v2433 = vextract.high.u32 %v2431
  %v2434 = vmul.u32 %v2427, %v2418
  %v2435 = vadd.s32 %v2430, %v2432
  %vm2436 = vc.u32 %v2430, %v2432
  %v2437 = vadd.s32 %v2433, 1
  %v2438 = vsel %vm2436, %v2437, %v2433
  %v2439 = vadd.s32 %v2434, %v2438
  %v2440 = vadd.s32 %v2439, 536870912
  %v2441 = vshrl.u32 %v2440, 30
  %v2442 = vshll.u32 %v2441, 30
  %v2443 = vsub.s32 %v2439, %v2442
  %vm2444 = vcmp.lt.s32.totalorder %v2443, 0
  %v2445 = vsub.s32 0, %v2443
  %v2446 = vsel %vm2444, %v2445, %v2443
  %v2447 = vclz %v2446
  %v2448 = vsub.s32 %v2447, 2
  %vm2449 = vcmp.gt.s32.totalorder 0, %v2448
  %v2450 = vsel %vm2449, 0, %v2448
  %v2451 = vsub.s32 32, %v2450
  %v2452 = vshll.u32 %v2443, %v2450
  %v2453 = vshrl.u32 %v2435, %v2451
  %v2454 = vor.u32 %v2452, %v2453
  %v2455 = vsub.s32 4294967266, %v2450
  %v2456 = vadd.s32 %v2455, 127
  %v2457 = vshll.u32 %v2456, 23
  %v2458 = vor.u32 4788187, %v2457
  %v2459 = vand.u32 2147483647, %v2458
  %v2461 = vcvt.s32.f32 %v2454
  %v2462 = vmul.f32 %v2461, %v2459
  %v2463 = vxor.u32 %v2462, 2147483648
  %v2464 = vsel %vm2381, %v2463, %v2462
  %v2465 = vsub.s32 4, %v2441
  %v2466 = vsel %vm2381, %v2465, %v2441
  %v2467 = vsel %vm2380, %v2378, %v2464
  %v2468 = vsel %vm2380, 0, %v2466
  %v2469 = vcosq.f32.pop %v2467
  %v2470 = vsinq.f32.pop %v2467
  %vm2471 = vweird.f32 %v2378
  %v2472 = vadd.s32 %v2468, 3
  %v2473 = vand.u32 %v2472, 3
  %vm2474 = vcmp.lt.s32.totalorder %v2473, 2
  %vm2475 = vcmp.eq.s32.totalorder %v2473, 0
  %v2476 = vxor.u32 %v2470, 2147483648
  %v2477 = vsel %vm2475, %v2469, %v2476
  %vm2478 = vcmp.eq.s32.totalorder %v2473, 2
  %v2479 = vxor.u32 %v2469, 2147483648
  %v2480 = vsel %vm2478, %v2479, %v2470
  %v2481 = vsel %vm2474, %v2477, %v2480
  %v2482 = vsel %vm2471, nan, %v2481
  %v2483 = vand.u32 2147483647, %v2378
  %vm2484 = vcmp.le.f32.partialorder %v2483, 0.7853982
  %vm2485 = vcmp.lt.s32.totalorder %v2378, 0
  %v2486 = vand.u32 %v2378, 2139095040
  %v2487 = vshrl.u32 %v2486, 23
  %v2488 = vsub.s32 %v2487, 127
  %v2489 = vand.u32 2147483647, %v2378
  %v2490 = vand.u32 %v2489, 8388607
  %v2491 = vor.u32 %v2490, 8388608
  %v2492 = vsub.s32 0, %v2491
  %v2493 = vadd.s32 %v2488, 1
  %vm2494 = vcmp.gt.s32.totalorder %v2493, 0
  %v2495 = vsel %vm2494, %v2493, 0
  %v2496 = vshrl.u32 %v2495, 5
  %v2497 = vand.u32 %v2495, 31
  %v2498 = vsub.s32 32, %v2497
  %v2499 = vshrl.u32 683565275, %v2498
  %v2500 = vshll.u32 683565275, %v2497
  %v2501 = vshrl.u32 2475754826, %v2498
  %v2502 = vor.u32 %v2500, %v2501
  %v2503 = vshll.u32 2475754826, %v2497
  %v2504 = vshrl.u32 2131351028, %v2498
  %v2505 = vor.u32 %v2503, %v2504
  %v2506 = vshll.u32 2131351028, %v2497
  %v2507 = vshrl.u32 2102212464, %v2498
  %v2508 = vor.u32 %v2506, %v2507
  %v2509 = vshll.u32 2102212464, %v2497
  %v2510 = vshrl.u32 920167782, %v2498
  %v2511 = vor.u32 %v2509, %v2510
  %v2512 = vshll.u32 920167782, %v2497
  %v2513 = vshrl.u32 1326507024, %v2498
  %v2514 = vor.u32 %v2512, %v2513
  %vm2515 = vcmp.lt.s32.totalorder %v2496, 1
  %vm2516 = vcmp.lt.s32.totalorder %v2496, 2
  %vm2517 = vcmp.lt.s32.totalorder %v2496, 3
  %vm2518 = vcmp.lt.s32.totalorder %v2496, 4
  %v2519 = vsel %vm2515, %v2499, %v2502
  %v2520 = vsel %vm2518, %v2508, 2102212464
  %v2521 = vsel %vm2517, %v2505, %v2520
  %v2522 = vsel %vm2516, %v2519, %v2521
  %v2523 = vsel %vm2515, %v2502, %v2505
  %v2524 = vsel %vm2518, %v2511, 920167782
  %v2525 = vsel %vm2517, %v2508, %v2524
  %v2526 = vsel %vm2516, %v2523, %v2525
  %v2527 = vsel %vm2515, %v2505, %v2508
  %v2528 = vsel %vm2518, %v2514, 1326507024
  %v2529 = vsel %vm2517, %v2511, %v2528
  %v2530 = vsel %vm2516, %v2527, %v2529
  %v2531 = vshll.u32 %v2491, 8
  %v2532 = vmul.u32.u64.compose %v2531, %v2530
  %v2533 = vextract.low.u32 %v2532
  %v2534 = vextract.high.u32 %v2532
  %v2535 = vmul.u32.u64.compose %v2531, %v2526
  %v2536 = vextract.low.u32 %v2535
  %v2537 = vextract.high.u32 %v2535
  %v2538 = vmul.u32 %v2531, %v2522
  %v2539 = vadd.s32 %v2534, %v2536
  %vm2540 = vc.u32 %v2534, %v2536
  %v2541 = vadd.s32 %v2537, 1
  %v2542 = vsel %vm2540, %v2541, %v2537
  %v2543 = vadd.s32 %v2538, %v2542
  %v2544 = vadd.s32 %v2543, 536870912
  %v2545 = vshrl.u32 %v2544, 30
  %v2546 = vshll.u32 %v2545, 30
  %v2547 = vsub.s32 %v2543, %v2546
  %vm2548 = vcmp.lt.s32.totalorder %v2547, 0
  %v2549 = vsub.s32 0, %v2547
  %v2550 = vsel %vm2548, %v2549, %v2547
  %v2551 = vclz %v2550
  %v2552 = vsub.s32 %v2551, 2
  %vm2553 = vcmp.gt.s32.totalorder 0, %v2552
  %v2554 = vsel %vm2553, 0, %v2552
  %v2555 = vsub.s32 32, %v2554
  %v2556 = vshll.u32 %v2547, %v2554
  %v2557 = vshrl.u32 %v2539, %v2555
  %v2558 = vor.u32 %v2556, %v2557
  %v2559 = vsub.s32 4294967266, %v2554
  %v2560 = vadd.s32 %v2559, 127
  %v2561 = vshll.u32 %v2560, 23
  %v2562 = vor.u32 4788187, %v2561
  %v2563 = vand.u32 2147483647, %v2562
  %v2565 = vcvt.s32.f32 %v2558
  %v2566 = vmul.f32 %v2565, %v2563
  %v2567 = vxor.u32 %v2566, 2147483648
  %v2568 = vsel %vm2485, %v2567, %v2566
  %v2569 = vsub.s32 4, %v2545
  %v2570 = vsel %vm2485, %v2569, %v2545
  %v2571 = vsel %vm2484, %v2378, %v2568
  %v2572 = vsel %vm2484, 0, %v2570
  %v2573 = vcosq.f32.pop %v2571
  %v2574 = vsinq.f32.pop %v2571
  %vm2575 = vweird.f32 %v2378
  %v2576 = vand.u32 %v2572, 3
  %vm2577 = vcmp.lt.s32.totalorder %v2576, 2
  %vm2578 = vcmp.eq.s32.totalorder %v2576, 0
  %v2579 = vxor.u32 %v2574, 2147483648
  %v2580 = vsel %vm2578, %v2573, %v2579
  %vm2581 = vcmp.eq.s32.totalorder %v2576, 2
  %v2582 = vxor.u32 %v2573, 2147483648
  %v2583 = vsel %vm2581, %v2582, %v2574
  %v2584 = vsel %vm2577, %v2580, %v2583
  %v2585 = vsel %vm2575, nan, %v2584
  %v2586 = vmul.f32 %v1632, %v2585
  %v2587 = vmul.f32 %v1642, %v2482
  %v2588 = vmul.f32 %v2587, %v2376
  %v2589 = vadd.f32 %v2586, %v2588
  %v2590 = vmul.f32 %v2589, %v2589
  %v2591 = vsub.f32 1.0, %v2590
  %v2592 = vmax.f32 %v2591, 0.0
  %v2593 = vrsqrt.pop %v2592
  %v2594 = vmul.f32 %v2592, %v2593
  %vm2595 = vcmp.eq.f32.partialorder %v2592, inf
  %v2596 = vsel %vm2595, %v2592, %v2594
  %vm2597 = vcmp.eq.f32.partialorder %v2592, 0.0
  %v2598 = vand.u32 %v2592, 2147483648
  %v2599 = vsel %vm2597, %v2598, %v2596
  %v2600 = vmul.f32 %v2273, %v2482
  %v2601 = vmul.f32 %v2600, %v1642
  %v2602 = vmul.f32 %v1632, %v2589
  %v2603 = vsub.f32 %v2585, %v2602
  %v2604 = vand.u32 2147483647, %v2603
  %v2605 = vand.u32 2147483647, %v2601
  %v2606 = vmin.f32 %v2604, %v2605
  %v2607 = vmax.f32 %v2604, %v2605
  %v2608 = vrcp.pop %v2607
  %v2609 = vmul.f32 %v2606, %v2608
  %v2610 = vmul.f32 %v2609, %v2609
  %v2611 = vmul.f32 0.002785687, %v2610
  %v2612 = vadd.f32 %v2611, -0.015866
  %v2613 = vmul.f32 %v2612, %v2610
  %v2614 = vadd.f32 %v2613, 0.04247222
  %v2615 = vmul.f32 %v2614, %v2610
  %v2616 = vadd.f32 %v2615, -0.074975304
  %v2617 = vmul.f32 %v2616, %v2610
  %v2618 = vadd.f32 %v2617, 0.1064488
  %v2619 = vmul.f32 %v2618, %v2610
  %v2620 = vadd.f32 %v2619, -0.14207031
  %v2621 = vmul.f32 %v2620, %v2610
  %v2622 = vadd.f32 %v2621, 0.19993454
  %v2623 = vmul.f32 %v2622, %v2610
  %v2624 = vadd.f32 %v2623, -0.33333147
  %v2625 = vmul.f32 %v2624, %v2610
  %v2626 = vmul.f32 %v2625, %v2609
  %v2627 = vadd.f32 %v2626, %v2609
  %vm2628 = vcmp.gt.f32.partialorder %v2605, %v2604
  %v2629 = vsub.f32 1.5707964, %v2627
  %v2630 = vsel %vm2628, %v2629, %v2627
  %vm2631 = vcmp.lt.f32.partialorder %v2603, 0.0
  %v2632 = vsub.f32 3.1415927, %v2630
  %v2633 = vsel %vm2631, %v2632, %v2630
  %vm2634 = vcmp.lt.s32.totalorder %v2603, 0
  %v2635 = vsel %vm2634, 3.1415927, 0.0
  %vm2636 = vcmp.eq.f32.partialorder %v2601, 0.0
  %v2637 = vsel %vm2636, %v2635, %v2633
  %vm2638 = vcmp.ne.f32.partialorder %v2603, %v2603
  %vm2639 = vcmp.ne.f32.partialorder %v2601, %v2601
  %vm2640 = vmor %vm2638, %vm2639
  %v2641 = vsel %vm2640, nan, %v2637
  %vm2642 = vcmp.lt.f32.partialorder %v2603, 0.0
  %v2643 = vsel %vm2642, 2.3561945, 0.7853982
  %vm2644 = vcmp.eq.s32.totalorder %v2604, inf
  %vm2645 = vcmp.eq.s32.totalorder %v2605, inf
  %vm2646 = vmand %vm2644, %vm2645
  %v2647 = vsel %vm2646, %v2643, %v2641
  %v2648 = vand.u32 2147483647, %v2647
  %v2649 = vand.u32 %v2601, 2147483648
  %v2650 = vor.u32 %v2648, %v2649
  %v2651 = vadd.f32 %v1694, %v2650
  %v2652 = vmul.f32 %v2599, 4.068063e+13
  %v2653 = vmul.f32 %v2589, 4.04083e+13
  %v2654 = vmul.f32 %v2599, 6378137.0
  %v2655 = vmul.f32 %v2589, 6356752.5
  %v2656 = vmul.f32 %v2652, %v2652
  %v2657 = vmul.f32 %v2653, %v2653
  %v2658 = vadd.f32 %v2656, %v2657
  %v2659 = vmul.f32 %v2654, %v2654
  %v2660 = vmul.f32 %v2655, %v2655
  %v2661 = vadd.f32 %v2659, %v2660
  %v2662 = vrcp.pop %v2661
  %v2663 = vmul.f32 %v2658, %v2662
  %v2664 = vadd.f32 %v2663, 1e-10
  %v2665 = vrsqrt.pop %v2664
  %v2666 = vmul.f32 %v2664, %v2665
  %v2667 = vmul.f32 %v2666, 0.001
  %v2668 = vand.u32 2147483647, %v2599
  %v2669 = vand.u32 2147483647, %v2589
  %v2670 = vmin.f32 %v2668, %v2669
  %v2671 = vmax.f32 %v2668, %v2669
  %v2672 = vrcp.pop %v2671
  %v2673 = vmul.f32 %v2670, %v2672
  %v2674 = vmul.f32 %v2673, %v2673
  %v2675 = vmul.f32 0.002785687, %v2674
  %v2676 = vadd.f32 %v2675, -0.015866
  %v2677 = vmul.f32 %v2676, %v2674
  %v2678 = vadd.f32 %v2677, 0.04247222
  %v2679 = vmul.f32 %v2678, %v2674
  %v2680 = vadd.f32 %v2679, -0.074975304
  %v2681 = vmul.f32 %v2680, %v2674
  %v2682 = vadd.f32 %v2681, 0.1064488
  %v2683 = vmul.f32 %v2682, %v2674
  %v2684 = vadd.f32 %v2683, -0.14207031
  %v2685 = vmul.f32 %v2684, %v2674
  %v2686 = vadd.f32 %v2685, 0.19993454
  %v2687 = vmul.f32 %v2686, %v2674
  %v2688 = vadd.f32 %v2687, -0.33333147
  %v2689 = vmul.f32 %v2688, %v2674
  %v2690 = vmul.f32 %v2689, %v2673
  %v2691 = vadd.f32 %v2690, %v2673
  %vm2692 = vcmp.gt.f32.partialorder %v2669, %v2668
  %v2693 = vsub.f32 1.5707964, %v2691
  %v2694 = vsel %vm2692, %v2693, %v2691
  %vm2695 = vcmp.lt.f32.partialorder %v2599, 0.0
  %v2696 = vsub.f32 3.1415927, %v2694
  %v2697 = vsel %vm2695, %v2696, %v2694
  %vm2698 = vcmp.lt.s32.totalorder %v2599, 0
  %v2699 = vsel %vm2698, 3.1415927, 0.0
  %vm2700 = vcmp.eq.f32.partialorder %v2589, 0.0
  %v2701 = vsel %vm2700, %v2699, %v2697
  %vm2702 = vcmp.ne.f32.partialorder %v2599, %v2599
  %vm2703 = vcmp.ne.f32.partialorder %v2589, %v2589
  %vm2704 = vmor %vm2702, %vm2703
  %v2705 = vsel %vm2704, nan, %v2701
  %vm2706 = vcmp.lt.f32.partialorder %v2599, 0.0
  %v2707 = vsel %vm2706, 2.3561945, 0.7853982
  %vm2708 = vcmp.eq.s32.totalorder %v2668, inf
  %vm2709 = vcmp.eq.s32.totalorder %v2669, inf
  %vm2710 = vmand %vm2708, %vm2709
  %v2711 = vsel %vm2710, %v2707, %v2705
  %v2712 = vand.u32 2147483647, %v2711
  %v2713 = vand.u32 %v2589, 2147483648
  %v2714 = vor.u32 %v2712, %v2713
  %v2715 = vmul.f32 %v2651, 57.29578
  %s2716 = scalar_lea.vmem %s4, 2
  %2717 = vst [vmem:[%s2716] sm:$0x1] %v2715
  %v2718 = vmul.f32 %v2714, 57.29578
  %s2719 = scalar_lea.vmem %s805, 2
  %2720 = vst [vmem:[%s2719] sm:$0x1] %v2718
  %s2721 = scalar_lea.vmem %s16, 3
  %v2722 = vld [vmem:[%s2721] sm:$0x1]
  %s2723 = scalar_lea.vmem %s1, 3
  %v2724 = vld [vmem:[%s2723] sm:$0x1]
  %v2725 = vmul.f32 %v2722, 0.017453292
  %v2726 = vsub.f32 %v2725, %v2714
  %v2727 = vmul.f32 %v2724, 0.017453292
  %v2728 = vsub.f32 %v2727, %v2651
  %v2729 = vmul.f32 %v2726, 0.5
  %v2730 = vand.u32 2147483647, %v2729
  %vm2731 = vcmp.le.f32.partialorder %v2730, 0.7853982
  %vm2732 = vcmp.lt.s32.totalorder %v2729, 0
  %v2733 = vand.u32 %v2729, 2139095040
  %v2734 = vshrl.u32 %v2733, 23
  %v2735 = vsub.s32 %v2734, 127
  %v2736 = vand.u32 2147483647, %v2729
  %v2737 = vand.u32 %v2736, 8388607
  %v2738 = vor.u32 %v2737, 8388608
  %v2739 = vsub.s32 0, %v2738
  %v2740 = vadd.s32 %v2735, 1
  %vm2741 = vcmp.gt.s32.totalorder %v2740, 0
  %v2742 = vsel %vm2741, %v2740, 0
  %v2743 = vshrl.u32 %v2742, 5
  %v2744 = vand.u32 %v2742, 31
  %v2745 = vsub.s32 32, %v2744
  %v2746 = vshrl.u32 683565275, %v2745
  %v2747 = vshll.u32 683565275, %v2744
  %v2748 = vshrl.u32 2475754826, %v2745
  %v2749 = vor.u32 %v2747, %v2748
  %v2750 = vshll.u32 2475754826, %v2744
  %v2751 = vshrl.u32 2131351028, %v2745
  %v2752 = vor.u32 %v2750, %v2751
  %v2753 = vshll.u32 2131351028, %v2744
  %v2754 = vshrl.u32 2102212464, %v2745
  %v2755 = vor.u32 %v2753, %v2754
  %v2756 = vshll.u32 2102212464, %v2744
  %v2757 = vshrl.u32 920167782, %v2745
  %v2758 = vor.u32 %v2756, %v2757
  %v2759 = vshll.u32 920167782, %v2744
  %v2760 = vshrl.u32 1326507024, %v2745
  %v2761 = vor.u32 %v2759, %v2760
  %vm2762 = vcmp.lt.s32.totalorder %v2743, 1
  %vm2763 = vcmp.lt.s32.totalorder %v2743, 2
  %vm2764 = vcmp.lt.s32.totalorder %v2743, 3
  %vm2765 = vcmp.lt.s32.totalorder %v2743, 4
  %v2766 = vsel %vm2762, %v2746, %v2749
  %v2767 = vsel %vm2765, %v2755, 2102212464
  %v2768 = vsel %vm2764, %v2752, %v2767
  %v2769 = vsel %vm2763, %v2766, %v2768
  %v2770 = vsel %vm2762, %v2749, %v2752
  %v2771 = vsel %vm2765, %v2758, 920167782
  %v2772 = vsel %vm2764, %v2755, %v2771
  %v2773 = vsel %vm2763, %v2770, %v2772
  %v2774 = vsel %vm2762, %v2752, %v2755
  %v2775 = vsel %vm2765, %v2761, 1326507024
  %v2776 = vsel %vm2764, %v2758, %v2775
  %v2777 = vsel %vm2763, %v2774, %v2776
  %v2778 = vshll.u32 %v2738, 8
  %v2779 = vmul.u32.u64.compose %v2778, %v2777
  %v2780 = vextract.low.u32 %v2779
  %v2781 = vextract.high.u32 %v2779
  %v2782 = vmul.u32.u64.compose %v2778, %v2773
  %v2783 = vextract.low.u32 %v2782
  %v2784 = vextract.high.u32 %v2782
  %v2785 = vmul.u32 %v2778, %v2769
  %v2786 = vadd.s32 %v2781, %v2783
  %vm2787 = vc.u32 %v2781, %v2783
  %v2788 = vadd.s32 %v2784, 1
  %v2789 = vsel %vm2787, %v2788, %v2784
  %v2790 = vadd.s32 %v2785, %v2789
  %v2791 = vadd.s32 %v2790, 536870912
  %v2792 = vshrl.u32 %v2791, 30
  %v2793 = vshll.u32 %v2792, 30
  %v2794 = vsub.s32 %v2790, %v2793
  %vm2795 = vcmp.lt.s32.totalorder %v2794, 0
  %v2796 = vsub.s32 0, %v2794
  %v2797 = vsel %vm2795, %v2796, %v2794
  %v2798 = vclz %v2797
  %v2799 = vsub.s32 %v2798, 2
  %vm2800 = vcmp.gt.s32.totalorder 0, %v2799
  %v2801 = vsel %vm2800, 0, %v2799
  %v2802 = vsub.s32 32, %v2801
  %v2803 = vshll.u32 %v2794, %v2801
  %v2804 = vshrl.u32 %v2786, %v2802
  %v2805 = vor.u32 %v2803, %v2804
  %v2806 = vsub.s32 4294967266, %v2801
  %v2807 = vadd.s32 %v2806, 127
  %v2808 = vshll.u32 %v2807, 23
  %v2809 = vor.u32 4788187, %v2808
  %v2810 = vand.u32 2147483647, %v2809
  %v2812 = vcvt.s32.f32 %v2805
  %v2813 = vmul.f32 %v2812, %v2810
  %v2814 = vxor.u32 %v2813, 2147483648
  %v2815 = vsel %vm2732, %v2814, %v2813
  %v2816 = vsub.s32 4, %v2792
  %v2817 = vsel %vm2732, %v2816, %v2792
  %v2818 = vsel %vm2731, %v2729, %v2815
  %v2819 = vsel %vm2731, 0, %v2817
  %v2820 = vcosq.f32.pop %v2818
  %v2821 = vsinq.f32.pop %v2818
  %vm2822 = vweird.f32 %v2729
  %v2823 = vadd.s32 %v2819, 3
  %v2824 = vand.u32 %v2823, 3
  %vm2825 = vcmp.lt.s32.totalorder %v2824, 2
  %vm2826 = vcmp.eq.s32.totalorder %v2824, 0
  %v2827 = vxor.u32 %v2821, 2147483648
  %v2828 = vsel %vm2826, %v2820, %v2827
  %vm2829 = vcmp.eq.s32.totalorder %v2824, 2
  %v2830 = vxor.u32 %v2820, 2147483648
  %v2831 = vsel %vm2829, %v2830, %v2821
  %v2832 = vsel %vm2825, %v2828, %v2831
  %v2833 = vsel %vm2822, nan, %v2832
  %v2834 = vmul.f32 %v2728, 0.5
  %v2835 = vand.u32 2147483647, %v2834
  %vm2836 = vcmp.le.f32.partialorder %v2835, 0.7853982
  %vm2837 = vcmp.lt.s32.totalorder %v2834, 0
  %v2838 = vand.u32 %v2834, 2139095040
  %v2839 = vshrl.u32 %v2838, 23
  %v2840 = vsub.s32 %v2839, 127
  %v2841 = vand.u32 2147483647, %v2834
  %v2842 = vand.u32 %v2841, 8388607
  %v2843 = vor.u32 %v2842, 8388608
  %v2844 = vsub.s32 0, %v2843
  %v2845 = vadd.s32 %v2840, 1
  %vm2846 = vcmp.gt.s32.totalorder %v2845, 0
  %v2847 = vsel %vm2846, %v2845, 0
  %v2848 = vshrl.u32 %v2847, 5
  %v2849 = vand.u32 %v2847, 31
  %v2850 = vsub.s32 32, %v2849
  %v2851 = vshrl.u32 683565275, %v2850
  %v2852 = vshll.u32 683565275, %v2849
  %v2853 = vshrl.u32 2475754826, %v2850
  %v2854 = vor.u32 %v2852, %v2853
  %v2855 = vshll.u32 2475754826, %v2849
  %v2856 = vshrl.u32 2131351028, %v2850
  %v2857 = vor.u32 %v2855, %v2856
  %v2858 = vshll.u32 2131351028, %v2849
  %v2859 = vshrl.u32 2102212464, %v2850
  %v2860 = vor.u32 %v2858, %v2859
  %v2861 = vshll.u32 2102212464, %v2849
  %v2862 = vshrl.u32 920167782, %v2850
  %v2863 = vor.u32 %v2861, %v2862
  %v2864 = vshll.u32 920167782, %v2849
  %v2865 = vshrl.u32 1326507024, %v2850
  %v2866 = vor.u32 %v2864, %v2865
  %vm2867 = vcmp.lt.s32.totalorder %v2848, 1
  %vm2868 = vcmp.lt.s32.totalorder %v2848, 2
  %vm2869 = vcmp.lt.s32.totalorder %v2848, 3
  %vm2870 = vcmp.lt.s32.totalorder %v2848, 4
  %v2871 = vsel %vm2867, %v2851, %v2854
  %v2872 = vsel %vm2870, %v2860, 2102212464
  %v2873 = vsel %vm2869, %v2857, %v2872
  %v2874 = vsel %vm2868, %v2871, %v2873
  %v2875 = vsel %vm2867, %v2854, %v2857
  %v2876 = vsel %vm2870, %v2863, 920167782
  %v2877 = vsel %vm2869, %v2860, %v2876
  %v2878 = vsel %vm2868, %v2875, %v2877
  %v2879 = vsel %vm2867, %v2857, %v2860
  %v2880 = vsel %vm2870, %v2866, 1326507024
  %v2881 = vsel %vm2869, %v2863, %v2880
  %v2882 = vsel %vm2868, %v2879, %v2881
  %v2883 = vshll.u32 %v2843, 8
  %v2884 = vmul.u32.u64.compose %v2883, %v2882
  %v2885 = vextract.low.u32 %v2884
  %v2886 = vextract.high.u32 %v2884
  %v2887 = vmul.u32.u64.compose %v2883, %v2878
  %v2888 = vextract.low.u32 %v2887
  %v2889 = vextract.high.u32 %v2887
  %v2890 = vmul.u32 %v2883, %v2874
  %v2891 = vadd.s32 %v2886, %v2888
  %vm2892 = vc.u32 %v2886, %v2888
  %v2893 = vadd.s32 %v2889, 1
  %v2894 = vsel %vm2892, %v2893, %v2889
  %v2895 = vadd.s32 %v2890, %v2894
  %v2896 = vadd.s32 %v2895, 536870912
  %v2897 = vshrl.u32 %v2896, 30
  %v2898 = vshll.u32 %v2897, 30
  %v2899 = vsub.s32 %v2895, %v2898
  %vm2900 = vcmp.lt.s32.totalorder %v2899, 0
  %v2901 = vsub.s32 0, %v2899
  %v2902 = vsel %vm2900, %v2901, %v2899
  %v2903 = vclz %v2902
  %v2904 = vsub.s32 %v2903, 2
  %vm2905 = vcmp.gt.s32.totalorder 0, %v2904
  %v2906 = vsel %vm2905, 0, %v2904
  %v2907 = vsub.s32 32, %v2906
  %v2908 = vshll.u32 %v2899, %v2906
  %v2909 = vshrl.u32 %v2891, %v2907
  %v2910 = vor.u32 %v2908, %v2909
  %v2911 = vsub.s32 4294967266, %v2906
  %v2912 = vadd.s32 %v2911, 127
  %v2913 = vshll.u32 %v2912, 23
  %v2914 = vor.u32 4788187, %v2913
  %v2915 = vand.u32 2147483647, %v2914
  %v2917 = vcvt.s32.f32 %v2910
  %v2918 = vmul.f32 %v2917, %v2915
  %v2919 = vxor.u32 %v2918, 2147483648
  %v2920 = vsel %vm2837, %v2919, %v2918
  %v2921 = vsub.s32 4, %v2897
  %v2922 = vsel %vm2837, %v2921, %v2897
  %v2923 = vsel %vm2836, %v2834, %v2920
  %v2924 = vsel %vm2836, 0, %v2922
  %v2925 = vcosq.f32.pop %v2923
  %v2926 = vsinq.f32.pop %v2923
  %vm2927 = vweird.f32 %v2834
  %v2928 = vadd.s32 %v2924, 3
  %v2929 = vand.u32 %v2928, 3
  %vm2930 = vcmp.lt.s32.totalorder %v2929, 2
  %vm2931 = vcmp.eq.s32.totalorder %v2929, 0
  %v2932 = vxor.u32 %v2926, 2147483648
  %v2933 = vsel %vm2931, %v2925, %v2932
  %vm2934 = vcmp.eq.s32.totalorder %v2929, 2
  %v2935 = vxor.u32 %v2925, 2147483648
  %v2936 = vsel %vm2934, %v2935, %v2926
  %v2937 = vsel %vm2930, %v2933, %v2936
  %v2938 = vsel %vm2927, nan, %v2937
  %v2939 = vmul.f32 %v2833, %v2833
  %v2940 = vand.u32 2147483647, %v2725
  %vm2941 = vcmp.le.f32.partialorder %v2940, 0.7853982
  %vm2942 = vcmp.lt.s32.totalorder %v2725, 0
  %v2943 = vand.u32 %v2725, 2139095040
  %v2944 = vshrl.u32 %v2943, 23
  %v2945 = vsub.s32 %v2944, 127
  %v2946 = vand.u32 2147483647, %v2725
  %v2947 = vand.u32 %v2946, 8388607
  %v2948 = vor.u32 %v2947, 8388608
  %v2949 = vsub.s32 0, %v2948
  %v2950 = vadd.s32 %v2945, 1
  %vm2951 = vcmp.gt.s32.totalorder %v2950, 0
  %v2952 = vsel %vm2951, %v2950, 0
  %v2953 = vshrl.u32 %v2952, 5
  %v2954 = vand.u32 %v2952, 31
  %v2955 = vsub.s32 32, %v2954
  %v2956 = vshrl.u32 683565275, %v2955
  %v2957 = vshll.u32 683565275, %v2954
  %v2958 = vshrl.u32 2475754826, %v2955
  %v2959 = vor.u32 %v2957, %v2958
  %v2960 = vshll.u32 2475754826, %v2954
  %v2961 = vshrl.u32 2131351028, %v2955
  %v2962 = vor.u32 %v2960, %v2961
  %v2963 = vshll.u32 2131351028, %v2954
  %v2964 = vshrl.u32 2102212464, %v2955
  %v2965 = vor.u32 %v2963, %v2964
  %v2966 = vshll.u32 2102212464, %v2954
  %v2967 = vshrl.u32 920167782, %v2955
  %v2968 = vor.u32 %v2966, %v2967
  %v2969 = vshll.u32 920167782, %v2954
  %v2970 = vshrl.u32 1326507024, %v2955
  %v2971 = vor.u32 %v2969, %v2970
  %vm2972 = vcmp.lt.s32.totalorder %v2953, 1
  %vm2973 = vcmp.lt.s32.totalorder %v2953, 2
  %vm2974 = vcmp.lt.s32.totalorder %v2953, 3
  %vm2975 = vcmp.lt.s32.totalorder %v2953, 4
  %v2976 = vsel %vm2972, %v2956, %v2959
  %v2977 = vsel %vm2975, %v2965, 2102212464
  %v2978 = vsel %vm2974, %v2962, %v2977
  %v2979 = vsel %vm2973, %v2976, %v2978
  %v2980 = vsel %vm2972, %v2959, %v2962
  %v2981 = vsel %vm2975, %v2968, 920167782
  %v2982 = vsel %vm2974, %v2965, %v2981
  %v2983 = vsel %vm2973, %v2980, %v2982
  %v2984 = vsel %vm2972, %v2962, %v2965
  %v2985 = vsel %vm2975, %v2971, 1326507024
  %v2986 = vsel %vm2974, %v2968, %v2985
  %v2987 = vsel %vm2973, %v2984, %v2986
  %v2988 = vshll.u32 %v2948, 8
  %v2989 = vmul.u32.u64.compose %v2988, %v2987
  %v2990 = vextract.low.u32 %v2989
  %v2991 = vextract.high.u32 %v2989
  %v2992 = vmul.u32.u64.compose %v2988, %v2983
  %v2993 = vextract.low.u32 %v2992
  %v2994 = vextract.high.u32 %v2992
  %v2995 = vmul.u32 %v2988, %v2979
  %v2996 = vadd.s32 %v2991, %v2993
  %vm2997 = vc.u32 %v2991, %v2993
  %v2998 = vadd.s32 %v2994, 1
  %v2999 = vsel %vm2997, %v2998, %v2994
  %v3000 = vadd.s32 %v2995, %v2999
  %v3001 = vadd.s32 %v3000, 536870912
  %v3002 = vshrl.u32 %v3001, 30
  %v3003 = vshll.u32 %v3002, 30
  %v3004 = vsub.s32 %v3000, %v3003
  %vm3005 = vcmp.lt.s32.totalorder %v3004, 0
  %v3006 = vsub.s32 0, %v3004
  %v3007 = vsel %vm3005, %v3006, %v3004
  %v3008 = vclz %v3007
  %v3009 = vsub.s32 %v3008, 2
  %vm3010 = vcmp.gt.s32.totalorder 0, %v3009
  %v3011 = vsel %vm3010, 0, %v3009
  %v3012 = vsub.s32 32, %v3011
  %v3013 = vshll.u32 %v3004, %v3011
  %v3014 = vshrl.u32 %v2996, %v3012
  %v3015 = vor.u32 %v3013, %v3014
  %v3016 = vsub.s32 4294967266, %v3011
  %v3017 = vadd.s32 %v3016, 127
  %v3018 = vshll.u32 %v3017, 23
  %v3019 = vor.u32 4788187, %v3018
  %v3020 = vand.u32 2147483647, %v3019
  %v3022 = vcvt.s32.f32 %v3015
  %v3023 = vmul.f32 %v3022, %v3020
  %v3024 = vxor.u32 %v3023, 2147483648
  %v3025 = vsel %vm2942, %v3024, %v3023
  %v3026 = vsub.s32 4, %v3002
  %v3027 = vsel %vm2942, %v3026, %v3002
  %v3028 = vsel %vm2941, %v2725, %v3025
  %v3029 = vsel %vm2941, 0, %v3027
  %v3030 = vcosq.f32.pop %v3028
  %v3031 = vsinq.f32.pop %v3028
  %vm3032 = vweird.f32 %v2725
  %v3033 = vand.u32 %v3029, 3
  %vm3034 = vcmp.lt.s32.totalorder %v3033, 2
  %vm3035 = vcmp.eq.s32.totalorder %v3033, 0
  %v3036 = vxor.u32 %v3031, 2147483648
  %v3037 = vsel %vm3035, %v3030, %v3036
  %vm3038 = vcmp.eq.s32.totalorder %v3033, 2
  %v3039 = vxor.u32 %v3030, 2147483648
  %v3040 = vsel %vm3038, %v3039, %v3031
  %v3041 = vsel %vm3034, %v3037, %v3040
  %v3042 = vsel %vm3032, nan, %v3041
  %v3043 = vmul.f32 %v2599, %v3042
  %v3044 = vmul.f32 %v3043, %v2938
  %v3045 = vmul.f32 %v3044, %v2938
  %v3046 = vadd.f32 %v2939, %v3045
  %v3047 = vadd.f32 %v3046, 1e-10
  %v3048 = vrsqrt.pop %v3047
  %v3049 = vmul.f32 %v3047, %v3048
  %vm3050 = vcmp.eq.f32.partialorder %v3047, inf
  %v3051 = vsel %vm3050, %v3047, %v3049
  %vm3052 = vcmp.eq.f32.partialorder %v3047, 0.0
  %v3053 = vand.u32 %v3047, 2147483648
  %v3054 = vsel %vm3052, %v3053, %v3051
  %v3055 = vsub.f32 1.0, %v3046
  %v3056 = vadd.f32 %v3055, 1e-10
  %v3057 = vrsqrt.pop %v3056
  %v3058 = vmul.f32 %v3056, %v3057
  %vm3059 = vcmp.eq.f32.partialorder %v3056, inf
  %v3060 = vsel %vm3059, %v3056, %v3058
  %vm3061 = vcmp.eq.f32.partialorder %v3056, 0.0
  %v3062 = vand.u32 %v3056, 2147483648
  %v3063 = vsel %vm3061, %v3062, %v3060
  %v3064 = vand.u32 2147483647, %v3063
  %v3065 = vand.u32 2147483647, %v3054
  %v3066 = vmin.f32 %v3064, %v3065
  %v3067 = vmax.f32 %v3064, %v3065
  %v3068 = vrcp.pop %v3067
  %v3069 = vmul.f32 %v3066, %v3068
  %v3070 = vmul.f32 %v3069, %v3069
  %v3071 = vmul.f32 0.002785687, %v3070
  %v3072 = vadd.f32 %v3071, -0.015866
  %v3073 = vmul.f32 %v3072, %v3070
  %v3074 = vadd.f32 %v3073, 0.04247222
  %v3075 = vmul.f32 %v3074, %v3070
  %v3076 = vadd.f32 %v3075, -0.074975304
  %v3077 = vmul.f32 %v3076, %v3070
  %v3078 = vadd.f32 %v3077, 0.1064488
  %v3079 = vmul.f32 %v3078, %v3070
  %v3080 = vadd.f32 %v3079, -0.14207031
  %v3081 = vmul.f32 %v3080, %v3070
  %v3082 = vadd.f32 %v3081, 0.19993454
  %v3083 = vmul.f32 %v3082, %v3070
  %v3084 = vadd.f32 %v3083, -0.33333147
  %v3085 = vmul.f32 %v3084, %v3070
  %v3086 = vmul.f32 %v3085, %v3069
  %v3087 = vadd.f32 %v3086, %v3069
  %vm3088 = vcmp.gt.f32.partialorder %v3065, %v3064
  %v3089 = vsub.f32 1.5707964, %v3087
  %v3090 = vsel %vm3088, %v3089, %v3087
  %vm3091 = vcmp.lt.f32.partialorder %v3063, 0.0
  %v3092 = vsub.f32 3.1415927, %v3090
  %v3093 = vsel %vm3091, %v3092, %v3090
  %vm3094 = vcmp.lt.s32.totalorder %v3063, 0
  %v3095 = vsel %vm3094, 3.1415927, 0.0
  %vm3096 = vcmp.eq.f32.partialorder %v3054, 0.0
  %v3097 = vsel %vm3096, %v3095, %v3093
  %vm3098 = vcmp.ne.f32.partialorder %v3063, %v3063
  %vm3099 = vcmp.ne.f32.partialorder %v3054, %v3054
  %vm3100 = vmor %vm3098, %vm3099
  %v3101 = vsel %vm3100, nan, %v3097
  %vm3102 = vcmp.lt.f32.partialorder %v3063, 0.0
  %v3103 = vsel %vm3102, 2.3561945, 0.7853982
  %vm3104 = vcmp.eq.s32.totalorder %v3064, inf
  %vm3105 = vcmp.eq.s32.totalorder %v3065, inf
  %vm3106 = vmand %vm3104, %vm3105
  %v3107 = vsel %vm3106, %v3103, %v3101
  %v3108 = vand.u32 2147483647, %v3107
  %v3109 = vand.u32 %v3054, 2147483648
  %v3110 = vor.u32 %v3108, %v3109
  %v3111 = vmul.f32 %v3110, 2.0
  %v3112 = vmul.f32 %v2667, %v3111
  %v3113 = vadd.f32 %v2156, %v3112
  %s3114 = scalar_lea.vmem %s0, 3
  %v3115 = vld [vmem:[%s3114] sm:$0x1]
  %v3116 = vadd.f32 %v2159, %v3115
  %s3117 = scalar_lea.vmem %s247, 3
  %v3118 = vld [vmem:[%s3117] sm:$0x1]
  %v3119 = vadd.f32 %v2168, %v3118
  %vm3120 = vcmp.gt.f32.partialorder %v3119, 360.0
  %v3121 = vsub.f32 %v3119, 360.0
  %vm3122 = vcmp.lt.f32.partialorder %v3119, 0.0
  %v3123 = vadd.f32 %v3119, 360.0
  %v3124 = vsel %vm3122, %v3123, %v3119
  %v3125 = vsel %vm3120, %v3121, %v3124
  %v3126 = vmul.f32 %v3125, 0.017453292
  %v3127 = vand.u32 2147483647, %v3126
  %vm3128 = vcmp.le.f32.partialorder %v3127, 0.7853982
  %vm3129 = vcmp.lt.s32.totalorder %v3126, 0
  %v3130 = vand.u32 %v3126, 2139095040
  %v3131 = vshrl.u32 %v3130, 23
  %v3132 = vsub.s32 %v3131, 127
  %v3133 = vand.u32 2147483647, %v3126
  %v3134 = vand.u32 %v3133, 8388607
  %v3135 = vor.u32 %v3134, 8388608
  %v3136 = vsub.s32 0, %v3135
  %v3137 = vadd.s32 %v3132, 1
  %vm3138 = vcmp.gt.s32.totalorder %v3137, 0
  %v3139 = vsel %vm3138, %v3137, 0
  %v3140 = vshrl.u32 %v3139, 5
  %v3141 = vand.u32 %v3139, 31
  %v3142 = vsub.s32 32, %v3141
  %v3143 = vshrl.u32 683565275, %v3142
  %v3144 = vshll.u32 683565275, %v3141
  %v3145 = vshrl.u32 2475754826, %v3142
  %v3146 = vor.u32 %v3144, %v3145
  %v3147 = vshll.u32 2475754826, %v3141
  %v3148 = vshrl.u32 2131351028, %v3142
  %v3149 = vor.u32 %v3147, %v3148
  %v3150 = vshll.u32 2131351028, %v3141
  %v3151 = vshrl.u32 2102212464, %v3142
  %v3152 = vor.u32 %v3150, %v3151
  %v3153 = vshll.u32 2102212464, %v3141
  %v3154 = vshrl.u32 920167782, %v3142
  %v3155 = vor.u32 %v3153, %v3154
  %v3156 = vshll.u32 920167782, %v3141
  %v3157 = vshrl.u32 1326507024, %v3142
  %v3158 = vor.u32 %v3156, %v3157
  %vm3159 = vcmp.lt.s32.totalorder %v3140, 1
  %vm3160 = vcmp.lt.s32.totalorder %v3140, 2
  %vm3161 = vcmp.lt.s32.totalorder %v3140, 3
  %vm3162 = vcmp.lt.s32.totalorder %v3140, 4
  %v3163 = vsel %vm3159, %v3143, %v3146
  %v3164 = vsel %vm3162, %v3152, 2102212464
  %v3165 = vsel %vm3161, %v3149, %v3164
  %v3166 = vsel %vm3160, %v3163, %v3165
  %v3167 = vsel %vm3159, %v3146, %v3149
  %v3168 = vsel %vm3162, %v3155, 920167782
  %v3169 = vsel %vm3161, %v3152, %v3168
  %v3170 = vsel %vm3160, %v3167, %v3169
  %v3171 = vsel %vm3159, %v3149, %v3152
  %v3172 = vsel %vm3162, %v3158, 1326507024
  %v3173 = vsel %vm3161, %v3155, %v3172
  %v3174 = vsel %vm3160, %v3171, %v3173
  %v3175 = vshll.u32 %v3135, 8
  %v3176 = vmul.u32.u64.compose %v3175, %v3174
  %v3177 = vextract.low.u32 %v3176
  %v3178 = vextract.high.u32 %v3176
  %v3179 = vmul.u32.u64.compose %v3175, %v3170
  %v3180 = vextract.low.u32 %v3179
  %v3181 = vextract.high.u32 %v3179
  %v3182 = vmul.u32 %v3175, %v3166
  %v3183 = vadd.s32 %v3178, %v3180
  %vm3184 = vc.u32 %v3178, %v3180
  %v3185 = vadd.s32 %v3181, 1
  %v3186 = vsel %vm3184, %v3185, %v3181
  %v3187 = vadd.s32 %v3182, %v3186
  %v3188 = vadd.s32 %v3187, 536870912
  %v3189 = vshrl.u32 %v3188, 30
  %v3190 = vshll.u32 %v3189, 30
  %v3191 = vsub.s32 %v3187, %v3190
  %vm3192 = vcmp.lt.s32.totalorder %v3191, 0
  %v3193 = vsub.s32 0, %v3191
  %v3194 = vsel %vm3192, %v3193, %v3191
  %v3195 = vclz %v3194
  %v3196 = vsub.s32 %v3195, 2
  %vm3197 = vcmp.gt.s32.totalorder 0, %v3196
  %v3198 = vsel %vm3197, 0, %v3196
  %v3199 = vsub.s32 32, %v3198
  %v3200 = vshll.u32 %v3191, %v3198
  %v3201 = vshrl.u32 %v3183, %v3199
  %v3202 = vor.u32 %v3200, %v3201
  %v3203 = vsub.s32 4294967266, %v3198
  %v3204 = vadd.s32 %v3203, 127
  %v3205 = vshll.u32 %v3204, 23
  %v3206 = vor.u32 4788187, %v3205
  %v3207 = vand.u32 2147483647, %v3206
  %v3209 = vcvt.s32.f32 %v3202
  %v3210 = vmul.f32 %v3209, %v3207
  %v3211 = vxor.u32 %v3210, 2147483648
  %v3212 = vsel %vm3129, %v3211, %v3210
  %v3213 = vsub.s32 4, %v3189
  %v3214 = vsel %vm3129, %v3213, %v3189
  %v3215 = vsel %vm3128, %v3126, %v3212
  %v3216 = vsel %vm3128, 0, %v3214
  %v3217 = vcosq.f32.pop %v3215
  %v3218 = vsinq.f32.pop %v3215
  %vm3219 = vweird.f32 %v3126
  %v3220 = vadd.s32 %v3216, 3
  %v3221 = vand.u32 %v3220, 3
  %vm3222 = vcmp.lt.s32.totalorder %v3221, 2
  %vm3223 = vcmp.eq.s32.totalorder %v3221, 0
  %v3224 = vxor.u32 %v3218, 2147483648
  %v3225 = vsel %vm3223, %v3217, %v3224
  %vm3226 = vcmp.eq.s32.totalorder %v3221, 2
  %v3227 = vxor.u32 %v3217, 2147483648
  %v3228 = vsel %vm3226, %v3227, %v3218
  %v3229 = vsel %vm3222, %v3225, %v3228
  %v3230 = vsel %vm3219, nan, %v3229
  %v3231 = vand.u32 2147483647, %v3126
  %vm3232 = vcmp.le.f32.partialorder %v3231, 0.7853982
  %vm3233 = vcmp.lt.s32.totalorder %v3126, 0
  %v3234 = vand.u32 %v3126, 2139095040
  %v3235 = vshrl.u32 %v3234, 23
  %v3236 = vsub.s32 %v3235, 127
  %v3237 = vand.u32 2147483647, %v3126
  %v3238 = vand.u32 %v3237, 8388607
  %v3239 = vor.u32 %v3238, 8388608
  %v3240 = vsub.s32 0, %v3239
  %v3241 = vadd.s32 %v3236, 1
  %vm3242 = vcmp.gt.s32.totalorder %v3241, 0
  %v3243 = vsel %vm3242, %v3241, 0
  %v3244 = vshrl.u32 %v3243, 5
  %v3245 = vand.u32 %v3243, 31
  %v3246 = vsub.s32 32, %v3245
  %v3247 = vshrl.u32 683565275, %v3246
  %v3248 = vshll.u32 683565275, %v3245
  %v3249 = vshrl.u32 2475754826, %v3246
  %v3250 = vor.u32 %v3248, %v3249
  %v3251 = vshll.u32 2475754826, %v3245
  %v3252 = vshrl.u32 2131351028, %v3246
  %v3253 = vor.u32 %v3251, %v3252
  %v3254 = vshll.u32 2131351028, %v3245
  %v3255 = vshrl.u32 2102212464, %v3246
  %v3256 = vor.u32 %v3254, %v3255
  %v3257 = vshll.u32 2102212464, %v3245
  %v3258 = vshrl.u32 920167782, %v3246
  %v3259 = vor.u32 %v3257, %v3258
  %v3260 = vshll.u32 920167782, %v3245
  %v3261 = vshrl.u32 1326507024, %v3246
  %v3262 = vor.u32 %v3260, %v3261
  %vm3263 = vcmp.lt.s32.totalorder %v3244, 1
  %vm3264 = vcmp.lt.s32.totalorder %v3244, 2
  %vm3265 = vcmp.lt.s32.totalorder %v3244, 3
  %vm3266 = vcmp.lt.s32.totalorder %v3244, 4
  %v3267 = vsel %vm3263, %v3247, %v3250
  %v3268 = vsel %vm3266, %v3256, 2102212464
  %v3269 = vsel %vm3265, %v3253, %v3268
  %v3270 = vsel %vm3264, %v3267, %v3269
  %v3271 = vsel %vm3263, %v3250, %v3253
  %v3272 = vsel %vm3266, %v3259, 920167782
  %v3273 = vsel %vm3265, %v3256, %v3272
  %v3274 = vsel %vm3264, %v3271, %v3273
  %v3275 = vsel %vm3263, %v3253, %v3256
  %v3276 = vsel %vm3266, %v3262, 1326507024
  %v3277 = vsel %vm3265, %v3259, %v3276
  %v3278 = vsel %vm3264, %v3275, %v3277
  %v3279 = vshll.u32 %v3239, 8
  %v3280 = vmul.u32.u64.compose %v3279, %v3278
  %v3281 = vextract.low.u32 %v3280
  %v3282 = vextract.high.u32 %v3280
  %v3283 = vmul.u32.u64.compose %v3279, %v3274
  %v3284 = vextract.low.u32 %v3283
  %v3285 = vextract.high.u32 %v3283
  %v3286 = vmul.u32 %v3279, %v3270
  %v3287 = vadd.s32 %v3282, %v3284
  %vm3288 = vc.u32 %v3282, %v3284
  %v3289 = vadd.s32 %v3285, 1
  %v3290 = vsel %vm3288, %v3289, %v3285
  %v3291 = vadd.s32 %v3286, %v3290
  %v3292 = vadd.s32 %v3291, 536870912
  %v3293 = vshrl.u32 %v3292, 30
  %v3294 = vshll.u32 %v3293, 30
  %v3295 = vsub.s32 %v3291, %v3294
  %vm3296 = vcmp.lt.s32.totalorder %v3295, 0
  %v3297 = vsub.s32 0, %v3295
  %v3298 = vsel %vm3296, %v3297, %v3295
  %v3299 = vclz %v3298
  %v3300 = vsub.s32 %v3299, 2
  %vm3301 = vcmp.gt.s32.totalorder 0, %v3300
  %v3302 = vsel %vm3301, 0, %v3300
  %v3303 = vsub.s32 32, %v3302
  %v3304 = vshll.u32 %v3295, %v3302
  %v3305 = vshrl.u32 %v3287, %v3303
  %v3306 = vor.u32 %v3304, %v3305
  %v3307 = vsub.s32 4294967266, %v3302
  %v3308 = vadd.s32 %v3307, 127
  %v3309 = vshll.u32 %v3308, 23
  %v3310 = vor.u32 4788187, %v3309
  %v3311 = vand.u32 2147483647, %v3310
  %v3313 = vcvt.s32.f32 %v3306
  %v3314 = vmul.f32 %v3313, %v3311
  %v3315 = vxor.u32 %v3314, 2147483648
  %v3316 = vsel %vm3233, %v3315, %v3314
  %v3317 = vsub.s32 4, %v3293
  %v3318 = vsel %vm3233, %v3317, %v3293
  %v3319 = vsel %vm3232, %v3126, %v3316
  %v3320 = vsel %vm3232, 0, %v3318
  %v3321 = vcosq.f32.pop %v3319
  %v3322 = vsinq.f32.pop %v3319
  %vm3323 = vweird.f32 %v3126
  %v3324 = vand.u32 %v3320, 3
  %vm3325 = vcmp.lt.s32.totalorder %v3324, 2
  %vm3326 = vcmp.eq.s32.totalorder %v3324, 0
  %v3327 = vxor.u32 %v3322, 2147483648
  %v3328 = vsel %vm3326, %v3321, %v3327
  %vm3329 = vcmp.eq.s32.totalorder %v3324, 2
  %v3330 = vxor.u32 %v3321, 2147483648
  %v3331 = vsel %vm3329, %v3330, %v3322
  %v3332 = vsel %vm3325, %v3328, %v3331
  %v3333 = vsel %vm3323, nan, %v3332
  %v3334 = vmul.f32 %v3116, 92.6
  %v3335 = vmul.f32 %v3334, %v2665
  %v3336 = vand.u32 2147483647, %v3335
  %vm3337 = vcmp.le.f32.partialorder %v3336, 0.7853982
  %vm3338 = vcmp.lt.s32.totalorder %v3335, 0
  %v3339 = vand.u32 %v3335, 2139095040
  %v3340 = vshrl.u32 %v3339, 23
  %v3341 = vsub.s32 %v3340, 127
  %v3342 = vand.u32 2147483647, %v3335
  %v3343 = vand.u32 %v3342, 8388607
  %v3344 = vor.u32 %v3343, 8388608
  %v3345 = vsub.s32 0, %v3344
  %v3346 = vadd.s32 %v3341, 1
  %vm3347 = vcmp.gt.s32.totalorder %v3346, 0
  %v3348 = vsel %vm3347, %v3346, 0
  %v3349 = vshrl.u32 %v3348, 5
  %v3350 = vand.u32 %v3348, 31
  %v3351 = vsub.s32 32, %v3350
  %v3352 = vshrl.u32 683565275, %v3351
  %v3353 = vshll.u32 683565275, %v3350
  %v3354 = vshrl.u32 2475754826, %v3351
  %v3355 = vor.u32 %v3353, %v3354
  %v3356 = vshll.u32 2475754826, %v3350
  %v3357 = vshrl.u32 2131351028, %v3351
  %v3358 = vor.u32 %v3356, %v3357
  %v3359 = vshll.u32 2131351028, %v3350
  %v3360 = vshrl.u32 2102212464, %v3351
  %v3361 = vor.u32 %v3359, %v3360
  %v3362 = vshll.u32 2102212464, %v3350
  %v3363 = vshrl.u32 920167782, %v3351
  %v3364 = vor.u32 %v3362, %v3363
  %v3365 = vshll.u32 920167782, %v3350
  %v3366 = vshrl.u32 1326507024, %v3351
  %v3367 = vor.u32 %v3365, %v3366
  %vm3368 = vcmp.lt.s32.totalorder %v3349, 1
  %vm3369 = vcmp.lt.s32.totalorder %v3349, 2
  %vm3370 = vcmp.lt.s32.totalorder %v3349, 3
  %vm3371 = vcmp.lt.s32.totalorder %v3349, 4
  %v3372 = vsel %vm3368, %v3352, %v3355
  %v3373 = vsel %vm3371, %v3361, 2102212464
  %v3374 = vsel %vm3370, %v3358, %v3373
  %v3375 = vsel %vm3369, %v3372, %v3374
  %v3376 = vsel %vm3368, %v3355, %v3358
  %v3377 = vsel %vm3371, %v3364, 920167782
  %v3378 = vsel %vm3370, %v3361, %v3377
  %v3379 = vsel %vm3369, %v3376, %v3378
  %v3380 = vsel %vm3368, %v3358, %v3361
  %v3381 = vsel %vm3371, %v3367, 1326507024
  %v3382 = vsel %vm3370, %v3364, %v3381
  %v3383 = vsel %vm3369, %v3380, %v3382
  %v3384 = vshll.u32 %v3344, 8
  %v3385 = vmul.u32.u64.compose %v3384, %v3383
  %v3386 = vextract.low.u32 %v3385
  %v3387 = vextract.high.u32 %v3385
  %v3388 = vmul.u32.u64.compose %v3384, %v3379
  %v3389 = vextract.low.u32 %v3388
  %v3390 = vextract.high.u32 %v3388
  %v3391 = vmul.u32 %v3384, %v3375
  %v3392 = vadd.s32 %v3387, %v3389
  %vm3393 = vc.u32 %v3387, %v3389
  %v3394 = vadd.s32 %v3390, 1
  %v3395 = vsel %vm3393, %v3394, %v3390
  %v3396 = vadd.s32 %v3391, %v3395
  %v3397 = vadd.s32 %v3396, 536870912
  %v3398 = vshrl.u32 %v3397, 30
  %v3399 = vshll.u32 %v3398, 30
  %v3400 = vsub.s32 %v3396, %v3399
  %vm3401 = vcmp.lt.s32.totalorder %v3400, 0
  %v3402 = vsub.s32 0, %v3400
  %v3403 = vsel %vm3401, %v3402, %v3400
  %v3404 = vclz %v3403
  %v3405 = vsub.s32 %v3404, 2
  %vm3406 = vcmp.gt.s32.totalorder 0, %v3405
  %v3407 = vsel %vm3406, 0, %v3405
  %v3408 = vsub.s32 32, %v3407
  %v3409 = vshll.u32 %v3400, %v3407
  %v3410 = vshrl.u32 %v3392, %v3408
  %v3411 = vor.u32 %v3409, %v3410
  %v3412 = vsub.s32 4294967266, %v3407
  %v3413 = vadd.s32 %v3412, 127
  %v3414 = vshll.u32 %v3413, 23
  %v3415 = vor.u32 4788187, %v3414
  %v3416 = vand.u32 2147483647, %v3415
  %v3418 = vcvt.s32.f32 %v3411
  %v3419 = vmul.f32 %v3418, %v3416
  %v3420 = vxor.u32 %v3419, 2147483648
  %v3421 = vsel %vm3338, %v3420, %v3419
  %v3422 = vsub.s32 4, %v3398
  %v3423 = vsel %vm3338, %v3422, %v3398
  %v3424 = vsel %vm3337, %v3335, %v3421
  %v3425 = vsel %vm3337, 0, %v3423
  %v3426 = vcosq.f32.pop %v3424
  %v3427 = vsinq.f32.pop %v3424
  %vm3428 = vweird.f32 %v3335
  %v3429 = vadd.s32 %v3425, 3
  %v3430 = vand.u32 %v3429, 3
  %vm3431 = vcmp.lt.s32.totalorder %v3430, 2
  %vm3432 = vcmp.eq.s32.totalorder %v3430, 0
  %v3433 = vxor.u32 %v3427, 2147483648
  %v3434 = vsel %vm3432, %v3426, %v3433
  %vm3435 = vcmp.eq.s32.totalorder %v3430, 2
  %v3436 = vxor.u32 %v3426, 2147483648
  %v3437 = vsel %vm3435, %v3436, %v3427
  %v3438 = vsel %vm3431, %v3434, %v3437
  %v3439 = vsel %vm3428, nan, %v3438
  %v3440 = vand.u32 2147483647, %v3335
  %vm3441 = vcmp.le.f32.partialorder %v3440, 0.7853982
  %vm3442 = vcmp.lt.s32.totalorder %v3335, 0
  %v3443 = vand.u32 %v3335, 2139095040
  %v3444 = vshrl.u32 %v3443, 23
  %v3445 = vsub.s32 %v3444, 127
  %v3446 = vand.u32 2147483647, %v3335
  %v3447 = vand.u32 %v3446, 8388607
  %v3448 = vor.u32 %v3447, 8388608
  %v3449 = vsub.s32 0, %v3448
  %v3450 = vadd.s32 %v3445, 1
  %vm3451 = vcmp.gt.s32.totalorder %v3450, 0
  %v3452 = vsel %vm3451, %v3450, 0
  %v3453 = vshrl.u32 %v3452, 5
  %v3454 = vand.u32 %v3452, 31
  %v3455 = vsub.s32 32, %v3454
  %v3456 = vshrl.u32 683565275, %v3455
  %v3457 = vshll.u32 683565275, %v3454
  %v3458 = vshrl.u32 2475754826, %v3455
  %v3459 = vor.u32 %v3457, %v3458
  %v3460 = vshll.u32 2475754826, %v3454
  %v3461 = vshrl.u32 2131351028, %v3455
  %v3462 = vor.u32 %v3460, %v3461
  %v3463 = vshll.u32 2131351028, %v3454
  %v3464 = vshrl.u32 2102212464, %v3455
  %v3465 = vor.u32 %v3463, %v3464
  %v3466 = vshll.u32 2102212464, %v3454
  %v3467 = vshrl.u32 920167782, %v3455
  %v3468 = vor.u32 %v3466, %v3467
  %v3469 = vshll.u32 920167782, %v3454
  %v3470 = vshrl.u32 1326507024, %v3455
  %v3471 = vor.u32 %v3469, %v3470
  %vm3472 = vcmp.lt.s32.totalorder %v3453, 1
  %vm3473 = vcmp.lt.s32.totalorder %v3453, 2
  %vm3474 = vcmp.lt.s32.totalorder %v3453, 3
  %vm3475 = vcmp.lt.s32.totalorder %v3453, 4
  %v3476 = vsel %vm3472, %v3456, %v3459
  %v3477 = vsel %vm3475, %v3465, 2102212464
  %v3478 = vsel %vm3474, %v3462, %v3477
  %v3479 = vsel %vm3473, %v3476, %v3478
  %v3480 = vsel %vm3472, %v3459, %v3462
  %v3481 = vsel %vm3475, %v3468, 920167782
  %v3482 = vsel %vm3474, %v3465, %v3481
  %v3483 = vsel %vm3473, %v3480, %v3482
  %v3484 = vsel %vm3472, %v3462, %v3465
  %v3485 = vsel %vm3475, %v3471, 1326507024
  %v3486 = vsel %vm3474, %v3468, %v3485
  %v3487 = vsel %vm3473, %v3484, %v3486
  %v3488 = vshll.u32 %v3448, 8
  %v3489 = vmul.u32.u64.compose %v3488, %v3487
  %v3490 = vextract.low.u32 %v3489
  %v3491 = vextract.high.u32 %v3489
  %v3492 = vmul.u32.u64.compose %v3488, %v3483
  %v3493 = vextract.low.u32 %v3492
  %v3494 = vextract.high.u32 %v3492
  %v3495 = vmul.u32 %v3488, %v3479
  %v3496 = vadd.s32 %v3491, %v3493
  %vm3497 = vc.u32 %v3491, %v3493
  %v3498 = vadd.s32 %v3494, 1
  %v3499 = vsel %vm3497, %v3498, %v3494
  %v3500 = vadd.s32 %v3495, %v3499
  %v3501 = vadd.s32 %v3500, 536870912
  %v3502 = vshrl.u32 %v3501, 30
  %v3503 = vshll.u32 %v3502, 30
  %v3504 = vsub.s32 %v3500, %v3503
  %vm3505 = vcmp.lt.s32.totalorder %v3504, 0
  %v3506 = vsub.s32 0, %v3504
  %v3507 = vsel %vm3505, %v3506, %v3504
  %v3508 = vclz %v3507
  %v3509 = vsub.s32 %v3508, 2
  %vm3510 = vcmp.gt.s32.totalorder 0, %v3509
  %v3511 = vsel %vm3510, 0, %v3509
  %v3512 = vsub.s32 32, %v3511
  %v3513 = vshll.u32 %v3504, %v3511
  %v3514 = vshrl.u32 %v3496, %v3512
  %v3515 = vor.u32 %v3513, %v3514
  %v3516 = vsub.s32 4294967266, %v3511
  %v3517 = vadd.s32 %v3516, 127
  %v3518 = vshll.u32 %v3517, 23
  %v3519 = vor.u32 4788187, %v3518
  %v3520 = vand.u32 2147483647, %v3519
  %v3522 = vcvt.s32.f32 %v3515
  %v3523 = vmul.f32 %v3522, %v3520
  %v3524 = vxor.u32 %v3523, 2147483648
  %v3525 = vsel %vm3442, %v3524, %v3523
  %v3526 = vsub.s32 4, %v3502
  %v3527 = vsel %vm3442, %v3526, %v3502
  %v3528 = vsel %vm3441, %v3335, %v3525
  %v3529 = vsel %vm3441, 0, %v3527
  %v3530 = vcosq.f32.pop %v3528
  %v3531 = vsinq.f32.pop %v3528
  %vm3532 = vweird.f32 %v3335
  %v3533 = vand.u32 %v3529, 3
  %vm3534 = vcmp.lt.s32.totalorder %v3533, 2
  %vm3535 = vcmp.eq.s32.totalorder %v3533, 0
  %v3536 = vxor.u32 %v3531, 2147483648
  %v3537 = vsel %vm3535, %v3530, %v3536
  %vm3538 = vcmp.eq.s32.totalorder %v3533, 2
  %v3539 = vxor.u32 %v3530, 2147483648
  %v3540 = vsel %vm3538, %v3539, %v3531
  %v3541 = vsel %vm3534, %v3537, %v3540
  %v3542 = vsel %vm3532, nan, %v3541
  %v3543 = vmul.f32 %v2589, %v3542
  %v3544 = vmul.f32 %v2599, %v3439
  %v3545 = vmul.f32 %v3544, %v3333
  %v3546 = vadd.f32 %v3543, %v3545
  %v3547 = vmul.f32 %v3546, %v3546
  %v3548 = vsub.f32 1.0, %v3547
  %v3549 = vmax.f32 %v3548, 0.0
  %v3550 = vrsqrt.pop %v3549
  %v3551 = vmul.f32 %v3549, %v3550
  %vm3552 = vcmp.eq.f32.partialorder %v3549, inf
  %v3553 = vsel %vm3552, %v3549, %v3551
  %vm3554 = vcmp.eq.f32.partialorder %v3549, 0.0
  %v3555 = vand.u32 %v3549, 2147483648
  %v3556 = vsel %vm3554, %v3555, %v3553
  %v3557 = vmul.f32 %v3230, %v3439
  %v3558 = vmul.f32 %v3557, %v2599
  %v3559 = vmul.f32 %v2589, %v3546
  %v3560 = vsub.f32 %v3542, %v3559
  %v3561 = vand.u32 2147483647, %v3560
  %v3562 = vand.u32 2147483647, %v3558
  %v3563 = vmin.f32 %v3561, %v3562
  %v3564 = vmax.f32 %v3561, %v3562
  %v3565 = vrcp.pop %v3564
  %v3566 = vmul.f32 %v3563, %v3565
  %v3567 = vmul.f32 %v3566, %v3566
  %v3568 = vmul.f32 0.002785687, %v3567
  %v3569 = vadd.f32 %v3568, -0.015866
  %v3570 = vmul.f32 %v3569, %v3567
  %v3571 = vadd.f32 %v3570, 0.04247222
  %v3572 = vmul.f32 %v3571, %v3567
  %v3573 = vadd.f32 %v3572, -0.074975304
  %v3574 = vmul.f32 %v3573, %v3567
  %v3575 = vadd.f32 %v3574, 0.1064488
  %v3576 = vmul.f32 %v3575, %v3567
  %v3577 = vadd.f32 %v3576, -0.14207031
  %v3578 = vmul.f32 %v3577, %v3567
  %v3579 = vadd.f32 %v3578, 0.19993454
  %v3580 = vmul.f32 %v3579, %v3567
  %v3581 = vadd.f32 %v3580, -0.33333147
  %v3582 = vmul.f32 %v3581, %v3567
  %v3583 = vmul.f32 %v3582, %v3566
  %v3584 = vadd.f32 %v3583, %v3566
  %vm3585 = vcmp.gt.f32.partialorder %v3562, %v3561
  %v3586 = vsub.f32 1.5707964, %v3584
  %v3587 = vsel %vm3585, %v3586, %v3584
  %vm3588 = vcmp.lt.f32.partialorder %v3560, 0.0
  %v3589 = vsub.f32 3.1415927, %v3587
  %v3590 = vsel %vm3588, %v3589, %v3587
  %vm3591 = vcmp.lt.s32.totalorder %v3560, 0
  %v3592 = vsel %vm3591, 3.1415927, 0.0
  %vm3593 = vcmp.eq.f32.partialorder %v3558, 0.0
  %v3594 = vsel %vm3593, %v3592, %v3590
  %vm3595 = vcmp.ne.f32.partialorder %v3560, %v3560
  %vm3596 = vcmp.ne.f32.partialorder %v3558, %v3558
  %vm3597 = vmor %vm3595, %vm3596
  %v3598 = vsel %vm3597, nan, %v3594
  %vm3599 = vcmp.lt.f32.partialorder %v3560, 0.0
  %v3600 = vsel %vm3599, 2.3561945, 0.7853982
  %vm3601 = vcmp.eq.s32.totalorder %v3561, inf
  %vm3602 = vcmp.eq.s32.totalorder %v3562, inf
  %vm3603 = vmand %vm3601, %vm3602
  %v3604 = vsel %vm3603, %v3600, %v3598
  %v3605 = vand.u32 2147483647, %v3604
  %v3606 = vand.u32 %v3558, 2147483648
  %v3607 = vor.u32 %v3605, %v3606
  %v3608 = vadd.f32 %v2651, %v3607
  %v3609 = vmul.f32 %v3556, 4.068063e+13
  %v3610 = vmul.f32 %v3546, 4.04083e+13
  %v3611 = vmul.f32 %v3556, 6378137.0
  %v3612 = vmul.f32 %v3546, 6356752.5
  %v3613 = vmul.f32 %v3609, %v3609
  %v3614 = vmul.f32 %v3610, %v3610
  %v3615 = vadd.f32 %v3613, %v3614
  %v3616 = vmul.f32 %v3611, %v3611
  %v3617 = vmul.f32 %v3612, %v3612
  %v3618 = vadd.f32 %v3616, %v3617
  %v3619 = vrcp.pop %v3618
  %v3620 = vmul.f32 %v3615, %v3619
  %v3621 = vadd.f32 %v3620, 1e-10
  %v3622 = vrsqrt.pop %v3621
  %v3623 = vmul.f32 %v3621, %v3622
  %v3624 = vmul.f32 %v3623, 0.001
  %v3625 = vand.u32 2147483647, %v3556
  %v3626 = vand.u32 2147483647, %v3546
  %v3627 = vmin.f32 %v3625, %v3626
  %v3628 = vmax.f32 %v3625, %v3626
  %v3629 = vrcp.pop %v3628
  %v3630 = vmul.f32 %v3627, %v3629
  %v3631 = vmul.f32 %v3630, %v3630
  %v3632 = vmul.f32 0.002785687, %v3631
  %v3633 = vadd.f32 %v3632, -0.015866
  %v3634 = vmul.f32 %v3633, %v3631
  %v3635 = vadd.f32 %v3634, 0.04247222
  %v3636 = vmul.f32 %v3635, %v3631
  %v3637 = vadd.f32 %v3636, -0.074975304
  %v3638 = vmul.f32 %v3637, %v3631
  %v3639 = vadd.f32 %v3638, 0.1064488
  %v3640 = vmul.f32 %v3639, %v3631
  %v3641 = vadd.f32 %v3640, -0.14207031
  %v3642 = vmul.f32 %v3641, %v3631
  %v3643 = vadd.f32 %v3642, 0.19993454
  %v3644 = vmul.f32 %v3643, %v3631
  %v3645 = vadd.f32 %v3644, -0.33333147
  %v3646 = vmul.f32 %v3645, %v3631
  %v3647 = vmul.f32 %v3646, %v3630
  %v3648 = vadd.f32 %v3647, %v3630
  %vm3649 = vcmp.gt.f32.partialorder %v3626, %v3625
  %v3650 = vsub.f32 1.5707964, %v3648
  %v3651 = vsel %vm3649, %v3650, %v3648
  %vm3652 = vcmp.lt.f32.partialorder %v3556, 0.0
  %v3653 = vsub.f32 3.1415927, %v3651
  %v3654 = vsel %vm3652, %v3653, %v3651
  %vm3655 = vcmp.lt.s32.totalorder %v3556, 0
  %v3656 = vsel %vm3655, 3.1415927, 0.0
  %vm3657 = vcmp.eq.f32.partialorder %v3546, 0.0
  %v3658 = vsel %vm3657, %v3656, %v3654
  %vm3659 = vcmp.ne.f32.partialorder %v3556, %v3556
  %vm3660 = vcmp.ne.f32.partialorder %v3546, %v3546
  %vm3661 = vmor %vm3659, %vm3660
  %v3662 = vsel %vm3661, nan, %v3658
  %vm3663 = vcmp.lt.f32.partialorder %v3556, 0.0
  %v3664 = vsel %vm3663, 2.3561945, 0.7853982
  %vm3665 = vcmp.eq.s32.totalorder %v3625, inf
  %vm3666 = vcmp.eq.s32.totalorder %v3626, inf
  %vm3667 = vmand %vm3665, %vm3666
  %v3668 = vsel %vm3667, %v3664, %v3662
  %v3669 = vand.u32 2147483647, %v3668
  %v3670 = vand.u32 %v3546, 2147483648
  %v3671 = vor.u32 %v3669, %v3670
  %v3672 = vmul.f32 %v3608, 57.29578
  %s3673 = scalar_lea.vmem %s4, 3
  %3674 = vst [vmem:[%s3673] sm:$0x1] %v3672
  %v3675 = vmul.f32 %v3671, 57.29578
  %s3676 = scalar_lea.vmem %s805, 3
  %3677 = vst [vmem:[%s3676] sm:$0x1] %v3675
  %s3678 = scalar_lea.vmem %s16, 4
  %v3679 = vld [vmem:[%s3678] sm:$0x1]
  %s3680 = scalar_lea.vmem %s1, 4
  %v3681 = vld [vmem:[%s3680] sm:$0x1]
  %v3682 = vmul.f32 %v3679, 0.017453292
  %v3683 = vsub.f32 %v3682, %v3671
  %v3684 = vmul.f32 %v3681, 0.017453292
  %v3685 = vsub.f32 %v3684, %v3608
  %v3686 = vmul.f32 %v3683, 0.5
  %v3687 = vand.u32 2147483647, %v3686
  %vm3688 = vcmp.le.f32.partialorder %v3687, 0.7853982
  %vm3689 = vcmp.lt.s32.totalorder %v3686, 0
  %v3690 = vand.u32 %v3686, 2139095040
  %v3691 = vshrl.u32 %v3690, 23
  %v3692 = vsub.s32 %v3691, 127
  %v3693 = vand.u32 2147483647, %v3686
  %v3694 = vand.u32 %v3693, 8388607
  %v3695 = vor.u32 %v3694, 8388608
  %v3696 = vsub.s32 0, %v3695
  %v3697 = vadd.s32 %v3692, 1
  %vm3698 = vcmp.gt.s32.totalorder %v3697, 0
  %v3699 = vsel %vm3698, %v3697, 0
  %v3700 = vshrl.u32 %v3699, 5
  %v3701 = vand.u32 %v3699, 31
  %v3702 = vsub.s32 32, %v3701
  %v3703 = vshrl.u32 683565275, %v3702
  %v3704 = vshll.u32 683565275, %v3701
  %v3705 = vshrl.u32 2475754826, %v3702
  %v3706 = vor.u32 %v3704, %v3705
  %v3707 = vshll.u32 2475754826, %v3701
  %v3708 = vshrl.u32 2131351028, %v3702
  %v3709 = vor.u32 %v3707, %v3708
  %v3710 = vshll.u32 2131351028, %v3701
  %v3711 = vshrl.u32 2102212464, %v3702
  %v3712 = vor.u32 %v3710, %v3711
  %v3713 = vshll.u32 2102212464, %v3701
  %v3714 = vshrl.u32 920167782, %v3702
  %v3715 = vor.u32 %v3713, %v3714
  %v3716 = vshll.u32 920167782, %v3701
  %v3717 = vshrl.u32 1326507024, %v3702
  %v3718 = vor.u32 %v3716, %v3717
  %vm3719 = vcmp.lt.s32.totalorder %v3700, 1
  %vm3720 = vcmp.lt.s32.totalorder %v3700, 2
  %vm3721 = vcmp.lt.s32.totalorder %v3700, 3
  %vm3722 = vcmp.lt.s32.totalorder %v3700, 4
  %v3723 = vsel %vm3719, %v3703, %v3706
  %v3724 = vsel %vm3722, %v3712, 2102212464
  %v3725 = vsel %vm3721, %v3709, %v3724
  %v3726 = vsel %vm3720, %v3723, %v3725
  %v3727 = vsel %vm3719, %v3706, %v3709
  %v3728 = vsel %vm3722, %v3715, 920167782
  %v3729 = vsel %vm3721, %v3712, %v3728
  %v3730 = vsel %vm3720, %v3727, %v3729
  %v3731 = vsel %vm3719, %v3709, %v3712
  %v3732 = vsel %vm3722, %v3718, 1326507024
  %v3733 = vsel %vm3721, %v3715, %v3732
  %v3734 = vsel %vm3720, %v3731, %v3733
  %v3735 = vshll.u32 %v3695, 8
  %v3736 = vmul.u32.u64.compose %v3735, %v3734
  %v3737 = vextract.low.u32 %v3736
  %v3738 = vextract.high.u32 %v3736
  %v3739 = vmul.u32.u64.compose %v3735, %v3730
  %v3740 = vextract.low.u32 %v3739
  %v3741 = vextract.high.u32 %v3739
  %v3742 = vmul.u32 %v3735, %v3726
  %v3743 = vadd.s32 %v3738, %v3740
  %vm3744 = vc.u32 %v3738, %v3740
  %v3745 = vadd.s32 %v3741, 1
  %v3746 = vsel %vm3744, %v3745, %v3741
  %v3747 = vadd.s32 %v3742, %v3746
  %v3748 = vadd.s32 %v3747, 536870912
  %v3749 = vshrl.u32 %v3748, 30
  %v3750 = vshll.u32 %v3749, 30
  %v3751 = vsub.s32 %v3747, %v3750
  %vm3752 = vcmp.lt.s32.totalorder %v3751, 0
  %v3753 = vsub.s32 0, %v3751
  %v3754 = vsel %vm3752, %v3753, %v3751
  %v3755 = vclz %v3754
  %v3756 = vsub.s32 %v3755, 2
  %vm3757 = vcmp.gt.s32.totalorder 0, %v3756
  %v3758 = vsel %vm3757, 0, %v3756
  %v3759 = vsub.s32 32, %v3758
  %v3760 = vshll.u32 %v3751, %v3758
  %v3761 = vshrl.u32 %v3743, %v3759
  %v3762 = vor.u32 %v3760, %v3761
  %v3763 = vsub.s32 4294967266, %v3758
  %v3764 = vadd.s32 %v3763, 127
  %v3765 = vshll.u32 %v3764, 23
  %v3766 = vor.u32 4788187, %v3765
  %v3767 = vand.u32 2147483647, %v3766
  %v3769 = vcvt.s32.f32 %v3762
  %v3770 = vmul.f32 %v3769, %v3767
  %v3771 = vxor.u32 %v3770, 2147483648
  %v3772 = vsel %vm3689, %v3771, %v3770
  %v3773 = vsub.s32 4, %v3749
  %v3774 = vsel %vm3689, %v3773, %v3749
  %v3775 = vsel %vm3688, %v3686, %v3772
  %v3776 = vsel %vm3688, 0, %v3774
  %v3777 = vcosq.f32.pop %v3775
  %v3778 = vsinq.f32.pop %v3775
  %vm3779 = vweird.f32 %v3686
  %v3780 = vadd.s32 %v3776, 3
  %v3781 = vand.u32 %v3780, 3
  %vm3782 = vcmp.lt.s32.totalorder %v3781, 2
  %vm3783 = vcmp.eq.s32.totalorder %v3781, 0
  %v3784 = vxor.u32 %v3778, 2147483648
  %v3785 = vsel %vm3783, %v3777, %v3784
  %vm3786 = vcmp.eq.s32.totalorder %v3781, 2
  %v3787 = vxor.u32 %v3777, 2147483648
  %v3788 = vsel %vm3786, %v3787, %v3778
  %v3789 = vsel %vm3782, %v3785, %v3788
  %v3790 = vsel %vm3779, nan, %v3789
  %v3791 = vmul.f32 %v3685, 0.5
  %v3792 = vand.u32 2147483647, %v3791
  %vm3793 = vcmp.le.f32.partialorder %v3792, 0.7853982
  %vm3794 = vcmp.lt.s32.totalorder %v3791, 0
  %v3795 = vand.u32 %v3791, 2139095040
  %v3796 = vshrl.u32 %v3795, 23
  %v3797 = vsub.s32 %v3796, 127
  %v3798 = vand.u32 2147483647, %v3791
  %v3799 = vand.u32 %v3798, 8388607
  %v3800 = vor.u32 %v3799, 8388608
  %v3801 = vsub.s32 0, %v3800
  %v3802 = vadd.s32 %v3797, 1
  %vm3803 = vcmp.gt.s32.totalorder %v3802, 0
  %v3804 = vsel %vm3803, %v3802, 0
  %v3805 = vshrl.u32 %v3804, 5
  %v3806 = vand.u32 %v3804, 31
  %v3807 = vsub.s32 32, %v3806
  %v3808 = vshrl.u32 683565275, %v3807
  %v3809 = vshll.u32 683565275, %v3806
  %v3810 = vshrl.u32 2475754826, %v3807
  %v3811 = vor.u32 %v3809, %v3810
  %v3812 = vshll.u32 2475754826, %v3806
  %v3813 = vshrl.u32 2131351028, %v3807
  %v3814 = vor.u32 %v3812, %v3813
  %v3815 = vshll.u32 2131351028, %v3806
  %v3816 = vshrl.u32 2102212464, %v3807
  %v3817 = vor.u32 %v3815, %v3816
  %v3818 = vshll.u32 2102212464, %v3806
  %v3819 = vshrl.u32 920167782, %v3807
  %v3820 = vor.u32 %v3818, %v3819
  %v3821 = vshll.u32 920167782, %v3806
  %v3822 = vshrl.u32 1326507024, %v3807
  %v3823 = vor.u32 %v3821, %v3822
  %vm3824 = vcmp.lt.s32.totalorder %v3805, 1
  %vm3825 = vcmp.lt.s32.totalorder %v3805, 2
  %vm3826 = vcmp.lt.s32.totalorder %v3805, 3
  %vm3827 = vcmp.lt.s32.totalorder %v3805, 4
  %v3828 = vsel %vm3824, %v3808, %v3811
  %v3829 = vsel %vm3827, %v3817, 2102212464
  %v3830 = vsel %vm3826, %v3814, %v3829
  %v3831 = vsel %vm3825, %v3828, %v3830
  %v3832 = vsel %vm3824, %v3811, %v3814
  %v3833 = vsel %vm3827, %v3820, 920167782
  %v3834 = vsel %vm3826, %v3817, %v3833
  %v3835 = vsel %vm3825, %v3832, %v3834
  %v3836 = vsel %vm3824, %v3814, %v3817
  %v3837 = vsel %vm3827, %v3823, 1326507024
  %v3838 = vsel %vm3826, %v3820, %v3837
  %v3839 = vsel %vm3825, %v3836, %v3838
  %v3840 = vshll.u32 %v3800, 8
  %v3841 = vmul.u32.u64.compose %v3840, %v3839
  %v3842 = vextract.low.u32 %v3841
  %v3843 = vextract.high.u32 %v3841
  %v3844 = vmul.u32.u64.compose %v3840, %v3835
  %v3845 = vextract.low.u32 %v3844
  %v3846 = vextract.high.u32 %v3844
  %v3847 = vmul.u32 %v3840, %v3831
  %v3848 = vadd.s32 %v3843, %v3845
  %vm3849 = vc.u32 %v3843, %v3845
  %v3850 = vadd.s32 %v3846, 1
  %v3851 = vsel %vm3849, %v3850, %v3846
  %v3852 = vadd.s32 %v3847, %v3851
  %v3853 = vadd.s32 %v3852, 536870912
  %v3854 = vshrl.u32 %v3853, 30
  %v3855 = vshll.u32 %v3854, 30
  %v3856 = vsub.s32 %v3852, %v3855
  %vm3857 = vcmp.lt.s32.totalorder %v3856, 0
  %v3858 = vsub.s32 0, %v3856
  %v3859 = vsel %vm3857, %v3858, %v3856
  %v3860 = vclz %v3859
  %v3861 = vsub.s32 %v3860, 2
  %vm3862 = vcmp.gt.s32.totalorder 0, %v3861
  %v3863 = vsel %vm3862, 0, %v3861
  %v3864 = vsub.s32 32, %v3863
  %v3865 = vshll.u32 %v3856, %v3863
  %v3866 = vshrl.u32 %v3848, %v3864
  %v3867 = vor.u32 %v3865, %v3866
  %v3868 = vsub.s32 4294967266, %v3863
  %v3869 = vadd.s32 %v3868, 127
  %v3870 = vshll.u32 %v3869, 23
  %v3871 = vor.u32 4788187, %v3870
  %v3872 = vand.u32 2147483647, %v3871
  %v3874 = vcvt.s32.f32 %v3867
  %v3875 = vmul.f32 %v3874, %v3872
  %v3876 = vxor.u32 %v3875, 2147483648
  %v3877 = vsel %vm3794, %v3876, %v3875
  %v3878 = vsub.s32 4, %v3854
  %v3879 = vsel %vm3794, %v3878, %v3854
  %v3880 = vsel %vm3793, %v3791, %v3877
  %v3881 = vsel %vm3793, 0, %v3879
  %v3882 = vcosq.f32.pop %v3880
  %v3883 = vsinq.f32.pop %v3880
  %vm3884 = vweird.f32 %v3791
  %v3885 = vadd.s32 %v3881, 3
  %v3886 = vand.u32 %v3885, 3
  %vm3887 = vcmp.lt.s32.totalorder %v3886, 2
  %vm3888 = vcmp.eq.s32.totalorder %v3886, 0
  %v3889 = vxor.u32 %v3883, 2147483648
  %v3890 = vsel %vm3888, %v3882, %v3889
  %vm3891 = vcmp.eq.s32.totalorder %v3886, 2
  %v3892 = vxor.u32 %v3882, 2147483648
  %v3893 = vsel %vm3891, %v3892, %v3883
  %v3894 = vsel %vm3887, %v3890, %v3893
  %v3895 = vsel %vm3884, nan, %v3894
  %v3896 = vmul.f32 %v3790, %v3790
  %v3897 = vand.u32 2147483647, %v3682
  %vm3898 = vcmp.le.f32.partialorder %v3897, 0.7853982
  %vm3899 = vcmp.lt.s32.totalorder %v3682, 0
  %v3900 = vand.u32 %v3682, 2139095040
  %v3901 = vshrl.u32 %v3900, 23
  %v3902 = vsub.s32 %v3901, 127
  %v3903 = vand.u32 2147483647, %v3682
  %v3904 = vand.u32 %v3903, 8388607
  %v3905 = vor.u32 %v3904, 8388608
  %v3906 = vsub.s32 0, %v3905
  %v3907 = vadd.s32 %v3902, 1
  %vm3908 = vcmp.gt.s32.totalorder %v3907, 0
  %v3909 = vsel %vm3908, %v3907, 0
  %v3910 = vshrl.u32 %v3909, 5
  %v3911 = vand.u32 %v3909, 31
  %v3912 = vsub.s32 32, %v3911
  %v3913 = vshrl.u32 683565275, %v3912
  %v3914 = vshll.u32 683565275, %v3911
  %v3915 = vshrl.u32 2475754826, %v3912
  %v3916 = vor.u32 %v3914, %v3915
  %v3917 = vshll.u32 2475754826, %v3911
  %v3918 = vshrl.u32 2131351028, %v3912
  %v3919 = vor.u32 %v3917, %v3918
  %v3920 = vshll.u32 2131351028, %v3911
  %v3921 = vshrl.u32 2102212464, %v3912
  %v3922 = vor.u32 %v3920, %v3921
  %v3923 = vshll.u32 2102212464, %v3911
  %v3924 = vshrl.u32 920167782, %v3912
  %v3925 = vor.u32 %v3923, %v3924
  %v3926 = vshll.u32 920167782, %v3911
  %v3927 = vshrl.u32 1326507024, %v3912
  %v3928 = vor.u32 %v3926, %v3927
  %vm3929 = vcmp.lt.s32.totalorder %v3910, 1
  %vm3930 = vcmp.lt.s32.totalorder %v3910, 2
  %vm3931 = vcmp.lt.s32.totalorder %v3910, 3
  %vm3932 = vcmp.lt.s32.totalorder %v3910, 4
  %v3933 = vsel %vm3929, %v3913, %v3916
  %v3934 = vsel %vm3932, %v3922, 2102212464
  %v3935 = vsel %vm3931, %v3919, %v3934
  %v3936 = vsel %vm3930, %v3933, %v3935
  %v3937 = vsel %vm3929, %v3916, %v3919
  %v3938 = vsel %vm3932, %v3925, 920167782
  %v3939 = vsel %vm3931, %v3922, %v3938
  %v3940 = vsel %vm3930, %v3937, %v3939
  %v3941 = vsel %vm3929, %v3919, %v3922
  %v3942 = vsel %vm3932, %v3928, 1326507024
  %v3943 = vsel %vm3931, %v3925, %v3942
  %v3944 = vsel %vm3930, %v3941, %v3943
  %v3945 = vshll.u32 %v3905, 8
  %v3946 = vmul.u32.u64.compose %v3945, %v3944
  %v3947 = vextract.low.u32 %v3946
  %v3948 = vextract.high.u32 %v3946
  %v3949 = vmul.u32.u64.compose %v3945, %v3940
  %v3950 = vextract.low.u32 %v3949
  %v3951 = vextract.high.u32 %v3949
  %v3952 = vmul.u32 %v3945, %v3936
  %v3953 = vadd.s32 %v3948, %v3950
  %vm3954 = vc.u32 %v3948, %v3950
  %v3955 = vadd.s32 %v3951, 1
  %v3956 = vsel %vm3954, %v3955, %v3951
  %v3957 = vadd.s32 %v3952, %v3956
  %v3958 = vadd.s32 %v3957, 536870912
  %v3959 = vshrl.u32 %v3958, 30
  %v3960 = vshll.u32 %v3959, 30
  %v3961 = vsub.s32 %v3957, %v3960
  %vm3962 = vcmp.lt.s32.totalorder %v3961, 0
  %v3963 = vsub.s32 0, %v3961
  %v3964 = vsel %vm3962, %v3963, %v3961
  %v3965 = vclz %v3964
  %v3966 = vsub.s32 %v3965, 2
  %vm3967 = vcmp.gt.s32.totalorder 0, %v3966
  %v3968 = vsel %vm3967, 0, %v3966
  %v3969 = vsub.s32 32, %v3968
  %v3970 = vshll.u32 %v3961, %v3968
  %v3971 = vshrl.u32 %v3953, %v3969
  %v3972 = vor.u32 %v3970, %v3971
  %v3973 = vsub.s32 4294967266, %v3968
  %v3974 = vadd.s32 %v3973, 127
  %v3975 = vshll.u32 %v3974, 23
  %v3976 = vor.u32 4788187, %v3975
  %v3977 = vand.u32 2147483647, %v3976
  %v3979 = vcvt.s32.f32 %v3972
  %v3980 = vmul.f32 %v3979, %v3977
  %v3981 = vxor.u32 %v3980, 2147483648
  %v3982 = vsel %vm3899, %v3981, %v3980
  %v3983 = vsub.s32 4, %v3959
  %v3984 = vsel %vm3899, %v3983, %v3959
  %v3985 = vsel %vm3898, %v3682, %v3982
  %v3986 = vsel %vm3898, 0, %v3984
  %v3987 = vcosq.f32.pop %v3985
  %v3988 = vsinq.f32.pop %v3985
  %vm3989 = vweird.f32 %v3682
  %v3990 = vand.u32 %v3986, 3
  %vm3991 = vcmp.lt.s32.totalorder %v3990, 2
  %vm3992 = vcmp.eq.s32.totalorder %v3990, 0
  %v3993 = vxor.u32 %v3988, 2147483648
  %v3994 = vsel %vm3992, %v3987, %v3993
  %vm3995 = vcmp.eq.s32.totalorder %v3990, 2
  %v3996 = vxor.u32 %v3987, 2147483648
  %v3997 = vsel %vm3995, %v3996, %v3988
  %v3998 = vsel %vm3991, %v3994, %v3997
  %v3999 = vsel %vm3989, nan, %v3998
  %v4000 = vmul.f32 %v3556, %v3999
  %v4001 = vmul.f32 %v4000, %v3895
  %v4002 = vmul.f32 %v4001, %v3895
  %v4003 = vadd.f32 %v3896, %v4002
  %v4004 = vadd.f32 %v4003, 1e-10
  %v4005 = vrsqrt.pop %v4004
  %v4006 = vmul.f32 %v4004, %v4005
  %vm4007 = vcmp.eq.f32.partialorder %v4004, inf
  %v4008 = vsel %vm4007, %v4004, %v4006
  %vm4009 = vcmp.eq.f32.partialorder %v4004, 0.0
  %v4010 = vand.u32 %v4004, 2147483648
  %v4011 = vsel %vm4009, %v4010, %v4008
  %v4012 = vsub.f32 1.0, %v4003
  %v4013 = vadd.f32 %v4012, 1e-10
  %v4014 = vrsqrt.pop %v4013
  %v4015 = vmul.f32 %v4013, %v4014
  %vm4016 = vcmp.eq.f32.partialorder %v4013, inf
  %v4017 = vsel %vm4016, %v4013, %v4015
  %vm4018 = vcmp.eq.f32.partialorder %v4013, 0.0
  %v4019 = vand.u32 %v4013, 2147483648
  %v4020 = vsel %vm4018, %v4019, %v4017
  %v4021 = vand.u32 2147483647, %v4020
  %v4022 = vand.u32 2147483647, %v4011
  %v4023 = vmin.f32 %v4021, %v4022
  %v4024 = vmax.f32 %v4021, %v4022
  %v4025 = vrcp.pop %v4024
  %v4026 = vmul.f32 %v4023, %v4025
  %v4027 = vmul.f32 %v4026, %v4026
  %v4028 = vmul.f32 0.002785687, %v4027
  %v4029 = vadd.f32 %v4028, -0.015866
  %v4030 = vmul.f32 %v4029, %v4027
  %v4031 = vadd.f32 %v4030, 0.04247222
  %v4032 = vmul.f32 %v4031, %v4027
  %v4033 = vadd.f32 %v4032, -0.074975304
  %v4034 = vmul.f32 %v4033, %v4027
  %v4035 = vadd.f32 %v4034, 0.1064488
  %v4036 = vmul.f32 %v4035, %v4027
  %v4037 = vadd.f32 %v4036, -0.14207031
  %v4038 = vmul.f32 %v4037, %v4027
  %v4039 = vadd.f32 %v4038, 0.19993454
  %v4040 = vmul.f32 %v4039, %v4027
  %v4041 = vadd.f32 %v4040, -0.33333147
  %v4042 = vmul.f32 %v4041, %v4027
  %v4043 = vmul.f32 %v4042, %v4026
  %v4044 = vadd.f32 %v4043, %v4026
  %vm4045 = vcmp.gt.f32.partialorder %v4022, %v4021
  %v4046 = vsub.f32 1.5707964, %v4044
  %v4047 = vsel %vm4045, %v4046, %v4044
  %vm4048 = vcmp.lt.f32.partialorder %v4020, 0.0
  %v4049 = vsub.f32 3.1415927, %v4047
  %v4050 = vsel %vm4048, %v4049, %v4047
  %vm4051 = vcmp.lt.s32.totalorder %v4020, 0
  %v4052 = vsel %vm4051, 3.1415927, 0.0
  %vm4053 = vcmp.eq.f32.partialorder %v4011, 0.0
  %v4054 = vsel %vm4053, %v4052, %v4050
  %vm4055 = vcmp.ne.f32.partialorder %v4020, %v4020
  %vm4056 = vcmp.ne.f32.partialorder %v4011, %v4011
  %vm4057 = vmor %vm4055, %vm4056
  %v4058 = vsel %vm4057, nan, %v4054
  %vm4059 = vcmp.lt.f32.partialorder %v4020, 0.0
  %v4060 = vsel %vm4059, 2.3561945, 0.7853982
  %vm4061 = vcmp.eq.s32.totalorder %v4021, inf
  %vm4062 = vcmp.eq.s32.totalorder %v4022, inf
  %vm4063 = vmand %vm4061, %vm4062
  %v4064 = vsel %vm4063, %v4060, %v4058
  %v4065 = vand.u32 2147483647, %v4064
  %v4066 = vand.u32 %v4011, 2147483648
  %v4067 = vor.u32 %v4065, %v4066
  %v4068 = vmul.f32 %v4067, 2.0
  %v4069 = vmul.f32 %v3624, %v4068
  %v4070 = vadd.f32 %v3113, %v4069
  %s4071 = scalar_lea.vmem %s0, 4
  %v4072 = vld [vmem:[%s4071] sm:$0x1]
  %v4073 = vadd.f32 %v3116, %v4072
  %s4074 = scalar_lea.vmem %s247, 4
  %v4075 = vld [vmem:[%s4074] sm:$0x1]
  %v4076 = vadd.f32 %v3125, %v4075
  %vm4077 = vcmp.gt.f32.partialorder %v4076, 360.0
  %v4078 = vsub.f32 %v4076, 360.0
  %vm4079 = vcmp.lt.f32.partialorder %v4076, 0.0
  %v4080 = vadd.f32 %v4076, 360.0
  %v4081 = vsel %vm4079, %v4080, %v4076
  %v4082 = vsel %vm4077, %v4078, %v4081
  %v4083 = vmul.f32 %v4082, 0.017453292
  %v4084 = vand.u32 2147483647, %v4083
  %vm4085 = vcmp.le.f32.partialorder %v4084, 0.7853982
  %vm4086 = vcmp.lt.s32.totalorder %v4083, 0
  %v4087 = vand.u32 %v4083, 2139095040
  %v4088 = vshrl.u32 %v4087, 23
  %v4089 = vsub.s32 %v4088, 127
  %v4090 = vand.u32 2147483647, %v4083
  %v4091 = vand.u32 %v4090, 8388607
  %v4092 = vor.u32 %v4091, 8388608
  %v4093 = vsub.s32 0, %v4092
  %v4094 = vadd.s32 %v4089, 1
  %vm4095 = vcmp.gt.s32.totalorder %v4094, 0
  %v4096 = vsel %vm4095, %v4094, 0
  %v4097 = vshrl.u32 %v4096, 5
  %v4098 = vand.u32 %v4096, 31
  %v4099 = vsub.s32 32, %v4098
  %v4100 = vshrl.u32 683565275, %v4099
  %v4101 = vshll.u32 683565275, %v4098
  %v4102 = vshrl.u32 2475754826, %v4099
  %v4103 = vor.u32 %v4101, %v4102
  %v4104 = vshll.u32 2475754826, %v4098
  %v4105 = vshrl.u32 2131351028, %v4099
  %v4106 = vor.u32 %v4104, %v4105
  %v4107 = vshll.u32 2131351028, %v4098
  %v4108 = vshrl.u32 2102212464, %v4099
  %v4109 = vor.u32 %v4107, %v4108
  %v4110 = vshll.u32 2102212464, %v4098
  %v4111 = vshrl.u32 920167782, %v4099
  %v4112 = vor.u32 %v4110, %v4111
  %v4113 = vshll.u32 920167782, %v4098
  %v4114 = vshrl.u32 1326507024, %v4099
  %v4115 = vor.u32 %v4113, %v4114
  %vm4116 = vcmp.lt.s32.totalorder %v4097, 1
  %vm4117 = vcmp.lt.s32.totalorder %v4097, 2
  %vm4118 = vcmp.lt.s32.totalorder %v4097, 3
  %vm4119 = vcmp.lt.s32.totalorder %v4097, 4
  %v4120 = vsel %vm4116, %v4100, %v4103
  %v4121 = vsel %vm4119, %v4109, 2102212464
  %v4122 = vsel %vm4118, %v4106, %v4121
  %v4123 = vsel %vm4117, %v4120, %v4122
  %v4124 = vsel %vm4116, %v4103, %v4106
  %v4125 = vsel %vm4119, %v4112, 920167782
  %v4126 = vsel %vm4118, %v4109, %v4125
  %v4127 = vsel %vm4117, %v4124, %v4126
  %v4128 = vsel %vm4116, %v4106, %v4109
  %v4129 = vsel %vm4119, %v4115, 1326507024
  %v4130 = vsel %vm4118, %v4112, %v4129
  %v4131 = vsel %vm4117, %v4128, %v4130
  %v4132 = vshll.u32 %v4092, 8
  %v4133 = vmul.u32.u64.compose %v4132, %v4131
  %v4134 = vextract.low.u32 %v4133
  %v4135 = vextract.high.u32 %v4133
  %v4136 = vmul.u32.u64.compose %v4132, %v4127
  %v4137 = vextract.low.u32 %v4136
  %v4138 = vextract.high.u32 %v4136
  %v4139 = vmul.u32 %v4132, %v4123
  %v4140 = vadd.s32 %v4135, %v4137
  %vm4141 = vc.u32 %v4135, %v4137
  %v4142 = vadd.s32 %v4138, 1
  %v4143 = vsel %vm4141, %v4142, %v4138
  %v4144 = vadd.s32 %v4139, %v4143
  %v4145 = vadd.s32 %v4144, 536870912
  %v4146 = vshrl.u32 %v4145, 30
  %v4147 = vshll.u32 %v4146, 30
  %v4148 = vsub.s32 %v4144, %v4147
  %vm4149 = vcmp.lt.s32.totalorder %v4148, 0
  %v4150 = vsub.s32 0, %v4148
  %v4151 = vsel %vm4149, %v4150, %v4148
  %v4152 = vclz %v4151
  %v4153 = vsub.s32 %v4152, 2
  %vm4154 = vcmp.gt.s32.totalorder 0, %v4153
  %v4155 = vsel %vm4154, 0, %v4153
  %v4156 = vsub.s32 32, %v4155
  %v4157 = vshll.u32 %v4148, %v4155
  %v4158 = vshrl.u32 %v4140, %v4156
  %v4159 = vor.u32 %v4157, %v4158
  %v4160 = vsub.s32 4294967266, %v4155
  %v4161 = vadd.s32 %v4160, 127
  %v4162 = vshll.u32 %v4161, 23
  %v4163 = vor.u32 4788187, %v4162
  %v4164 = vand.u32 2147483647, %v4163
  %v4166 = vcvt.s32.f32 %v4159
  %v4167 = vmul.f32 %v4166, %v4164
  %v4168 = vxor.u32 %v4167, 2147483648
  %v4169 = vsel %vm4086, %v4168, %v4167
  %v4170 = vsub.s32 4, %v4146
  %v4171 = vsel %vm4086, %v4170, %v4146
  %v4172 = vsel %vm4085, %v4083, %v4169
  %v4173 = vsel %vm4085, 0, %v4171
  %v4174 = vcosq.f32.pop %v4172
  %v4175 = vsinq.f32.pop %v4172
  %vm4176 = vweird.f32 %v4083
  %v4177 = vadd.s32 %v4173, 3
  %v4178 = vand.u32 %v4177, 3
  %vm4179 = vcmp.lt.s32.totalorder %v4178, 2
  %vm4180 = vcmp.eq.s32.totalorder %v4178, 0
  %v4181 = vxor.u32 %v4175, 2147483648
  %v4182 = vsel %vm4180, %v4174, %v4181
  %vm4183 = vcmp.eq.s32.totalorder %v4178, 2
  %v4184 = vxor.u32 %v4174, 2147483648
  %v4185 = vsel %vm4183, %v4184, %v4175
  %v4186 = vsel %vm4179, %v4182, %v4185
  %v4187 = vsel %vm4176, nan, %v4186
  %v4188 = vand.u32 2147483647, %v4083
  %vm4189 = vcmp.le.f32.partialorder %v4188, 0.7853982
  %vm4190 = vcmp.lt.s32.totalorder %v4083, 0
  %v4191 = vand.u32 %v4083, 2139095040
  %v4192 = vshrl.u32 %v4191, 23
  %v4193 = vsub.s32 %v4192, 127
  %v4194 = vand.u32 2147483647, %v4083
  %v4195 = vand.u32 %v4194, 8388607
  %v4196 = vor.u32 %v4195, 8388608
  %v4197 = vsub.s32 0, %v4196
  %v4198 = vadd.s32 %v4193, 1
  %vm4199 = vcmp.gt.s32.totalorder %v4198, 0
  %v4200 = vsel %vm4199, %v4198, 0
  %v4201 = vshrl.u32 %v4200, 5
  %v4202 = vand.u32 %v4200, 31
  %v4203 = vsub.s32 32, %v4202
  %v4204 = vshrl.u32 683565275, %v4203
  %v4205 = vshll.u32 683565275, %v4202
  %v4206 = vshrl.u32 2475754826, %v4203
  %v4207 = vor.u32 %v4205, %v4206
  %v4208 = vshll.u32 2475754826, %v4202
  %v4209 = vshrl.u32 2131351028, %v4203
  %v4210 = vor.u32 %v4208, %v4209
  %v4211 = vshll.u32 2131351028, %v4202
  %v4212 = vshrl.u32 2102212464, %v4203
  %v4213 = vor.u32 %v4211, %v4212
  %v4214 = vshll.u32 2102212464, %v4202
  %v4215 = vshrl.u32 920167782, %v4203
  %v4216 = vor.u32 %v4214, %v4215
  %v4217 = vshll.u32 920167782, %v4202
  %v4218 = vshrl.u32 1326507024, %v4203
  %v4219 = vor.u32 %v4217, %v4218
  %vm4220 = vcmp.lt.s32.totalorder %v4201, 1
  %vm4221 = vcmp.lt.s32.totalorder %v4201, 2
  %vm4222 = vcmp.lt.s32.totalorder %v4201, 3
  %vm4223 = vcmp.lt.s32.totalorder %v4201, 4
  %v4224 = vsel %vm4220, %v4204, %v4207
  %v4225 = vsel %vm4223, %v4213, 2102212464
  %v4226 = vsel %vm4222, %v4210, %v4225
  %v4227 = vsel %vm4221, %v4224, %v4226
  %v4228 = vsel %vm4220, %v4207, %v4210
  %v4229 = vsel %vm4223, %v4216, 920167782
  %v4230 = vsel %vm4222, %v4213, %v4229
  %v4231 = vsel %vm4221, %v4228, %v4230
  %v4232 = vsel %vm4220, %v4210, %v4213
  %v4233 = vsel %vm4223, %v4219, 1326507024
  %v4234 = vsel %vm4222, %v4216, %v4233
  %v4235 = vsel %vm4221, %v4232, %v4234
  %v4236 = vshll.u32 %v4196, 8
  %v4237 = vmul.u32.u64.compose %v4236, %v4235
  %v4238 = vextract.low.u32 %v4237
  %v4239 = vextract.high.u32 %v4237
  %v4240 = vmul.u32.u64.compose %v4236, %v4231
  %v4241 = vextract.low.u32 %v4240
  %v4242 = vextract.high.u32 %v4240
  %v4243 = vmul.u32 %v4236, %v4227
  %v4244 = vadd.s32 %v4239, %v4241
  %vm4245 = vc.u32 %v4239, %v4241
  %v4246 = vadd.s32 %v4242, 1
  %v4247 = vsel %vm4245, %v4246, %v4242
  %v4248 = vadd.s32 %v4243, %v4247
  %v4249 = vadd.s32 %v4248, 536870912
  %v4250 = vshrl.u32 %v4249, 30
  %v4251 = vshll.u32 %v4250, 30
  %v4252 = vsub.s32 %v4248, %v4251
  %vm4253 = vcmp.lt.s32.totalorder %v4252, 0
  %v4254 = vsub.s32 0, %v4252
  %v4255 = vsel %vm4253, %v4254, %v4252
  %v4256 = vclz %v4255
  %v4257 = vsub.s32 %v4256, 2
  %vm4258 = vcmp.gt.s32.totalorder 0, %v4257
  %v4259 = vsel %vm4258, 0, %v4257
  %v4260 = vsub.s32 32, %v4259
  %v4261 = vshll.u32 %v4252, %v4259
  %v4262 = vshrl.u32 %v4244, %v4260
  %v4263 = vor.u32 %v4261, %v4262
  %v4264 = vsub.s32 4294967266, %v4259
  %v4265 = vadd.s32 %v4264, 127
  %v4266 = vshll.u32 %v4265, 23
  %v4267 = vor.u32 4788187, %v4266
  %v4268 = vand.u32 2147483647, %v4267
  %v4270 = vcvt.s32.f32 %v4263
  %v4271 = vmul.f32 %v4270, %v4268
  %v4272 = vxor.u32 %v4271, 2147483648
  %v4273 = vsel %vm4190, %v4272, %v4271
  %v4274 = vsub.s32 4, %v4250
  %v4275 = vsel %vm4190, %v4274, %v4250
  %v4276 = vsel %vm4189, %v4083, %v4273
  %v4277 = vsel %vm4189, 0, %v4275
  %v4278 = vcosq.f32.pop %v4276
  %v4279 = vsinq.f32.pop %v4276
  %vm4280 = vweird.f32 %v4083
  %v4281 = vand.u32 %v4277, 3
  %vm4282 = vcmp.lt.s32.totalorder %v4281, 2
  %vm4283 = vcmp.eq.s32.totalorder %v4281, 0
  %v4284 = vxor.u32 %v4279, 2147483648
  %v4285 = vsel %vm4283, %v4278, %v4284
  %vm4286 = vcmp.eq.s32.totalorder %v4281, 2
  %v4287 = vxor.u32 %v4278, 2147483648
  %v4288 = vsel %vm4286, %v4287, %v4279
  %v4289 = vsel %vm4282, %v4285, %v4288
  %v4290 = vsel %vm4280, nan, %v4289
  %v4291 = vmul.f32 %v4073, 92.6
  %v4292 = vmul.f32 %v4291, %v3622
  %v4293 = vand.u32 2147483647, %v4292
  %vm4294 = vcmp.le.f32.partialorder %v4293, 0.7853982
  %vm4295 = vcmp.lt.s32.totalorder %v4292, 0
  %v4296 = vand.u32 %v4292, 2139095040
  %v4297 = vshrl.u32 %v4296, 23
  %v4298 = vsub.s32 %v4297, 127
  %v4299 = vand.u32 2147483647, %v4292
  %v4300 = vand.u32 %v4299, 8388607
  %v4301 = vor.u32 %v4300, 8388608
  %v4302 = vsub.s32 0, %v4301
  %v4303 = vadd.s32 %v4298, 1
  %vm4304 = vcmp.gt.s32.totalorder %v4303, 0
  %v4305 = vsel %vm4304, %v4303, 0
  %v4306 = vshrl.u32 %v4305, 5
  %v4307 = vand.u32 %v4305, 31
  %v4308 = vsub.s32 32, %v4307
  %v4309 = vshrl.u32 683565275, %v4308
  %v4310 = vshll.u32 683565275, %v4307
  %v4311 = vshrl.u32 2475754826, %v4308
  %v4312 = vor.u32 %v4310, %v4311
  %v4313 = vshll.u32 2475754826, %v4307
  %v4314 = vshrl.u32 2131351028, %v4308
  %v4315 = vor.u32 %v4313, %v4314
  %v4316 = vshll.u32 2131351028, %v4307
  %v4317 = vshrl.u32 2102212464, %v4308
  %v4318 = vor.u32 %v4316, %v4317
  %v4319 = vshll.u32 2102212464, %v4307
  %v4320 = vshrl.u32 920167782, %v4308
  %v4321 = vor.u32 %v4319, %v4320
  %v4322 = vshll.u32 920167782, %v4307
  %v4323 = vshrl.u32 1326507024, %v4308
  %v4324 = vor.u32 %v4322, %v4323
  %vm4325 = vcmp.lt.s32.totalorder %v4306, 1
  %vm4326 = vcmp.lt.s32.totalorder %v4306, 2
  %vm4327 = vcmp.lt.s32.totalorder %v4306, 3
  %vm4328 = vcmp.lt.s32.totalorder %v4306, 4
  %v4329 = vsel %vm4325, %v4309, %v4312
  %v4330 = vsel %vm4328, %v4318, 2102212464
  %v4331 = vsel %vm4327, %v4315, %v4330
  %v4332 = vsel %vm4326, %v4329, %v4331
  %v4333 = vsel %vm4325, %v4312, %v4315
  %v4334 = vsel %vm4328, %v4321, 920167782
  %v4335 = vsel %vm4327, %v4318, %v4334
  %v4336 = vsel %vm4326, %v4333, %v4335
  %v4337 = vsel %vm4325, %v4315, %v4318
  %v4338 = vsel %vm4328, %v4324, 1326507024
  %v4339 = vsel %vm4327, %v4321, %v4338
  %v4340 = vsel %vm4326, %v4337, %v4339
  %v4341 = vshll.u32 %v4301, 8
  %v4342 = vmul.u32.u64.compose %v4341, %v4340
  %v4343 = vextract.low.u32 %v4342
  %v4344 = vextract.high.u32 %v4342
  %v4345 = vmul.u32.u64.compose %v4341, %v4336
  %v4346 = vextract.low.u32 %v4345
  %v4347 = vextract.high.u32 %v4345
  %v4348 = vmul.u32 %v4341, %v4332
  %v4349 = vadd.s32 %v4344, %v4346
  %vm4350 = vc.u32 %v4344, %v4346
  %v4351 = vadd.s32 %v4347, 1
  %v4352 = vsel %vm4350, %v4351, %v4347
  %v4353 = vadd.s32 %v4348, %v4352
  %v4354 = vadd.s32 %v4353, 536870912
  %v4355 = vshrl.u32 %v4354, 30
  %v4356 = vshll.u32 %v4355, 30
  %v4357 = vsub.s32 %v4353, %v4356
  %vm4358 = vcmp.lt.s32.totalorder %v4357, 0
  %v4359 = vsub.s32 0, %v4357
  %v4360 = vsel %vm4358, %v4359, %v4357
  %v4361 = vclz %v4360
  %v4362 = vsub.s32 %v4361, 2
  %vm4363 = vcmp.gt.s32.totalorder 0, %v4362
  %v4364 = vsel %vm4363, 0, %v4362
  %v4365 = vsub.s32 32, %v4364
  %v4366 = vshll.u32 %v4357, %v4364
  %v4367 = vshrl.u32 %v4349, %v4365
  %v4368 = vor.u32 %v4366, %v4367
  %v4369 = vsub.s32 4294967266, %v4364
  %v4370 = vadd.s32 %v4369, 127
  %v4371 = vshll.u32 %v4370, 23
  %v4372 = vor.u32 4788187, %v4371
  %v4373 = vand.u32 2147483647, %v4372
  %v4375 = vcvt.s32.f32 %v4368
  %v4376 = vmul.f32 %v4375, %v4373
  %v4377 = vxor.u32 %v4376, 2147483648
  %v4378 = vsel %vm4295, %v4377, %v4376
  %v4379 = vsub.s32 4, %v4355
  %v4380 = vsel %vm4295, %v4379, %v4355
  %v4381 = vsel %vm4294, %v4292, %v4378
  %v4382 = vsel %vm4294, 0, %v4380
  %v4383 = vcosq.f32.pop %v4381
  %v4384 = vsinq.f32.pop %v4381
  %vm4385 = vweird.f32 %v4292
  %v4386 = vadd.s32 %v4382, 3
  %v4387 = vand.u32 %v4386, 3
  %vm4388 = vcmp.lt.s32.totalorder %v4387, 2
  %vm4389 = vcmp.eq.s32.totalorder %v4387, 0
  %v4390 = vxor.u32 %v4384, 2147483648
  %v4391 = vsel %vm4389, %v4383, %v4390
  %vm4392 = vcmp.eq.s32.totalorder %v4387, 2
  %v4393 = vxor.u32 %v4383, 2147483648
  %v4394 = vsel %vm4392, %v4393, %v4384
  %v4395 = vsel %vm4388, %v4391, %v4394
  %v4396 = vsel %vm4385, nan, %v4395
  %v4397 = vand.u32 2147483647, %v4292
  %vm4398 = vcmp.le.f32.partialorder %v4397, 0.7853982
  %vm4399 = vcmp.lt.s32.totalorder %v4292, 0
  %v4400 = vand.u32 %v4292, 2139095040
  %v4401 = vshrl.u32 %v4400, 23
  %v4402 = vsub.s32 %v4401, 127
  %v4403 = vand.u32 2147483647, %v4292
  %v4404 = vand.u32 %v4403, 8388607
  %v4405 = vor.u32 %v4404, 8388608
  %v4406 = vsub.s32 0, %v4405
  %v4407 = vadd.s32 %v4402, 1
  %vm4408 = vcmp.gt.s32.totalorder %v4407, 0
  %v4409 = vsel %vm4408, %v4407, 0
  %v4410 = vshrl.u32 %v4409, 5
  %v4411 = vand.u32 %v4409, 31
  %v4412 = vsub.s32 32, %v4411
  %v4413 = vshrl.u32 683565275, %v4412
  %v4414 = vshll.u32 683565275, %v4411
  %v4415 = vshrl.u32 2475754826, %v4412
  %v4416 = vor.u32 %v4414, %v4415
  %v4417 = vshll.u32 2475754826, %v4411
  %v4418 = vshrl.u32 2131351028, %v4412
  %v4419 = vor.u32 %v4417, %v4418
  %v4420 = vshll.u32 2131351028, %v4411
  %v4421 = vshrl.u32 2102212464, %v4412
  %v4422 = vor.u32 %v4420, %v4421
  %v4423 = vshll.u32 2102212464, %v4411
  %v4424 = vshrl.u32 920167782, %v4412
  %v4425 = vor.u32 %v4423, %v4424
  %v4426 = vshll.u32 920167782, %v4411
  %v4427 = vshrl.u32 1326507024, %v4412
  %v4428 = vor.u32 %v4426, %v4427
  %vm4429 = vcmp.lt.s32.totalorder %v4410, 1
  %vm4430 = vcmp.lt.s32.totalorder %v4410, 2
  %vm4431 = vcmp.lt.s32.totalorder %v4410, 3
  %vm4432 = vcmp.lt.s32.totalorder %v4410, 4
  %v4433 = vsel %vm4429, %v4413, %v4416
  %v4434 = vsel %vm4432, %v4422, 2102212464
  %v4435 = vsel %vm4431, %v4419, %v4434
  %v4436 = vsel %vm4430, %v4433, %v4435
  %v4437 = vsel %vm4429, %v4416, %v4419
  %v4438 = vsel %vm4432, %v4425, 920167782
  %v4439 = vsel %vm4431, %v4422, %v4438
  %v4440 = vsel %vm4430, %v4437, %v4439
  %v4441 = vsel %vm4429, %v4419, %v4422
  %v4442 = vsel %vm4432, %v4428, 1326507024
  %v4443 = vsel %vm4431, %v4425, %v4442
  %v4444 = vsel %vm4430, %v4441, %v4443
  %v4445 = vshll.u32 %v4405, 8
  %v4446 = vmul.u32.u64.compose %v4445, %v4444
  %v4447 = vextract.low.u32 %v4446
  %v4448 = vextract.high.u32 %v4446
  %v4449 = vmul.u32.u64.compose %v4445, %v4440
  %v4450 = vextract.low.u32 %v4449
  %v4451 = vextract.high.u32 %v4449
  %v4452 = vmul.u32 %v4445, %v4436
  %v4453 = vadd.s32 %v4448, %v4450
  %vm4454 = vc.u32 %v4448, %v4450
  %v4455 = vadd.s32 %v4451, 1
  %v4456 = vsel %vm4454, %v4455, %v4451
  %v4457 = vadd.s32 %v4452, %v4456
  %v4458 = vadd.s32 %v4457, 536870912
  %v4459 = vshrl.u32 %v4458, 30
  %v4460 = vshll.u32 %v4459, 30
  %v4461 = vsub.s32 %v4457, %v4460
  %vm4462 = vcmp.lt.s32.totalorder %v4461, 0
  %v4463 = vsub.s32 0, %v4461
  %v4464 = vsel %vm4462, %v4463, %v4461
  %v4465 = vclz %v4464
  %v4466 = vsub.s32 %v4465, 2
  %vm4467 = vcmp.gt.s32.totalorder 0, %v4466
  %v4468 = vsel %vm4467, 0, %v4466
  %v4469 = vsub.s32 32, %v4468
  %v4470 = vshll.u32 %v4461, %v4468
  %v4471 = vshrl.u32 %v4453, %v4469
  %v4472 = vor.u32 %v4470, %v4471
  %v4473 = vsub.s32 4294967266, %v4468
  %v4474 = vadd.s32 %v4473, 127
  %v4475 = vshll.u32 %v4474, 23
  %v4476 = vor.u32 4788187, %v4475
  %v4477 = vand.u32 2147483647, %v4476
  %v4479 = vcvt.s32.f32 %v4472
  %v4480 = vmul.f32 %v4479, %v4477
  %v4481 = vxor.u32 %v4480, 2147483648
  %v4482 = vsel %vm4399, %v4481, %v4480
  %v4483 = vsub.s32 4, %v4459
  %v4484 = vsel %vm4399, %v4483, %v4459
  %v4485 = vsel %vm4398, %v4292, %v4482
  %v4486 = vsel %vm4398, 0, %v4484
  %v4487 = vcosq.f32.pop %v4485
  %v4488 = vsinq.f32.pop %v4485
  %vm4489 = vweird.f32 %v4292
  %v4490 = vand.u32 %v4486, 3
  %vm4491 = vcmp.lt.s32.totalorder %v4490, 2
  %vm4492 = vcmp.eq.s32.totalorder %v4490, 0
  %v4493 = vxor.u32 %v4488, 2147483648
  %v4494 = vsel %vm4492, %v4487, %v4493
  %vm4495 = vcmp.eq.s32.totalorder %v4490, 2
  %v4496 = vxor.u32 %v4487, 2147483648
  %v4497 = vsel %vm4495, %v4496, %v4488
  %v4498 = vsel %vm4491, %v4494, %v4497
  %v4499 = vsel %vm4489, nan, %v4498
  %v4500 = vmul.f32 %v3546, %v4499
  %v4501 = vmul.f32 %v3556, %v4396
  %v4502 = vmul.f32 %v4501, %v4290
  %v4503 = vadd.f32 %v4500, %v4502
  %v4504 = vmul.f32 %v4503, %v4503
  %v4505 = vsub.f32 1.0, %v4504
  %v4506 = vmax.f32 %v4505, 0.0
  %v4507 = vrsqrt.pop %v4506
  %v4508 = vmul.f32 %v4506, %v4507
  %vm4509 = vcmp.eq.f32.partialorder %v4506, inf
  %v4510 = vsel %vm4509, %v4506, %v4508
  %vm4511 = vcmp.eq.f32.partialorder %v4506, 0.0
  %v4512 = vand.u32 %v4506, 2147483648
  %v4513 = vsel %vm4511, %v4512, %v4510
  %v4514 = vmul.f32 %v4187, %v4396
  %v4515 = vmul.f32 %v4514, %v3556
  %v4516 = vmul.f32 %v3546, %v4503
  %v4517 = vsub.f32 %v4499, %v4516
  %v4518 = vand.u32 2147483647, %v4517
  %v4519 = vand.u32 2147483647, %v4515
  %v4520 = vmin.f32 %v4518, %v4519
  %v4521 = vmax.f32 %v4518, %v4519
  %v4522 = vrcp.pop %v4521
  %v4523 = vmul.f32 %v4520, %v4522
  %v4524 = vmul.f32 %v4523, %v4523
  %v4525 = vmul.f32 0.002785687, %v4524
  %v4526 = vadd.f32 %v4525, -0.015866
  %v4527 = vmul.f32 %v4526, %v4524
  %v4528 = vadd.f32 %v4527, 0.04247222
  %v4529 = vmul.f32 %v4528, %v4524
  %v4530 = vadd.f32 %v4529, -0.074975304
  %v4531 = vmul.f32 %v4530, %v4524
  %v4532 = vadd.f32 %v4531, 0.1064488
  %v4533 = vmul.f32 %v4532, %v4524
  %v4534 = vadd.f32 %v4533, -0.14207031
  %v4535 = vmul.f32 %v4534, %v4524
  %v4536 = vadd.f32 %v4535, 0.19993454
  %v4537 = vmul.f32 %v4536, %v4524
  %v4538 = vadd.f32 %v4537, -0.33333147
  %v4539 = vmul.f32 %v4538, %v4524
  %v4540 = vmul.f32 %v4539, %v4523
  %v4541 = vadd.f32 %v4540, %v4523
  %vm4542 = vcmp.gt.f32.partialorder %v4519, %v4518
  %v4543 = vsub.f32 1.5707964, %v4541
  %v4544 = vsel %vm4542, %v4543, %v4541
  %vm4545 = vcmp.lt.f32.partialorder %v4517, 0.0
  %v4546 = vsub.f32 3.1415927, %v4544
  %v4547 = vsel %vm4545, %v4546, %v4544
  %vm4548 = vcmp.lt.s32.totalorder %v4517, 0
  %v4549 = vsel %vm4548, 3.1415927, 0.0
  %vm4550 = vcmp.eq.f32.partialorder %v4515, 0.0
  %v4551 = vsel %vm4550, %v4549, %v4547
  %vm4552 = vcmp.ne.f32.partialorder %v4517, %v4517
  %vm4553 = vcmp.ne.f32.partialorder %v4515, %v4515
  %vm4554 = vmor %vm4552, %vm4553
  %v4555 = vsel %vm4554, nan, %v4551
  %vm4556 = vcmp.lt.f32.partialorder %v4517, 0.0
  %v4557 = vsel %vm4556, 2.3561945, 0.7853982
  %vm4558 = vcmp.eq.s32.totalorder %v4518, inf
  %vm4559 = vcmp.eq.s32.totalorder %v4519, inf
  %vm4560 = vmand %vm4558, %vm4559
  %v4561 = vsel %vm4560, %v4557, %v4555
  %v4562 = vand.u32 2147483647, %v4561
  %v4563 = vand.u32 %v4515, 2147483648
  %v4564 = vor.u32 %v4562, %v4563
  %v4565 = vadd.f32 %v3608, %v4564
  %v4566 = vmul.f32 %v4513, 4.068063e+13
  %v4567 = vmul.f32 %v4503, 4.04083e+13
  %v4568 = vmul.f32 %v4513, 6378137.0
  %v4569 = vmul.f32 %v4503, 6356752.5
  %v4570 = vmul.f32 %v4566, %v4566
  %v4571 = vmul.f32 %v4567, %v4567
  %v4572 = vadd.f32 %v4570, %v4571
  %v4573 = vmul.f32 %v4568, %v4568
  %v4574 = vmul.f32 %v4569, %v4569
  %v4575 = vadd.f32 %v4573, %v4574
  %v4576 = vrcp.pop %v4575
  %v4577 = vmul.f32 %v4572, %v4576
  %v4578 = vadd.f32 %v4577, 1e-10
  %v4579 = vrsqrt.pop %v4578
  %v4580 = vmul.f32 %v4578, %v4579
  %v4581 = vmul.f32 %v4580, 0.001
  %v4582 = vand.u32 2147483647, %v4513
  %v4583 = vand.u32 2147483647, %v4503
  %v4584 = vmin.f32 %v4582, %v4583
  %v4585 = vmax.f32 %v4582, %v4583
  %v4586 = vrcp.pop %v4585
  %v4587 = vmul.f32 %v4584, %v4586
  %v4588 = vmul.f32 %v4587, %v4587
  %v4589 = vmul.f32 0.002785687, %v4588
  %v4590 = vadd.f32 %v4589, -0.015866
  %v4591 = vmul.f32 %v4590, %v4588
  %v4592 = vadd.f32 %v4591, 0.04247222
  %v4593 = vmul.f32 %v4592, %v4588
  %v4594 = vadd.f32 %v4593, -0.074975304
  %v4595 = vmul.f32 %v4594, %v4588
  %v4596 = vadd.f32 %v4595, 0.1064488
  %v4597 = vmul.f32 %v4596, %v4588
  %v4598 = vadd.f32 %v4597, -0.14207031
  %v4599 = vmul.f32 %v4598, %v4588
  %v4600 = vadd.f32 %v4599, 0.19993454
  %v4601 = vmul.f32 %v4600, %v4588
  %v4602 = vadd.f32 %v4601, -0.33333147
  %v4603 = vmul.f32 %v4602, %v4588
  %v4604 = vmul.f32 %v4603, %v4587
  %v4605 = vadd.f32 %v4604, %v4587
  %vm4606 = vcmp.gt.f32.partialorder %v4583, %v4582
  %v4607 = vsub.f32 1.5707964, %v4605
  %v4608 = vsel %vm4606, %v4607, %v4605
  %vm4609 = vcmp.lt.f32.partialorder %v4513, 0.0
  %v4610 = vsub.f32 3.1415927, %v4608
  %v4611 = vsel %vm4609, %v4610, %v4608
  %vm4612 = vcmp.lt.s32.totalorder %v4513, 0
  %v4613 = vsel %vm4612, 3.1415927, 0.0
  %vm4614 = vcmp.eq.f32.partialorder %v4503, 0.0
  %v4615 = vsel %vm4614, %v4613, %v4611
  %vm4616 = vcmp.ne.f32.partialorder %v4513, %v4513
  %vm4617 = vcmp.ne.f32.partialorder %v4503, %v4503
  %vm4618 = vmor %vm4616, %vm4617
  %v4619 = vsel %vm4618, nan, %v4615
  %vm4620 = vcmp.lt.f32.partialorder %v4513, 0.0
  %v4621 = vsel %vm4620, 2.3561945, 0.7853982
  %vm4622 = vcmp.eq.s32.totalorder %v4582, inf
  %vm4623 = vcmp.eq.s32.totalorder %v4583, inf
  %vm4624 = vmand %vm4622, %vm4623
  %v4625 = vsel %vm4624, %v4621, %v4619
  %v4626 = vand.u32 2147483647, %v4625
  %v4627 = vand.u32 %v4503, 2147483648
  %v4628 = vor.u32 %v4626, %v4627
  %v4629 = vmul.f32 %v4565, 57.29578
  %s4630 = scalar_lea.vmem %s4, 4
  %4631 = vst [vmem:[%s4630] sm:$0x1] %v4629
  %v4632 = vmul.f32 %v4628, 57.29578
  %s4633 = scalar_lea.vmem %s805, 4
  %4634 = vst [vmem:[%s4633] sm:$0x1] %v4632
  %s4635 = scalar_lea.vmem %s16, 5
  %v4636 = vld [vmem:[%s4635] sm:$0x1]
  %s4637 = scalar_lea.vmem %s1, 5
  %v4638 = vld [vmem:[%s4637] sm:$0x1]
  %v4639 = vmul.f32 %v4636, 0.017453292
  %v4640 = vsub.f32 %v4639, %v4628
  %v4641 = vmul.f32 %v4638, 0.017453292
  %v4642 = vsub.f32 %v4641, %v4565
  %v4643 = vmul.f32 %v4640, 0.5
  %v4644 = vand.u32 2147483647, %v4643
  %vm4645 = vcmp.le.f32.partialorder %v4644, 0.7853982
  %vm4646 = vcmp.lt.s32.totalorder %v4643, 0
  %v4647 = vand.u32 %v4643, 2139095040
  %v4648 = vshrl.u32 %v4647, 23
  %v4649 = vsub.s32 %v4648, 127
  %v4650 = vand.u32 2147483647, %v4643
  %v4651 = vand.u32 %v4650, 8388607
  %v4652 = vor.u32 %v4651, 8388608
  %v4653 = vsub.s32 0, %v4652
  %v4654 = vadd.s32 %v4649, 1
  %vm4655 = vcmp.gt.s32.totalorder %v4654, 0
  %v4656 = vsel %vm4655, %v4654, 0
  %v4657 = vshrl.u32 %v4656, 5
  %v4658 = vand.u32 %v4656, 31
  %v4659 = vsub.s32 32, %v4658
  %v4660 = vshrl.u32 683565275, %v4659
  %v4661 = vshll.u32 683565275, %v4658
  %v4662 = vshrl.u32 2475754826, %v4659
  %v4663 = vor.u32 %v4661, %v4662
  %v4664 = vshll.u32 2475754826, %v4658
  %v4665 = vshrl.u32 2131351028, %v4659
  %v4666 = vor.u32 %v4664, %v4665
  %v4667 = vshll.u32 2131351028, %v4658
  %v4668 = vshrl.u32 2102212464, %v4659
  %v4669 = vor.u32 %v4667, %v4668
  %v4670 = vshll.u32 2102212464, %v4658
  %v4671 = vshrl.u32 920167782, %v4659
  %v4672 = vor.u32 %v4670, %v4671
  %v4673 = vshll.u32 920167782, %v4658
  %v4674 = vshrl.u32 1326507024, %v4659
  %v4675 = vor.u32 %v4673, %v4674
  %vm4676 = vcmp.lt.s32.totalorder %v4657, 1
  %vm4677 = vcmp.lt.s32.totalorder %v4657, 2
  %vm4678 = vcmp.lt.s32.totalorder %v4657, 3
  %vm4679 = vcmp.lt.s32.totalorder %v4657, 4
  %v4680 = vsel %vm4676, %v4660, %v4663
  %v4681 = vsel %vm4679, %v4669, 2102212464
  %v4682 = vsel %vm4678, %v4666, %v4681
  %v4683 = vsel %vm4677, %v4680, %v4682
  %v4684 = vsel %vm4676, %v4663, %v4666
  %v4685 = vsel %vm4679, %v4672, 920167782
  %v4686 = vsel %vm4678, %v4669, %v4685
  %v4687 = vsel %vm4677, %v4684, %v4686
  %v4688 = vsel %vm4676, %v4666, %v4669
  %v4689 = vsel %vm4679, %v4675, 1326507024
  %v4690 = vsel %vm4678, %v4672, %v4689
  %v4691 = vsel %vm4677, %v4688, %v4690
  %v4692 = vshll.u32 %v4652, 8
  %v4693 = vmul.u32.u64.compose %v4692, %v4691
  %v4694 = vextract.low.u32 %v4693
  %v4695 = vextract.high.u32 %v4693
  %v4696 = vmul.u32.u64.compose %v4692, %v4687
  %v4697 = vextract.low.u32 %v4696
  %v4698 = vextract.high.u32 %v4696
  %v4699 = vmul.u32 %v4692, %v4683
  %v4700 = vadd.s32 %v4695, %v4697
  %vm4701 = vc.u32 %v4695, %v4697
  %v4702 = vadd.s32 %v4698, 1
  %v4703 = vsel %vm4701, %v4702, %v4698
  %v4704 = vadd.s32 %v4699, %v4703
  %v4705 = vadd.s32 %v4704, 536870912
  %v4706 = vshrl.u32 %v4705, 30
  %v4707 = vshll.u32 %v4706, 30
  %v4708 = vsub.s32 %v4704, %v4707
  %vm4709 = vcmp.lt.s32.totalorder %v4708, 0
  %v4710 = vsub.s32 0, %v4708
  %v4711 = vsel %vm4709, %v4710, %v4708
  %v4712 = vclz %v4711
  %v4713 = vsub.s32 %v4712, 2
  %vm4714 = vcmp.gt.s32.totalorder 0, %v4713
  %v4715 = vsel %vm4714, 0, %v4713
  %v4716 = vsub.s32 32, %v4715
  %v4717 = vshll.u32 %v4708, %v4715
  %v4718 = vshrl.u32 %v4700, %v4716
  %v4719 = vor.u32 %v4717, %v4718
  %v4720 = vsub.s32 4294967266, %v4715
  %v4721 = vadd.s32 %v4720, 127
  %v4722 = vshll.u32 %v4721, 23
  %v4723 = vor.u32 4788187, %v4722
  %v4724 = vand.u32 2147483647, %v4723
  %v4726 = vcvt.s32.f32 %v4719
  %v4727 = vmul.f32 %v4726, %v4724
  %v4728 = vxor.u32 %v4727, 2147483648
  %v4729 = vsel %vm4646, %v4728, %v4727
  %v4730 = vsub.s32 4, %v4706
  %v4731 = vsel %vm4646, %v4730, %v4706
  %v4732 = vsel %vm4645, %v4643, %v4729
  %v4733 = vsel %vm4645, 0, %v4731
  %v4734 = vcosq.f32.pop %v4732
  %v4735 = vsinq.f32.pop %v4732
  %vm4736 = vweird.f32 %v4643
  %v4737 = vadd.s32 %v4733, 3
  %v4738 = vand.u32 %v4737, 3
  %vm4739 = vcmp.lt.s32.totalorder %v4738, 2
  %vm4740 = vcmp.eq.s32.totalorder %v4738, 0
  %v4741 = vxor.u32 %v4735, 2147483648
  %v4742 = vsel %vm4740, %v4734, %v4741
  %vm4743 = vcmp.eq.s32.totalorder %v4738, 2
  %v4744 = vxor.u32 %v4734, 2147483648
  %v4745 = vsel %vm4743, %v4744, %v4735
  %v4746 = vsel %vm4739, %v4742, %v4745
  %v4747 = vsel %vm4736, nan, %v4746
  %v4748 = vmul.f32 %v4642, 0.5
  %v4749 = vand.u32 2147483647, %v4748
  %vm4750 = vcmp.le.f32.partialorder %v4749, 0.7853982
  %vm4751 = vcmp.lt.s32.totalorder %v4748, 0
  %v4752 = vand.u32 %v4748, 2139095040
  %v4753 = vshrl.u32 %v4752, 23
  %v4754 = vsub.s32 %v4753, 127
  %v4755 = vand.u32 2147483647, %v4748
  %v4756 = vand.u32 %v4755, 8388607
  %v4757 = vor.u32 %v4756, 8388608
  %v4758 = vsub.s32 0, %v4757
  %v4759 = vadd.s32 %v4754, 1
  %vm4760 = vcmp.gt.s32.totalorder %v4759, 0
  %v4761 = vsel %vm4760, %v4759, 0
  %v4762 = vshrl.u32 %v4761, 5
  %v4763 = vand.u32 %v4761, 31
  %v4764 = vsub.s32 32, %v4763
  %v4765 = vshrl.u32 683565275, %v4764
  %v4766 = vshll.u32 683565275, %v4763
  %v4767 = vshrl.u32 2475754826, %v4764
  %v4768 = vor.u32 %v4766, %v4767
  %v4769 = vshll.u32 2475754826, %v4763
  %v4770 = vshrl.u32 2131351028, %v4764
  %v4771 = vor.u32 %v4769, %v4770
  %v4772 = vshll.u32 2131351028, %v4763
  %v4773 = vshrl.u32 2102212464, %v4764
  %v4774 = vor.u32 %v4772, %v4773
  %v4775 = vshll.u32 2102212464, %v4763
  %v4776 = vshrl.u32 920167782, %v4764
  %v4777 = vor.u32 %v4775, %v4776
  %v4778 = vshll.u32 920167782, %v4763
  %v4779 = vshrl.u32 1326507024, %v4764
  %v4780 = vor.u32 %v4778, %v4779
  %vm4781 = vcmp.lt.s32.totalorder %v4762, 1
  %vm4782 = vcmp.lt.s32.totalorder %v4762, 2
  %vm4783 = vcmp.lt.s32.totalorder %v4762, 3
  %vm4784 = vcmp.lt.s32.totalorder %v4762, 4
  %v4785 = vsel %vm4781, %v4765, %v4768
  %v4786 = vsel %vm4784, %v4774, 2102212464
  %v4787 = vsel %vm4783, %v4771, %v4786
  %v4788 = vsel %vm4782, %v4785, %v4787
  %v4789 = vsel %vm4781, %v4768, %v4771
  %v4790 = vsel %vm4784, %v4777, 920167782
  %v4791 = vsel %vm4783, %v4774, %v4790
  %v4792 = vsel %vm4782, %v4789, %v4791
  %v4793 = vsel %vm4781, %v4771, %v4774
  %v4794 = vsel %vm4784, %v4780, 1326507024
  %v4795 = vsel %vm4783, %v4777, %v4794
  %v4796 = vsel %vm4782, %v4793, %v4795
  %v4797 = vshll.u32 %v4757, 8
  %v4798 = vmul.u32.u64.compose %v4797, %v4796
  %v4799 = vextract.low.u32 %v4798
  %v4800 = vextract.high.u32 %v4798
  %v4801 = vmul.u32.u64.compose %v4797, %v4792
  %v4802 = vextract.low.u32 %v4801
  %v4803 = vextract.high.u32 %v4801
  %v4804 = vmul.u32 %v4797, %v4788
  %v4805 = vadd.s32 %v4800, %v4802
  %vm4806 = vc.u32 %v4800, %v4802
  %v4807 = vadd.s32 %v4803, 1
  %v4808 = vsel %vm4806, %v4807, %v4803
  %v4809 = vadd.s32 %v4804, %v4808
  %v4810 = vadd.s32 %v4809, 536870912
  %v4811 = vshrl.u32 %v4810, 30
  %v4812 = vshll.u32 %v4811, 30
  %v4813 = vsub.s32 %v4809, %v4812
  %vm4814 = vcmp.lt.s32.totalorder %v4813, 0
  %v4815 = vsub.s32 0, %v4813
  %v4816 = vsel %vm4814, %v4815, %v4813
  %v4817 = vclz %v4816
  %v4818 = vsub.s32 %v4817, 2
  %vm4819 = vcmp.gt.s32.totalorder 0, %v4818
  %v4820 = vsel %vm4819, 0, %v4818
  %v4821 = vsub.s32 32, %v4820
  %v4822 = vshll.u32 %v4813, %v4820
  %v4823 = vshrl.u32 %v4805, %v4821
  %v4824 = vor.u32 %v4822, %v4823
  %v4825 = vsub.s32 4294967266, %v4820
  %v4826 = vadd.s32 %v4825, 127
  %v4827 = vshll.u32 %v4826, 23
  %v4828 = vor.u32 4788187, %v4827
  %v4829 = vand.u32 2147483647, %v4828
  %v4831 = vcvt.s32.f32 %v4824
  %v4832 = vmul.f32 %v4831, %v4829
  %v4833 = vxor.u32 %v4832, 2147483648
  %v4834 = vsel %vm4751, %v4833, %v4832
  %v4835 = vsub.s32 4, %v4811
  %v4836 = vsel %vm4751, %v4835, %v4811
  %v4837 = vsel %vm4750, %v4748, %v4834
  %v4838 = vsel %vm4750, 0, %v4836
  %v4839 = vcosq.f32.pop %v4837
  %v4840 = vsinq.f32.pop %v4837
  %vm4841 = vweird.f32 %v4748
  %v4842 = vadd.s32 %v4838, 3
  %v4843 = vand.u32 %v4842, 3
  %vm4844 = vcmp.lt.s32.totalorder %v4843, 2
  %vm4845 = vcmp.eq.s32.totalorder %v4843, 0
  %v4846 = vxor.u32 %v4840, 2147483648
  %v4847 = vsel %vm4845, %v4839, %v4846
  %vm4848 = vcmp.eq.s32.totalorder %v4843, 2
  %v4849 = vxor.u32 %v4839, 2147483648
  %v4850 = vsel %vm4848, %v4849, %v4840
  %v4851 = vsel %vm4844, %v4847, %v4850
  %v4852 = vsel %vm4841, nan, %v4851
  %v4853 = vmul.f32 %v4747, %v4747
  %v4854 = vand.u32 2147483647, %v4639
  %vm4855 = vcmp.le.f32.partialorder %v4854, 0.7853982
  %vm4856 = vcmp.lt.s32.totalorder %v4639, 0
  %v4857 = vand.u32 %v4639, 2139095040
  %v4858 = vshrl.u32 %v4857, 23
  %v4859 = vsub.s32 %v4858, 127
  %v4860 = vand.u32 2147483647, %v4639
  %v4861 = vand.u32 %v4860, 8388607
  %v4862 = vor.u32 %v4861, 8388608
  %v4863 = vsub.s32 0, %v4862
  %v4864 = vadd.s32 %v4859, 1
  %vm4865 = vcmp.gt.s32.totalorder %v4864, 0
  %v4866 = vsel %vm4865, %v4864, 0
  %v4867 = vshrl.u32 %v4866, 5
  %v4868 = vand.u32 %v4866, 31
  %v4869 = vsub.s32 32, %v4868
  %v4870 = vshrl.u32 683565275, %v4869
  %v4871 = vshll.u32 683565275, %v4868
  %v4872 = vshrl.u32 2475754826, %v4869
  %v4873 = vor.u32 %v4871, %v4872
  %v4874 = vshll.u32 2475754826, %v4868
  %v4875 = vshrl.u32 2131351028, %v4869
  %v4876 = vor.u32 %v4874, %v4875
  %v4877 = vshll.u32 2131351028, %v4868
  %v4878 = vshrl.u32 2102212464, %v4869
  %v4879 = vor.u32 %v4877, %v4878
  %v4880 = vshll.u32 2102212464, %v4868
  %v4881 = vshrl.u32 920167782, %v4869
  %v4882 = vor.u32 %v4880, %v4881
  %v4883 = vshll.u32 920167782, %v4868
  %v4884 = vshrl.u32 1326507024, %v4869
  %v4885 = vor.u32 %v4883, %v4884
  %vm4886 = vcmp.lt.s32.totalorder %v4867, 1
  %vm4887 = vcmp.lt.s32.totalorder %v4867, 2
  %vm4888 = vcmp.lt.s32.totalorder %v4867, 3
  %vm4889 = vcmp.lt.s32.totalorder %v4867, 4
  %v4890 = vsel %vm4886, %v4870, %v4873
  %v4891 = vsel %vm4889, %v4879, 2102212464
  %v4892 = vsel %vm4888, %v4876, %v4891
  %v4893 = vsel %vm4887, %v4890, %v4892
  %v4894 = vsel %vm4886, %v4873, %v4876
  %v4895 = vsel %vm4889, %v4882, 920167782
  %v4896 = vsel %vm4888, %v4879, %v4895
  %v4897 = vsel %vm4887, %v4894, %v4896
  %v4898 = vsel %vm4886, %v4876, %v4879
  %v4899 = vsel %vm4889, %v4885, 1326507024
  %v4900 = vsel %vm4888, %v4882, %v4899
  %v4901 = vsel %vm4887, %v4898, %v4900
  %v4902 = vshll.u32 %v4862, 8
  %v4903 = vmul.u32.u64.compose %v4902, %v4901
  %v4904 = vextract.low.u32 %v4903
  %v4905 = vextract.high.u32 %v4903
  %v4906 = vmul.u32.u64.compose %v4902, %v4897
  %v4907 = vextract.low.u32 %v4906
  %v4908 = vextract.high.u32 %v4906
  %v4909 = vmul.u32 %v4902, %v4893
  %v4910 = vadd.s32 %v4905, %v4907
  %vm4911 = vc.u32 %v4905, %v4907
  %v4912 = vadd.s32 %v4908, 1
  %v4913 = vsel %vm4911, %v4912, %v4908
  %v4914 = vadd.s32 %v4909, %v4913
  %v4915 = vadd.s32 %v4914, 536870912
  %v4916 = vshrl.u32 %v4915, 30
  %v4917 = vshll.u32 %v4916, 30
  %v4918 = vsub.s32 %v4914, %v4917
  %vm4919 = vcmp.lt.s32.totalorder %v4918, 0
  %v4920 = vsub.s32 0, %v4918
  %v4921 = vsel %vm4919, %v4920, %v4918
  %v4922 = vclz %v4921
  %v4923 = vsub.s32 %v4922, 2
  %vm4924 = vcmp.gt.s32.totalorder 0, %v4923
  %v4925 = vsel %vm4924, 0, %v4923
  %v4926 = vsub.s32 32, %v4925
  %v4927 = vshll.u32 %v4918, %v4925
  %v4928 = vshrl.u32 %v4910, %v4926
  %v4929 = vor.u32 %v4927, %v4928
  %v4930 = vsub.s32 4294967266, %v4925
  %v4931 = vadd.s32 %v4930, 127
  %v4932 = vshll.u32 %v4931, 23
  %v4933 = vor.u32 4788187, %v4932
  %v4934 = vand.u32 2147483647, %v4933
  %v4936 = vcvt.s32.f32 %v4929
  %v4937 = vmul.f32 %v4936, %v4934
  %v4938 = vxor.u32 %v4937, 2147483648
  %v4939 = vsel %vm4856, %v4938, %v4937
  %v4940 = vsub.s32 4, %v4916
  %v4941 = vsel %vm4856, %v4940, %v4916
  %v4942 = vsel %vm4855, %v4639, %v4939
  %v4943 = vsel %vm4855, 0, %v4941
  %v4944 = vcosq.f32.pop %v4942
  %v4945 = vsinq.f32.pop %v4942
  %vm4946 = vweird.f32 %v4639
  %v4947 = vand.u32 %v4943, 3
  %vm4948 = vcmp.lt.s32.totalorder %v4947, 2
  %vm4949 = vcmp.eq.s32.totalorder %v4947, 0
  %v4950 = vxor.u32 %v4945, 2147483648
  %v4951 = vsel %vm4949, %v4944, %v4950
  %vm4952 = vcmp.eq.s32.totalorder %v4947, 2
  %v4953 = vxor.u32 %v4944, 2147483648
  %v4954 = vsel %vm4952, %v4953, %v4945
  %v4955 = vsel %vm4948, %v4951, %v4954
  %v4956 = vsel %vm4946, nan, %v4955
  %v4957 = vmul.f32 %v4513, %v4956
  %v4958 = vmul.f32 %v4957, %v4852
  %v4959 = vmul.f32 %v4958, %v4852
  %v4960 = vadd.f32 %v4853, %v4959
  %v4961 = vadd.f32 %v4960, 1e-10
  %v4962 = vrsqrt.pop %v4961
  %v4963 = vmul.f32 %v4961, %v4962
  %vm4964 = vcmp.eq.f32.partialorder %v4961, inf
  %v4965 = vsel %vm4964, %v4961, %v4963
  %vm4966 = vcmp.eq.f32.partialorder %v4961, 0.0
  %v4967 = vand.u32 %v4961, 2147483648
  %v4968 = vsel %vm4966, %v4967, %v4965
  %v4969 = vsub.f32 1.0, %v4960
  %v4970 = vadd.f32 %v4969, 1e-10
  %v4971 = vrsqrt.pop %v4970
  %v4972 = vmul.f32 %v4970, %v4971
  %vm4973 = vcmp.eq.f32.partialorder %v4970, inf
  %v4974 = vsel %vm4973, %v4970, %v4972
  %vm4975 = vcmp.eq.f32.partialorder %v4970, 0.0
  %v4976 = vand.u32 %v4970, 2147483648
  %v4977 = vsel %vm4975, %v4976, %v4974
  %v4978 = vand.u32 2147483647, %v4977
  %v4979 = vand.u32 2147483647, %v4968
  %v4980 = vmin.f32 %v4978, %v4979
  %v4981 = vmax.f32 %v4978, %v4979
  %v4982 = vrcp.pop %v4981
  %v4983 = vmul.f32 %v4980, %v4982
  %v4984 = vmul.f32 %v4983, %v4983
  %v4985 = vmul.f32 0.002785687, %v4984
  %v4986 = vadd.f32 %v4985, -0.015866
  %v4987 = vmul.f32 %v4986, %v4984
  %v4988 = vadd.f32 %v4987, 0.04247222
  %v4989 = vmul.f32 %v4988, %v4984
  %v4990 = vadd.f32 %v4989, -0.074975304
  %v4991 = vmul.f32 %v4990, %v4984
  %v4992 = vadd.f32 %v4991, 0.1064488
  %v4993 = vmul.f32 %v4992, %v4984
  %v4994 = vadd.f32 %v4993, -0.14207031
  %v4995 = vmul.f32 %v4994, %v4984
  %v4996 = vadd.f32 %v4995, 0.19993454
  %v4997 = vmul.f32 %v4996, %v4984
  %v4998 = vadd.f32 %v4997, -0.33333147
  %v4999 = vmul.f32 %v4998, %v4984
  %v5000 = vmul.f32 %v4999, %v4983
  %v5001 = vadd.f32 %v5000, %v4983
  %vm5002 = vcmp.gt.f32.partialorder %v4979, %v4978
  %v5003 = vsub.f32 1.5707964, %v5001
  %v5004 = vsel %vm5002, %v5003, %v5001
  %vm5005 = vcmp.lt.f32.partialorder %v4977, 0.0
  %v5006 = vsub.f32 3.1415927, %v5004
  %v5007 = vsel %vm5005, %v5006, %v5004
  %vm5008 = vcmp.lt.s32.totalorder %v4977, 0
  %v5009 = vsel %vm5008, 3.1415927, 0.0
  %vm5010 = vcmp.eq.f32.partialorder %v4968, 0.0
  %v5011 = vsel %vm5010, %v5009, %v5007
  %vm5012 = vcmp.ne.f32.partialorder %v4977, %v4977
  %vm5013 = vcmp.ne.f32.partialorder %v4968, %v4968
  %vm5014 = vmor %vm5012, %vm5013
  %v5015 = vsel %vm5014, nan, %v5011
  %vm5016 = vcmp.lt.f32.partialorder %v4977, 0.0
  %v5017 = vsel %vm5016, 2.3561945, 0.7853982
  %vm5018 = vcmp.eq.s32.totalorder %v4978, inf
  %vm5019 = vcmp.eq.s32.totalorder %v4979, inf
  %vm5020 = vmand %vm5018, %vm5019
  %v5021 = vsel %vm5020, %v5017, %v5015
  %v5022 = vand.u32 2147483647, %v5021
  %v5023 = vand.u32 %v4968, 2147483648
  %v5024 = vor.u32 %v5022, %v5023
  %v5025 = vmul.f32 %v5024, 2.0
  %v5026 = vmul.f32 %v4581, %v5025
  %v5027 = vadd.f32 %v4070, %v5026
  %s5028 = scalar_lea.vmem %s0, 5
  %v5029 = vld [vmem:[%s5028] sm:$0x1]
  %v5030 = vadd.f32 %v4073, %v5029
  %s5031 = scalar_lea.vmem %s247, 5
  %v5032 = vld [vmem:[%s5031] sm:$0x1]
  %v5033 = vadd.f32 %v4082, %v5032
  %vm5034 = vcmp.gt.f32.partialorder %v5033, 360.0
  %v5035 = vsub.f32 %v5033, 360.0
  %vm5036 = vcmp.lt.f32.partialorder %v5033, 0.0
  %v5037 = vadd.f32 %v5033, 360.0
  %v5038 = vsel %vm5036, %v5037, %v5033
  %v5039 = vsel %vm5034, %v5035, %v5038
  %v5040 = vmul.f32 %v5039, 0.017453292
  %v5041 = vand.u32 2147483647, %v5040
  %vm5042 = vcmp.le.f32.partialorder %v5041, 0.7853982
  %vm5043 = vcmp.lt.s32.totalorder %v5040, 0
  %v5044 = vand.u32 %v5040, 2139095040
  %v5045 = vshrl.u32 %v5044, 23
  %v5046 = vsub.s32 %v5045, 127
  %v5047 = vand.u32 2147483647, %v5040
  %v5048 = vand.u32 %v5047, 8388607
  %v5049 = vor.u32 %v5048, 8388608
  %v5050 = vsub.s32 0, %v5049
  %v5051 = vadd.s32 %v5046, 1
  %vm5052 = vcmp.gt.s32.totalorder %v5051, 0
  %v5053 = vsel %vm5052, %v5051, 0
  %v5054 = vshrl.u32 %v5053, 5
  %v5055 = vand.u32 %v5053, 31
  %v5056 = vsub.s32 32, %v5055
  %v5057 = vshrl.u32 683565275, %v5056
  %v5058 = vshll.u32 683565275, %v5055
  %v5059 = vshrl.u32 2475754826, %v5056
  %v5060 = vor.u32 %v5058, %v5059
  %v5061 = vshll.u32 2475754826, %v5055
  %v5062 = vshrl.u32 2131351028, %v5056
  %v5063 = vor.u32 %v5061, %v5062
  %v5064 = vshll.u32 2131351028, %v5055
  %v5065 = vshrl.u32 2102212464, %v5056
  %v5066 = vor.u32 %v5064, %v5065
  %v5067 = vshll.u32 2102212464, %v5055
  %v5068 = vshrl.u32 920167782, %v5056
  %v5069 = vor.u32 %v5067, %v5068
  %v5070 = vshll.u32 920167782, %v5055
  %v5071 = vshrl.u32 1326507024, %v5056
  %v5072 = vor.u32 %v5070, %v5071
  %vm5073 = vcmp.lt.s32.totalorder %v5054, 1
  %vm5074 = vcmp.lt.s32.totalorder %v5054, 2
  %vm5075 = vcmp.lt.s32.totalorder %v5054, 3
  %vm5076 = vcmp.lt.s32.totalorder %v5054, 4
  %v5077 = vsel %vm5073, %v5057, %v5060
  %v5078 = vsel %vm5076, %v5066, 2102212464
  %v5079 = vsel %vm5075, %v5063, %v5078
  %v5080 = vsel %vm5074, %v5077, %v5079
  %v5081 = vsel %vm5073, %v5060, %v5063
  %v5082 = vsel %vm5076, %v5069, 920167782
  %v5083 = vsel %vm5075, %v5066, %v5082
  %v5084 = vsel %vm5074, %v5081, %v5083
  %v5085 = vsel %vm5073, %v5063, %v5066
  %v5086 = vsel %vm5076, %v5072, 1326507024
  %v5087 = vsel %vm5075, %v5069, %v5086
  %v5088 = vsel %vm5074, %v5085, %v5087
  %v5089 = vshll.u32 %v5049, 8
  %v5090 = vmul.u32.u64.compose %v5089, %v5088
  %v5091 = vextract.low.u32 %v5090
  %v5092 = vextract.high.u32 %v5090
  %v5093 = vmul.u32.u64.compose %v5089, %v5084
  %v5094 = vextract.low.u32 %v5093
  %v5095 = vextract.high.u32 %v5093
  %v5096 = vmul.u32 %v5089, %v5080
  %v5097 = vadd.s32 %v5092, %v5094
  %vm5098 = vc.u32 %v5092, %v5094
  %v5099 = vadd.s32 %v5095, 1
  %v5100 = vsel %vm5098, %v5099, %v5095
  %v5101 = vadd.s32 %v5096, %v5100
  %v5102 = vadd.s32 %v5101, 536870912
  %v5103 = vshrl.u32 %v5102, 30
  %v5104 = vshll.u32 %v5103, 30
  %v5105 = vsub.s32 %v5101, %v5104
  %vm5106 = vcmp.lt.s32.totalorder %v5105, 0
  %v5107 = vsub.s32 0, %v5105
  %v5108 = vsel %vm5106, %v5107, %v5105
  %v5109 = vclz %v5108
  %v5110 = vsub.s32 %v5109, 2
  %vm5111 = vcmp.gt.s32.totalorder 0, %v5110
  %v5112 = vsel %vm5111, 0, %v5110
  %v5113 = vsub.s32 32, %v5112
  %v5114 = vshll.u32 %v5105, %v5112
  %v5115 = vshrl.u32 %v5097, %v5113
  %v5116 = vor.u32 %v5114, %v5115
  %v5117 = vsub.s32 4294967266, %v5112
  %v5118 = vadd.s32 %v5117, 127
  %v5119 = vshll.u32 %v5118, 23
  %v5120 = vor.u32 4788187, %v5119
  %v5121 = vand.u32 2147483647, %v5120
  %v5123 = vcvt.s32.f32 %v5116
  %v5124 = vmul.f32 %v5123, %v5121
  %v5125 = vxor.u32 %v5124, 2147483648
  %v5126 = vsel %vm5043, %v5125, %v5124
  %v5127 = vsub.s32 4, %v5103
  %v5128 = vsel %vm5043, %v5127, %v5103
  %v5129 = vsel %vm5042, %v5040, %v5126
  %v5130 = vsel %vm5042, 0, %v5128
  %v5131 = vcosq.f32.pop %v5129
  %v5132 = vsinq.f32.pop %v5129
  %vm5133 = vweird.f32 %v5040
  %v5134 = vadd.s32 %v5130, 3
  %v5135 = vand.u32 %v5134, 3
  %vm5136 = vcmp.lt.s32.totalorder %v5135, 2
  %vm5137 = vcmp.eq.s32.totalorder %v5135, 0
  %v5138 = vxor.u32 %v5132, 2147483648
  %v5139 = vsel %vm5137, %v5131, %v5138
  %vm5140 = vcmp.eq.s32.totalorder %v5135, 2
  %v5141 = vxor.u32 %v5131, 2147483648
  %v5142 = vsel %vm5140, %v5141, %v5132
  %v5143 = vsel %vm5136, %v5139, %v5142
  %v5144 = vsel %vm5133, nan, %v5143
  %v5145 = vand.u32 2147483647, %v5040
  %vm5146 = vcmp.le.f32.partialorder %v5145, 0.7853982
  %vm5147 = vcmp.lt.s32.totalorder %v5040, 0
  %v5148 = vand.u32 %v5040, 2139095040
  %v5149 = vshrl.u32 %v5148, 23
  %v5150 = vsub.s32 %v5149, 127
  %v5151 = vand.u32 2147483647, %v5040
  %v5152 = vand.u32 %v5151, 8388607
  %v5153 = vor.u32 %v5152, 8388608
  %v5154 = vsub.s32 0, %v5153
  %v5155 = vadd.s32 %v5150, 1
  %vm5156 = vcmp.gt.s32.totalorder %v5155, 0
  %v5157 = vsel %vm5156, %v5155, 0
  %v5158 = vshrl.u32 %v5157, 5
  %v5159 = vand.u32 %v5157, 31
  %v5160 = vsub.s32 32, %v5159
  %v5161 = vshrl.u32 683565275, %v5160
  %v5162 = vshll.u32 683565275, %v5159
  %v5163 = vshrl.u32 2475754826, %v5160
  %v5164 = vor.u32 %v5162, %v5163
  %v5165 = vshll.u32 2475754826, %v5159
  %v5166 = vshrl.u32 2131351028, %v5160
  %v5167 = vor.u32 %v5165, %v5166
  %v5168 = vshll.u32 2131351028, %v5159
  %v5169 = vshrl.u32 2102212464, %v5160
  %v5170 = vor.u32 %v5168, %v5169
  %v5171 = vshll.u32 2102212464, %v5159
  %v5172 = vshrl.u32 920167782, %v5160
  %v5173 = vor.u32 %v5171, %v5172
  %v5174 = vshll.u32 920167782, %v5159
  %v5175 = vshrl.u32 1326507024, %v5160
  %v5176 = vor.u32 %v5174, %v5175
  %vm5177 = vcmp.lt.s32.totalorder %v5158, 1
  %vm5178 = vcmp.lt.s32.totalorder %v5158, 2
  %vm5179 = vcmp.lt.s32.totalorder %v5158, 3
  %vm5180 = vcmp.lt.s32.totalorder %v5158, 4
  %v5181 = vsel %vm5177, %v5161, %v5164
  %v5182 = vsel %vm5180, %v5170, 2102212464
  %v5183 = vsel %vm5179, %v5167, %v5182
  %v5184 = vsel %vm5178, %v5181, %v5183
  %v5185 = vsel %vm5177, %v5164, %v5167
  %v5186 = vsel %vm5180, %v5173, 920167782
  %v5187 = vsel %vm5179, %v5170, %v5186
  %v5188 = vsel %vm5178, %v5185, %v5187
  %v5189 = vsel %vm5177, %v5167, %v5170
  %v5190 = vsel %vm5180, %v5176, 1326507024
  %v5191 = vsel %vm5179, %v5173, %v5190
  %v5192 = vsel %vm5178, %v5189, %v5191
  %v5193 = vshll.u32 %v5153, 8
  %v5194 = vmul.u32.u64.compose %v5193, %v5192
  %v5195 = vextract.low.u32 %v5194
  %v5196 = vextract.high.u32 %v5194
  %v5197 = vmul.u32.u64.compose %v5193, %v5188
  %v5198 = vextract.low.u32 %v5197
  %v5199 = vextract.high.u32 %v5197
  %v5200 = vmul.u32 %v5193, %v5184
  %v5201 = vadd.s32 %v5196, %v5198
  %vm5202 = vc.u32 %v5196, %v5198
  %v5203 = vadd.s32 %v5199, 1
  %v5204 = vsel %vm5202, %v5203, %v5199
  %v5205 = vadd.s32 %v5200, %v5204
  %v5206 = vadd.s32 %v5205, 536870912
  %v5207 = vshrl.u32 %v5206, 30
  %v5208 = vshll.u32 %v5207, 30
  %v5209 = vsub.s32 %v5205, %v5208
  %vm5210 = vcmp.lt.s32.totalorder %v5209, 0
  %v5211 = vsub.s32 0, %v5209
  %v5212 = vsel %vm5210, %v5211, %v5209
  %v5213 = vclz %v5212
  %v5214 = vsub.s32 %v5213, 2
  %vm5215 = vcmp.gt.s32.totalorder 0, %v5214
  %v5216 = vsel %vm5215, 0, %v5214
  %v5217 = vsub.s32 32, %v5216
  %v5218 = vshll.u32 %v5209, %v5216
  %v5219 = vshrl.u32 %v5201, %v5217
  %v5220 = vor.u32 %v5218, %v5219
  %v5221 = vsub.s32 4294967266, %v5216
  %v5222 = vadd.s32 %v5221, 127
  %v5223 = vshll.u32 %v5222, 23
  %v5224 = vor.u32 4788187, %v5223
  %v5225 = vand.u32 2147483647, %v5224
  %v5227 = vcvt.s32.f32 %v5220
  %v5228 = vmul.f32 %v5227, %v5225
  %v5229 = vxor.u32 %v5228, 2147483648
  %v5230 = vsel %vm5147, %v5229, %v5228
  %v5231 = vsub.s32 4, %v5207
  %v5232 = vsel %vm5147, %v5231, %v5207
  %v5233 = vsel %vm5146, %v5040, %v5230
  %v5234 = vsel %vm5146, 0, %v5232
  %v5235 = vcosq.f32.pop %v5233
  %v5236 = vsinq.f32.pop %v5233
  %vm5237 = vweird.f32 %v5040
  %v5238 = vand.u32 %v5234, 3
  %vm5239 = vcmp.lt.s32.totalorder %v5238, 2
  %vm5240 = vcmp.eq.s32.totalorder %v5238, 0
  %v5241 = vxor.u32 %v5236, 2147483648
  %v5242 = vsel %vm5240, %v5235, %v5241
  %vm5243 = vcmp.eq.s32.totalorder %v5238, 2
  %v5244 = vxor.u32 %v5235, 2147483648
  %v5245 = vsel %vm5243, %v5244, %v5236
  %v5246 = vsel %vm5239, %v5242, %v5245
  %v5247 = vsel %vm5237, nan, %v5246
  %v5248 = vmul.f32 %v5030, 92.6
  %v5249 = vmul.f32 %v5248, %v4579
  %v5250 = vand.u32 2147483647, %v5249
  %vm5251 = vcmp.le.f32.partialorder %v5250, 0.7853982
  %vm5252 = vcmp.lt.s32.totalorder %v5249, 0
  %v5253 = vand.u32 %v5249, 2139095040
  %v5254 = vshrl.u32 %v5253, 23
  %v5255 = vsub.s32 %v5254, 127
  %v5256 = vand.u32 2147483647, %v5249
  %v5257 = vand.u32 %v5256, 8388607
  %v5258 = vor.u32 %v5257, 8388608
  %v5259 = vsub.s32 0, %v5258
  %v5260 = vadd.s32 %v5255, 1
  %vm5261 = vcmp.gt.s32.totalorder %v5260, 0
  %v5262 = vsel %vm5261, %v5260, 0
  %v5263 = vshrl.u32 %v5262, 5
  %v5264 = vand.u32 %v5262, 31
  %v5265 = vsub.s32 32, %v5264
  %v5266 = vshrl.u32 683565275, %v5265
  %v5267 = vshll.u32 683565275, %v5264
  %v5268 = vshrl.u32 2475754826, %v5265
  %v5269 = vor.u32 %v5267, %v5268
  %v5270 = vshll.u32 2475754826, %v5264
  %v5271 = vshrl.u32 2131351028, %v5265
  %v5272 = vor.u32 %v5270, %v5271
  %v5273 = vshll.u32 2131351028, %v5264
  %v5274 = vshrl.u32 2102212464, %v5265
  %v5275 = vor.u32 %v5273, %v5274
  %v5276 = vshll.u32 2102212464, %v5264
  %v5277 = vshrl.u32 920167782, %v5265
  %v5278 = vor.u32 %v5276, %v5277
  %v5279 = vshll.u32 920167782, %v5264
  %v5280 = vshrl.u32 1326507024, %v5265
  %v5281 = vor.u32 %v5279, %v5280
  %vm5282 = vcmp.lt.s32.totalorder %v5263, 1
  %vm5283 = vcmp.lt.s32.totalorder %v5263, 2
  %vm5284 = vcmp.lt.s32.totalorder %v5263, 3
  %vm5285 = vcmp.lt.s32.totalorder %v5263, 4
  %v5286 = vsel %vm5282, %v5266, %v5269
  %v5287 = vsel %vm5285, %v5275, 2102212464
  %v5288 = vsel %vm5284, %v5272, %v5287
  %v5289 = vsel %vm5283, %v5286, %v5288
  %v5290 = vsel %vm5282, %v5269, %v5272
  %v5291 = vsel %vm5285, %v5278, 920167782
  %v5292 = vsel %vm5284, %v5275, %v5291
  %v5293 = vsel %vm5283, %v5290, %v5292
  %v5294 = vsel %vm5282, %v5272, %v5275
  %v5295 = vsel %vm5285, %v5281, 1326507024
  %v5296 = vsel %vm5284, %v5278, %v5295
  %v5297 = vsel %vm5283, %v5294, %v5296
  %v5298 = vshll.u32 %v5258, 8
  %v5299 = vmul.u32.u64.compose %v5298, %v5297
  %v5300 = vextract.low.u32 %v5299
  %v5301 = vextract.high.u32 %v5299
  %v5302 = vmul.u32.u64.compose %v5298, %v5293
  %v5303 = vextract.low.u32 %v5302
  %v5304 = vextract.high.u32 %v5302
  %v5305 = vmul.u32 %v5298, %v5289
  %v5306 = vadd.s32 %v5301, %v5303
  %vm5307 = vc.u32 %v5301, %v5303
  %v5308 = vadd.s32 %v5304, 1
  %v5309 = vsel %vm5307, %v5308, %v5304
  %v5310 = vadd.s32 %v5305, %v5309
  %v5311 = vadd.s32 %v5310, 536870912
  %v5312 = vshrl.u32 %v5311, 30
  %v5313 = vshll.u32 %v5312, 30
  %v5314 = vsub.s32 %v5310, %v5313
  %vm5315 = vcmp.lt.s32.totalorder %v5314, 0
  %v5316 = vsub.s32 0, %v5314
  %v5317 = vsel %vm5315, %v5316, %v5314
  %v5318 = vclz %v5317
  %v5319 = vsub.s32 %v5318, 2
  %vm5320 = vcmp.gt.s32.totalorder 0, %v5319
  %v5321 = vsel %vm5320, 0, %v5319
  %v5322 = vsub.s32 32, %v5321
  %v5323 = vshll.u32 %v5314, %v5321
  %v5324 = vshrl.u32 %v5306, %v5322
  %v5325 = vor.u32 %v5323, %v5324
  %v5326 = vsub.s32 4294967266, %v5321
  %v5327 = vadd.s32 %v5326, 127
  %v5328 = vshll.u32 %v5327, 23
  %v5329 = vor.u32 4788187, %v5328
  %v5330 = vand.u32 2147483647, %v5329
  %v5332 = vcvt.s32.f32 %v5325
  %v5333 = vmul.f32 %v5332, %v5330
  %v5334 = vxor.u32 %v5333, 2147483648
  %v5335 = vsel %vm5252, %v5334, %v5333
  %v5336 = vsub.s32 4, %v5312
  %v5337 = vsel %vm5252, %v5336, %v5312
  %v5338 = vsel %vm5251, %v5249, %v5335
  %v5339 = vsel %vm5251, 0, %v5337
  %v5340 = vcosq.f32.pop %v5338
  %v5341 = vsinq.f32.pop %v5338
  %vm5342 = vweird.f32 %v5249
  %v5343 = vadd.s32 %v5339, 3
  %v5344 = vand.u32 %v5343, 3
  %vm5345 = vcmp.lt.s32.totalorder %v5344, 2
  %vm5346 = vcmp.eq.s32.totalorder %v5344, 0
  %v5347 = vxor.u32 %v5341, 2147483648
  %v5348 = vsel %vm5346, %v5340, %v5347
  %vm5349 = vcmp.eq.s32.totalorder %v5344, 2
  %v5350 = vxor.u32 %v5340, 2147483648
  %v5351 = vsel %vm5349, %v5350, %v5341
  %v5352 = vsel %vm5345, %v5348, %v5351
  %v5353 = vsel %vm5342, nan, %v5352
  %v5354 = vand.u32 2147483647, %v5249
  %vm5355 = vcmp.le.f32.partialorder %v5354, 0.7853982
  %vm5356 = vcmp.lt.s32.totalorder %v5249, 0
  %v5357 = vand.u32 %v5249, 2139095040
  %v5358 = vshrl.u32 %v5357, 23
  %v5359 = vsub.s32 %v5358, 127
  %v5360 = vand.u32 2147483647, %v5249
  %v5361 = vand.u32 %v5360, 8388607
  %v5362 = vor.u32 %v5361, 8388608
  %v5363 = vsub.s32 0, %v5362
  %v5364 = vadd.s32 %v5359, 1
  %vm5365 = vcmp.gt.s32.totalorder %v5364, 0
  %v5366 = vsel %vm5365, %v5364, 0
  %v5367 = vshrl.u32 %v5366, 5
  %v5368 = vand.u32 %v5366, 31
  %v5369 = vsub.s32 32, %v5368
  %v5370 = vshrl.u32 683565275, %v5369
  %v5371 = vshll.u32 683565275, %v5368
  %v5372 = vshrl.u32 2475754826, %v5369
  %v5373 = vor.u32 %v5371, %v5372
  %v5374 = vshll.u32 2475754826, %v5368
  %v5375 = vshrl.u32 2131351028, %v5369
  %v5376 = vor.u32 %v5374, %v5375
  %v5377 = vshll.u32 2131351028, %v5368
  %v5378 = vshrl.u32 2102212464, %v5369
  %v5379 = vor.u32 %v5377, %v5378
  %v5380 = vshll.u32 2102212464, %v5368
  %v5381 = vshrl.u32 920167782, %v5369
  %v5382 = vor.u32 %v5380, %v5381
  %v5383 = vshll.u32 920167782, %v5368
  %v5384 = vshrl.u32 1326507024, %v5369
  %v5385 = vor.u32 %v5383, %v5384
  %vm5386 = vcmp.lt.s32.totalorder %v5367, 1
  %vm5387 = vcmp.lt.s32.totalorder %v5367, 2
  %vm5388 = vcmp.lt.s32.totalorder %v5367, 3
  %vm5389 = vcmp.lt.s32.totalorder %v5367, 4
  %v5390 = vsel %vm5386, %v5370, %v5373
  %v5391 = vsel %vm5389, %v5379, 2102212464
  %v5392 = vsel %vm5388, %v5376, %v5391
  %v5393 = vsel %vm5387, %v5390, %v5392
  %v5394 = vsel %vm5386, %v5373, %v5376
  %v5395 = vsel %vm5389, %v5382, 920167782
  %v5396 = vsel %vm5388, %v5379, %v5395
  %v5397 = vsel %vm5387, %v5394, %v5396
  %v5398 = vsel %vm5386, %v5376, %v5379
  %v5399 = vsel %vm5389, %v5385, 1326507024
  %v5400 = vsel %vm5388, %v5382, %v5399
  %v5401 = vsel %vm5387, %v5398, %v5400
  %v5402 = vshll.u32 %v5362, 8
  %v5403 = vmul.u32.u64.compose %v5402, %v5401
  %v5404 = vextract.low.u32 %v5403
  %v5405 = vextract.high.u32 %v5403
  %v5406 = vmul.u32.u64.compose %v5402, %v5397
  %v5407 = vextract.low.u32 %v5406
  %v5408 = vextract.high.u32 %v5406
  %v5409 = vmul.u32 %v5402, %v5393
  %v5410 = vadd.s32 %v5405, %v5407
  %vm5411 = vc.u32 %v5405, %v5407
  %v5412 = vadd.s32 %v5408, 1
  %v5413 = vsel %vm5411, %v5412, %v5408
  %v5414 = vadd.s32 %v5409, %v5413
  %v5415 = vadd.s32 %v5414, 536870912
  %v5416 = vshrl.u32 %v5415, 30
  %v5417 = vshll.u32 %v5416, 30
  %v5418 = vsub.s32 %v5414, %v5417
  %vm5419 = vcmp.lt.s32.totalorder %v5418, 0
  %v5420 = vsub.s32 0, %v5418
  %v5421 = vsel %vm5419, %v5420, %v5418
  %v5422 = vclz %v5421
  %v5423 = vsub.s32 %v5422, 2
  %vm5424 = vcmp.gt.s32.totalorder 0, %v5423
  %v5425 = vsel %vm5424, 0, %v5423
  %v5426 = vsub.s32 32, %v5425
  %v5427 = vshll.u32 %v5418, %v5425
  %v5428 = vshrl.u32 %v5410, %v5426
  %v5429 = vor.u32 %v5427, %v5428
  %v5430 = vsub.s32 4294967266, %v5425
  %v5431 = vadd.s32 %v5430, 127
  %v5432 = vshll.u32 %v5431, 23
  %v5433 = vor.u32 4788187, %v5432
  %v5434 = vand.u32 2147483647, %v5433
  %v5436 = vcvt.s32.f32 %v5429
  %v5437 = vmul.f32 %v5436, %v5434
  %v5438 = vxor.u32 %v5437, 2147483648
  %v5439 = vsel %vm5356, %v5438, %v5437
  %v5440 = vsub.s32 4, %v5416
  %v5441 = vsel %vm5356, %v5440, %v5416
  %v5442 = vsel %vm5355, %v5249, %v5439
  %v5443 = vsel %vm5355, 0, %v5441
  %v5444 = vcosq.f32.pop %v5442
  %v5445 = vsinq.f32.pop %v5442
  %vm5446 = vweird.f32 %v5249
  %v5447 = vand.u32 %v5443, 3
  %vm5448 = vcmp.lt.s32.totalorder %v5447, 2
  %vm5449 = vcmp.eq.s32.totalorder %v5447, 0
  %v5450 = vxor.u32 %v5445, 2147483648
  %v5451 = vsel %vm5449, %v5444, %v5450
  %vm5452 = vcmp.eq.s32.totalorder %v5447, 2
  %v5453 = vxor.u32 %v5444, 2147483648
  %v5454 = vsel %vm5452, %v5453, %v5445
  %v5455 = vsel %vm5448, %v5451, %v5454
  %v5456 = vsel %vm5446, nan, %v5455
  %v5457 = vmul.f32 %v4503, %v5456
  %v5458 = vmul.f32 %v4513, %v5353
  %v5459 = vmul.f32 %v5458, %v5247
  %v5460 = vadd.f32 %v5457, %v5459
  %v5461 = vmul.f32 %v5460, %v5460
  %v5462 = vsub.f32 1.0, %v5461
  %v5463 = vmax.f32 %v5462, 0.0
  %v5464 = vrsqrt.pop %v5463
  %v5465 = vmul.f32 %v5463, %v5464
  %vm5466 = vcmp.eq.f32.partialorder %v5463, inf
  %v5467 = vsel %vm5466, %v5463, %v5465
  %vm5468 = vcmp.eq.f32.partialorder %v5463, 0.0
  %v5469 = vand.u32 %v5463, 2147483648
  %v5470 = vsel %vm5468, %v5469, %v5467
  %v5471 = vmul.f32 %v5144, %v5353
  %v5472 = vmul.f32 %v5471, %v4513
  %v5473 = vmul.f32 %v4503, %v5460
  %v5474 = vsub.f32 %v5456, %v5473
  %v5475 = vand.u32 2147483647, %v5474
  %v5476 = vand.u32 2147483647, %v5472
  %v5477 = vmin.f32 %v5475, %v5476
  %v5478 = vmax.f32 %v5475, %v5476
  %v5479 = vrcp.pop %v5478
  %v5480 = vmul.f32 %v5477, %v5479
  %v5481 = vmul.f32 %v5480, %v5480
  %v5482 = vmul.f32 0.002785687, %v5481
  %v5483 = vadd.f32 %v5482, -0.015866
  %v5484 = vmul.f32 %v5483, %v5481
  %v5485 = vadd.f32 %v5484, 0.04247222
  %v5486 = vmul.f32 %v5485, %v5481
  %v5487 = vadd.f32 %v5486, -0.074975304
  %v5488 = vmul.f32 %v5487, %v5481
  %v5489 = vadd.f32 %v5488, 0.1064488
  %v5490 = vmul.f32 %v5489, %v5481
  %v5491 = vadd.f32 %v5490, -0.14207031
  %v5492 = vmul.f32 %v5491, %v5481
  %v5493 = vadd.f32 %v5492, 0.19993454
  %v5494 = vmul.f32 %v5493, %v5481
  %v5495 = vadd.f32 %v5494, -0.33333147
  %v5496 = vmul.f32 %v5495, %v5481
  %v5497 = vmul.f32 %v5496, %v5480
  %v5498 = vadd.f32 %v5497, %v5480
  %vm5499 = vcmp.gt.f32.partialorder %v5476, %v5475
  %v5500 = vsub.f32 1.5707964, %v5498
  %v5501 = vsel %vm5499, %v5500, %v5498
  %vm5502 = vcmp.lt.f32.partialorder %v5474, 0.0
  %v5503 = vsub.f32 3.1415927, %v5501
  %v5504 = vsel %vm5502, %v5503, %v5501
  %vm5505 = vcmp.lt.s32.totalorder %v5474, 0
  %v5506 = vsel %vm5505, 3.1415927, 0.0
  %vm5507 = vcmp.eq.f32.partialorder %v5472, 0.0
  %v5508 = vsel %vm5507, %v5506, %v5504
  %vm5509 = vcmp.ne.f32.partialorder %v5474, %v5474
  %vm5510 = vcmp.ne.f32.partialorder %v5472, %v5472
  %vm5511 = vmor %vm5509, %vm5510
  %v5512 = vsel %vm5511, nan, %v5508
  %vm5513 = vcmp.lt.f32.partialorder %v5474, 0.0
  %v5514 = vsel %vm5513, 2.3561945, 0.7853982
  %vm5515 = vcmp.eq.s32.totalorder %v5475, inf
  %vm5516 = vcmp.eq.s32.totalorder %v5476, inf
  %vm5517 = vmand %vm5515, %vm5516
  %v5518 = vsel %vm5517, %v5514, %v5512
  %v5519 = vand.u32 2147483647, %v5518
  %v5520 = vand.u32 %v5472, 2147483648
  %v5521 = vor.u32 %v5519, %v5520
  %v5522 = vadd.f32 %v4565, %v5521
  %v5523 = vmul.f32 %v5470, 4.068063e+13
  %v5524 = vmul.f32 %v5460, 4.04083e+13
  %v5525 = vmul.f32 %v5470, 6378137.0
  %v5526 = vmul.f32 %v5460, 6356752.5
  %v5527 = vmul.f32 %v5523, %v5523
  %v5528 = vmul.f32 %v5524, %v5524
  %v5529 = vadd.f32 %v5527, %v5528
  %v5530 = vmul.f32 %v5525, %v5525
  %v5531 = vmul.f32 %v5526, %v5526
  %v5532 = vadd.f32 %v5530, %v5531
  %v5533 = vrcp.pop %v5532
  %v5534 = vmul.f32 %v5529, %v5533
  %v5535 = vadd.f32 %v5534, 1e-10
  %v5536 = vrsqrt.pop %v5535
  %v5537 = vmul.f32 %v5535, %v5536
  %v5538 = vmul.f32 %v5537, 0.001
  %v5539 = vand.u32 2147483647, %v5470
  %v5540 = vand.u32 2147483647, %v5460
  %v5541 = vmin.f32 %v5539, %v5540
  %v5542 = vmax.f32 %v5539, %v5540
  %v5543 = vrcp.pop %v5542
  %v5544 = vmul.f32 %v5541, %v5543
  %v5545 = vmul.f32 %v5544, %v5544
  %v5546 = vmul.f32 0.002785687, %v5545
  %v5547 = vadd.f32 %v5546, -0.015866
  %v5548 = vmul.f32 %v5547, %v5545
  %v5549 = vadd.f32 %v5548, 0.04247222
  %v5550 = vmul.f32 %v5549, %v5545
  %v5551 = vadd.f32 %v5550, -0.074975304
  %v5552 = vmul.f32 %v5551, %v5545
  %v5553 = vadd.f32 %v5552, 0.1064488
  %v5554 = vmul.f32 %v5553, %v5545
  %v5555 = vadd.f32 %v5554, -0.14207031
  %v5556 = vmul.f32 %v5555, %v5545
  %v5557 = vadd.f32 %v5556, 0.19993454
  %v5558 = vmul.f32 %v5557, %v5545
  %v5559 = vadd.f32 %v5558, -0.33333147
  %v5560 = vmul.f32 %v5559, %v5545
  %v5561 = vmul.f32 %v5560, %v5544
  %v5562 = vadd.f32 %v5561, %v5544
  %vm5563 = vcmp.gt.f32.partialorder %v5540, %v5539
  %v5564 = vsub.f32 1.5707964, %v5562
  %v5565 = vsel %vm5563, %v5564, %v5562
  %vm5566 = vcmp.lt.f32.partialorder %v5470, 0.0
  %v5567 = vsub.f32 3.1415927, %v5565
  %v5568 = vsel %vm5566, %v5567, %v5565
  %vm5569 = vcmp.lt.s32.totalorder %v5470, 0
  %v5570 = vsel %vm5569, 3.1415927, 0.0
  %vm5571 = vcmp.eq.f32.partialorder %v5460, 0.0
  %v5572 = vsel %vm5571, %v5570, %v5568
  %vm5573 = vcmp.ne.f32.partialorder %v5470, %v5470
  %vm5574 = vcmp.ne.f32.partialorder %v5460, %v5460
  %vm5575 = vmor %vm5573, %vm5574
  %v5576 = vsel %vm5575, nan, %v5572
  %vm5577 = vcmp.lt.f32.partialorder %v5470, 0.0
  %v5578 = vsel %vm5577, 2.3561945, 0.7853982
  %vm5579 = vcmp.eq.s32.totalorder %v5539, inf
  %vm5580 = vcmp.eq.s32.totalorder %v5540, inf
  %vm5581 = vmand %vm5579, %vm5580
  %v5582 = vsel %vm5581, %v5578, %v5576
  %v5583 = vand.u32 2147483647, %v5582
  %v5584 = vand.u32 %v5460, 2147483648
  %v5585 = vor.u32 %v5583, %v5584
  %v5586 = vmul.f32 %v5522, 57.29578
  %s5587 = scalar_lea.vmem %s4, 5
  %5588 = vst [vmem:[%s5587] sm:$0x1] %v5586
  %v5589 = vmul.f32 %v5585, 57.29578
  %s5590 = scalar_lea.vmem %s805, 5
  %5591 = vst [vmem:[%s5590] sm:$0x1] %v5589
  %s5592 = scalar_lea.vmem %s16, 6
  %v5593 = vld [vmem:[%s5592] sm:$0x1]
  %s5594 = scalar_lea.vmem %s1, 6
  %v5595 = vld [vmem:[%s5594] sm:$0x1]
  %v5596 = vmul.f32 %v5593, 0.017453292
  %v5597 = vsub.f32 %v5596, %v5585
  %v5598 = vmul.f32 %v5595, 0.017453292
  %v5599 = vsub.f32 %v5598, %v5522
  %v5600 = vmul.f32 %v5597, 0.5
  %v5601 = vand.u32 2147483647, %v5600
  %vm5602 = vcmp.le.f32.partialorder %v5601, 0.7853982
  %vm5603 = vcmp.lt.s32.totalorder %v5600, 0
  %v5604 = vand.u32 %v5600, 2139095040
  %v5605 = vshrl.u32 %v5604, 23
  %v5606 = vsub.s32 %v5605, 127
  %v5607 = vand.u32 2147483647, %v5600
  %v5608 = vand.u32 %v5607, 8388607
  %v5609 = vor.u32 %v5608, 8388608
  %v5610 = vsub.s32 0, %v5609
  %v5611 = vadd.s32 %v5606, 1
  %vm5612 = vcmp.gt.s32.totalorder %v5611, 0
  %v5613 = vsel %vm5612, %v5611, 0
  %v5614 = vshrl.u32 %v5613, 5
  %v5615 = vand.u32 %v5613, 31
  %v5616 = vsub.s32 32, %v5615
  %v5617 = vshrl.u32 683565275, %v5616
  %v5618 = vshll.u32 683565275, %v5615
  %v5619 = vshrl.u32 2475754826, %v5616
  %v5620 = vor.u32 %v5618, %v5619
  %v5621 = vshll.u32 2475754826, %v5615
  %v5622 = vshrl.u32 2131351028, %v5616
  %v5623 = vor.u32 %v5621, %v5622
  %v5624 = vshll.u32 2131351028, %v5615
  %v5625 = vshrl.u32 2102212464, %v5616
  %v5626 = vor.u32 %v5624, %v5625
  %v5627 = vshll.u32 2102212464, %v5615
  %v5628 = vshrl.u32 920167782, %v5616
  %v5629 = vor.u32 %v5627, %v5628
  %v5630 = vshll.u32 920167782, %v5615
  %v5631 = vshrl.u32 1326507024, %v5616
  %v5632 = vor.u32 %v5630, %v5631
  %vm5633 = vcmp.lt.s32.totalorder %v5614, 1
  %vm5634 = vcmp.lt.s32.totalorder %v5614, 2
  %vm5635 = vcmp.lt.s32.totalorder %v5614, 3
  %vm5636 = vcmp.lt.s32.totalorder %v5614, 4
  %v5637 = vsel %vm5633, %v5617, %v5620
  %v5638 = vsel %vm5636, %v5626, 2102212464
  %v5639 = vsel %vm5635, %v5623, %v5638
  %v5640 = vsel %vm5634, %v5637, %v5639
  %v5641 = vsel %vm5633, %v5620, %v5623
  %v5642 = vsel %vm5636, %v5629, 920167782
  %v5643 = vsel %vm5635, %v5626, %v5642
  %v5644 = vsel %vm5634, %v5641, %v5643
  %v5645 = vsel %vm5633, %v5623, %v5626
  %v5646 = vsel %vm5636, %v5632, 1326507024
  %v5647 = vsel %vm5635, %v5629, %v5646
  %v5648 = vsel %vm5634, %v5645, %v5647
  %v5649 = vshll.u32 %v5609, 8
  %v5650 = vmul.u32.u64.compose %v5649, %v5648
  %v5651 = vextract.low.u32 %v5650
  %v5652 = vextract.high.u32 %v5650
  %v5653 = vmul.u32.u64.compose %v5649, %v5644
  %v5654 = vextract.low.u32 %v5653
  %v5655 = vextract.high.u32 %v5653
  %v5656 = vmul.u32 %v5649, %v5640
  %v5657 = vadd.s32 %v5652, %v5654
  %vm5658 = vc.u32 %v5652, %v5654
  %v5659 = vadd.s32 %v5655, 1
  %v5660 = vsel %vm5658, %v5659, %v5655
  %v5661 = vadd.s32 %v5656, %v5660
  %v5662 = vadd.s32 %v5661, 536870912
  %v5663 = vshrl.u32 %v5662, 30
  %v5664 = vshll.u32 %v5663, 30
  %v5665 = vsub.s32 %v5661, %v5664
  %vm5666 = vcmp.lt.s32.totalorder %v5665, 0
  %v5667 = vsub.s32 0, %v5665
  %v5668 = vsel %vm5666, %v5667, %v5665
  %v5669 = vclz %v5668
  %v5670 = vsub.s32 %v5669, 2
  %vm5671 = vcmp.gt.s32.totalorder 0, %v5670
  %v5672 = vsel %vm5671, 0, %v5670
  %v5673 = vsub.s32 32, %v5672
  %v5674 = vshll.u32 %v5665, %v5672
  %v5675 = vshrl.u32 %v5657, %v5673
  %v5676 = vor.u32 %v5674, %v5675
  %v5677 = vsub.s32 4294967266, %v5672
  %v5678 = vadd.s32 %v5677, 127
  %v5679 = vshll.u32 %v5678, 23
  %v5680 = vor.u32 4788187, %v5679
  %v5681 = vand.u32 2147483647, %v5680
  %v5683 = vcvt.s32.f32 %v5676
  %v5684 = vmul.f32 %v5683, %v5681
  %v5685 = vxor.u32 %v5684, 2147483648
  %v5686 = vsel %vm5603, %v5685, %v5684
  %v5687 = vsub.s32 4, %v5663
  %v5688 = vsel %vm5603, %v5687, %v5663
  %v5689 = vsel %vm5602, %v5600, %v5686
  %v5690 = vsel %vm5602, 0, %v5688
  %v5691 = vcosq.f32.pop %v5689
  %v5692 = vsinq.f32.pop %v5689
  %vm5693 = vweird.f32 %v5600
  %v5694 = vadd.s32 %v5690, 3
  %v5695 = vand.u32 %v5694, 3
  %vm5696 = vcmp.lt.s32.totalorder %v5695, 2
  %vm5697 = vcmp.eq.s32.totalorder %v5695, 0
  %v5698 = vxor.u32 %v5692, 2147483648
  %v5699 = vsel %vm5697, %v5691, %v5698
  %vm5700 = vcmp.eq.s32.totalorder %v5695, 2
  %v5701 = vxor.u32 %v5691, 2147483648
  %v5702 = vsel %vm5700, %v5701, %v5692
  %v5703 = vsel %vm5696, %v5699, %v5702
  %v5704 = vsel %vm5693, nan, %v5703
  %v5705 = vmul.f32 %v5599, 0.5
  %v5706 = vand.u32 2147483647, %v5705
  %vm5707 = vcmp.le.f32.partialorder %v5706, 0.7853982
  %vm5708 = vcmp.lt.s32.totalorder %v5705, 0
  %v5709 = vand.u32 %v5705, 2139095040
  %v5710 = vshrl.u32 %v5709, 23
  %v5711 = vsub.s32 %v5710, 127
  %v5712 = vand.u32 2147483647, %v5705
  %v5713 = vand.u32 %v5712, 8388607
  %v5714 = vor.u32 %v5713, 8388608
  %v5715 = vsub.s32 0, %v5714
  %v5716 = vadd.s32 %v5711, 1
  %vm5717 = vcmp.gt.s32.totalorder %v5716, 0
  %v5718 = vsel %vm5717, %v5716, 0
  %v5719 = vshrl.u32 %v5718, 5
  %v5720 = vand.u32 %v5718, 31
  %v5721 = vsub.s32 32, %v5720
  %v5722 = vshrl.u32 683565275, %v5721
  %v5723 = vshll.u32 683565275, %v5720
  %v5724 = vshrl.u32 2475754826, %v5721
  %v5725 = vor.u32 %v5723, %v5724
  %v5726 = vshll.u32 2475754826, %v5720
  %v5727 = vshrl.u32 2131351028, %v5721
  %v5728 = vor.u32 %v5726, %v5727
  %v5729 = vshll.u32 2131351028, %v5720
  %v5730 = vshrl.u32 2102212464, %v5721
  %v5731 = vor.u32 %v5729, %v5730
  %v5732 = vshll.u32 2102212464, %v5720
  %v5733 = vshrl.u32 920167782, %v5721
  %v5734 = vor.u32 %v5732, %v5733
  %v5735 = vshll.u32 920167782, %v5720
  %v5736 = vshrl.u32 1326507024, %v5721
  %v5737 = vor.u32 %v5735, %v5736
  %vm5738 = vcmp.lt.s32.totalorder %v5719, 1
  %vm5739 = vcmp.lt.s32.totalorder %v5719, 2
  %vm5740 = vcmp.lt.s32.totalorder %v5719, 3
  %vm5741 = vcmp.lt.s32.totalorder %v5719, 4
  %v5742 = vsel %vm5738, %v5722, %v5725
  %v5743 = vsel %vm5741, %v5731, 2102212464
  %v5744 = vsel %vm5740, %v5728, %v5743
  %v5745 = vsel %vm5739, %v5742, %v5744
  %v5746 = vsel %vm5738, %v5725, %v5728
  %v5747 = vsel %vm5741, %v5734, 920167782
  %v5748 = vsel %vm5740, %v5731, %v5747
  %v5749 = vsel %vm5739, %v5746, %v5748
  %v5750 = vsel %vm5738, %v5728, %v5731
  %v5751 = vsel %vm5741, %v5737, 1326507024
  %v5752 = vsel %vm5740, %v5734, %v5751
  %v5753 = vsel %vm5739, %v5750, %v5752
  %v5754 = vshll.u32 %v5714, 8
  %v5755 = vmul.u32.u64.compose %v5754, %v5753
  %v5756 = vextract.low.u32 %v5755
  %v5757 = vextract.high.u32 %v5755
  %v5758 = vmul.u32.u64.compose %v5754, %v5749
  %v5759 = vextract.low.u32 %v5758
  %v5760 = vextract.high.u32 %v5758
  %v5761 = vmul.u32 %v5754, %v5745
  %v5762 = vadd.s32 %v5757, %v5759
  %vm5763 = vc.u32 %v5757, %v5759
  %v5764 = vadd.s32 %v5760, 1
  %v5765 = vsel %vm5763, %v5764, %v5760
  %v5766 = vadd.s32 %v5761, %v5765
  %v5767 = vadd.s32 %v5766, 536870912
  %v5768 = vshrl.u32 %v5767, 30
  %v5769 = vshll.u32 %v5768, 30
  %v5770 = vsub.s32 %v5766, %v5769
  %vm5771 = vcmp.lt.s32.totalorder %v5770, 0
  %v5772 = vsub.s32 0, %v5770
  %v5773 = vsel %vm5771, %v5772, %v5770
  %v5774 = vclz %v5773
  %v5775 = vsub.s32 %v5774, 2
  %vm5776 = vcmp.gt.s32.totalorder 0, %v5775
  %v5777 = vsel %vm5776, 0, %v5775
  %v5778 = vsub.s32 32, %v5777
  %v5779 = vshll.u32 %v5770, %v5777
  %v5780 = vshrl.u32 %v5762, %v5778
  %v5781 = vor.u32 %v5779, %v5780
  %v5782 = vsub.s32 4294967266, %v5777
  %v5783 = vadd.s32 %v5782, 127
  %v5784 = vshll.u32 %v5783, 23
  %v5785 = vor.u32 4788187, %v5784
  %v5786 = vand.u32 2147483647, %v5785
  %v5788 = vcvt.s32.f32 %v5781
  %v5789 = vmul.f32 %v5788, %v5786
  %v5790 = vxor.u32 %v5789, 2147483648
  %v5791 = vsel %vm5708, %v5790, %v5789
  %v5792 = vsub.s32 4, %v5768
  %v5793 = vsel %vm5708, %v5792, %v5768
  %v5794 = vsel %vm5707, %v5705, %v5791
  %v5795 = vsel %vm5707, 0, %v5793
  %v5796 = vcosq.f32.pop %v5794
  %v5797 = vsinq.f32.pop %v5794
  %vm5798 = vweird.f32 %v5705
  %v5799 = vadd.s32 %v5795, 3
  %v5800 = vand.u32 %v5799, 3
  %vm5801 = vcmp.lt.s32.totalorder %v5800, 2
  %vm5802 = vcmp.eq.s32.totalorder %v5800, 0
  %v5803 = vxor.u32 %v5797, 2147483648
  %v5804 = vsel %vm5802, %v5796, %v5803
  %vm5805 = vcmp.eq.s32.totalorder %v5800, 2
  %v5806 = vxor.u32 %v5796, 2147483648
  %v5807 = vsel %vm5805, %v5806, %v5797
  %v5808 = vsel %vm5801, %v5804, %v5807
  %v5809 = vsel %vm5798, nan, %v5808
  %v5810 = vmul.f32 %v5704, %v5704
  %v5811 = vand.u32 2147483647, %v5596
  %vm5812 = vcmp.le.f32.partialorder %v5811, 0.7853982
  %vm5813 = vcmp.lt.s32.totalorder %v5596, 0
  %v5814 = vand.u32 %v5596, 2139095040
  %v5815 = vshrl.u32 %v5814, 23
  %v5816 = vsub.s32 %v5815, 127
  %v5817 = vand.u32 2147483647, %v5596
  %v5818 = vand.u32 %v5817, 8388607
  %v5819 = vor.u32 %v5818, 8388608
  %v5820 = vsub.s32 0, %v5819
  %v5821 = vadd.s32 %v5816, 1
  %vm5822 = vcmp.gt.s32.totalorder %v5821, 0
  %v5823 = vsel %vm5822, %v5821, 0
  %v5824 = vshrl.u32 %v5823, 5
  %v5825 = vand.u32 %v5823, 31
  %v5826 = vsub.s32 32, %v5825
  %v5827 = vshrl.u32 683565275, %v5826
  %v5828 = vshll.u32 683565275, %v5825
  %v5829 = vshrl.u32 2475754826, %v5826
  %v5830 = vor.u32 %v5828, %v5829
  %v5831 = vshll.u32 2475754826, %v5825
  %v5832 = vshrl.u32 2131351028, %v5826
  %v5833 = vor.u32 %v5831, %v5832
  %v5834 = vshll.u32 2131351028, %v5825
  %v5835 = vshrl.u32 2102212464, %v5826
  %v5836 = vor.u32 %v5834, %v5835
  %v5837 = vshll.u32 2102212464, %v5825
  %v5838 = vshrl.u32 920167782, %v5826
  %v5839 = vor.u32 %v5837, %v5838
  %v5840 = vshll.u32 920167782, %v5825
  %v5841 = vshrl.u32 1326507024, %v5826
  %v5842 = vor.u32 %v5840, %v5841
  %vm5843 = vcmp.lt.s32.totalorder %v5824, 1
  %vm5844 = vcmp.lt.s32.totalorder %v5824, 2
  %vm5845 = vcmp.lt.s32.totalorder %v5824, 3
  %vm5846 = vcmp.lt.s32.totalorder %v5824, 4
  %v5847 = vsel %vm5843, %v5827, %v5830
  %v5848 = vsel %vm5846, %v5836, 2102212464
  %v5849 = vsel %vm5845, %v5833, %v5848
  %v5850 = vsel %vm5844, %v5847, %v5849
  %v5851 = vsel %vm5843, %v5830, %v5833
  %v5852 = vsel %vm5846, %v5839, 920167782
  %v5853 = vsel %vm5845, %v5836, %v5852
  %v5854 = vsel %vm5844, %v5851, %v5853
  %v5855 = vsel %vm5843, %v5833, %v5836
  %v5856 = vsel %vm5846, %v5842, 1326507024
  %v5857 = vsel %vm5845, %v5839, %v5856
  %v5858 = vsel %vm5844, %v5855, %v5857
  %v5859 = vshll.u32 %v5819, 8
  %v5860 = vmul.u32.u64.compose %v5859, %v5858
  %v5861 = vextract.low.u32 %v5860
  %v5862 = vextract.high.u32 %v5860
  %v5863 = vmul.u32.u64.compose %v5859, %v5854
  %v5864 = vextract.low.u32 %v5863
  %v5865 = vextract.high.u32 %v5863
  %v5866 = vmul.u32 %v5859, %v5850
  %v5867 = vadd.s32 %v5862, %v5864
  %vm5868 = vc.u32 %v5862, %v5864
  %v5869 = vadd.s32 %v5865, 1
  %v5870 = vsel %vm5868, %v5869, %v5865
  %v5871 = vadd.s32 %v5866, %v5870
  %v5872 = vadd.s32 %v5871, 536870912
  %v5873 = vshrl.u32 %v5872, 30
  %v5874 = vshll.u32 %v5873, 30
  %v5875 = vsub.s32 %v5871, %v5874
  %vm5876 = vcmp.lt.s32.totalorder %v5875, 0
  %v5877 = vsub.s32 0, %v5875
  %v5878 = vsel %vm5876, %v5877, %v5875
  %v5879 = vclz %v5878
  %v5880 = vsub.s32 %v5879, 2
  %vm5881 = vcmp.gt.s32.totalorder 0, %v5880
  %v5882 = vsel %vm5881, 0, %v5880
  %v5883 = vsub.s32 32, %v5882
  %v5884 = vshll.u32 %v5875, %v5882
  %v5885 = vshrl.u32 %v5867, %v5883
  %v5886 = vor.u32 %v5884, %v5885
  %v5887 = vsub.s32 4294967266, %v5882
  %v5888 = vadd.s32 %v5887, 127
  %v5889 = vshll.u32 %v5888, 23
  %v5890 = vor.u32 4788187, %v5889
  %v5891 = vand.u32 2147483647, %v5890
  %v5893 = vcvt.s32.f32 %v5886
  %v5894 = vmul.f32 %v5893, %v5891
  %v5895 = vxor.u32 %v5894, 2147483648
  %v5896 = vsel %vm5813, %v5895, %v5894
  %v5897 = vsub.s32 4, %v5873
  %v5898 = vsel %vm5813, %v5897, %v5873
  %v5899 = vsel %vm5812, %v5596, %v5896
  %v5900 = vsel %vm5812, 0, %v5898
  %v5901 = vcosq.f32.pop %v5899
  %v5902 = vsinq.f32.pop %v5899
  %vm5903 = vweird.f32 %v5596
  %v5904 = vand.u32 %v5900, 3
  %vm5905 = vcmp.lt.s32.totalorder %v5904, 2
  %vm5906 = vcmp.eq.s32.totalorder %v5904, 0
  %v5907 = vxor.u32 %v5902, 2147483648
  %v5908 = vsel %vm5906, %v5901, %v5907
  %vm5909 = vcmp.eq.s32.totalorder %v5904, 2
  %v5910 = vxor.u32 %v5901, 2147483648
  %v5911 = vsel %vm5909, %v5910, %v5902
  %v5912 = vsel %vm5905, %v5908, %v5911
  %v5913 = vsel %vm5903, nan, %v5912
  %v5914 = vmul.f32 %v5470, %v5913
  %v5915 = vmul.f32 %v5914, %v5809
  %v5916 = vmul.f32 %v5915, %v5809
  %v5917 = vadd.f32 %v5810, %v5916
  %v5918 = vadd.f32 %v5917, 1e-10
  %v5919 = vrsqrt.pop %v5918
  %v5920 = vmul.f32 %v5918, %v5919
  %vm5921 = vcmp.eq.f32.partialorder %v5918, inf
  %v5922 = vsel %vm5921, %v5918, %v5920
  %vm5923 = vcmp.eq.f32.partialorder %v5918, 0.0
  %v5924 = vand.u32 %v5918, 2147483648
  %v5925 = vsel %vm5923, %v5924, %v5922
  %v5926 = vsub.f32 1.0, %v5917
  %v5927 = vadd.f32 %v5926, 1e-10
  %v5928 = vrsqrt.pop %v5927
  %v5929 = vmul.f32 %v5927, %v5928
  %vm5930 = vcmp.eq.f32.partialorder %v5927, inf
  %v5931 = vsel %vm5930, %v5927, %v5929
  %vm5932 = vcmp.eq.f32.partialorder %v5927, 0.0
  %v5933 = vand.u32 %v5927, 2147483648
  %v5934 = vsel %vm5932, %v5933, %v5931
  %v5935 = vand.u32 2147483647, %v5934
  %v5936 = vand.u32 2147483647, %v5925
  %v5937 = vmin.f32 %v5935, %v5936
  %v5938 = vmax.f32 %v5935, %v5936
  %v5939 = vrcp.pop %v5938
  %v5940 = vmul.f32 %v5937, %v5939
  %v5941 = vmul.f32 %v5940, %v5940
  %v5942 = vmul.f32 0.002785687, %v5941
  %v5943 = vadd.f32 %v5942, -0.015866
  %v5944 = vmul.f32 %v5943, %v5941
  %v5945 = vadd.f32 %v5944, 0.04247222
  %v5946 = vmul.f32 %v5945, %v5941
  %v5947 = vadd.f32 %v5946, -0.074975304
  %v5948 = vmul.f32 %v5947, %v5941
  %v5949 = vadd.f32 %v5948, 0.1064488
  %v5950 = vmul.f32 %v5949, %v5941
  %v5951 = vadd.f32 %v5950, -0.14207031
  %v5952 = vmul.f32 %v5951, %v5941
  %v5953 = vadd.f32 %v5952, 0.19993454
  %v5954 = vmul.f32 %v5953, %v5941
  %v5955 = vadd.f32 %v5954, -0.33333147
  %v5956 = vmul.f32 %v5955, %v5941
  %v5957 = vmul.f32 %v5956, %v5940
  %v5958 = vadd.f32 %v5957, %v5940
  %vm5959 = vcmp.gt.f32.partialorder %v5936, %v5935
  %v5960 = vsub.f32 1.5707964, %v5958
  %v5961 = vsel %vm5959, %v5960, %v5958
  %vm5962 = vcmp.lt.f32.partialorder %v5934, 0.0
  %v5963 = vsub.f32 3.1415927, %v5961
  %v5964 = vsel %vm5962, %v5963, %v5961
  %vm5965 = vcmp.lt.s32.totalorder %v5934, 0
  %v5966 = vsel %vm5965, 3.1415927, 0.0
  %vm5967 = vcmp.eq.f32.partialorder %v5925, 0.0
  %v5968 = vsel %vm5967, %v5966, %v5964
  %vm5969 = vcmp.ne.f32.partialorder %v5934, %v5934
  %vm5970 = vcmp.ne.f32.partialorder %v5925, %v5925
  %vm5971 = vmor %vm5969, %vm5970
  %v5972 = vsel %vm5971, nan, %v5968
  %vm5973 = vcmp.lt.f32.partialorder %v5934, 0.0
  %v5974 = vsel %vm5973, 2.3561945, 0.7853982
  %vm5975 = vcmp.eq.s32.totalorder %v5935, inf
  %vm5976 = vcmp.eq.s32.totalorder %v5936, inf
  %vm5977 = vmand %vm5975, %vm5976
  %v5978 = vsel %vm5977, %v5974, %v5972
  %v5979 = vand.u32 2147483647, %v5978
  %v5980 = vand.u32 %v5925, 2147483648
  %v5981 = vor.u32 %v5979, %v5980
  %v5982 = vmul.f32 %v5981, 2.0
  %v5983 = vmul.f32 %v5538, %v5982
  %v5984 = vadd.f32 %v5027, %v5983
  %s5985 = scalar_lea.vmem %s0, 6
  %v5986 = vld [vmem:[%s5985] sm:$0x1]
  %v5987 = vadd.f32 %v5030, %v5986
  %s5988 = scalar_lea.vmem %s247, 6
  %v5989 = vld [vmem:[%s5988] sm:$0x1]
  %v5990 = vadd.f32 %v5039, %v5989
  %vm5991 = vcmp.gt.f32.partialorder %v5990, 360.0
  %v5992 = vsub.f32 %v5990, 360.0
  %vm5993 = vcmp.lt.f32.partialorder %v5990, 0.0
  %v5994 = vadd.f32 %v5990, 360.0
  %v5995 = vsel %vm5993, %v5994, %v5990
  %v5996 = vsel %vm5991, %v5992, %v5995
  %v5997 = vmul.f32 %v5996, 0.017453292
  %v5998 = vand.u32 2147483647, %v5997
  %vm5999 = vcmp.le.f32.partialorder %v5998, 0.7853982
  %vm6000 = vcmp.lt.s32.totalorder %v5997, 0
  %v6001 = vand.u32 %v5997, 2139095040
  %v6002 = vshrl.u32 %v6001, 23
  %v6003 = vsub.s32 %v6002, 127
  %v6004 = vand.u32 2147483647, %v5997
  %v6005 = vand.u32 %v6004, 8388607
  %v6006 = vor.u32 %v6005, 8388608
  %v6007 = vsub.s32 0, %v6006
  %v6008 = vadd.s32 %v6003, 1
  %vm6009 = vcmp.gt.s32.totalorder %v6008, 0
  %v6010 = vsel %vm6009, %v6008, 0
  %v6011 = vshrl.u32 %v6010, 5
  %v6012 = vand.u32 %v6010, 31
  %v6013 = vsub.s32 32, %v6012
  %v6014 = vshrl.u32 683565275, %v6013
  %v6015 = vshll.u32 683565275, %v6012
  %v6016 = vshrl.u32 2475754826, %v6013
  %v6017 = vor.u32 %v6015, %v6016
  %v6018 = vshll.u32 2475754826, %v6012
  %v6019 = vshrl.u32 2131351028, %v6013
  %v6020 = vor.u32 %v6018, %v6019
  %v6021 = vshll.u32 2131351028, %v6012
  %v6022 = vshrl.u32 2102212464, %v6013
  %v6023 = vor.u32 %v6021, %v6022
  %v6024 = vshll.u32 2102212464, %v6012
  %v6025 = vshrl.u32 920167782, %v6013
  %v6026 = vor.u32 %v6024, %v6025
  %v6027 = vshll.u32 920167782, %v6012
  %v6028 = vshrl.u32 1326507024, %v6013
  %v6029 = vor.u32 %v6027, %v6028
  %vm6030 = vcmp.lt.s32.totalorder %v6011, 1
  %vm6031 = vcmp.lt.s32.totalorder %v6011, 2
  %vm6032 = vcmp.lt.s32.totalorder %v6011, 3
  %vm6033 = vcmp.lt.s32.totalorder %v6011, 4
  %v6034 = vsel %vm6030, %v6014, %v6017
  %v6035 = vsel %vm6033, %v6023, 2102212464
  %v6036 = vsel %vm6032, %v6020, %v6035
  %v6037 = vsel %vm6031, %v6034, %v6036
  %v6038 = vsel %vm6030, %v6017, %v6020
  %v6039 = vsel %vm6033, %v6026, 920167782
  %v6040 = vsel %vm6032, %v6023, %v6039
  %v6041 = vsel %vm6031, %v6038, %v6040
  %v6042 = vsel %vm6030, %v6020, %v6023
  %v6043 = vsel %vm6033, %v6029, 1326507024
  %v6044 = vsel %vm6032, %v6026, %v6043
  %v6045 = vsel %vm6031, %v6042, %v6044
  %v6046 = vshll.u32 %v6006, 8
  %v6047 = vmul.u32.u64.compose %v6046, %v6045
  %v6048 = vextract.low.u32 %v6047
  %v6049 = vextract.high.u32 %v6047
  %v6050 = vmul.u32.u64.compose %v6046, %v6041
  %v6051 = vextract.low.u32 %v6050
  %v6052 = vextract.high.u32 %v6050
  %v6053 = vmul.u32 %v6046, %v6037
  %v6054 = vadd.s32 %v6049, %v6051
  %vm6055 = vc.u32 %v6049, %v6051
  %v6056 = vadd.s32 %v6052, 1
  %v6057 = vsel %vm6055, %v6056, %v6052
  %v6058 = vadd.s32 %v6053, %v6057
  %v6059 = vadd.s32 %v6058, 536870912
  %v6060 = vshrl.u32 %v6059, 30
  %v6061 = vshll.u32 %v6060, 30
  %v6062 = vsub.s32 %v6058, %v6061
  %vm6063 = vcmp.lt.s32.totalorder %v6062, 0
  %v6064 = vsub.s32 0, %v6062
  %v6065 = vsel %vm6063, %v6064, %v6062
  %v6066 = vclz %v6065
  %v6067 = vsub.s32 %v6066, 2
  %vm6068 = vcmp.gt.s32.totalorder 0, %v6067
  %v6069 = vsel %vm6068, 0, %v6067
  %v6070 = vsub.s32 32, %v6069
  %v6071 = vshll.u32 %v6062, %v6069
  %v6072 = vshrl.u32 %v6054, %v6070
  %v6073 = vor.u32 %v6071, %v6072
  %v6074 = vsub.s32 4294967266, %v6069
  %v6075 = vadd.s32 %v6074, 127
  %v6076 = vshll.u32 %v6075, 23
  %v6077 = vor.u32 4788187, %v6076
  %v6078 = vand.u32 2147483647, %v6077
  %v6080 = vcvt.s32.f32 %v6073
  %v6081 = vmul.f32 %v6080, %v6078
  %v6082 = vxor.u32 %v6081, 2147483648
  %v6083 = vsel %vm6000, %v6082, %v6081
  %v6084 = vsub.s32 4, %v6060
  %v6085 = vsel %vm6000, %v6084, %v6060
  %v6086 = vsel %vm5999, %v5997, %v6083
  %v6087 = vsel %vm5999, 0, %v6085
  %v6088 = vcosq.f32.pop %v6086
  %v6089 = vsinq.f32.pop %v6086
  %vm6090 = vweird.f32 %v5997
  %v6091 = vadd.s32 %v6087, 3
  %v6092 = vand.u32 %v6091, 3
  %vm6093 = vcmp.lt.s32.totalorder %v6092, 2
  %vm6094 = vcmp.eq.s32.totalorder %v6092, 0
  %v6095 = vxor.u32 %v6089, 2147483648
  %v6096 = vsel %vm6094, %v6088, %v6095
  %vm6097 = vcmp.eq.s32.totalorder %v6092, 2
  %v6098 = vxor.u32 %v6088, 2147483648
  %v6099 = vsel %vm6097, %v6098, %v6089
  %v6100 = vsel %vm6093, %v6096, %v6099
  %v6101 = vsel %vm6090, nan, %v6100
  %v6102 = vand.u32 2147483647, %v5997
  %vm6103 = vcmp.le.f32.partialorder %v6102, 0.7853982
  %vm6104 = vcmp.lt.s32.totalorder %v5997, 0
  %v6105 = vand.u32 %v5997, 2139095040
  %v6106 = vshrl.u32 %v6105, 23
  %v6107 = vsub.s32 %v6106, 127
  %v6108 = vand.u32 2147483647, %v5997
  %v6109 = vand.u32 %v6108, 8388607
  %v6110 = vor.u32 %v6109, 8388608
  %v6111 = vsub.s32 0, %v6110
  %v6112 = vadd.s32 %v6107, 1
  %vm6113 = vcmp.gt.s32.totalorder %v6112, 0
  %v6114 = vsel %vm6113, %v6112, 0
  %v6115 = vshrl.u32 %v6114, 5
  %v6116 = vand.u32 %v6114, 31
  %v6117 = vsub.s32 32, %v6116
  %v6118 = vshrl.u32 683565275, %v6117
  %v6119 = vshll.u32 683565275, %v6116
  %v6120 = vshrl.u32 2475754826, %v6117
  %v6121 = vor.u32 %v6119, %v6120
  %v6122 = vshll.u32 2475754826, %v6116
  %v6123 = vshrl.u32 2131351028, %v6117
  %v6124 = vor.u32 %v6122, %v6123
  %v6125 = vshll.u32 2131351028, %v6116
  %v6126 = vshrl.u32 2102212464, %v6117
  %v6127 = vor.u32 %v6125, %v6126
  %v6128 = vshll.u32 2102212464, %v6116
  %v6129 = vshrl.u32 920167782, %v6117
  %v6130 = vor.u32 %v6128, %v6129
  %v6131 = vshll.u32 920167782, %v6116
  %v6132 = vshrl.u32 1326507024, %v6117
  %v6133 = vor.u32 %v6131, %v6132
  %vm6134 = vcmp.lt.s32.totalorder %v6115, 1
  %vm6135 = vcmp.lt.s32.totalorder %v6115, 2
  %vm6136 = vcmp.lt.s32.totalorder %v6115, 3
  %vm6137 = vcmp.lt.s32.totalorder %v6115, 4
  %v6138 = vsel %vm6134, %v6118, %v6121
  %v6139 = vsel %vm6137, %v6127, 2102212464
  %v6140 = vsel %vm6136, %v6124, %v6139
  %v6141 = vsel %vm6135, %v6138, %v6140
  %v6142 = vsel %vm6134, %v6121, %v6124
  %v6143 = vsel %vm6137, %v6130, 920167782
  %v6144 = vsel %vm6136, %v6127, %v6143
  %v6145 = vsel %vm6135, %v6142, %v6144
  %v6146 = vsel %vm6134, %v6124, %v6127
  %v6147 = vsel %vm6137, %v6133, 1326507024
  %v6148 = vsel %vm6136, %v6130, %v6147
  %v6149 = vsel %vm6135, %v6146, %v6148
  %v6150 = vshll.u32 %v6110, 8
  %v6151 = vmul.u32.u64.compose %v6150, %v6149
  %v6152 = vextract.low.u32 %v6151
  %v6153 = vextract.high.u32 %v6151
  %v6154 = vmul.u32.u64.compose %v6150, %v6145
  %v6155 = vextract.low.u32 %v6154
  %v6156 = vextract.high.u32 %v6154
  %v6157 = vmul.u32 %v6150, %v6141
  %v6158 = vadd.s32 %v6153, %v6155
  %vm6159 = vc.u32 %v6153, %v6155
  %v6160 = vadd.s32 %v6156, 1
  %v6161 = vsel %vm6159, %v6160, %v6156
  %v6162 = vadd.s32 %v6157, %v6161
  %v6163 = vadd.s32 %v6162, 536870912
  %v6164 = vshrl.u32 %v6163, 30
  %v6165 = vshll.u32 %v6164, 30
  %v6166 = vsub.s32 %v6162, %v6165
  %vm6167 = vcmp.lt.s32.totalorder %v6166, 0
  %v6168 = vsub.s32 0, %v6166
  %v6169 = vsel %vm6167, %v6168, %v6166
  %v6170 = vclz %v6169
  %v6171 = vsub.s32 %v6170, 2
  %vm6172 = vcmp.gt.s32.totalorder 0, %v6171
  %v6173 = vsel %vm6172, 0, %v6171
  %v6174 = vsub.s32 32, %v6173
  %v6175 = vshll.u32 %v6166, %v6173
  %v6176 = vshrl.u32 %v6158, %v6174
  %v6177 = vor.u32 %v6175, %v6176
  %v6178 = vsub.s32 4294967266, %v6173
  %v6179 = vadd.s32 %v6178, 127
  %v6180 = vshll.u32 %v6179, 23
  %v6181 = vor.u32 4788187, %v6180
  %v6182 = vand.u32 2147483647, %v6181
  %v6184 = vcvt.s32.f32 %v6177
  %v6185 = vmul.f32 %v6184, %v6182
  %v6186 = vxor.u32 %v6185, 2147483648
  %v6187 = vsel %vm6104, %v6186, %v6185
  %v6188 = vsub.s32 4, %v6164
  %v6189 = vsel %vm6104, %v6188, %v6164
  %v6190 = vsel %vm6103, %v5997, %v6187
  %v6191 = vsel %vm6103, 0, %v6189
  %v6192 = vcosq.f32.pop %v6190
  %v6193 = vsinq.f32.pop %v6190
  %vm6194 = vweird.f32 %v5997
  %v6195 = vand.u32 %v6191, 3
  %vm6196 = vcmp.lt.s32.totalorder %v6195, 2
  %vm6197 = vcmp.eq.s32.totalorder %v6195, 0
  %v6198 = vxor.u32 %v6193, 2147483648
  %v6199 = vsel %vm6197, %v6192, %v6198
  %vm6200 = vcmp.eq.s32.totalorder %v6195, 2
  %v6201 = vxor.u32 %v6192, 2147483648
  %v6202 = vsel %vm6200, %v6201, %v6193
  %v6203 = vsel %vm6196, %v6199, %v6202
  %v6204 = vsel %vm6194, nan, %v6203
  %v6205 = vmul.f32 %v5987, 92.6
  %v6206 = vmul.f32 %v6205, %v5536
  %v6207 = vand.u32 2147483647, %v6206
  %vm6208 = vcmp.le.f32.partialorder %v6207, 0.7853982
  %vm6209 = vcmp.lt.s32.totalorder %v6206, 0
  %v6210 = vand.u32 %v6206, 2139095040
  %v6211 = vshrl.u32 %v6210, 23
  %v6212 = vsub.s32 %v6211, 127
  %v6213 = vand.u32 2147483647, %v6206
  %v6214 = vand.u32 %v6213, 8388607
  %v6215 = vor.u32 %v6214, 8388608
  %v6216 = vsub.s32 0, %v6215
  %v6217 = vadd.s32 %v6212, 1
  %vm6218 = vcmp.gt.s32.totalorder %v6217, 0
  %v6219 = vsel %vm6218, %v6217, 0
  %v6220 = vshrl.u32 %v6219, 5
  %v6221 = vand.u32 %v6219, 31
  %v6222 = vsub.s32 32, %v6221
  %v6223 = vshrl.u32 683565275, %v6222
  %v6224 = vshll.u32 683565275, %v6221
  %v6225 = vshrl.u32 2475754826, %v6222
  %v6226 = vor.u32 %v6224, %v6225
  %v6227 = vshll.u32 2475754826, %v6221
  %v6228 = vshrl.u32 2131351028, %v6222
  %v6229 = vor.u32 %v6227, %v6228
  %v6230 = vshll.u32 2131351028, %v6221
  %v6231 = vshrl.u32 2102212464, %v6222
  %v6232 = vor.u32 %v6230, %v6231
  %v6233 = vshll.u32 2102212464, %v6221
  %v6234 = vshrl.u32 920167782, %v6222
  %v6235 = vor.u32 %v6233, %v6234
  %v6236 = vshll.u32 920167782, %v6221
  %v6237 = vshrl.u32 1326507024, %v6222
  %v6238 = vor.u32 %v6236, %v6237
  %vm6239 = vcmp.lt.s32.totalorder %v6220, 1
  %vm6240 = vcmp.lt.s32.totalorder %v6220, 2
  %vm6241 = vcmp.lt.s32.totalorder %v6220, 3
  %vm6242 = vcmp.lt.s32.totalorder %v6220, 4
  %v6243 = vsel %vm6239, %v6223, %v6226
  %v6244 = vsel %vm6242, %v6232, 2102212464
  %v6245 = vsel %vm6241, %v6229, %v6244
  %v6246 = vsel %vm6240, %v6243, %v6245
  %v6247 = vsel %vm6239, %v6226, %v6229
  %v6248 = vsel %vm6242, %v6235, 920167782
  %v6249 = vsel %vm6241, %v6232, %v6248
  %v6250 = vsel %vm6240, %v6247, %v6249
  %v6251 = vsel %vm6239, %v6229, %v6232
  %v6252 = vsel %vm6242, %v6238, 1326507024
  %v6253 = vsel %vm6241, %v6235, %v6252
  %v6254 = vsel %vm6240, %v6251, %v6253
  %v6255 = vshll.u32 %v6215, 8
  %v6256 = vmul.u32.u64.compose %v6255, %v6254
  %v6257 = vextract.low.u32 %v6256
  %v6258 = vextract.high.u32 %v6256
  %v6259 = vmul.u32.u64.compose %v6255, %v6250
  %v6260 = vextract.low.u32 %v6259
  %v6261 = vextract.high.u32 %v6259
  %v6262 = vmul.u32 %v6255, %v6246
  %v6263 = vadd.s32 %v6258, %v6260
  %vm6264 = vc.u32 %v6258, %v6260
  %v6265 = vadd.s32 %v6261, 1
  %v6266 = vsel %vm6264, %v6265, %v6261
  %v6267 = vadd.s32 %v6262, %v6266
  %v6268 = vadd.s32 %v6267, 536870912
  %v6269 = vshrl.u32 %v6268, 30
  %v6270 = vshll.u32 %v6269, 30
  %v6271 = vsub.s32 %v6267, %v6270
  %vm6272 = vcmp.lt.s32.totalorder %v6271, 0
  %v6273 = vsub.s32 0, %v6271
  %v6274 = vsel %vm6272, %v6273, %v6271
  %v6275 = vclz %v6274
  %v6276 = vsub.s32 %v6275, 2
  %vm6277 = vcmp.gt.s32.totalorder 0, %v6276
  %v6278 = vsel %vm6277, 0, %v6276
  %v6279 = vsub.s32 32, %v6278
  %v6280 = vshll.u32 %v6271, %v6278
  %v6281 = vshrl.u32 %v6263, %v6279
  %v6282 = vor.u32 %v6280, %v6281
  %v6283 = vsub.s32 4294967266, %v6278
  %v6284 = vadd.s32 %v6283, 127
  %v6285 = vshll.u32 %v6284, 23
  %v6286 = vor.u32 4788187, %v6285
  %v6287 = vand.u32 2147483647, %v6286
  %v6289 = vcvt.s32.f32 %v6282
  %v6290 = vmul.f32 %v6289, %v6287
  %v6291 = vxor.u32 %v6290, 2147483648
  %v6292 = vsel %vm6209, %v6291, %v6290
  %v6293 = vsub.s32 4, %v6269
  %v6294 = vsel %vm6209, %v6293, %v6269
  %v6295 = vsel %vm6208, %v6206, %v6292
  %v6296 = vsel %vm6208, 0, %v6294
  %v6297 = vcosq.f32.pop %v6295
  %v6298 = vsinq.f32.pop %v6295
  %vm6299 = vweird.f32 %v6206
  %v6300 = vadd.s32 %v6296, 3
  %v6301 = vand.u32 %v6300, 3
  %vm6302 = vcmp.lt.s32.totalorder %v6301, 2
  %vm6303 = vcmp.eq.s32.totalorder %v6301, 0
  %v6304 = vxor.u32 %v6298, 2147483648
  %v6305 = vsel %vm6303, %v6297, %v6304
  %vm6306 = vcmp.eq.s32.totalorder %v6301, 2
  %v6307 = vxor.u32 %v6297, 2147483648
  %v6308 = vsel %vm6306, %v6307, %v6298
  %v6309 = vsel %vm6302, %v6305, %v6308
  %v6310 = vsel %vm6299, nan, %v6309
  %v6311 = vand.u32 2147483647, %v6206
  %vm6312 = vcmp.le.f32.partialorder %v6311, 0.7853982
  %vm6313 = vcmp.lt.s32.totalorder %v6206, 0
  %v6314 = vand.u32 %v6206, 2139095040
  %v6315 = vshrl.u32 %v6314, 23
  %v6316 = vsub.s32 %v6315, 127
  %v6317 = vand.u32 2147483647, %v6206
  %v6318 = vand.u32 %v6317, 8388607
  %v6319 = vor.u32 %v6318, 8388608
  %v6320 = vsub.s32 0, %v6319
  %v6321 = vadd.s32 %v6316, 1
  %vm6322 = vcmp.gt.s32.totalorder %v6321, 0
  %v6323 = vsel %vm6322, %v6321, 0
  %v6324 = vshrl.u32 %v6323, 5
  %v6325 = vand.u32 %v6323, 31
  %v6326 = vsub.s32 32, %v6325
  %v6327 = vshrl.u32 683565275, %v6326
  %v6328 = vshll.u32 683565275, %v6325
  %v6329 = vshrl.u32 2475754826, %v6326
  %v6330 = vor.u32 %v6328, %v6329
  %v6331 = vshll.u32 2475754826, %v6325
  %v6332 = vshrl.u32 2131351028, %v6326
  %v6333 = vor.u32 %v6331, %v6332
  %v6334 = vshll.u32 2131351028, %v6325
  %v6335 = vshrl.u32 2102212464, %v6326
  %v6336 = vor.u32 %v6334, %v6335
  %v6337 = vshll.u32 2102212464, %v6325
  %v6338 = vshrl.u32 920167782, %v6326
  %v6339 = vor.u32 %v6337, %v6338
  %v6340 = vshll.u32 920167782, %v6325
  %v6341 = vshrl.u32 1326507024, %v6326
  %v6342 = vor.u32 %v6340, %v6341
  %vm6343 = vcmp.lt.s32.totalorder %v6324, 1
  %vm6344 = vcmp.lt.s32.totalorder %v6324, 2
  %vm6345 = vcmp.lt.s32.totalorder %v6324, 3
  %vm6346 = vcmp.lt.s32.totalorder %v6324, 4
  %v6347 = vsel %vm6343, %v6327, %v6330
  %v6348 = vsel %vm6346, %v6336, 2102212464
  %v6349 = vsel %vm6345, %v6333, %v6348
  %v6350 = vsel %vm6344, %v6347, %v6349
  %v6351 = vsel %vm6343, %v6330, %v6333
  %v6352 = vsel %vm6346, %v6339, 920167782
  %v6353 = vsel %vm6345, %v6336, %v6352
  %v6354 = vsel %vm6344, %v6351, %v6353
  %v6355 = vsel %vm6343, %v6333, %v6336
  %v6356 = vsel %vm6346, %v6342, 1326507024
  %v6357 = vsel %vm6345, %v6339, %v6356
  %v6358 = vsel %vm6344, %v6355, %v6357
  %v6359 = vshll.u32 %v6319, 8
  %v6360 = vmul.u32.u64.compose %v6359, %v6358
  %v6361 = vextract.low.u32 %v6360
  %v6362 = vextract.high.u32 %v6360
  %v6363 = vmul.u32.u64.compose %v6359, %v6354
  %v6364 = vextract.low.u32 %v6363
  %v6365 = vextract.high.u32 %v6363
  %v6366 = vmul.u32 %v6359, %v6350
  %v6367 = vadd.s32 %v6362, %v6364
  %vm6368 = vc.u32 %v6362, %v6364
  %v6369 = vadd.s32 %v6365, 1
  %v6370 = vsel %vm6368, %v6369, %v6365
  %v6371 = vadd.s32 %v6366, %v6370
  %v6372 = vadd.s32 %v6371, 536870912
  %v6373 = vshrl.u32 %v6372, 30
  %v6374 = vshll.u32 %v6373, 30
  %v6375 = vsub.s32 %v6371, %v6374
  %vm6376 = vcmp.lt.s32.totalorder %v6375, 0
  %v6377 = vsub.s32 0, %v6375
  %v6378 = vsel %vm6376, %v6377, %v6375
  %v6379 = vclz %v6378
  %v6380 = vsub.s32 %v6379, 2
  %vm6381 = vcmp.gt.s32.totalorder 0, %v6380
  %v6382 = vsel %vm6381, 0, %v6380
  %v6383 = vsub.s32 32, %v6382
  %v6384 = vshll.u32 %v6375, %v6382
  %v6385 = vshrl.u32 %v6367, %v6383
  %v6386 = vor.u32 %v6384, %v6385
  %v6387 = vsub.s32 4294967266, %v6382
  %v6388 = vadd.s32 %v6387, 127
  %v6389 = vshll.u32 %v6388, 23
  %v6390 = vor.u32 4788187, %v6389
  %v6391 = vand.u32 2147483647, %v6390
  %v6393 = vcvt.s32.f32 %v6386
  %v6394 = vmul.f32 %v6393, %v6391
  %v6395 = vxor.u32 %v6394, 2147483648
  %v6396 = vsel %vm6313, %v6395, %v6394
  %v6397 = vsub.s32 4, %v6373
  %v6398 = vsel %vm6313, %v6397, %v6373
  %v6399 = vsel %vm6312, %v6206, %v6396
  %v6400 = vsel %vm6312, 0, %v6398
  %v6401 = vcosq.f32.pop %v6399
  %v6402 = vsinq.f32.pop %v6399
  %vm6403 = vweird.f32 %v6206
  %v6404 = vand.u32 %v6400, 3
  %vm6405 = vcmp.lt.s32.totalorder %v6404, 2
  %vm6406 = vcmp.eq.s32.totalorder %v6404, 0
  %v6407 = vxor.u32 %v6402, 2147483648
  %v6408 = vsel %vm6406, %v6401, %v6407
  %vm6409 = vcmp.eq.s32.totalorder %v6404, 2
  %v6410 = vxor.u32 %v6401, 2147483648
  %v6411 = vsel %vm6409, %v6410, %v6402
  %v6412 = vsel %vm6405, %v6408, %v6411
  %v6413 = vsel %vm6403, nan, %v6412
  %v6414 = vmul.f32 %v5460, %v6413
  %v6415 = vmul.f32 %v5470, %v6310
  %v6416 = vmul.f32 %v6415, %v6204
  %v6417 = vadd.f32 %v6414, %v6416
  %v6418 = vmul.f32 %v6417, %v6417
  %v6419 = vsub.f32 1.0, %v6418
  %v6420 = vmax.f32 %v6419, 0.0
  %v6421 = vrsqrt.pop %v6420
  %v6422 = vmul.f32 %v6420, %v6421
  %vm6423 = vcmp.eq.f32.partialorder %v6420, inf
  %v6424 = vsel %vm6423, %v6420, %v6422
  %vm6425 = vcmp.eq.f32.partialorder %v6420, 0.0
  %v6426 = vand.u32 %v6420, 2147483648
  %v6427 = vsel %vm6425, %v6426, %v6424
  %v6428 = vmul.f32 %v6101, %v6310
  %v6429 = vmul.f32 %v6428, %v5470
  %v6430 = vmul.f32 %v5460, %v6417
  %v6431 = vsub.f32 %v6413, %v6430
  %v6432 = vand.u32 2147483647, %v6431
  %v6433 = vand.u32 2147483647, %v6429
  %v6434 = vmin.f32 %v6432, %v6433
  %v6435 = vmax.f32 %v6432, %v6433
  %v6436 = vrcp.pop %v6435
  %v6437 = vmul.f32 %v6434, %v6436
  %v6438 = vmul.f32 %v6437, %v6437
  %v6439 = vmul.f32 0.002785687, %v6438
  %v6440 = vadd.f32 %v6439, -0.015866
  %v6441 = vmul.f32 %v6440, %v6438
  %v6442 = vadd.f32 %v6441, 0.04247222
  %v6443 = vmul.f32 %v6442, %v6438
  %v6444 = vadd.f32 %v6443, -0.074975304
  %v6445 = vmul.f32 %v6444, %v6438
  %v6446 = vadd.f32 %v6445, 0.1064488
  %v6447 = vmul.f32 %v6446, %v6438
  %v6448 = vadd.f32 %v6447, -0.14207031
  %v6449 = vmul.f32 %v6448, %v6438
  %v6450 = vadd.f32 %v6449, 0.19993454
  %v6451 = vmul.f32 %v6450, %v6438
  %v6452 = vadd.f32 %v6451, -0.33333147
  %v6453 = vmul.f32 %v6452, %v6438
  %v6454 = vmul.f32 %v6453, %v6437
  %v6455 = vadd.f32 %v6454, %v6437
  %vm6456 = vcmp.gt.f32.partialorder %v6433, %v6432
  %v6457 = vsub.f32 1.5707964, %v6455
  %v6458 = vsel %vm6456, %v6457, %v6455
  %vm6459 = vcmp.lt.f32.partialorder %v6431, 0.0
  %v6460 = vsub.f32 3.1415927, %v6458
  %v6461 = vsel %vm6459, %v6460, %v6458
  %vm6462 = vcmp.lt.s32.totalorder %v6431, 0
  %v6463 = vsel %vm6462, 3.1415927, 0.0
  %vm6464 = vcmp.eq.f32.partialorder %v6429, 0.0
  %v6465 = vsel %vm6464, %v6463, %v6461
  %vm6466 = vcmp.ne.f32.partialorder %v6431, %v6431
  %vm6467 = vcmp.ne.f32.partialorder %v6429, %v6429
  %vm6468 = vmor %vm6466, %vm6467
  %v6469 = vsel %vm6468, nan, %v6465
  %vm6470 = vcmp.lt.f32.partialorder %v6431, 0.0
  %v6471 = vsel %vm6470, 2.3561945, 0.7853982
  %vm6472 = vcmp.eq.s32.totalorder %v6432, inf
  %vm6473 = vcmp.eq.s32.totalorder %v6433, inf
  %vm6474 = vmand %vm6472, %vm6473
  %v6475 = vsel %vm6474, %v6471, %v6469
  %v6476 = vand.u32 2147483647, %v6475
  %v6477 = vand.u32 %v6429, 2147483648
  %v6478 = vor.u32 %v6476, %v6477
  %v6479 = vadd.f32 %v5522, %v6478
  %v6480 = vmul.f32 %v6427, 4.068063e+13
  %v6481 = vmul.f32 %v6417, 4.04083e+13
  %v6482 = vmul.f32 %v6427, 6378137.0
  %v6483 = vmul.f32 %v6417, 6356752.5
  %v6484 = vmul.f32 %v6480, %v6480
  %v6485 = vmul.f32 %v6481, %v6481
  %v6486 = vadd.f32 %v6484, %v6485
  %v6487 = vmul.f32 %v6482, %v6482
  %v6488 = vmul.f32 %v6483, %v6483
  %v6489 = vadd.f32 %v6487, %v6488
  %v6490 = vrcp.pop %v6489
  %v6491 = vmul.f32 %v6486, %v6490
  %v6492 = vadd.f32 %v6491, 1e-10
  %v6493 = vrsqrt.pop %v6492
  %v6494 = vmul.f32 %v6492, %v6493
  %v6495 = vmul.f32 %v6494, 0.001
  %v6496 = vand.u32 2147483647, %v6427
  %v6497 = vand.u32 2147483647, %v6417
  %v6498 = vmin.f32 %v6496, %v6497
  %v6499 = vmax.f32 %v6496, %v6497
  %v6500 = vrcp.pop %v6499
  %v6501 = vmul.f32 %v6498, %v6500
  %v6502 = vmul.f32 %v6501, %v6501
  %v6503 = vmul.f32 0.002785687, %v6502
  %v6504 = vadd.f32 %v6503, -0.015866
  %v6505 = vmul.f32 %v6504, %v6502
  %v6506 = vadd.f32 %v6505, 0.04247222
  %v6507 = vmul.f32 %v6506, %v6502
  %v6508 = vadd.f32 %v6507, -0.074975304
  %v6509 = vmul.f32 %v6508, %v6502
  %v6510 = vadd.f32 %v6509, 0.1064488
  %v6511 = vmul.f32 %v6510, %v6502
  %v6512 = vadd.f32 %v6511, -0.14207031
  %v6513 = vmul.f32 %v6512, %v6502
  %v6514 = vadd.f32 %v6513, 0.19993454
  %v6515 = vmul.f32 %v6514, %v6502
  %v6516 = vadd.f32 %v6515, -0.33333147
  %v6517 = vmul.f32 %v6516, %v6502
  %v6518 = vmul.f32 %v6517, %v6501
  %v6519 = vadd.f32 %v6518, %v6501
  %vm6520 = vcmp.gt.f32.partialorder %v6497, %v6496
  %v6521 = vsub.f32 1.5707964, %v6519
  %v6522 = vsel %vm6520, %v6521, %v6519
  %vm6523 = vcmp.lt.f32.partialorder %v6427, 0.0
  %v6524 = vsub.f32 3.1415927, %v6522
  %v6525 = vsel %vm6523, %v6524, %v6522
  %vm6526 = vcmp.lt.s32.totalorder %v6427, 0
  %v6527 = vsel %vm6526, 3.1415927, 0.0
  %vm6528 = vcmp.eq.f32.partialorder %v6417, 0.0
  %v6529 = vsel %vm6528, %v6527, %v6525
  %vm6530 = vcmp.ne.f32.partialorder %v6427, %v6427
  %vm6531 = vcmp.ne.f32.partialorder %v6417, %v6417
  %vm6532 = vmor %vm6530, %vm6531
  %v6533 = vsel %vm6532, nan, %v6529
  %vm6534 = vcmp.lt.f32.partialorder %v6427, 0.0
  %v6535 = vsel %vm6534, 2.3561945, 0.7853982
  %vm6536 = vcmp.eq.s32.totalorder %v6496, inf
  %vm6537 = vcmp.eq.s32.totalorder %v6497, inf
  %vm6538 = vmand %vm6536, %vm6537
  %v6539 = vsel %vm6538, %v6535, %v6533
  %v6540 = vand.u32 2147483647, %v6539
  %v6541 = vand.u32 %v6417, 2147483648
  %v6542 = vor.u32 %v6540, %v6541
  %v6543 = vmul.f32 %v6479, 57.29578
  %s6544 = scalar_lea.vmem %s4, 6
  %6545 = vst [vmem:[%s6544] sm:$0x1] %v6543
  %v6546 = vmul.f32 %v6542, 57.29578
  %s6547 = scalar_lea.vmem %s805, 6
  %6548 = vst [vmem:[%s6547] sm:$0x1] %v6546
  %s6549 = scalar_lea.vmem %s16, 7
  %v6550 = vld [vmem:[%s6549] sm:$0x1]
  %s6551 = scalar_lea.vmem %s1, 7
  %v6552 = vld [vmem:[%s6551] sm:$0x1]
  %v6553 = vmul.f32 %v6550, 0.017453292
  %v6554 = vsub.f32 %v6553, %v6542
  %v6555 = vmul.f32 %v6552, 0.017453292
  %v6556 = vsub.f32 %v6555, %v6479
  %v6557 = vmul.f32 %v6554, 0.5
  %v6558 = vand.u32 2147483647, %v6557
  %vm6559 = vcmp.le.f32.partialorder %v6558, 0.7853982
  %vm6560 = vcmp.lt.s32.totalorder %v6557, 0
  %v6561 = vand.u32 %v6557, 2139095040
  %v6562 = vshrl.u32 %v6561, 23
  %v6563 = vsub.s32 %v6562, 127
  %v6564 = vand.u32 2147483647, %v6557
  %v6565 = vand.u32 %v6564, 8388607
  %v6566 = vor.u32 %v6565, 8388608
  %v6567 = vsub.s32 0, %v6566
  %v6568 = vadd.s32 %v6563, 1
  %vm6569 = vcmp.gt.s32.totalorder %v6568, 0
  %v6570 = vsel %vm6569, %v6568, 0
  %v6571 = vshrl.u32 %v6570, 5
  %v6572 = vand.u32 %v6570, 31
  %v6573 = vsub.s32 32, %v6572
  %v6574 = vshrl.u32 683565275, %v6573
  %v6575 = vshll.u32 683565275, %v6572
  %v6576 = vshrl.u32 2475754826, %v6573
  %v6577 = vor.u32 %v6575, %v6576
  %v6578 = vshll.u32 2475754826, %v6572
  %v6579 = vshrl.u32 2131351028, %v6573
  %v6580 = vor.u32 %v6578, %v6579
  %v6581 = vshll.u32 2131351028, %v6572
  %v6582 = vshrl.u32 2102212464, %v6573
  %v6583 = vor.u32 %v6581, %v6582
  %v6584 = vshll.u32 2102212464, %v6572
  %v6585 = vshrl.u32 920167782, %v6573
  %v6586 = vor.u32 %v6584, %v6585
  %v6587 = vshll.u32 920167782, %v6572
  %v6588 = vshrl.u32 1326507024, %v6573
  %v6589 = vor.u32 %v6587, %v6588
  %vm6590 = vcmp.lt.s32.totalorder %v6571, 1
  %vm6591 = vcmp.lt.s32.totalorder %v6571, 2
  %vm6592 = vcmp.lt.s32.totalorder %v6571, 3
  %vm6593 = vcmp.lt.s32.totalorder %v6571, 4
  %v6594 = vsel %vm6590, %v6574, %v6577
  %v6595 = vsel %vm6593, %v6583, 2102212464
  %v6596 = vsel %vm6592, %v6580, %v6595
  %v6597 = vsel %vm6591, %v6594, %v6596
  %v6598 = vsel %vm6590, %v6577, %v6580
  %v6599 = vsel %vm6593, %v6586, 920167782
  %v6600 = vsel %vm6592, %v6583, %v6599
  %v6601 = vsel %vm6591, %v6598, %v6600
  %v6602 = vsel %vm6590, %v6580, %v6583
  %v6603 = vsel %vm6593, %v6589, 1326507024
  %v6604 = vsel %vm6592, %v6586, %v6603
  %v6605 = vsel %vm6591, %v6602, %v6604
  %v6606 = vshll.u32 %v6566, 8
  %v6607 = vmul.u32.u64.compose %v6606, %v6605
  %v6608 = vextract.low.u32 %v6607
  %v6609 = vextract.high.u32 %v6607
  %v6610 = vmul.u32.u64.compose %v6606, %v6601
  %v6611 = vextract.low.u32 %v6610
  %v6612 = vextract.high.u32 %v6610
  %v6613 = vmul.u32 %v6606, %v6597
  %v6614 = vadd.s32 %v6609, %v6611
  %vm6615 = vc.u32 %v6609, %v6611
  %v6616 = vadd.s32 %v6612, 1
  %v6617 = vsel %vm6615, %v6616, %v6612
  %v6618 = vadd.s32 %v6613, %v6617
  %v6619 = vadd.s32 %v6618, 536870912
  %v6620 = vshrl.u32 %v6619, 30
  %v6621 = vshll.u32 %v6620, 30
  %v6622 = vsub.s32 %v6618, %v6621
  %vm6623 = vcmp.lt.s32.totalorder %v6622, 0
  %v6624 = vsub.s32 0, %v6622
  %v6625 = vsel %vm6623, %v6624, %v6622
  %v6626 = vclz %v6625
  %v6627 = vsub.s32 %v6626, 2
  %vm6628 = vcmp.gt.s32.totalorder 0, %v6627
  %v6629 = vsel %vm6628, 0, %v6627
  %v6630 = vsub.s32 32, %v6629
  %v6631 = vshll.u32 %v6622, %v6629
  %v6632 = vshrl.u32 %v6614, %v6630
  %v6633 = vor.u32 %v6631, %v6632
  %v6634 = vsub.s32 4294967266, %v6629
  %v6635 = vadd.s32 %v6634, 127
  %v6636 = vshll.u32 %v6635, 23
  %v6637 = vor.u32 4788187, %v6636
  %v6638 = vand.u32 2147483647, %v6637
  %v6640 = vcvt.s32.f32 %v6633
  %v6641 = vmul.f32 %v6640, %v6638
  %v6642 = vxor.u32 %v6641, 2147483648
  %v6643 = vsel %vm6560, %v6642, %v6641
  %v6644 = vsub.s32 4, %v6620
  %v6645 = vsel %vm6560, %v6644, %v6620
  %v6646 = vsel %vm6559, %v6557, %v6643
  %v6647 = vsel %vm6559, 0, %v6645
  %v6648 = vcosq.f32.pop %v6646
  %v6649 = vsinq.f32.pop %v6646
  %vm6650 = vweird.f32 %v6557
  %v6651 = vadd.s32 %v6647, 3
  %v6652 = vand.u32 %v6651, 3
  %vm6653 = vcmp.lt.s32.totalorder %v6652, 2
  %vm6654 = vcmp.eq.s32.totalorder %v6652, 0
  %v6655 = vxor.u32 %v6649, 2147483648
  %v6656 = vsel %vm6654, %v6648, %v6655
  %vm6657 = vcmp.eq.s32.totalorder %v6652, 2
  %v6658 = vxor.u32 %v6648, 2147483648
  %v6659 = vsel %vm6657, %v6658, %v6649
  %v6660 = vsel %vm6653, %v6656, %v6659
  %v6661 = vsel %vm6650, nan, %v6660
  %v6662 = vmul.f32 %v6556, 0.5
  %v6663 = vand.u32 2147483647, %v6662
  %vm6664 = vcmp.le.f32.partialorder %v6663, 0.7853982
  %vm6665 = vcmp.lt.s32.totalorder %v6662, 0
  %v6666 = vand.u32 %v6662, 2139095040
  %v6667 = vshrl.u32 %v6666, 23
  %v6668 = vsub.s32 %v6667, 127
  %v6669 = vand.u32 2147483647, %v6662
  %v6670 = vand.u32 %v6669, 8388607
  %v6671 = vor.u32 %v6670, 8388608
  %v6672 = vsub.s32 0, %v6671
  %v6673 = vadd.s32 %v6668, 1
  %vm6674 = vcmp.gt.s32.totalorder %v6673, 0
  %v6675 = vsel %vm6674, %v6673, 0
  %v6676 = vshrl.u32 %v6675, 5
  %v6677 = vand.u32 %v6675, 31
  %v6678 = vsub.s32 32, %v6677
  %v6679 = vshrl.u32 683565275, %v6678
  %v6680 = vshll.u32 683565275, %v6677
  %v6681 = vshrl.u32 2475754826, %v6678
  %v6682 = vor.u32 %v6680, %v6681
  %v6683 = vshll.u32 2475754826, %v6677
  %v6684 = vshrl.u32 2131351028, %v6678
  %v6685 = vor.u32 %v6683, %v6684
  %v6686 = vshll.u32 2131351028, %v6677
  %v6687 = vshrl.u32 2102212464, %v6678
  %v6688 = vor.u32 %v6686, %v6687
  %v6689 = vshll.u32 2102212464, %v6677
  %v6690 = vshrl.u32 920167782, %v6678
  %v6691 = vor.u32 %v6689, %v6690
  %v6692 = vshll.u32 920167782, %v6677
  %v6693 = vshrl.u32 1326507024, %v6678
  %v6694 = vor.u32 %v6692, %v6693
  %vm6695 = vcmp.lt.s32.totalorder %v6676, 1
  %vm6696 = vcmp.lt.s32.totalorder %v6676, 2
  %vm6697 = vcmp.lt.s32.totalorder %v6676, 3
  %vm6698 = vcmp.lt.s32.totalorder %v6676, 4
  %v6699 = vsel %vm6695, %v6679, %v6682
  %v6700 = vsel %vm6698, %v6688, 2102212464
  %v6701 = vsel %vm6697, %v6685, %v6700
  %v6702 = vsel %vm6696, %v6699, %v6701
  %v6703 = vsel %vm6695, %v6682, %v6685
  %v6704 = vsel %vm6698, %v6691, 920167782
  %v6705 = vsel %vm6697, %v6688, %v6704
  %v6706 = vsel %vm6696, %v6703, %v6705
  %v6707 = vsel %vm6695, %v6685, %v6688
  %v6708 = vsel %vm6698, %v6694, 1326507024
  %v6709 = vsel %vm6697, %v6691, %v6708
  %v6710 = vsel %vm6696, %v6707, %v6709
  %v6711 = vshll.u32 %v6671, 8
  %v6712 = vmul.u32.u64.compose %v6711, %v6710
  %v6713 = vextract.low.u32 %v6712
  %v6714 = vextract.high.u32 %v6712
  %v6715 = vmul.u32.u64.compose %v6711, %v6706
  %v6716 = vextract.low.u32 %v6715
  %v6717 = vextract.high.u32 %v6715
  %v6718 = vmul.u32 %v6711, %v6702
  %v6719 = vadd.s32 %v6714, %v6716
  %vm6720 = vc.u32 %v6714, %v6716
  %v6721 = vadd.s32 %v6717, 1
  %v6722 = vsel %vm6720, %v6721, %v6717
  %v6723 = vadd.s32 %v6718, %v6722
  %v6724 = vadd.s32 %v6723, 536870912
  %v6725 = vshrl.u32 %v6724, 30
  %v6726 = vshll.u32 %v6725, 30
  %v6727 = vsub.s32 %v6723, %v6726
  %vm6728 = vcmp.lt.s32.totalorder %v6727, 0
  %v6729 = vsub.s32 0, %v6727
  %v6730 = vsel %vm6728, %v6729, %v6727
  %v6731 = vclz %v6730
  %v6732 = vsub.s32 %v6731, 2
  %vm6733 = vcmp.gt.s32.totalorder 0, %v6732
  %v6734 = vsel %vm6733, 0, %v6732
  %v6735 = vsub.s32 32, %v6734
  %v6736 = vshll.u32 %v6727, %v6734
  %v6737 = vshrl.u32 %v6719, %v6735
  %v6738 = vor.u32 %v6736, %v6737
  %v6739 = vsub.s32 4294967266, %v6734
  %v6740 = vadd.s32 %v6739, 127
  %v6741 = vshll.u32 %v6740, 23
  %v6742 = vor.u32 4788187, %v6741
  %v6743 = vand.u32 2147483647, %v6742
  %v6745 = vcvt.s32.f32 %v6738
  %v6746 = vmul.f32 %v6745, %v6743
  %v6747 = vxor.u32 %v6746, 2147483648
  %v6748 = vsel %vm6665, %v6747, %v6746
  %v6749 = vsub.s32 4, %v6725
  %v6750 = vsel %vm6665, %v6749, %v6725
  %v6751 = vsel %vm6664, %v6662, %v6748
  %v6752 = vsel %vm6664, 0, %v6750
  %v6753 = vcosq.f32.pop %v6751
  %v6754 = vsinq.f32.pop %v6751
  %vm6755 = vweird.f32 %v6662
  %v6756 = vadd.s32 %v6752, 3
  %v6757 = vand.u32 %v6756, 3
  %vm6758 = vcmp.lt.s32.totalorder %v6757, 2
  %vm6759 = vcmp.eq.s32.totalorder %v6757, 0
  %v6760 = vxor.u32 %v6754, 2147483648
  %v6761 = vsel %vm6759, %v6753, %v6760
  %vm6762 = vcmp.eq.s32.totalorder %v6757, 2
  %v6763 = vxor.u32 %v6753, 2147483648
  %v6764 = vsel %vm6762, %v6763, %v6754
  %v6765 = vsel %vm6758, %v6761, %v6764
  %v6766 = vsel %vm6755, nan, %v6765
  %v6767 = vmul.f32 %v6661, %v6661
  %v6768 = vand.u32 2147483647, %v6553
  %vm6769 = vcmp.le.f32.partialorder %v6768, 0.7853982
  %vm6770 = vcmp.lt.s32.totalorder %v6553, 0
  %v6771 = vand.u32 %v6553, 2139095040
  %v6772 = vshrl.u32 %v6771, 23
  %v6773 = vsub.s32 %v6772, 127
  %v6774 = vand.u32 2147483647, %v6553
  %v6775 = vand.u32 %v6774, 8388607
  %v6776 = vor.u32 %v6775, 8388608
  %v6777 = vsub.s32 0, %v6776
  %v6778 = vadd.s32 %v6773, 1
  %vm6779 = vcmp.gt.s32.totalorder %v6778, 0
  %v6780 = vsel %vm6779, %v6778, 0
  %v6781 = vshrl.u32 %v6780, 5
  %v6782 = vand.u32 %v6780, 31
  %v6783 = vsub.s32 32, %v6782
  %v6784 = vshrl.u32 683565275, %v6783
  %v6785 = vshll.u32 683565275, %v6782
  %v6786 = vshrl.u32 2475754826, %v6783
  %v6787 = vor.u32 %v6785, %v6786
  %v6788 = vshll.u32 2475754826, %v6782
  %v6789 = vshrl.u32 2131351028, %v6783
  %v6790 = vor.u32 %v6788, %v6789
  %v6791 = vshll.u32 2131351028, %v6782
  %v6792 = vshrl.u32 2102212464, %v6783
  %v6793 = vor.u32 %v6791, %v6792
  %v6794 = vshll.u32 2102212464, %v6782
  %v6795 = vshrl.u32 920167782, %v6783
  %v6796 = vor.u32 %v6794, %v6795
  %v6797 = vshll.u32 920167782, %v6782
  %v6798 = vshrl.u32 1326507024, %v6783
  %v6799 = vor.u32 %v6797, %v6798
  %vm6800 = vcmp.lt.s32.totalorder %v6781, 1
  %vm6801 = vcmp.lt.s32.totalorder %v6781, 2
  %vm6802 = vcmp.lt.s32.totalorder %v6781, 3
  %vm6803 = vcmp.lt.s32.totalorder %v6781, 4
  %v6804 = vsel %vm6800, %v6784, %v6787
  %v6805 = vsel %vm6803, %v6793, 2102212464
  %v6806 = vsel %vm6802, %v6790, %v6805
  %v6807 = vsel %vm6801, %v6804, %v6806
  %v6808 = vsel %vm6800, %v6787, %v6790
  %v6809 = vsel %vm6803, %v6796, 920167782
  %v6810 = vsel %vm6802, %v6793, %v6809
  %v6811 = vsel %vm6801, %v6808, %v6810
  %v6812 = vsel %vm6800, %v6790, %v6793
  %v6813 = vsel %vm6803, %v6799, 1326507024
  %v6814 = vsel %vm6802, %v6796, %v6813
  %v6815 = vsel %vm6801, %v6812, %v6814
  %v6816 = vshll.u32 %v6776, 8
  %v6817 = vmul.u32.u64.compose %v6816, %v6815
  %v6818 = vextract.low.u32 %v6817
  %v6819 = vextract.high.u32 %v6817
  %v6820 = vmul.u32.u64.compose %v6816, %v6811
  %v6821 = vextract.low.u32 %v6820
  %v6822 = vextract.high.u32 %v6820
  %v6823 = vmul.u32 %v6816, %v6807
  %v6824 = vadd.s32 %v6819, %v6821
  %vm6825 = vc.u32 %v6819, %v6821
  %v6826 = vadd.s32 %v6822, 1
  %v6827 = vsel %vm6825, %v6826, %v6822
  %v6828 = vadd.s32 %v6823, %v6827
  %v6829 = vadd.s32 %v6828, 536870912
  %v6830 = vshrl.u32 %v6829, 30
  %v6831 = vshll.u32 %v6830, 30
  %v6832 = vsub.s32 %v6828, %v6831
  %vm6833 = vcmp.lt.s32.totalorder %v6832, 0
  %v6834 = vsub.s32 0, %v6832
  %v6835 = vsel %vm6833, %v6834, %v6832
  %v6836 = vclz %v6835
  %v6837 = vsub.s32 %v6836, 2
  %vm6838 = vcmp.gt.s32.totalorder 0, %v6837
  %v6839 = vsel %vm6838, 0, %v6837
  %v6840 = vsub.s32 32, %v6839
  %v6841 = vshll.u32 %v6832, %v6839
  %v6842 = vshrl.u32 %v6824, %v6840
  %v6843 = vor.u32 %v6841, %v6842
  %v6844 = vsub.s32 4294967266, %v6839
  %v6845 = vadd.s32 %v6844, 127
  %v6846 = vshll.u32 %v6845, 23
  %v6847 = vor.u32 4788187, %v6846
  %v6848 = vand.u32 2147483647, %v6847
  %v6850 = vcvt.s32.f32 %v6843
  %v6851 = vmul.f32 %v6850, %v6848
  %v6852 = vxor.u32 %v6851, 2147483648
  %v6853 = vsel %vm6770, %v6852, %v6851
  %v6854 = vsub.s32 4, %v6830
  %v6855 = vsel %vm6770, %v6854, %v6830
  %v6856 = vsel %vm6769, %v6553, %v6853
  %v6857 = vsel %vm6769, 0, %v6855
  %v6858 = vcosq.f32.pop %v6856
  %v6859 = vsinq.f32.pop %v6856
  %vm6860 = vweird.f32 %v6553
  %v6861 = vand.u32 %v6857, 3
  %vm6862 = vcmp.lt.s32.totalorder %v6861, 2
  %vm6863 = vcmp.eq.s32.totalorder %v6861, 0
  %v6864 = vxor.u32 %v6859, 2147483648
  %v6865 = vsel %vm6863, %v6858, %v6864
  %vm6866 = vcmp.eq.s32.totalorder %v6861, 2
  %v6867 = vxor.u32 %v6858, 2147483648
  %v6868 = vsel %vm6866, %v6867, %v6859
  %v6869 = vsel %vm6862, %v6865, %v6868
  %v6870 = vsel %vm6860, nan, %v6869
  %v6871 = vmul.f32 %v6427, %v6870
  %v6872 = vmul.f32 %v6871, %v6766
  %v6873 = vmul.f32 %v6872, %v6766
  %v6874 = vadd.f32 %v6767, %v6873
  %v6875 = vadd.f32 %v6874, 1e-10
  %v6876 = vrsqrt.pop %v6875
  %v6877 = vmul.f32 %v6875, %v6876
  %vm6878 = vcmp.eq.f32.partialorder %v6875, inf
  %v6879 = vsel %vm6878, %v6875, %v6877
  %vm6880 = vcmp.eq.f32.partialorder %v6875, 0.0
  %v6881 = vand.u32 %v6875, 2147483648
  %v6882 = vsel %vm6880, %v6881, %v6879
  %v6883 = vsub.f32 1.0, %v6874
  %v6884 = vadd.f32 %v6883, 1e-10
  %v6885 = vrsqrt.pop %v6884
  %v6886 = vmul.f32 %v6884, %v6885
  %vm6887 = vcmp.eq.f32.partialorder %v6884, inf
  %v6888 = vsel %vm6887, %v6884, %v6886
  %vm6889 = vcmp.eq.f32.partialorder %v6884, 0.0
  %v6890 = vand.u32 %v6884, 2147483648
  %v6891 = vsel %vm6889, %v6890, %v6888
  %v6892 = vand.u32 2147483647, %v6891
  %v6893 = vand.u32 2147483647, %v6882
  %v6894 = vmin.f32 %v6892, %v6893
  %v6895 = vmax.f32 %v6892, %v6893
  %v6896 = vrcp.pop %v6895
  %v6897 = vmul.f32 %v6894, %v6896
  %v6898 = vmul.f32 %v6897, %v6897
  %v6899 = vmul.f32 0.002785687, %v6898
  %v6900 = vadd.f32 %v6899, -0.015866
  %v6901 = vmul.f32 %v6900, %v6898
  %v6902 = vadd.f32 %v6901, 0.04247222
  %v6903 = vmul.f32 %v6902, %v6898
  %v6904 = vadd.f32 %v6903, -0.074975304
  %v6905 = vmul.f32 %v6904, %v6898
  %v6906 = vadd.f32 %v6905, 0.1064488
  %v6907 = vmul.f32 %v6906, %v6898
  %v6908 = vadd.f32 %v6907, -0.14207031
  %v6909 = vmul.f32 %v6908, %v6898
  %v6910 = vadd.f32 %v6909, 0.19993454
  %v6911 = vmul.f32 %v6910, %v6898
  %v6912 = vadd.f32 %v6911, -0.33333147
  %v6913 = vmul.f32 %v6912, %v6898
  %v6914 = vmul.f32 %v6913, %v6897
  %v6915 = vadd.f32 %v6914, %v6897
  %vm6916 = vcmp.gt.f32.partialorder %v6893, %v6892
  %v6917 = vsub.f32 1.5707964, %v6915
  %v6918 = vsel %vm6916, %v6917, %v6915
  %vm6919 = vcmp.lt.f32.partialorder %v6891, 0.0
  %v6920 = vsub.f32 3.1415927, %v6918
  %v6921 = vsel %vm6919, %v6920, %v6918
  %vm6922 = vcmp.lt.s32.totalorder %v6891, 0
  %v6923 = vsel %vm6922, 3.1415927, 0.0
  %vm6924 = vcmp.eq.f32.partialorder %v6882, 0.0
  %v6925 = vsel %vm6924, %v6923, %v6921
  %vm6926 = vcmp.ne.f32.partialorder %v6891, %v6891
  %vm6927 = vcmp.ne.f32.partialorder %v6882, %v6882
  %vm6928 = vmor %vm6926, %vm6927
  %v6929 = vsel %vm6928, nan, %v6925
  %vm6930 = vcmp.lt.f32.partialorder %v6891, 0.0
  %v6931 = vsel %vm6930, 2.3561945, 0.7853982
  %vm6932 = vcmp.eq.s32.totalorder %v6892, inf
  %vm6933 = vcmp.eq.s32.totalorder %v6893, inf
  %vm6934 = vmand %vm6932, %vm6933
  %v6935 = vsel %vm6934, %v6931, %v6929
  %v6936 = vand.u32 2147483647, %v6935
  %v6937 = vand.u32 %v6882, 2147483648
  %v6938 = vor.u32 %v6936, %v6937
  %v6939 = vmul.f32 %v6938, 2.0
  %v6940 = vmul.f32 %v6495, %v6939
  %v6941 = vadd.f32 %v5984, %v6940
  %s6942 = scalar_lea.vmem %s0, 7
  %v6943 = vld [vmem:[%s6942] sm:$0x1]
  %v6944 = vadd.f32 %v5987, %v6943
  %s6945 = scalar_lea.vmem %s247, 7
  %v6946 = vld [vmem:[%s6945] sm:$0x1]
  %v6947 = vadd.f32 %v5996, %v6946
  %vm6948 = vcmp.gt.f32.partialorder %v6947, 360.0
  %v6949 = vsub.f32 %v6947, 360.0
  %vm6950 = vcmp.lt.f32.partialorder %v6947, 0.0
  %v6951 = vadd.f32 %v6947, 360.0
  %v6952 = vsel %vm6950, %v6951, %v6947
  %v6953 = vsel %vm6948, %v6949, %v6952
  %v6954 = vmul.f32 %v6953, 0.017453292
  %v6955 = vand.u32 2147483647, %v6954
  %vm6956 = vcmp.le.f32.partialorder %v6955, 0.7853982
  %vm6957 = vcmp.lt.s32.totalorder %v6954, 0
  %v6958 = vand.u32 %v6954, 2139095040
  %v6959 = vshrl.u32 %v6958, 23
  %v6960 = vsub.s32 %v6959, 127
  %v6961 = vand.u32 2147483647, %v6954
  %v6962 = vand.u32 %v6961, 8388607
  %v6963 = vor.u32 %v6962, 8388608
  %v6964 = vsub.s32 0, %v6963
  %v6965 = vadd.s32 %v6960, 1
  %vm6966 = vcmp.gt.s32.totalorder %v6965, 0
  %v6967 = vsel %vm6966, %v6965, 0
  %v6968 = vshrl.u32 %v6967, 5
  %v6969 = vand.u32 %v6967, 31
  %v6970 = vsub.s32 32, %v6969
  %v6971 = vshrl.u32 683565275, %v6970
  %v6972 = vshll.u32 683565275, %v6969
  %v6973 = vshrl.u32 2475754826, %v6970
  %v6974 = vor.u32 %v6972, %v6973
  %v6975 = vshll.u32 2475754826, %v6969
  %v6976 = vshrl.u32 2131351028, %v6970
  %v6977 = vor.u32 %v6975, %v6976
  %v6978 = vshll.u32 2131351028, %v6969
  %v6979 = vshrl.u32 2102212464, %v6970
  %v6980 = vor.u32 %v6978, %v6979
  %v6981 = vshll.u32 2102212464, %v6969
  %v6982 = vshrl.u32 920167782, %v6970
  %v6983 = vor.u32 %v6981, %v6982
  %v6984 = vshll.u32 920167782, %v6969
  %v6985 = vshrl.u32 1326507024, %v6970
  %v6986 = vor.u32 %v6984, %v6985
  %vm6987 = vcmp.lt.s32.totalorder %v6968, 1
  %vm6988 = vcmp.lt.s32.totalorder %v6968, 2
  %vm6989 = vcmp.lt.s32.totalorder %v6968, 3
  %vm6990 = vcmp.lt.s32.totalorder %v6968, 4
  %v6991 = vsel %vm6987, %v6971, %v6974
  %v6992 = vsel %vm6990, %v6980, 2102212464
  %v6993 = vsel %vm6989, %v6977, %v6992
  %v6994 = vsel %vm6988, %v6991, %v6993
  %v6995 = vsel %vm6987, %v6974, %v6977
  %v6996 = vsel %vm6990, %v6983, 920167782
  %v6997 = vsel %vm6989, %v6980, %v6996
  %v6998 = vsel %vm6988, %v6995, %v6997
  %v6999 = vsel %vm6987, %v6977, %v6980
  %v7000 = vsel %vm6990, %v6986, 1326507024
  %v7001 = vsel %vm6989, %v6983, %v7000
  %v7002 = vsel %vm6988, %v6999, %v7001
  %v7003 = vshll.u32 %v6963, 8
  %v7004 = vmul.u32.u64.compose %v7003, %v7002
  %v7005 = vextract.low.u32 %v7004
  %v7006 = vextract.high.u32 %v7004
  %v7007 = vmul.u32.u64.compose %v7003, %v6998
  %v7008 = vextract.low.u32 %v7007
  %v7009 = vextract.high.u32 %v7007
  %v7010 = vmul.u32 %v7003, %v6994
  %v7011 = vadd.s32 %v7006, %v7008
  %vm7012 = vc.u32 %v7006, %v7008
  %v7013 = vadd.s32 %v7009, 1
  %v7014 = vsel %vm7012, %v7013, %v7009
  %v7015 = vadd.s32 %v7010, %v7014
  %v7016 = vadd.s32 %v7015, 536870912
  %v7017 = vshrl.u32 %v7016, 30
  %v7018 = vshll.u32 %v7017, 30
  %v7019 = vsub.s32 %v7015, %v7018
  %vm7020 = vcmp.lt.s32.totalorder %v7019, 0
  %v7021 = vsub.s32 0, %v7019
  %v7022 = vsel %vm7020, %v7021, %v7019
  %v7023 = vclz %v7022
  %v7024 = vsub.s32 %v7023, 2
  %vm7025 = vcmp.gt.s32.totalorder 0, %v7024
  %v7026 = vsel %vm7025, 0, %v7024
  %v7027 = vsub.s32 32, %v7026
  %v7028 = vshll.u32 %v7019, %v7026
  %v7029 = vshrl.u32 %v7011, %v7027
  %v7030 = vor.u32 %v7028, %v7029
  %v7031 = vsub.s32 4294967266, %v7026
  %v7032 = vadd.s32 %v7031, 127
  %v7033 = vshll.u32 %v7032, 23
  %v7034 = vor.u32 4788187, %v7033
  %v7035 = vand.u32 2147483647, %v7034
  %v7037 = vcvt.s32.f32 %v7030
  %v7038 = vmul.f32 %v7037, %v7035
  %v7039 = vxor.u32 %v7038, 2147483648
  %v7040 = vsel %vm6957, %v7039, %v7038
  %v7041 = vsub.s32 4, %v7017
  %v7042 = vsel %vm6957, %v7041, %v7017
  %v7043 = vsel %vm6956, %v6954, %v7040
  %v7044 = vsel %vm6956, 0, %v7042
  %v7045 = vcosq.f32.pop %v7043
  %v7046 = vsinq.f32.pop %v7043
  %vm7047 = vweird.f32 %v6954
  %v7048 = vadd.s32 %v7044, 3
  %v7049 = vand.u32 %v7048, 3
  %vm7050 = vcmp.lt.s32.totalorder %v7049, 2
  %vm7051 = vcmp.eq.s32.totalorder %v7049, 0
  %v7052 = vxor.u32 %v7046, 2147483648
  %v7053 = vsel %vm7051, %v7045, %v7052
  %vm7054 = vcmp.eq.s32.totalorder %v7049, 2
  %v7055 = vxor.u32 %v7045, 2147483648
  %v7056 = vsel %vm7054, %v7055, %v7046
  %v7057 = vsel %vm7050, %v7053, %v7056
  %v7058 = vsel %vm7047, nan, %v7057
  %v7059 = vand.u32 2147483647, %v6954
  %vm7060 = vcmp.le.f32.partialorder %v7059, 0.7853982
  %vm7061 = vcmp.lt.s32.totalorder %v6954, 0
  %v7062 = vand.u32 %v6954, 2139095040
  %v7063 = vshrl.u32 %v7062, 23
  %v7064 = vsub.s32 %v7063, 127
  %v7065 = vand.u32 2147483647, %v6954
  %v7066 = vand.u32 %v7065, 8388607
  %v7067 = vor.u32 %v7066, 8388608
  %v7068 = vsub.s32 0, %v7067
  %v7069 = vadd.s32 %v7064, 1
  %vm7070 = vcmp.gt.s32.totalorder %v7069, 0
  %v7071 = vsel %vm7070, %v7069, 0
  %v7072 = vshrl.u32 %v7071, 5
  %v7073 = vand.u32 %v7071, 31
  %v7074 = vsub.s32 32, %v7073
  %v7075 = vshrl.u32 683565275, %v7074
  %v7076 = vshll.u32 683565275, %v7073
  %v7077 = vshrl.u32 2475754826, %v7074
  %v7078 = vor.u32 %v7076, %v7077
  %v7079 = vshll.u32 2475754826, %v7073
  %v7080 = vshrl.u32 2131351028, %v7074
  %v7081 = vor.u32 %v7079, %v7080
  %v7082 = vshll.u32 2131351028, %v7073
  %v7083 = vshrl.u32 2102212464, %v7074
  %v7084 = vor.u32 %v7082, %v7083
  %v7085 = vshll.u32 2102212464, %v7073
  %v7086 = vshrl.u32 920167782, %v7074
  %v7087 = vor.u32 %v7085, %v7086
  %v7088 = vshll.u32 920167782, %v7073
  %v7089 = vshrl.u32 1326507024, %v7074
  %v7090 = vor.u32 %v7088, %v7089
  %vm7091 = vcmp.lt.s32.totalorder %v7072, 1
  %vm7092 = vcmp.lt.s32.totalorder %v7072, 2
  %vm7093 = vcmp.lt.s32.totalorder %v7072, 3
  %vm7094 = vcmp.lt.s32.totalorder %v7072, 4
  %v7095 = vsel %vm7091, %v7075, %v7078
  %v7096 = vsel %vm7094, %v7084, 2102212464
  %v7097 = vsel %vm7093, %v7081, %v7096
  %v7098 = vsel %vm7092, %v7095, %v7097
  %v7099 = vsel %vm7091, %v7078, %v7081
  %v7100 = vsel %vm7094, %v7087, 920167782
  %v7101 = vsel %vm7093, %v7084, %v7100
  %v7102 = vsel %vm7092, %v7099, %v7101
  %v7103 = vsel %vm7091, %v7081, %v7084
  %v7104 = vsel %vm7094, %v7090, 1326507024
  %v7105 = vsel %vm7093, %v7087, %v7104
  %v7106 = vsel %vm7092, %v7103, %v7105
  %v7107 = vshll.u32 %v7067, 8
  %v7108 = vmul.u32.u64.compose %v7107, %v7106
  %v7109 = vextract.low.u32 %v7108
  %v7110 = vextract.high.u32 %v7108
  %v7111 = vmul.u32.u64.compose %v7107, %v7102
  %v7112 = vextract.low.u32 %v7111
  %v7113 = vextract.high.u32 %v7111
  %v7114 = vmul.u32 %v7107, %v7098
  %v7115 = vadd.s32 %v7110, %v7112
  %vm7116 = vc.u32 %v7110, %v7112
  %v7117 = vadd.s32 %v7113, 1
  %v7118 = vsel %vm7116, %v7117, %v7113
  %v7119 = vadd.s32 %v7114, %v7118
  %v7120 = vadd.s32 %v7119, 536870912
  %v7121 = vshrl.u32 %v7120, 30
  %v7122 = vshll.u32 %v7121, 30
  %v7123 = vsub.s32 %v7119, %v7122
  %vm7124 = vcmp.lt.s32.totalorder %v7123, 0
  %v7125 = vsub.s32 0, %v7123
  %v7126 = vsel %vm7124, %v7125, %v7123
  %v7127 = vclz %v7126
  %v7128 = vsub.s32 %v7127, 2
  %vm7129 = vcmp.gt.s32.totalorder 0, %v7128
  %v7130 = vsel %vm7129, 0, %v7128
  %v7131 = vsub.s32 32, %v7130
  %v7132 = vshll.u32 %v7123, %v7130
  %v7133 = vshrl.u32 %v7115, %v7131
  %v7134 = vor.u32 %v7132, %v7133
  %v7135 = vsub.s32 4294967266, %v7130
  %v7136 = vadd.s32 %v7135, 127
  %v7137 = vshll.u32 %v7136, 23
  %v7138 = vor.u32 4788187, %v7137
  %v7139 = vand.u32 2147483647, %v7138
  %v7141 = vcvt.s32.f32 %v7134
  %v7142 = vmul.f32 %v7141, %v7139
  %v7143 = vxor.u32 %v7142, 2147483648
  %v7144 = vsel %vm7061, %v7143, %v7142
  %v7145 = vsub.s32 4, %v7121
  %v7146 = vsel %vm7061, %v7145, %v7121
  %v7147 = vsel %vm7060, %v6954, %v7144
  %v7148 = vsel %vm7060, 0, %v7146
  %v7149 = vcosq.f32.pop %v7147
  %v7150 = vsinq.f32.pop %v7147
  %vm7151 = vweird.f32 %v6954
  %v7152 = vand.u32 %v7148, 3
  %vm7153 = vcmp.lt.s32.totalorder %v7152, 2
  %vm7154 = vcmp.eq.s32.totalorder %v7152, 0
  %v7155 = vxor.u32 %v7150, 2147483648
  %v7156 = vsel %vm7154, %v7149, %v7155
  %vm7157 = vcmp.eq.s32.totalorder %v7152, 2
  %v7158 = vxor.u32 %v7149, 2147483648
  %v7159 = vsel %vm7157, %v7158, %v7150
  %v7160 = vsel %vm7153, %v7156, %v7159
  %v7161 = vsel %vm7151, nan, %v7160
  %v7162 = vmul.f32 %v6944, 92.6
  %v7163 = vmul.f32 %v7162, %v6493
  %v7164 = vand.u32 2147483647, %v7163
  %vm7165 = vcmp.le.f32.partialorder %v7164, 0.7853982
  %vm7166 = vcmp.lt.s32.totalorder %v7163, 0
  %v7167 = vand.u32 %v7163, 2139095040
  %v7168 = vshrl.u32 %v7167, 23
  %v7169 = vsub.s32 %v7168, 127
  %v7170 = vand.u32 2147483647, %v7163
  %v7171 = vand.u32 %v7170, 8388607
  %v7172 = vor.u32 %v7171, 8388608
  %v7173 = vsub.s32 0, %v7172
  %v7174 = vadd.s32 %v7169, 1
  %vm7175 = vcmp.gt.s32.totalorder %v7174, 0
  %v7176 = vsel %vm7175, %v7174, 0
  %v7177 = vshrl.u32 %v7176, 5
  %v7178 = vand.u32 %v7176, 31
  %v7179 = vsub.s32 32, %v7178
  %v7180 = vshrl.u32 683565275, %v7179
  %v7181 = vshll.u32 683565275, %v7178
  %v7182 = vshrl.u32 2475754826, %v7179
  %v7183 = vor.u32 %v7181, %v7182
  %v7184 = vshll.u32 2475754826, %v7178
  %v7185 = vshrl.u32 2131351028, %v7179
  %v7186 = vor.u32 %v7184, %v7185
  %v7187 = vshll.u32 2131351028, %v7178
  %v7188 = vshrl.u32 2102212464, %v7179
  %v7189 = vor.u32 %v7187, %v7188
  %v7190 = vshll.u32 2102212464, %v7178
  %v7191 = vshrl.u32 920167782, %v7179
  %v7192 = vor.u32 %v7190, %v7191
  %v7193 = vshll.u32 920167782, %v7178
  %v7194 = vshrl.u32 1326507024, %v7179
  %v7195 = vor.u32 %v7193, %v7194
  %vm7196 = vcmp.lt.s32.totalorder %v7177, 1
  %vm7197 = vcmp.lt.s32.totalorder %v7177, 2
  %vm7198 = vcmp.lt.s32.totalorder %v7177, 3
  %vm7199 = vcmp.lt.s32.totalorder %v7177, 4
  %v7200 = vsel %vm7196, %v7180, %v7183
  %v7201 = vsel %vm7199, %v7189, 2102212464
  %v7202 = vsel %vm7198, %v7186, %v7201
  %v7203 = vsel %vm7197, %v7200, %v7202
  %v7204 = vsel %vm7196, %v7183, %v7186
  %v7205 = vsel %vm7199, %v7192, 920167782
  %v7206 = vsel %vm7198, %v7189, %v7205
  %v7207 = vsel %vm7197, %v7204, %v7206
  %v7208 = vsel %vm7196, %v7186, %v7189
  %v7209 = vsel %vm7199, %v7195, 1326507024
  %v7210 = vsel %vm7198, %v7192, %v7209
  %v7211 = vsel %vm7197, %v7208, %v7210
  %v7212 = vshll.u32 %v7172, 8
  %v7213 = vmul.u32.u64.compose %v7212, %v7211
  %v7214 = vextract.low.u32 %v7213
  %v7215 = vextract.high.u32 %v7213
  %v7216 = vmul.u32.u64.compose %v7212, %v7207
  %v7217 = vextract.low.u32 %v7216
  %v7218 = vextract.high.u32 %v7216
  %v7219 = vmul.u32 %v7212, %v7203
  %v7220 = vadd.s32 %v7215, %v7217
  %vm7221 = vc.u32 %v7215, %v7217
  %v7222 = vadd.s32 %v7218, 1
  %v7223 = vsel %vm7221, %v7222, %v7218
  %v7224 = vadd.s32 %v7219, %v7223
  %v7225 = vadd.s32 %v7224, 536870912
  %v7226 = vshrl.u32 %v7225, 30
  %v7227 = vshll.u32 %v7226, 30
  %v7228 = vsub.s32 %v7224, %v7227
  %vm7229 = vcmp.lt.s32.totalorder %v7228, 0
  %v7230 = vsub.s32 0, %v7228
  %v7231 = vsel %vm7229, %v7230, %v7228
  %v7232 = vclz %v7231
  %v7233 = vsub.s32 %v7232, 2
  %vm7234 = vcmp.gt.s32.totalorder 0, %v7233
  %v7235 = vsel %vm7234, 0, %v7233
  %v7236 = vsub.s32 32, %v7235
  %v7237 = vshll.u32 %v7228, %v7235
  %v7238 = vshrl.u32 %v7220, %v7236
  %v7239 = vor.u32 %v7237, %v7238
  %v7240 = vsub.s32 4294967266, %v7235
  %v7241 = vadd.s32 %v7240, 127
  %v7242 = vshll.u32 %v7241, 23
  %v7243 = vor.u32 4788187, %v7242
  %v7244 = vand.u32 2147483647, %v7243
  %v7246 = vcvt.s32.f32 %v7239
  %v7247 = vmul.f32 %v7246, %v7244
  %v7248 = vxor.u32 %v7247, 2147483648
  %v7249 = vsel %vm7166, %v7248, %v7247
  %v7250 = vsub.s32 4, %v7226
  %v7251 = vsel %vm7166, %v7250, %v7226
  %v7252 = vsel %vm7165, %v7163, %v7249
  %v7253 = vsel %vm7165, 0, %v7251
  %v7254 = vcosq.f32.pop %v7252
  %v7255 = vsinq.f32.pop %v7252
  %vm7256 = vweird.f32 %v7163
  %v7257 = vadd.s32 %v7253, 3
  %v7258 = vand.u32 %v7257, 3
  %vm7259 = vcmp.lt.s32.totalorder %v7258, 2
  %vm7260 = vcmp.eq.s32.totalorder %v7258, 0
  %v7261 = vxor.u32 %v7255, 2147483648
  %v7262 = vsel %vm7260, %v7254, %v7261
  %vm7263 = vcmp.eq.s32.totalorder %v7258, 2
  %v7264 = vxor.u32 %v7254, 2147483648
  %v7265 = vsel %vm7263, %v7264, %v7255
  %v7266 = vsel %vm7259, %v7262, %v7265
  %v7267 = vsel %vm7256, nan, %v7266
  %v7268 = vand.u32 2147483647, %v7163
  %vm7269 = vcmp.le.f32.partialorder %v7268, 0.7853982
  %vm7270 = vcmp.lt.s32.totalorder %v7163, 0
  %v7271 = vand.u32 %v7163, 2139095040
  %v7272 = vshrl.u32 %v7271, 23
  %v7273 = vsub.s32 %v7272, 127
  %v7274 = vand.u32 2147483647, %v7163
  %v7275 = vand.u32 %v7274, 8388607
  %v7276 = vor.u32 %v7275, 8388608
  %v7277 = vsub.s32 0, %v7276
  %v7278 = vadd.s32 %v7273, 1
  %vm7279 = vcmp.gt.s32.totalorder %v7278, 0
  %v7280 = vsel %vm7279, %v7278, 0
  %v7281 = vshrl.u32 %v7280, 5
  %v7282 = vand.u32 %v7280, 31
  %v7283 = vsub.s32 32, %v7282
  %v7284 = vshrl.u32 683565275, %v7283
  %v7285 = vshll.u32 683565275, %v7282
  %v7286 = vshrl.u32 2475754826, %v7283
  %v7287 = vor.u32 %v7285, %v7286
  %v7288 = vshll.u32 2475754826, %v7282
  %v7289 = vshrl.u32 2131351028, %v7283
  %v7290 = vor.u32 %v7288, %v7289
  %v7291 = vshll.u32 2131351028, %v7282
  %v7292 = vshrl.u32 2102212464, %v7283
  %v7293 = vor.u32 %v7291, %v7292
  %v7294 = vshll.u32 2102212464, %v7282
  %v7295 = vshrl.u32 920167782, %v7283
  %v7296 = vor.u32 %v7294, %v7295
  %v7297 = vshll.u32 920167782, %v7282
  %v7298 = vshrl.u32 1326507024, %v7283
  %v7299 = vor.u32 %v7297, %v7298
  %vm7300 = vcmp.lt.s32.totalorder %v7281, 1
  %vm7301 = vcmp.lt.s32.totalorder %v7281, 2
  %vm7302 = vcmp.lt.s32.totalorder %v7281, 3
  %vm7303 = vcmp.lt.s32.totalorder %v7281, 4
  %v7304 = vsel %vm7300, %v7284, %v7287
  %v7305 = vsel %vm7303, %v7293, 2102212464
  %v7306 = vsel %vm7302, %v7290, %v7305
  %v7307 = vsel %vm7301, %v7304, %v7306
  %v7308 = vsel %vm7300, %v7287, %v7290
  %v7309 = vsel %vm7303, %v7296, 920167782
  %v7310 = vsel %vm7302, %v7293, %v7309
  %v7311 = vsel %vm7301, %v7308, %v7310
  %v7312 = vsel %vm7300, %v7290, %v7293
  %v7313 = vsel %vm7303, %v7299, 1326507024
  %v7314 = vsel %vm7302, %v7296, %v7313
  %v7315 = vsel %vm7301, %v7312, %v7314
  %v7316 = vshll.u32 %v7276, 8
  %v7317 = vmul.u32.u64.compose %v7316, %v7315
  %v7318 = vextract.low.u32 %v7317
  %v7319 = vextract.high.u32 %v7317
  %v7320 = vmul.u32.u64.compose %v7316, %v7311
  %v7321 = vextract.low.u32 %v7320
  %v7322 = vextract.high.u32 %v7320
  %v7323 = vmul.u32 %v7316, %v7307
  %v7324 = vadd.s32 %v7319, %v7321
  %vm7325 = vc.u32 %v7319, %v7321
  %v7326 = vadd.s32 %v7322, 1
  %v7327 = vsel %vm7325, %v7326, %v7322
  %v7328 = vadd.s32 %v7323, %v7327
  %v7329 = vadd.s32 %v7328, 536870912
  %v7330 = vshrl.u32 %v7329, 30
  %v7331 = vshll.u32 %v7330, 30
  %v7332 = vsub.s32 %v7328, %v7331
  %vm7333 = vcmp.lt.s32.totalorder %v7332, 0
  %v7334 = vsub.s32 0, %v7332
  %v7335 = vsel %vm7333, %v7334, %v7332
  %v7336 = vclz %v7335
  %v7337 = vsub.s32 %v7336, 2
  %vm7338 = vcmp.gt.s32.totalorder 0, %v7337
  %v7339 = vsel %vm7338, 0, %v7337
  %v7340 = vsub.s32 32, %v7339
  %v7341 = vshll.u32 %v7332, %v7339
  %v7342 = vshrl.u32 %v7324, %v7340
  %v7343 = vor.u32 %v7341, %v7342
  %v7344 = vsub.s32 4294967266, %v7339
  %v7345 = vadd.s32 %v7344, 127
  %v7346 = vshll.u32 %v7345, 23
  %v7347 = vor.u32 4788187, %v7346
  %v7348 = vand.u32 2147483647, %v7347
  %v7350 = vcvt.s32.f32 %v7343
  %v7351 = vmul.f32 %v7350, %v7348
  %v7352 = vxor.u32 %v7351, 2147483648
  %v7353 = vsel %vm7270, %v7352, %v7351
  %v7354 = vsub.s32 4, %v7330
  %v7355 = vsel %vm7270, %v7354, %v7330
  %v7356 = vsel %vm7269, %v7163, %v7353
  %v7357 = vsel %vm7269, 0, %v7355
  %v7358 = vcosq.f32.pop %v7356
  %v7359 = vsinq.f32.pop %v7356
  %vm7360 = vweird.f32 %v7163
  %v7361 = vand.u32 %v7357, 3
  %vm7362 = vcmp.lt.s32.totalorder %v7361, 2
  %vm7363 = vcmp.eq.s32.totalorder %v7361, 0
  %v7364 = vxor.u32 %v7359, 2147483648
  %v7365 = vsel %vm7363, %v7358, %v7364
  %vm7366 = vcmp.eq.s32.totalorder %v7361, 2
  %v7367 = vxor.u32 %v7358, 2147483648
  %v7368 = vsel %vm7366, %v7367, %v7359
  %v7369 = vsel %vm7362, %v7365, %v7368
  %v7370 = vsel %vm7360, nan, %v7369
  %v7371 = vmul.f32 %v6417, %v7370
  %v7372 = vmul.f32 %v6427, %v7267
  %v7373 = vmul.f32 %v7372, %v7161
  %v7374 = vadd.f32 %v7371, %v7373
  %v7375 = vmul.f32 %v7374, %v7374
  %v7376 = vsub.f32 1.0, %v7375
  %v7377 = vmax.f32 %v7376, 0.0
  %v7378 = vrsqrt.pop %v7377
  %v7379 = vmul.f32 %v7377, %v7378
  %vm7380 = vcmp.eq.f32.partialorder %v7377, inf
  %v7381 = vsel %vm7380, %v7377, %v7379
  %vm7382 = vcmp.eq.f32.partialorder %v7377, 0.0
  %v7383 = vand.u32 %v7377, 2147483648
  %v7384 = vsel %vm7382, %v7383, %v7381
  %v7385 = vmul.f32 %v7058, %v7267
  %v7386 = vmul.f32 %v7385, %v6427
  %v7387 = vmul.f32 %v6417, %v7374
  %v7388 = vsub.f32 %v7370, %v7387
  %v7389 = vand.u32 2147483647, %v7388
  %v7390 = vand.u32 2147483647, %v7386
  %v7391 = vmin.f32 %v7389, %v7390
  %v7392 = vmax.f32 %v7389, %v7390
  %v7393 = vrcp.pop %v7392
  %v7394 = vmul.f32 %v7391, %v7393
  %v7395 = vmul.f32 %v7394, %v7394
  %v7396 = vmul.f32 0.002785687, %v7395
  %v7397 = vadd.f32 %v7396, -0.015866
  %v7398 = vmul.f32 %v7397, %v7395
  %v7399 = vadd.f32 %v7398, 0.04247222
  %v7400 = vmul.f32 %v7399, %v7395
  %v7401 = vadd.f32 %v7400, -0.074975304
  %v7402 = vmul.f32 %v7401, %v7395
  %v7403 = vadd.f32 %v7402, 0.1064488
  %v7404 = vmul.f32 %v7403, %v7395
  %v7405 = vadd.f32 %v7404, -0.14207031
  %v7406 = vmul.f32 %v7405, %v7395
  %v7407 = vadd.f32 %v7406, 0.19993454
  %v7408 = vmul.f32 %v7407, %v7395
  %v7409 = vadd.f32 %v7408, -0.33333147
  %v7410 = vmul.f32 %v7409, %v7395
  %v7411 = vmul.f32 %v7410, %v7394
  %v7412 = vadd.f32 %v7411, %v7394
  %vm7413 = vcmp.gt.f32.partialorder %v7390, %v7389
  %v7414 = vsub.f32 1.5707964, %v7412
  %v7415 = vsel %vm7413, %v7414, %v7412
  %vm7416 = vcmp.lt.f32.partialorder %v7388, 0.0
  %v7417 = vsub.f32 3.1415927, %v7415
  %v7418 = vsel %vm7416, %v7417, %v7415
  %vm7419 = vcmp.lt.s32.totalorder %v7388, 0
  %v7420 = vsel %vm7419, 3.1415927, 0.0
  %vm7421 = vcmp.eq.f32.partialorder %v7386, 0.0
  %v7422 = vsel %vm7421, %v7420, %v7418
  %vm7423 = vcmp.ne.f32.partialorder %v7388, %v7388
  %vm7424 = vcmp.ne.f32.partialorder %v7386, %v7386
  %vm7425 = vmor %vm7423, %vm7424
  %v7426 = vsel %vm7425, nan, %v7422
  %vm7427 = vcmp.lt.f32.partialorder %v7388, 0.0
  %v7428 = vsel %vm7427, 2.3561945, 0.7853982
  %vm7429 = vcmp.eq.s32.totalorder %v7389, inf
  %vm7430 = vcmp.eq.s32.totalorder %v7390, inf
  %vm7431 = vmand %vm7429, %vm7430
  %v7432 = vsel %vm7431, %v7428, %v7426
  %v7433 = vand.u32 2147483647, %v7432
  %v7434 = vand.u32 %v7386, 2147483648
  %v7435 = vor.u32 %v7433, %v7434
  %v7436 = vadd.f32 %v6479, %v7435
  %v7437 = vmul.f32 %v7384, 4.068063e+13
  %v7438 = vmul.f32 %v7374, 4.04083e+13
  %v7439 = vmul.f32 %v7384, 6378137.0
  %v7440 = vmul.f32 %v7374, 6356752.5
  %v7441 = vmul.f32 %v7437, %v7437
  %v7442 = vmul.f32 %v7438, %v7438
  %v7443 = vadd.f32 %v7441, %v7442
  %v7444 = vmul.f32 %v7439, %v7439
  %v7445 = vmul.f32 %v7440, %v7440
  %v7446 = vadd.f32 %v7444, %v7445
  %v7447 = vrcp.pop %v7446
  %v7448 = vmul.f32 %v7443, %v7447
  %v7449 = vadd.f32 %v7448, 1e-10
  %v7450 = vrsqrt.pop %v7449
  %v7451 = vmul.f32 %v7449, %v7450
  %v7452 = vmul.f32 %v7451, 0.001
  %v7453 = vand.u32 2147483647, %v7384
  %v7454 = vand.u32 2147483647, %v7374
  %v7455 = vmin.f32 %v7453, %v7454
  %v7456 = vmax.f32 %v7453, %v7454
  %v7457 = vrcp.pop %v7456
  %v7458 = vmul.f32 %v7455, %v7457
  %v7459 = vmul.f32 %v7458, %v7458
  %v7460 = vmul.f32 0.002785687, %v7459
  %v7461 = vadd.f32 %v7460, -0.015866
  %v7462 = vmul.f32 %v7461, %v7459
  %v7463 = vadd.f32 %v7462, 0.04247222
  %v7464 = vmul.f32 %v7463, %v7459
  %v7465 = vadd.f32 %v7464, -0.074975304
  %v7466 = vmul.f32 %v7465, %v7459
  %v7467 = vadd.f32 %v7466, 0.1064488
  %v7468 = vmul.f32 %v7467, %v7459
  %v7469 = vadd.f32 %v7468, -0.14207031
  %v7470 = vmul.f32 %v7469, %v7459
  %v7471 = vadd.f32 %v7470, 0.19993454
  %v7472 = vmul.f32 %v7471, %v7459
  %v7473 = vadd.f32 %v7472, -0.33333147
  %v7474 = vmul.f32 %v7473, %v7459
  %v7475 = vmul.f32 %v7474, %v7458
  %v7476 = vadd.f32 %v7475, %v7458
  %vm7477 = vcmp.gt.f32.partialorder %v7454, %v7453
  %v7478 = vsub.f32 1.5707964, %v7476
  %v7479 = vsel %vm7477, %v7478, %v7476
  %vm7480 = vcmp.lt.f32.partialorder %v7384, 0.0
  %v7481 = vsub.f32 3.1415927, %v7479
  %v7482 = vsel %vm7480, %v7481, %v7479
  %vm7483 = vcmp.lt.s32.totalorder %v7384, 0
  %v7484 = vsel %vm7483, 3.1415927, 0.0
  %vm7485 = vcmp.eq.f32.partialorder %v7374, 0.0
  %v7486 = vsel %vm7485, %v7484, %v7482
  %vm7487 = vcmp.ne.f32.partialorder %v7384, %v7384
  %vm7488 = vcmp.ne.f32.partialorder %v7374, %v7374
  %vm7489 = vmor %vm7487, %vm7488
  %v7490 = vsel %vm7489, nan, %v7486
  %vm7491 = vcmp.lt.f32.partialorder %v7384, 0.0
  %v7492 = vsel %vm7491, 2.3561945, 0.7853982
  %vm7493 = vcmp.eq.s32.totalorder %v7453, inf
  %vm7494 = vcmp.eq.s32.totalorder %v7454, inf
  %vm7495 = vmand %vm7493, %vm7494
  %v7496 = vsel %vm7495, %v7492, %v7490
  %v7497 = vand.u32 2147483647, %v7496
  %v7498 = vand.u32 %v7374, 2147483648
  %v7499 = vor.u32 %v7497, %v7498
  %v7500 = vmul.f32 %v7436, 57.29578
  %s7501 = scalar_lea.vmem %s4, 7
  %7502 = vst [vmem:[%s7501] sm:$0x1] %v7500
  %v7503 = vmul.f32 %v7499, 57.29578
  %s7504 = scalar_lea.vmem %s805, 7
  %7505 = vst [vmem:[%s7504] sm:$0x1] %v7503
  %s7506 = scalar_lea.vmem %s16, 8
  %v7507 = vld [vmem:[%s7506] sm:$0x1]
  %s7508 = scalar_lea.vmem %s1, 8
  %v7509 = vld [vmem:[%s7508] sm:$0x1]
  %v7510 = vmul.f32 %v7507, 0.017453292
  %v7511 = vsub.f32 %v7510, %v7499
  %v7512 = vmul.f32 %v7509, 0.017453292
  %v7513 = vsub.f32 %v7512, %v7436
  %v7514 = vmul.f32 %v7511, 0.5
  %v7515 = vand.u32 2147483647, %v7514
  %vm7516 = vcmp.le.f32.partialorder %v7515, 0.7853982
  %vm7517 = vcmp.lt.s32.totalorder %v7514, 0
  %v7518 = vand.u32 %v7514, 2139095040
  %v7519 = vshrl.u32 %v7518, 23
  %v7520 = vsub.s32 %v7519, 127
  %v7521 = vand.u32 2147483647, %v7514
  %v7522 = vand.u32 %v7521, 8388607
  %v7523 = vor.u32 %v7522, 8388608
  %v7524 = vsub.s32 0, %v7523
  %v7525 = vadd.s32 %v7520, 1
  %vm7526 = vcmp.gt.s32.totalorder %v7525, 0
  %v7527 = vsel %vm7526, %v7525, 0
  %v7528 = vshrl.u32 %v7527, 5
  %v7529 = vand.u32 %v7527, 31
  %v7530 = vsub.s32 32, %v7529
  %v7531 = vshrl.u32 683565275, %v7530
  %v7532 = vshll.u32 683565275, %v7529
  %v7533 = vshrl.u32 2475754826, %v7530
  %v7534 = vor.u32 %v7532, %v7533
  %v7535 = vshll.u32 2475754826, %v7529
  %v7536 = vshrl.u32 2131351028, %v7530
  %v7537 = vor.u32 %v7535, %v7536
  %v7538 = vshll.u32 2131351028, %v7529
  %v7539 = vshrl.u32 2102212464, %v7530
  %v7540 = vor.u32 %v7538, %v7539
  %v7541 = vshll.u32 2102212464, %v7529
  %v7542 = vshrl.u32 920167782, %v7530
  %v7543 = vor.u32 %v7541, %v7542
  %v7544 = vshll.u32 920167782, %v7529
  %v7545 = vshrl.u32 1326507024, %v7530
  %v7546 = vor.u32 %v7544, %v7545
  %vm7547 = vcmp.lt.s32.totalorder %v7528, 1
  %vm7548 = vcmp.lt.s32.totalorder %v7528, 2
  %vm7549 = vcmp.lt.s32.totalorder %v7528, 3
  %vm7550 = vcmp.lt.s32.totalorder %v7528, 4
  %v7551 = vsel %vm7547, %v7531, %v7534
  %v7552 = vsel %vm7550, %v7540, 2102212464
  %v7553 = vsel %vm7549, %v7537, %v7552
  %v7554 = vsel %vm7548, %v7551, %v7553
  %v7555 = vsel %vm7547, %v7534, %v7537
  %v7556 = vsel %vm7550, %v7543, 920167782
  %v7557 = vsel %vm7549, %v7540, %v7556
  %v7558 = vsel %vm7548, %v7555, %v7557
  %v7559 = vsel %vm7547, %v7537, %v7540
  %v7560 = vsel %vm7550, %v7546, 1326507024
  %v7561 = vsel %vm7549, %v7543, %v7560
  %v7562 = vsel %vm7548, %v7559, %v7561
  %v7563 = vshll.u32 %v7523, 8
  %v7564 = vmul.u32.u64.compose %v7563, %v7562
  %v7565 = vextract.low.u32 %v7564
  %v7566 = vextract.high.u32 %v7564
  %v7567 = vmul.u32.u64.compose %v7563, %v7558
  %v7568 = vextract.low.u32 %v7567
  %v7569 = vextract.high.u32 %v7567
  %v7570 = vmul.u32 %v7563, %v7554
  %v7571 = vadd.s32 %v7566, %v7568
  %vm7572 = vc.u32 %v7566, %v7568
  %v7573 = vadd.s32 %v7569, 1
  %v7574 = vsel %vm7572, %v7573, %v7569
  %v7575 = vadd.s32 %v7570, %v7574
  %v7576 = vadd.s32 %v7575, 536870912
  %v7577 = vshrl.u32 %v7576, 30
  %v7578 = vshll.u32 %v7577, 30
  %v7579 = vsub.s32 %v7575, %v7578
  %vm7580 = vcmp.lt.s32.totalorder %v7579, 0
  %v7581 = vsub.s32 0, %v7579
  %v7582 = vsel %vm7580, %v7581, %v7579
  %v7583 = vclz %v7582
  %v7584 = vsub.s32 %v7583, 2
  %vm7585 = vcmp.gt.s32.totalorder 0, %v7584
  %v7586 = vsel %vm7585, 0, %v7584
  %v7587 = vsub.s32 32, %v7586
  %v7588 = vshll.u32 %v7579, %v7586
  %v7589 = vshrl.u32 %v7571, %v7587
  %v7590 = vor.u32 %v7588, %v7589
  %v7591 = vsub.s32 4294967266, %v7586
  %v7592 = vadd.s32 %v7591, 127
  %v7593 = vshll.u32 %v7592, 23
  %v7594 = vor.u32 4788187, %v7593
  %v7595 = vand.u32 2147483647, %v7594
  %v7597 = vcvt.s32.f32 %v7590
  %v7598 = vmul.f32 %v7597, %v7595
  %v7599 = vxor.u32 %v7598, 2147483648
  %v7600 = vsel %vm7517, %v7599, %v7598
  %v7601 = vsub.s32 4, %v7577
  %v7602 = vsel %vm7517, %v7601, %v7577
  %v7603 = vsel %vm7516, %v7514, %v7600
  %v7604 = vsel %vm7516, 0, %v7602
  %v7605 = vcosq.f32.pop %v7603
  %v7606 = vsinq.f32.pop %v7603
  %vm7607 = vweird.f32 %v7514
  %v7608 = vadd.s32 %v7604, 3
  %v7609 = vand.u32 %v7608, 3
  %vm7610 = vcmp.lt.s32.totalorder %v7609, 2
  %vm7611 = vcmp.eq.s32.totalorder %v7609, 0
  %v7612 = vxor.u32 %v7606, 2147483648
  %v7613 = vsel %vm7611, %v7605, %v7612
  %vm7614 = vcmp.eq.s32.totalorder %v7609, 2
  %v7615 = vxor.u32 %v7605, 2147483648
  %v7616 = vsel %vm7614, %v7615, %v7606
  %v7617 = vsel %vm7610, %v7613, %v7616
  %v7618 = vsel %vm7607, nan, %v7617
  %v7619 = vmul.f32 %v7513, 0.5
  %v7620 = vand.u32 2147483647, %v7619
  %vm7621 = vcmp.le.f32.partialorder %v7620, 0.7853982
  %vm7622 = vcmp.lt.s32.totalorder %v7619, 0
  %v7623 = vand.u32 %v7619, 2139095040
  %v7624 = vshrl.u32 %v7623, 23
  %v7625 = vsub.s32 %v7624, 127
  %v7626 = vand.u32 2147483647, %v7619
  %v7627 = vand.u32 %v7626, 8388607
  %v7628 = vor.u32 %v7627, 8388608
  %v7629 = vsub.s32 0, %v7628
  %v7630 = vadd.s32 %v7625, 1
  %vm7631 = vcmp.gt.s32.totalorder %v7630, 0
  %v7632 = vsel %vm7631, %v7630, 0
  %v7633 = vshrl.u32 %v7632, 5
  %v7634 = vand.u32 %v7632, 31
  %v7635 = vsub.s32 32, %v7634
  %v7636 = vshrl.u32 683565275, %v7635
  %v7637 = vshll.u32 683565275, %v7634
  %v7638 = vshrl.u32 2475754826, %v7635
  %v7639 = vor.u32 %v7637, %v7638
  %v7640 = vshll.u32 2475754826, %v7634
  %v7641 = vshrl.u32 2131351028, %v7635
  %v7642 = vor.u32 %v7640, %v7641
  %v7643 = vshll.u32 2131351028, %v7634
  %v7644 = vshrl.u32 2102212464, %v7635
  %v7645 = vor.u32 %v7643, %v7644
  %v7646 = vshll.u32 2102212464, %v7634
  %v7647 = vshrl.u32 920167782, %v7635
  %v7648 = vor.u32 %v7646, %v7647
  %v7649 = vshll.u32 920167782, %v7634
  %v7650 = vshrl.u32 1326507024, %v7635
  %v7651 = vor.u32 %v7649, %v7650
  %vm7652 = vcmp.lt.s32.totalorder %v7633, 1
  %vm7653 = vcmp.lt.s32.totalorder %v7633, 2
  %vm7654 = vcmp.lt.s32.totalorder %v7633, 3
  %vm7655 = vcmp.lt.s32.totalorder %v7633, 4
  %v7656 = vsel %vm7652, %v7636, %v7639
  %v7657 = vsel %vm7655, %v7645, 2102212464
  %v7658 = vsel %vm7654, %v7642, %v7657
  %v7659 = vsel %vm7653, %v7656, %v7658
  %v7660 = vsel %vm7652, %v7639, %v7642
  %v7661 = vsel %vm7655, %v7648, 920167782
  %v7662 = vsel %vm7654, %v7645, %v7661
  %v7663 = vsel %vm7653, %v7660, %v7662
  %v7664 = vsel %vm7652, %v7642, %v7645
  %v7665 = vsel %vm7655, %v7651, 1326507024
  %v7666 = vsel %vm7654, %v7648, %v7665
  %v7667 = vsel %vm7653, %v7664, %v7666
  %v7668 = vshll.u32 %v7628, 8
  %v7669 = vmul.u32.u64.compose %v7668, %v7667
  %v7670 = vextract.low.u32 %v7669
  %v7671 = vextract.high.u32 %v7669
  %v7672 = vmul.u32.u64.compose %v7668, %v7663
  %v7673 = vextract.low.u32 %v7672
  %v7674 = vextract.high.u32 %v7672
  %v7675 = vmul.u32 %v7668, %v7659
  %v7676 = vadd.s32 %v7671, %v7673
  %vm7677 = vc.u32 %v7671, %v7673
  %v7678 = vadd.s32 %v7674, 1
  %v7679 = vsel %vm7677, %v7678, %v7674
  %v7680 = vadd.s32 %v7675, %v7679
  %v7681 = vadd.s32 %v7680, 536870912
  %v7682 = vshrl.u32 %v7681, 30
  %v7683 = vshll.u32 %v7682, 30
  %v7684 = vsub.s32 %v7680, %v7683
  %vm7685 = vcmp.lt.s32.totalorder %v7684, 0
  %v7686 = vsub.s32 0, %v7684
  %v7687 = vsel %vm7685, %v7686, %v7684
  %v7688 = vclz %v7687
  %v7689 = vsub.s32 %v7688, 2
  %vm7690 = vcmp.gt.s32.totalorder 0, %v7689
  %v7691 = vsel %vm7690, 0, %v7689
  %v7692 = vsub.s32 32, %v7691
  %v7693 = vshll.u32 %v7684, %v7691
  %v7694 = vshrl.u32 %v7676, %v7692
  %v7695 = vor.u32 %v7693, %v7694
  %v7696 = vsub.s32 4294967266, %v7691
  %v7697 = vadd.s32 %v7696, 127
  %v7698 = vshll.u32 %v7697, 23
  %v7699 = vor.u32 4788187, %v7698
  %v7700 = vand.u32 2147483647, %v7699
  %v7702 = vcvt.s32.f32 %v7695
  %v7703 = vmul.f32 %v7702, %v7700
  %v7704 = vxor.u32 %v7703, 2147483648
  %v7705 = vsel %vm7622, %v7704, %v7703
  %v7706 = vsub.s32 4, %v7682
  %v7707 = vsel %vm7622, %v7706, %v7682
  %v7708 = vsel %vm7621, %v7619, %v7705
  %v7709 = vsel %vm7621, 0, %v7707
  %v7710 = vcosq.f32.pop %v7708
  %v7711 = vsinq.f32.pop %v7708
  %vm7712 = vweird.f32 %v7619
  %v7713 = vadd.s32 %v7709, 3
  %v7714 = vand.u32 %v7713, 3
  %vm7715 = vcmp.lt.s32.totalorder %v7714, 2
  %vm7716 = vcmp.eq.s32.totalorder %v7714, 0
  %v7717 = vxor.u32 %v7711, 2147483648
  %v7718 = vsel %vm7716, %v7710, %v7717
  %vm7719 = vcmp.eq.s32.totalorder %v7714, 2
  %v7720 = vxor.u32 %v7710, 2147483648
  %v7721 = vsel %vm7719, %v7720, %v7711
  %v7722 = vsel %vm7715, %v7718, %v7721
  %v7723 = vsel %vm7712, nan, %v7722
  %v7724 = vmul.f32 %v7618, %v7618
  %v7725 = vand.u32 2147483647, %v7510
  %vm7726 = vcmp.le.f32.partialorder %v7725, 0.7853982
  %vm7727 = vcmp.lt.s32.totalorder %v7510, 0
  %v7728 = vand.u32 %v7510, 2139095040
  %v7729 = vshrl.u32 %v7728, 23
  %v7730 = vsub.s32 %v7729, 127
  %v7731 = vand.u32 2147483647, %v7510
  %v7732 = vand.u32 %v7731, 8388607
  %v7733 = vor.u32 %v7732, 8388608
  %v7734 = vsub.s32 0, %v7733
  %v7735 = vadd.s32 %v7730, 1
  %vm7736 = vcmp.gt.s32.totalorder %v7735, 0
  %v7737 = vsel %vm7736, %v7735, 0
  %v7738 = vshrl.u32 %v7737, 5
  %v7739 = vand.u32 %v7737, 31
  %v7740 = vsub.s32 32, %v7739
  %v7741 = vshrl.u32 683565275, %v7740
  %v7742 = vshll.u32 683565275, %v7739
  %v7743 = vshrl.u32 2475754826, %v7740
  %v7744 = vor.u32 %v7742, %v7743
  %v7745 = vshll.u32 2475754826, %v7739
  %v7746 = vshrl.u32 2131351028, %v7740
  %v7747 = vor.u32 %v7745, %v7746
  %v7748 = vshll.u32 2131351028, %v7739
  %v7749 = vshrl.u32 2102212464, %v7740
  %v7750 = vor.u32 %v7748, %v7749
  %v7751 = vshll.u32 2102212464, %v7739
  %v7752 = vshrl.u32 920167782, %v7740
  %v7753 = vor.u32 %v7751, %v7752
  %v7754 = vshll.u32 920167782, %v7739
  %v7755 = vshrl.u32 1326507024, %v7740
  %v7756 = vor.u32 %v7754, %v7755
  %vm7757 = vcmp.lt.s32.totalorder %v7738, 1
  %vm7758 = vcmp.lt.s32.totalorder %v7738, 2
  %vm7759 = vcmp.lt.s32.totalorder %v7738, 3
  %vm7760 = vcmp.lt.s32.totalorder %v7738, 4
  %v7761 = vsel %vm7757, %v7741, %v7744
  %v7762 = vsel %vm7760, %v7750, 2102212464
  %v7763 = vsel %vm7759, %v7747, %v7762
  %v7764 = vsel %vm7758, %v7761, %v7763
  %v7765 = vsel %vm7757, %v7744, %v7747
  %v7766 = vsel %vm7760, %v7753, 920167782
  %v7767 = vsel %vm7759, %v7750, %v7766
  %v7768 = vsel %vm7758, %v7765, %v7767
  %v7769 = vsel %vm7757, %v7747, %v7750
  %v7770 = vsel %vm7760, %v7756, 1326507024
  %v7771 = vsel %vm7759, %v7753, %v7770
  %v7772 = vsel %vm7758, %v7769, %v7771
  %v7773 = vshll.u32 %v7733, 8
  %v7774 = vmul.u32.u64.compose %v7773, %v7772
  %v7775 = vextract.low.u32 %v7774
  %v7776 = vextract.high.u32 %v7774
  %v7777 = vmul.u32.u64.compose %v7773, %v7768
  %v7778 = vextract.low.u32 %v7777
  %v7779 = vextract.high.u32 %v7777
  %v7780 = vmul.u32 %v7773, %v7764
  %v7781 = vadd.s32 %v7776, %v7778
  %vm7782 = vc.u32 %v7776, %v7778
  %v7783 = vadd.s32 %v7779, 1
  %v7784 = vsel %vm7782, %v7783, %v7779
  %v7785 = vadd.s32 %v7780, %v7784
  %v7786 = vadd.s32 %v7785, 536870912
  %v7787 = vshrl.u32 %v7786, 30
  %v7788 = vshll.u32 %v7787, 30
  %v7789 = vsub.s32 %v7785, %v7788
  %vm7790 = vcmp.lt.s32.totalorder %v7789, 0
  %v7791 = vsub.s32 0, %v7789
  %v7792 = vsel %vm7790, %v7791, %v7789
  %v7793 = vclz %v7792
  %v7794 = vsub.s32 %v7793, 2
  %vm7795 = vcmp.gt.s32.totalorder 0, %v7794
  %v7796 = vsel %vm7795, 0, %v7794
  %v7797 = vsub.s32 32, %v7796
  %v7798 = vshll.u32 %v7789, %v7796
  %v7799 = vshrl.u32 %v7781, %v7797
  %v7800 = vor.u32 %v7798, %v7799
  %v7801 = vsub.s32 4294967266, %v7796
  %v7802 = vadd.s32 %v7801, 127
  %v7803 = vshll.u32 %v7802, 23
  %v7804 = vor.u32 4788187, %v7803
  %v7805 = vand.u32 2147483647, %v7804
  %v7807 = vcvt.s32.f32 %v7800
  %v7808 = vmul.f32 %v7807, %v7805
  %v7809 = vxor.u32 %v7808, 2147483648
  %v7810 = vsel %vm7727, %v7809, %v7808
  %v7811 = vsub.s32 4, %v7787
  %v7812 = vsel %vm7727, %v7811, %v7787
  %v7813 = vsel %vm7726, %v7510, %v7810
  %v7814 = vsel %vm7726, 0, %v7812
  %v7815 = vcosq.f32.pop %v7813
  %v7816 = vsinq.f32.pop %v7813
  %vm7817 = vweird.f32 %v7510
  %v7818 = vand.u32 %v7814, 3
  %vm7819 = vcmp.lt.s32.totalorder %v7818, 2
  %vm7820 = vcmp.eq.s32.totalorder %v7818, 0
  %v7821 = vxor.u32 %v7816, 2147483648
  %v7822 = vsel %vm7820, %v7815, %v7821
  %vm7823 = vcmp.eq.s32.totalorder %v7818, 2
  %v7824 = vxor.u32 %v7815, 2147483648
  %v7825 = vsel %vm7823, %v7824, %v7816
  %v7826 = vsel %vm7819, %v7822, %v7825
  %v7827 = vsel %vm7817, nan, %v7826
  %v7828 = vmul.f32 %v7384, %v7827
  %v7829 = vmul.f32 %v7828, %v7723
  %v7830 = vmul.f32 %v7829, %v7723
  %v7831 = vadd.f32 %v7724, %v7830
  %v7832 = vadd.f32 %v7831, 1e-10
  %v7833 = vrsqrt.pop %v7832
  %v7834 = vmul.f32 %v7832, %v7833
  %vm7835 = vcmp.eq.f32.partialorder %v7832, inf
  %v7836 = vsel %vm7835, %v7832, %v7834
  %vm7837 = vcmp.eq.f32.partialorder %v7832, 0.0
  %v7838 = vand.u32 %v7832, 2147483648
  %v7839 = vsel %vm7837, %v7838, %v7836
  %v7840 = vsub.f32 1.0, %v7831
  %v7841 = vadd.f32 %v7840, 1e-10
  %v7842 = vrsqrt.pop %v7841
  %v7843 = vmul.f32 %v7841, %v7842
  %vm7844 = vcmp.eq.f32.partialorder %v7841, inf
  %v7845 = vsel %vm7844, %v7841, %v7843
  %vm7846 = vcmp.eq.f32.partialorder %v7841, 0.0
  %v7847 = vand.u32 %v7841, 2147483648
  %v7848 = vsel %vm7846, %v7847, %v7845
  %v7849 = vand.u32 2147483647, %v7848
  %v7850 = vand.u32 2147483647, %v7839
  %v7851 = vmin.f32 %v7849, %v7850
  %v7852 = vmax.f32 %v7849, %v7850
  %v7853 = vrcp.pop %v7852
  %v7854 = vmul.f32 %v7851, %v7853
  %v7855 = vmul.f32 %v7854, %v7854
  %v7856 = vmul.f32 0.002785687, %v7855
  %v7857 = vadd.f32 %v7856, -0.015866
  %v7858 = vmul.f32 %v7857, %v7855
  %v7859 = vadd.f32 %v7858, 0.04247222
  %v7860 = vmul.f32 %v7859, %v7855
  %v7861 = vadd.f32 %v7860, -0.074975304
  %v7862 = vmul.f32 %v7861, %v7855
  %v7863 = vadd.f32 %v7862, 0.1064488
  %v7864 = vmul.f32 %v7863, %v7855
  %v7865 = vadd.f32 %v7864, -0.14207031
  %v7866 = vmul.f32 %v7865, %v7855
  %v7867 = vadd.f32 %v7866, 0.19993454
  %v7868 = vmul.f32 %v7867, %v7855
  %v7869 = vadd.f32 %v7868, -0.33333147
  %v7870 = vmul.f32 %v7869, %v7855
  %v7871 = vmul.f32 %v7870, %v7854
  %v7872 = vadd.f32 %v7871, %v7854
  %vm7873 = vcmp.gt.f32.partialorder %v7850, %v7849
  %v7874 = vsub.f32 1.5707964, %v7872
  %v7875 = vsel %vm7873, %v7874, %v7872
  %vm7876 = vcmp.lt.f32.partialorder %v7848, 0.0
  %v7877 = vsub.f32 3.1415927, %v7875
  %v7878 = vsel %vm7876, %v7877, %v7875
  %vm7879 = vcmp.lt.s32.totalorder %v7848, 0
  %v7880 = vsel %vm7879, 3.1415927, 0.0
  %vm7881 = vcmp.eq.f32.partialorder %v7839, 0.0
  %v7882 = vsel %vm7881, %v7880, %v7878
  %vm7883 = vcmp.ne.f32.partialorder %v7848, %v7848
  %vm7884 = vcmp.ne.f32.partialorder %v7839, %v7839
  %vm7885 = vmor %vm7883, %vm7884
  %v7886 = vsel %vm7885, nan, %v7882
  %vm7887 = vcmp.lt.f32.partialorder %v7848, 0.0
  %v7888 = vsel %vm7887, 2.3561945, 0.7853982
  %vm7889 = vcmp.eq.s32.totalorder %v7849, inf
  %vm7890 = vcmp.eq.s32.totalorder %v7850, inf
  %vm7891 = vmand %vm7889, %vm7890
  %v7892 = vsel %vm7891, %v7888, %v7886
  %v7893 = vand.u32 2147483647, %v7892
  %v7894 = vand.u32 %v7839, 2147483648
  %v7895 = vor.u32 %v7893, %v7894
  %v7896 = vmul.f32 %v7895, 2.0
  %v7897 = vmul.f32 %v7452, %v7896
  %v7898 = vadd.f32 %v6941, %v7897
  %v7899 = vlaneseq
  %v7900 = vshrl.u32 %v7899, 7
  %v7901 = vlaneseq
  %v7902 = vand.u32 %v7901, 127
  %s7903 = smul.u32 0, 128
  %v7904 = vmul.u32 %v7900, 128
  %v7905 = vstv %s7903
  %v7906 = vadd.s32 %v7905, %v7904
  %v7907 = vadd.s32 %v7906, %v7902
  %vm7908 = vcmp.lt.s32.totalorder %v7907, 4
  %v7909 = vsel %vm7908, %v7898, 0.0
  %7910 = vst [vmem:[%s3] sm:$0x1] %v7909
  // Predicated region
  $region14: #{myloss_forward.1} parent=0 // pred_check
    _
  $region15: #{myloss_forward.1} parent=0 // pred_check_branch
    %7912 = sbr.rel (0) target = $region17
  $region16: #{myloss_forward.1} parent=0 // pred_region
    _
  $region17: #{myloss_forward.1} parent=0 // pred_fallthru
    _
  // Predicated region
  $region18: #{myloss_forward.1} parent=0 // pred_check
    _
  $region19: #{myloss_forward.1} parent=0 // pred_check_branch
    %7914 = sbr.rel (0) target = $region21
  $region20: #{myloss_forward.1} parent=0 // pred_region
    _
  $region21: #{myloss_forward.1} parent=0 // pred_fallthru
    _
  // Predicated region
  $region22: #{myloss_forward.1} parent=0 // pred_check
    _
  $region23: #{myloss_forward.1} parent=0 // pred_check_branch
    %7916 = sbr.rel (0) target = $region25
  $region24: #{myloss_forward.1} parent=0 // pred_region
    _
  $region25: #{myloss_forward.1} parent=0 // pred_fallthru
    _
  // Predicated region
  $region26: #{myloss_forward.1} parent=0 // pred_check
    _
  $region27: #{myloss_forward.1} parent=0 // pred_check_branch
    %7918 = sbr.rel (0) target = $region29
  $region28: #{myloss_forward.1} parent=0 // pred_region
    _
  $region29: #{myloss_forward.1} parent=0 // pred_fallthru
    _

</llo_original>
